<compile_context>
chip_gen: v5e
topology: v5e:2x2
jax: 0.10.0
libtpu: 0.0.40
codegen_flags: <defaults>
</compile_context>

<pallas_src>
import jax
import jax.numpy as jnp
from jax.experimental import pallas as pl
from jax.experimental.pallas import tpu as pltpu


_TAPS = [(kh, kw) for kh in range(3) for kw in range(3)]
_W1C = 726   # conv1 output width in stride-28 flat coords (25*28+25 + 1)
_W2C = 668   # conv2 output width (23*28+23 + 1)
_CPC = 639   # pooled-anchor (2x2-max) width (22*28+22 + 1)


# ---------------------------------------------------------------------------
# Kernel 1: conv1 + relu + conv2 + relu + 2x2 maxpool  (T samples / grid step)
# ---------------------------------------------------------------------------
def _conv_pool_kernel(x_ref, w1_ref, b1_ref, w2_ref, b2_ref, sel_ref, o_ref,
                      y1_scr, p2_scr, y2_scr):
    T = x_ref.shape[0]

    @pl.loop(0, T)
    def _sample(s):
        xr = x_ref[pl.ds(s, 1), :]                         # (1, 784) f32

        # ---- conv1 (1 -> 32): 9 shifted VPU FMAs, ~95% lane utilization ----
        acc1 = w1_ref[:, 0:1] * xr[:, 0:_W1C]              # tap (0, 0)
        for k in range(1, 9):
            kh, kw = _TAPS[k]
            sh = kh * 28 + kw
            acc1 = acc1 + w1_ref[:, k:k + 1] * xr[:, sh:sh + _W1C]
        y1_scr[...] = jnp.maximum(acc1 + b1_ref[...], 0.0).astype(jnp.bfloat16)

        # ---- conv2 im2col slab: 9 whole-plane lane-shifted copies of y1 ----
        for k, (kh, kw) in enumerate(_TAPS):
            sh = kh * 28 + kw
            p2_scr[k * 32:(k + 1) * 32, :] = y1_scr[:, sh:sh + _W2C]

        # ---- conv2 (32 -> 64): one wide MXU matmul, f32 accumulate ---------
        y2 = jnp.dot(w2_ref[...], p2_scr[...],
                     preferred_element_type=jnp.float32) + b2_ref[...]
        y2_scr[...] = jnp.maximum(y2, 0.0)                 # (64, 668) f32

        # ---- 2x2 maxpool: lane-shift maxes (col:+1, row:+28) in f32 --------
        cmax = jnp.maximum(
            jnp.maximum(y2_scr[:, 0:_CPC], y2_scr[:, 1:_CPC + 1]),
            jnp.maximum(y2_scr[:, 28:28 + _CPC], y2_scr[:, 29:29 + _CPC]))
        # one 0/1 selection matmul compacts the 144 valid pooled anchors
        pooled = jnp.dot(cmax.astype(jnp.bfloat16), sel_ref[...],
                         preferred_element_type=jnp.float32)   # (64, 144)
        # PyTorch flatten order: element (c, j) == flat index c*144 + j
        o_ref[pl.ds(s, 1)] = pooled.astype(o_ref.dtype)[None]


# ---------------------------------------------------------------------------
# Kernel 2: fc1 + relu + fc2 + log_softmax  (batch tile x channel-chunk grid)
# ---------------------------------------------------------------------------
def _fc_kernel(x_ref, w1_ref, b1_ref, w2_ref, b2_ref, o_ref, acc_ref):
    k = pl.program_id(1)

    @pl.when(k == 0)
    def _():
        acc_ref[...] = jnp.zeros_like(acc_ref)

    acc = acc_ref[...]
    for c in range(8):                                  # 8 channels / chunk
        acc = acc + jnp.dot(x_ref[:, c, :], w1_ref[c],
                            preferred_element_type=jnp.float32)
    acc_ref[...] = acc

    @pl.when(k == pl.num_programs(1) - 1)
    def _():
        h = jnp.maximum(acc_ref[...] + b1_ref[...], 0.0).astype(jnp.bfloat16)
        z = jnp.dot(h, w2_ref[...],
                    preferred_element_type=jnp.float32) + b2_ref[...]
        m = jnp.max(z, axis=1, keepdims=True)
        lse = m + jnp.log(jnp.sum(jnp.exp(z - m), axis=1, keepdims=True))
        o_ref[...] = (z - lse).astype(o_ref.dtype)


# ---------------------------------------------------------------------------
# pallas_call wrappers
# ---------------------------------------------------------------------------
def _conv_pool(prep, x_flat):
    Bp = x_flat.shape[0]
    T = 8
    return pl.pallas_call(
        _conv_pool_kernel,
        out_shape=jax.ShapeDtypeStruct((Bp, 64, 144), jnp.bfloat16),
        grid=(Bp // T,),
        in_specs=[
            pl.BlockSpec((T, 784), lambda i: (i, 0)),        # images
            pl.BlockSpec((32, 9), lambda i: (0, 0)),         # conv1 weight
            pl.BlockSpec((32, 1), lambda i: (0, 0)),         # conv1 bias
            pl.BlockSpec((64, 288), lambda i: (0, 0)),       # conv2 weight
            pl.BlockSpec((64, 1), lambda i: (0, 0)),         # conv2 bias
            pl.BlockSpec((_CPC, 144), lambda i: (0, 0)),     # pool selector
        ],
        out_specs=pl.BlockSpec((T, 64, 144), lambda i: (i, 0, 0)),
        scratch_shapes=[
            pltpu.VMEM((32, _W1C), jnp.bfloat16),    # conv1 output
            pltpu.VMEM((288, _W2C), jnp.bfloat16),   # conv2 im2col slab
            pltpu.VMEM((64, _W2C), jnp.float32),     # conv2 output
        ],
        compiler_params=pltpu.CompilerParams(
            dimension_semantics=("parallel",)),
    )(x_flat, prep["w1"], prep["b1"], prep["w2"], prep["b2"], prep["sel"])


def _fc_head(prep, pooled):
    Bp = pooled.shape[0]
    # Bp is always a multiple of 8; pick the largest well-behaved row tile so
    # blocks stay small (<= 128 rows) even for ragged batches.
    tb = next(t for t in (128, 64, 32, 16, 8) if Bp % t == 0)
    return pl.pallas_call(
        _fc_kernel,
        out_shape=jax.ShapeDtypeStruct((Bp, 10), jnp.float32),
        grid=(Bp // tb, 8),                                  # 8 K-chunks
        in_specs=[
            pl.BlockSpec((tb, 8, 144), lambda i, k: (i, k, 0)),   # activ.
            pl.BlockSpec((8, 144, 128), lambda i, k: (k, 0, 0)),  # fc1 W
            pl.BlockSpec((1, 128), lambda i, k: (0, 0)),          # fc1 b
            pl.BlockSpec((128, 10), lambda i, k: (0, 0)),         # fc2 W
            pl.BlockSpec((1, 10), lambda i, k: (0, 0)),           # fc2 b
        ],
        out_specs=pl.BlockSpec((tb, 10), lambda i, k: (i, 0)),
        scratch_shapes=[pltpu.VMEM((tb, 128), jnp.float32)],
        compiler_params=pltpu.CompilerParams(
            dimension_semantics=("parallel", "arbitrary")),
    )(pooled, prep["wfc1"], prep["bfc1"], prep["wfc2"], prep["bfc2"])


# ---------------------------------------------------------------------------
# One-time parameter preparation (all transposes / permutations folded here)
# ---------------------------------------------------------------------------
def prepare_params(params):
    w1 = params["w1"].reshape(32, 9).astype(jnp.float32)     # (oc, kh*3+kw)
    b1 = params["b1"].reshape(32, 1).astype(jnp.float32)
    # conv2: column = (kh*3+kw)*32 + ic  -> matches in-kernel slab row order
    w2 = jnp.transpose(params["w2"], (0, 2, 3, 1)).reshape(64, 288)
    w2 = w2.astype(jnp.bfloat16)
    b2 = params["b2"].reshape(64, 1).astype(jnp.float32)
    # fc1: (128, 9216) with columns in PyTorch order c*144 + h*12 + w
    #      -> (channel-chunkable) (64, 144, 128)
    wfc1 = params["wfc1"].reshape(128, 64, 144).transpose(1, 2, 0)
    wfc1 = wfc1.astype(jnp.bfloat16)
    bfc1 = params["bfc1"].reshape(1, 128).astype(jnp.float32)
    wfc2 = params["wfc2"].T.astype(jnp.bfloat16)              # (128, 10)
    bfc2 = params["bfc2"].reshape(1, 10).astype(jnp.float32)
    # pooling selector: anchor of pooled (ph, pw) is flat index 56*ph + 2*pw
    p = jnp.arange(_CPC)[:, None]
    j = jnp.arange(144)[None, :]
    anchor = 56 * (j // 12) + 2 * (j % 12)
    sel = (p == anchor).astype(jnp.bfloat16)                  # (639, 144)
    return dict(w1=w1, b1=b1, w2=w2, b2=b2, wfc1=wfc1, bfc1=bfc1,
                wfc2=wfc2, bfc2=bfc2, sel=sel)


def init_params(key):
    """Deterministic init, PyTorch-convention parameter shapes."""
    ks = jax.random.split(key, 8)

    def u(k, shape, fan_in):
        bound = 1.0 / jnp.sqrt(jnp.float32(fan_in))
        return jax.random.uniform(k, shape, jnp.float32, -bound, bound)

    return {
        "w1": u(ks[0], (32, 1, 3, 3), 1 * 9),
        "b1": u(ks[1], (32,), 1 * 9),
        "w2": u(ks[2], (64, 32, 3, 3), 32 * 9),
        "b2": u(ks[3], (64,), 32 * 9),
        "wfc1": u(ks[4], (128, 9216), 9216),
        "bfc1": u(ks[5], (128,), 9216),
        "wfc2": u(ks[6], (10, 128), 128),
        "bfc2": u(ks[7], (10,), 128),
    }


@jax.jit
def net_forward(prep, x_nchw):
    B = x_nchw.shape[0]
    x = x_nchw.reshape(B, 28 * 28).astype(jnp.float32)   # flat 784, ch == 1
    Bp = (B + 7) // 8 * 8                                # conv batch tile = 8
    if Bp != B:
        x = jnp.pad(x, ((0, Bp - B), (0, 0)))
    pooled = _conv_pool(prep, x)                         # (Bp, 64, 144) bf16
    logp = _fc_head(prep, pooled)                        # (Bp, 10) f32
    return logp[:B]


# Pure-JAX reference (loose numerical sanity check only).
def reference_forward(params, x_nchw):
    dn = ("NCHW", "OIHW", "NCHW")
    y = jax.lax.conv_general_dilated(x_nchw.astype(jnp.float32), params["w1"],
                                     (1, 1), "VALID", dimension_numbers=dn)
    y = jax.nn.relu(y + params["b1"].reshape(1, 32, 1, 1))
    y = jax.lax.conv_general_dilated(y, params["w2"], (1, 1), "VALID",
                                     dimension_numbers=dn)
    y = jax.nn.relu(y + params["b2"].reshape(1, 64, 1, 1))
    B = y.shape[0]
    y = y.reshape(B, 64, 12, 2, 12, 2).max(axis=(3, 5))
    flat = y.reshape(B, 9216)
    h = jax.nn.relu(flat @ params["wfc1"].T + params["bfc1"])
    z = h @ params["wfc2"].T + params["bfc2"]
    return jax.nn.log_softmax(z, axis=1)


if __name__ == "__main__":
    key = jax.random.PRNGKey(0)
    pkey, xkey = jax.random.split(key)
    params = init_params(pkey)
    prep = prepare_params(params)
    x = jax.random.normal(xkey, (2, 1, 28, 28), jnp.float32)

    out = net_forward(prep, x)
    out = jax.block_until_ready(out)

    assert out.shape == (2, 10), out.shape
    assert bool(jnp.all(jnp.isfinite(out)))
    # log-softmax rows must exponentiate to a probability distribution.
    assert bool(jnp.allclose(jnp.sum(jnp.exp(out), axis=1), 1.0, atol=1e-4))
    # loose numerical check vs a pure-JAX/XLA reference (bf16 matmul path).
    ref = reference_forward(params, x)
    assert float(jnp.max(jnp.abs(out - ref))) < 0.1
    print("KERNEL_OK")
</pallas_src>

<mosaic_0001>
module attributes {stable_mosaic.version = 11 : i64} {
  func.func @_conv_pool_kernel(%arg0: i32, %arg1: memref<8x784xf32, #tpu.memory_space<vmem>>, %arg2: memref<32x9xf32, #tpu.memory_space<vmem>>, %arg3: memref<32x1xf32, #tpu.memory_space<vmem>>, %arg4: memref<64x288xbf16, #tpu.memory_space<vmem>>, %arg5: memref<64x1xf32, #tpu.memory_space<vmem>>, %arg6: memref<639x144xbf16, #tpu.memory_space<vmem>>, %arg7: memref<8x64x144xbf16, #tpu.memory_space<vmem>>, %arg8: memref<32x726xbf16, #tpu.memory_space<vmem>>, %arg9: memref<288x668xbf16, #tpu.memory_space<vmem>>, %arg10: memref<64x668xf32, #tpu.memory_space<vmem>>) attributes {dimension_semantics = [#tpu.dimension_semantics<parallel>], iteration_bounds = array<i64: 1>, scalar_prefetch = 0 : i64, scratch_operands = 3 : i64, tpu.core_type = #tpu.core_type<tc>, window_params = [{transform_indices = @transform_0, window_bounds = array<i64: 8, 784>}, {pipeline_mode = #tpu.pipeline_mode<synchronous>, transform_indices = @transform_1, window_bounds = array<i64: 32, 9>}, {pipeline_mode = #tpu.pipeline_mode<synchronous>, transform_indices = @transform_2, window_bounds = array<i64: 32, 1>}, {pipeline_mode = #tpu.pipeline_mode<synchronous>, transform_indices = @transform_3, window_bounds = array<i64: 64, 288>}, {pipeline_mode = #tpu.pipeline_mode<synchronous>, transform_indices = @transform_4, window_bounds = array<i64: 64, 1>}, {pipeline_mode = #tpu.pipeline_mode<synchronous>, transform_indices = @transform_5, window_bounds = array<i64: 639, 144>}, {transform_indices = @transform_6, window_bounds = array<i64: 8, 64, 144>}]} {
    %c0_i32 = arith.constant 0 : i32
    %c8_i32 = arith.constant 8 : i32
    %0 = arith.addi %c0_i32, %c8_i32 : i32
    %c1_i32 = arith.constant 1 : i32
    scf.for %arg11 = %c0_i32 to %0 step %c1_i32  : i32 {
      %c1_i32_1 = arith.constant 1 : i32
      %1 = arith.muli %arg11, %c1_i32_1 : i32
      %c0_i32_2 = arith.constant 0 : i32
      %2 = arith.addi %c0_i32_2, %1 : i32
      %3 = arith.index_cast %2 : i32 to index
      %c0 = arith.constant 0 : index
      %4 = vector.load %arg1[%3, %c0] : memref<8x784xf32, #tpu.memory_space<vmem>>, vector<1x784xf32>
      %c0_3 = arith.constant 0 : index
      %c0_4 = arith.constant 0 : index
      %5 = vector.load %arg2[%c0_3, %c0_4] : memref<32x9xf32, #tpu.memory_space<vmem>>, vector<32x1xf32>
      %6 = vector.extract_strided_slice %4 {offsets = [0, 0], sizes = [1, 726], strides = [1, 1]} : vector<1x784xf32> to vector<1x726xf32>
      %7 = vector.broadcast %5 : vector<32x1xf32> to vector<32x726xf32>
      %8 = vector.broadcast %6 : vector<1x726xf32> to vector<32x726xf32>
      %9 = arith.mulf %7, %8 : vector<32x726xf32>
      %c0_5 = arith.constant 0 : index
      %c1 = arith.constant 1 : index
      %10 = vector.load %arg2[%c0_5, %c1] : memref<32x9xf32, #tpu.memory_space<vmem>>, vector<32x1xf32>
      %11 = vector.extract_strided_slice %4 {offsets = [0, 1], sizes = [1, 726], strides = [1, 1]} : vector<1x784xf32> to vector<1x726xf32>
      %12 = vector.broadcast %10 : vector<32x1xf32> to vector<32x726xf32>
      %13 = vector.broadcast %11 : vector<1x726xf32> to vector<32x726xf32>
      %14 = arith.mulf %12, %13 : vector<32x726xf32>
      %15 = arith.addf %9, %14 : vector<32x726xf32>
      %c0_6 = arith.constant 0 : index
      %c2 = arith.constant 2 : index
      %16 = vector.load %arg2[%c0_6, %c2] : memref<32x9xf32, #tpu.memory_space<vmem>>, vector<32x1xf32>
      %17 = vector.extract_strided_slice %4 {offsets = [0, 2], sizes = [1, 726], strides = [1, 1]} : vector<1x784xf32> to vector<1x726xf32>
      %18 = vector.broadcast %16 : vector<32x1xf32> to vector<32x726xf32>
      %19 = vector.broadcast %17 : vector<1x726xf32> to vector<32x726xf32>
      %20 = arith.mulf %18, %19 : vector<32x726xf32>
      %21 = arith.addf %15, %20 : vector<32x726xf32>
      %c0_7 = arith.constant 0 : index
      %c3 = arith.constant 3 : index
      %22 = vector.load %arg2[%c0_7, %c3] : memref<32x9xf32, #tpu.memory_space<vmem>>, vector<32x1xf32>
      %23 = vector.extract_strided_slice %4 {offsets = [0, 28], sizes = [1, 726], strides = [1, 1]} : vector<1x784xf32> to vector<1x726xf32>
      %24 = vector.broadcast %22 : vector<32x1xf32> to vector<32x726xf32>
      %25 = vector.broadcast %23 : vector<1x726xf32> to vector<32x726xf32>
      %26 = arith.mulf %24, %25 : vector<32x726xf32>
      %27 = arith.addf %21, %26 : vector<32x726xf32>
      %c0_8 = arith.constant 0 : index
      %c4 = arith.constant 4 : index
      %28 = vector.load %arg2[%c0_8, %c4] : memref<32x9xf32, #tpu.memory_space<vmem>>, vector<32x1xf32>
      %29 = vector.extract_strided_slice %4 {offsets = [0, 29], sizes = [1, 726], strides = [1, 1]} : vector<1x784xf32> to vector<1x726xf32>
      %30 = vector.broadcast %28 : vector<32x1xf32> to vector<32x726xf32>
      %31 = vector.broadcast %29 : vector<1x726xf32> to vector<32x726xf32>
      %32 = arith.mulf %30, %31 : vector<32x726xf32>
      %33 = arith.addf %27, %32 : vector<32x726xf32>
      %c0_9 = arith.constant 0 : index
      %c5 = arith.constant 5 : index
      %34 = vector.load %arg2[%c0_9, %c5] : memref<32x9xf32, #tpu.memory_space<vmem>>, vector<32x1xf32>
      %35 = vector.extract_strided_slice %4 {offsets = [0, 30], sizes = [1, 726], strides = [1, 1]} : vector<1x784xf32> to vector<1x726xf32>
      %36 = vector.broadcast %34 : vector<32x1xf32> to vector<32x726xf32>
      %37 = vector.broadcast %35 : vector<1x726xf32> to vector<32x726xf32>
      %38 = arith.mulf %36, %37 : vector<32x726xf32>
      %39 = arith.addf %33, %38 : vector<32x726xf32>
      %c0_10 = arith.constant 0 : index
      %c6 = arith.constant 6 : index
      %40 = vector.load %arg2[%c0_10, %c6] : memref<32x9xf32, #tpu.memory_space<vmem>>, vector<32x1xf32>
      %41 = vector.extract_strided_slice %4 {offsets = [0, 56], sizes = [1, 726], strides = [1, 1]} : vector<1x784xf32> to vector<1x726xf32>
      %42 = vector.broadcast %40 : vector<32x1xf32> to vector<32x726xf32>
      %43 = vector.broadcast %41 : vector<1x726xf32> to vector<32x726xf32>
      %44 = arith.mulf %42, %43 : vector<32x726xf32>
      %45 = arith.addf %39, %44 : vector<32x726xf32>
      %c0_11 = arith.constant 0 : index
      %c7 = arith.constant 7 : index
      %46 = vector.load %arg2[%c0_11, %c7] : memref<32x9xf32, #tpu.memory_space<vmem>>, vector<32x1xf32>
      %47 = vector.extract_strided_slice %4 {offsets = [0, 57], sizes = [1, 726], strides = [1, 1]} : vector<1x784xf32> to vector<1x726xf32>
      %48 = vector.broadcast %46 : vector<32x1xf32> to vector<32x726xf32>
      %49 = vector.broadcast %47 : vector<1x726xf32> to vector<32x726xf32>
      %50 = arith.mulf %48, %49 : vector<32x726xf32>
      %51 = arith.addf %45, %50 : vector<32x726xf32>
      %c0_12 = arith.constant 0 : index
      %c8 = arith.constant 8 : index
      %52 = vector.load %arg2[%c0_12, %c8] : memref<32x9xf32, #tpu.memory_space<vmem>>, vector<32x1xf32>
      %53 = vector.extract_strided_slice %4 {offsets = [0, 58], sizes = [1, 726], strides = [1, 1]} : vector<1x784xf32> to vector<1x726xf32>
      %54 = vector.broadcast %52 : vector<32x1xf32> to vector<32x726xf32>
      %55 = vector.broadcast %53 : vector<1x726xf32> to vector<32x726xf32>
      %56 = arith.mulf %54, %55 : vector<32x726xf32>
      %57 = arith.addf %51, %56 : vector<32x726xf32>
      %c0_13 = arith.constant 0 : index
      %c0_14 = arith.constant 0 : index
      %58 = vector.load %arg3[%c0_13, %c0_14] : memref<32x1xf32, #tpu.memory_space<vmem>>, vector<32x1xf32>
      %59 = vector.broadcast %58 : vector<32x1xf32> to vector<32x726xf32>
      %60 = arith.addf %57, %59 : vector<32x726xf32>
      %cst = arith.constant 0.000000e+00 : f32
      %61 = vector.broadcast %cst : f32 to vector<32x726xf32>
      %62 = arith.maximumf %60, %61 : vector<32x726xf32>
      %63 = arith.truncf %62 : vector<32x726xf32> to vector<32x726xbf16>
      %c0_15 = arith.constant 0 : index
      %c0_16 = arith.constant 0 : index
      %64 = vector.load %arg8[%c0_15, %c0_16] : memref<32x726xbf16, #tpu.memory_space<vmem>>, vector<32x726xbf16>
      tpu.vector_store %arg8[%c0_15, %c0_16], %63 {strides = array<i32>} : memref<32x726xbf16, #tpu.memory_space<vmem>>, vector<32x726xbf16>,
      %c0_17 = arith.constant 0 : index
      %c0_18 = arith.constant 0 : index
      %65 = vector.load %arg8[%c0_17, %c0_18] : memref<32x726xbf16, #tpu.memory_space<vmem>>, vector<32x668xbf16>
      %c0_19 = arith.constant 0 : index
      %c0_20 = arith.constant 0 : index
      %66 = vector.load %arg9[%c0_19, %c0_20] : memref<288x668xbf16, #tpu.memory_space<vmem>>, vector<32x668xbf16>
      tpu.vector_store %arg9[%c0_19, %c0_20], %65 {strides = array<i32>} : memref<288x668xbf16, #tpu.memory_space<vmem>>, vector<32x668xbf16>,
      %c0_21 = arith.constant 0 : index
      %c1_22 = arith.constant 1 : index
      %67 = vector.load %arg8[%c0_21, %c1_22] : memref<32x726xbf16, #tpu.memory_space<vmem>>, vector<32x668xbf16>
      %c32 = arith.constant 32 : index
      %c0_23 = arith.constant 0 : index
      %68 = vector.load %arg9[%c32, %c0_23] : memref<288x668xbf16, #tpu.memory_space<vmem>>, vector<32x668xbf16>
      tpu.vector_store %arg9[%c32, %c0_23], %67 {strides = array<i32>} : memref<288x668xbf16, #tpu.memory_space<vmem>>, vector<32x668xbf16>,
      %c0_24 = arith.constant 0 : index
      %c2_25 = arith.constant 2 : index
      %69 = vector.load %arg8[%c0_24, %c2_25] : memref<32x726xbf16, #tpu.memory_space<vmem>>, vector<32x668xbf16>
      %c64 = arith.constant 64 : index
      %c0_26 = arith.constant 0 : index
      %70 = vector.load %arg9[%c64, %c0_26] : memref<288x668xbf16, #tpu.memory_space<vmem>>, vector<32x668xbf16>
      tpu.vector_store %arg9[%c64, %c0_26], %69 {strides = array<i32>} : memref<288x668xbf16, #tpu.memory_space<vmem>>, vector<32x668xbf16>,
      %c0_27 = arith.constant 0 : index
      %c28 = arith.constant 28 : index
      %71 = vector.load %arg8[%c0_27, %c28] : memref<32x726xbf16, #tpu.memory_space<vmem>>, vector<32x668xbf16>
      %c96 = arith.constant 96 : index
      %c0_28 = arith.constant 0 : index
      %72 = vector.load %arg9[%c96, %c0_28] : memref<288x668xbf16, #tpu.memory_space<vmem>>, vector<32x668xbf16>
      tpu.vector_store %arg9[%c96, %c0_28], %71 {strides = array<i32>} : memref<288x668xbf16, #tpu.memory_space<vmem>>, vector<32x668xbf16>,
      %c0_29 = arith.constant 0 : index
      %c29 = arith.constant 29 : index
      %73 = vector.load %arg8[%c0_29, %c29] : memref<32x726xbf16, #tpu.memory_space<vmem>>, vector<32x668xbf16>
      %c128 = arith.constant 128 : index
      %c0_30 = arith.constant 0 : index
      %74 = vector.load %arg9[%c128, %c0_30] : memref<288x668xbf16, #tpu.memory_space<vmem>>, vector<32x668xbf16>
      tpu.vector_store %arg9[%c128, %c0_30], %73 {strides = array<i32>} : memref<288x668xbf16, #tpu.memory_space<vmem>>, vector<32x668xbf16>,
      %c0_31 = arith.constant 0 : index
      %c30 = arith.constant 30 : index
      %75 = vector.load %arg8[%c0_31, %c30] : memref<32x726xbf16, #tpu.memory_space<vmem>>, vector<32x668xbf16>
      %c160 = arith.constant 160 : index
      %c0_32 = arith.constant 0 : index
      %76 = vector.load %arg9[%c160, %c0_32] : memref<288x668xbf16, #tpu.memory_space<vmem>>, vector<32x668xbf16>
      tpu.vector_store %arg9[%c160, %c0_32], %75 {strides = array<i32>} : memref<288x668xbf16, #tpu.memory_space<vmem>>, vector<32x668xbf16>,
      %c0_33 = arith.constant 0 : index
      %c56 = arith.constant 56 : index
      %77 = vector.load %arg8[%c0_33, %c56] : memref<32x726xbf16, #tpu.memory_space<vmem>>, vector<32x668xbf16>
      %c192 = arith.constant 192 : index
      %c0_34 = arith.constant 0 : index
      %78 = vector.load %arg9[%c192, %c0_34] : memref<288x668xbf16, #tpu.memory_space<vmem>>, vector<32x668xbf16>
      tpu.vector_store %arg9[%c192, %c0_34], %77 {strides = array<i32>} : memref<288x668xbf16, #tpu.memory_space<vmem>>, vector<32x668xbf16>,
      %c0_35 = arith.constant 0 : index
      %c57 = arith.constant 57 : index
      %79 = vector.load %arg8[%c0_35, %c57] : memref<32x726xbf16, #tpu.memory_space<vmem>>, vector<32x668xbf16>
      %c224 = arith.constant 224 : index
      %c0_36 = arith.constant 0 : index
      %80 = vector.load %arg9[%c224, %c0_36] : memref<288x668xbf16, #tpu.memory_space<vmem>>, vector<32x668xbf16>
      tpu.vector_store %arg9[%c224, %c0_36], %79 {strides = array<i32>} : memref<288x668xbf16, #tpu.memory_space<vmem>>, vector<32x668xbf16>,
      %c0_37 = arith.constant 0 : index
      %c58 = arith.constant 58 : index
      %81 = vector.load %arg8[%c0_37, %c58] : memref<32x726xbf16, #tpu.memory_space<vmem>>, vector<32x668xbf16>
      %c256 = arith.constant 256 : index
      %c0_38 = arith.constant 0 : index
      %82 = vector.load %arg9[%c256, %c0_38] : memref<288x668xbf16, #tpu.memory_space<vmem>>, vector<32x668xbf16>
      tpu.vector_store %arg9[%c256, %c0_38], %81 {strides = array<i32>} : memref<288x668xbf16, #tpu.memory_space<vmem>>, vector<32x668xbf16>,
      %c0_39 = arith.constant 0 : index
      %c0_40 = arith.constant 0 : index
      %83 = vector.load %arg4[%c0_39, %c0_40] : memref<64x288xbf16, #tpu.memory_space<vmem>>, vector<64x288xbf16>
      %c0_41 = arith.constant 0 : index
      %c0_42 = arith.constant 0 : index
      %84 = vector.load %arg9[%c0_41, %c0_42] : memref<288x668xbf16, #tpu.memory_space<vmem>>, vector<288x668xbf16>
      %cst_43 = arith.constant dense<0.000000e+00> : vector<64x668xf32>
      %85 = tpu.matmul %83, %84, %cst_43 {dimension_numbers = #tpu.dot_dimension_numbers<[1], [0], [0], [1], [0, 0, 1, 1], [], []>} : vector<64x288xbf16>, vector<288x668xbf16>, vector<64x668xf32> -> vector<64x668xf32>
      %c0_44 = arith.constant 0 : index
      %c0_45 = arith.constant 0 : index
      %86 = vector.load %arg5[%c0_44, %c0_45] : memref<64x1xf32, #tpu.memory_space<vmem>>, vector<64x1xf32>
      %87 = vector.broadcast %86 : vector<64x1xf32> to vector<64x668xf32>
      %88 = arith.addf %85, %87 : vector<64x668xf32>
      %cst_46 = arith.constant 0.000000e+00 : f32
      %89 = vector.broadcast %cst_46 : f32 to vector<64x668xf32>
      %90 = arith.maximumf %88, %89 : vector<64x668xf32>
      %c0_47 = arith.constant 0 : index
      %c0_48 = arith.constant 0 : index
      %91 = vector.load %arg10[%c0_47, %c0_48] : memref<64x668xf32, #tpu.memory_space<vmem>>, vector<64x668xf32>
      tpu.vector_store %arg10[%c0_47, %c0_48], %90 {strides = array<i32>} : memref<64x668xf32, #tpu.memory_space<vmem>>, vector<64x668xf32>,
      %c0_49 = arith.constant 0 : index
      %c0_50 = arith.constant 0 : index
      %92 = vector.load %arg10[%c0_49, %c0_50] : memref<64x668xf32, #tpu.memory_space<vmem>>, vector<64x639xf32>
      %c0_51 = arith.constant 0 : index
      %c1_52 = arith.constant 1 : index
      %93 = vector.load %arg10[%c0_51, %c1_52] : memref<64x668xf32, #tpu.memory_space<vmem>>, vector<64x639xf32>
      %94 = arith.maximumf %92, %93 : vector<64x639xf32>
      %c0_53 = arith.constant 0 : index
      %c28_54 = arith.constant 28 : index
      %95 = vector.load %arg10[%c0_53, %c28_54] : memref<64x668xf32, #tpu.memory_space<vmem>>, vector<64x639xf32>
      %c0_55 = arith.constant 0 : index
      %c29_56 = arith.constant 29 : index
      %96 = vector.load %arg10[%c0_55, %c29_56] : memref<64x668xf32, #tpu.memory_space<vmem>>, vector<64x639xf32>
      %97 = arith.maximumf %95, %96 : vector<64x639xf32>
      %98 = arith.maximumf %94, %97 : vector<64x639xf32>
      %99 = arith.truncf %98 : vector<64x639xf32> to vector<64x639xbf16>
      %c0_57 = arith.constant 0 : index
      %c0_58 = arith.constant 0 : index
      %100 = vector.load %arg6[%c0_57, %c0_58] : memref<639x144xbf16, #tpu.memory_space<vmem>>, vector<639x144xbf16>
      %cst_59 = arith.constant dense<0.000000e+00> : vector<64x144xf32>
      %101 = tpu.matmul %99, %100, %cst_59 {dimension_numbers = #tpu.dot_dimension_numbers<[1], [0], [0], [1], [0, 0, 1, 1], [], []>} : vector<64x639xbf16>, vector<639x144xbf16>, vector<64x144xf32> -> vector<64x144xf32>
      %102 = arith.truncf %101 : vector<64x144xf32> to vector<64x144xbf16>
      %103 = vector.shape_cast %102 : vector<64x144xbf16> to vector<1x64x144xbf16>
      %104 = arith.index_cast %2 : i32 to index
      %c0_60 = arith.constant 0 : index
      %c0_61 = arith.constant 0 : index
      %105 = vector.load %arg7[%104, %c0_60, %c0_61] : memref<8x64x144xbf16, #tpu.memory_space<vmem>>, vector<1x64x144xbf16>
      tpu.vector_store %arg7[%104, %c0_60, %c0_61], %103 {strides = array<i32>} : memref<8x64x144xbf16, #tpu.memory_space<vmem>>, vector<1x64x144xbf16>,
    }
    %c8_i32_0 = arith.constant 8 : i32
    return
  }
  func.func @transform_0(%arg0: i32) -> (i32, i32) {
    %c0_i32 = arith.constant 0 : i32
    %c0_i32_0 = arith.constant 0 : i32
    return %arg0, %c0_i32 : i32, i32
  }
  func.func @transform_1(%arg0: i32) -> (i32, i32) {
    %c0_i32 = arith.constant 0 : i32
    %c0_i32_0 = arith.constant 0 : i32
    %c0_i32_1 = arith.constant 0 : i32
    return %c0_i32, %c0_i32_0 : i32, i32
  }
  func.func @transform_2(%arg0: i32) -> (i32, i32) {
    %c0_i32 = arith.constant 0 : i32
    %c0_i32_0 = arith.constant 0 : i32
    %c0_i32_1 = arith.constant 0 : i32
    return %c0_i32, %c0_i32_0 : i32, i32
  }
  func.func @transform_3(%arg0: i32) -> (i32, i32) {
    %c0_i32 = arith.constant 0 : i32
    %c0_i32_0 = arith.constant 0 : i32
    %c0_i32_1 = arith.constant 0 : i32
    return %c0_i32, %c0_i32_0 : i32, i32
  }
  func.func @transform_4(%arg0: i32) -> (i32, i32) {
    %c0_i32 = arith.constant 0 : i32
    %c0_i32_0 = arith.constant 0 : i32
    %c0_i32_1 = arith.constant 0 : i32
    return %c0_i32, %c0_i32_0 : i32, i32
  }
  func.func @transform_5(%arg0: i32) -> (i32, i32) {
    %c0_i32 = arith.constant 0 : i32
    %c0_i32_0 = arith.constant 0 : i32
    %c0_i32_1 = arith.constant 0 : i32
    return %c0_i32, %c0_i32_0 : i32, i32
  }
  func.func @transform_6(%arg0: i32) -> (i32, i32, i32) {
    %c0_i32 = arith.constant 0 : i32
    %c0_i32_0 = arith.constant 0 : i32
    %c0_i32_1 = arith.constant 0 : i32
    return %arg0, %c0_i32, %c0_i32_0 : i32, i32, i32
  }
}

module attributes {stable_mosaic.version = 11 : i64} {
  func.func @_fc_kernel(%arg0: i32, %arg1: i32, %arg2: memref<8x8x144xbf16, #tpu.memory_space<vmem>>, %arg3: memref<8x144x128xbf16, #tpu.memory_space<vmem>>, %arg4: memref<1x128xf32, #tpu.memory_space<vmem>>, %arg5: memref<128x10xbf16, #tpu.memory_space<vmem>>, %arg6: memref<1x10xf32, #tpu.memory_space<vmem>>, %arg7: memref<8x10xf32, #tpu.memory_space<vmem>>, %arg8: memref<8x128xf32, #tpu.memory_space<vmem>>) attributes {dimension_semantics = [#tpu.dimension_semantics<parallel>, #tpu.dimension_semantics<arbitrary>], iteration_bounds = array<i64: 1, 8>, scalar_prefetch = 0 : i64, scratch_operands = 1 : i64, tpu.core_type = #tpu.core_type<tc>, window_params = [{transform_indices = @transform_0, window_bounds = array<i64: 8, 8, 144>}, {transform_indices = @transform_1, window_bounds = array<i64: 8, 144, 128>}, {pipeline_mode = #tpu.pipeline_mode<synchronous>, transform_indices = @transform_2, window_bounds = array<i64: 1, 128>}, {pipeline_mode = #tpu.pipeline_mode<synchronous>, transform_indices = @transform_3, window_bounds = array<i64: 128, 10>}, {pipeline_mode = #tpu.pipeline_mode<synchronous>, transform_indices = @transform_4, window_bounds = array<i64: 1, 10>}, {transform_indices = @transform_5, window_bounds = array<i64: 8, 10>}]} {
    %c0_i32 = arith.constant 0 : i32
    %0 = arith.cmpi eq, %arg1, %c0_i32 : i32
    %1 = arith.extui %0 : i1 to i32
    %c0_i32_0 = arith.constant 0 : i32
    %2 = arith.cmpi ne, %1, %c0_i32_0 : i32
    scf.if %2 {
      %cst_53 = arith.constant 0.000000e+00 : f32
      %56 = vector.broadcast %cst_53 : f32 to vector<8x128xf32>
      %c0_54 = arith.constant 0 : index
      %c0_55 = arith.constant 0 : index
      %57 = vector.load %arg8[%c0_54, %c0_55] : memref<8x128xf32, #tpu.memory_space<vmem>>, vector<8x128xf32>
      tpu.vector_store %arg8[%c0_54, %c0_55], %56 {strides = array<i32>} : memref<8x128xf32, #tpu.memory_space<vmem>>, vector<8x128xf32>,
    } else {
    }
    %c0 = arith.constant 0 : index
    %c0_1 = arith.constant 0 : index
    %3 = vector.load %arg8[%c0, %c0_1] : memref<8x128xf32, #tpu.memory_space<vmem>>, vector<8x128xf32>
    %c0_2 = arith.constant 0 : index
    %c0_3 = arith.constant 0 : index
    %c0_4 = arith.constant 0 : index
    %4 = vector.load %arg2[%c0_2, %c0_3, %c0_4] : memref<8x8x144xbf16, #tpu.memory_space<vmem>>, vector<8x1x144xbf16>
    %5 = vector.shape_cast %4 : vector<8x1x144xbf16> to vector<8x144xbf16>
    %c0_5 = arith.constant 0 : index
    %c0_6 = arith.constant 0 : index
    %c0_7 = arith.constant 0 : index
    %6 = vector.load %arg3[%c0_5, %c0_6, %c0_7] : memref<8x144x128xbf16, #tpu.memory_space<vmem>>, vector<1x144x128xbf16>
    %7 = vector.shape_cast %6 : vector<1x144x128xbf16> to vector<144x128xbf16>
    %cst = arith.constant dense<0.000000e+00> : vector<8x128xf32>
    %8 = tpu.matmul %5, %7, %cst {dimension_numbers = #tpu.dot_dimension_numbers<[1], [0], [0], [1], [0, 0, 1, 1], [], []>} : vector<8x144xbf16>, vector<144x128xbf16>, vector<8x128xf32> -> vector<8x128xf32>
    %9 = arith.addf %3, %8 : vector<8x128xf32>
    %c0_8 = arith.constant 0 : index
    %c1 = arith.constant 1 : index
    %c0_9 = arith.constant 0 : index
    %10 = vector.load %arg2[%c0_8, %c1, %c0_9] : memref<8x8x144xbf16, #tpu.memory_space<vmem>>, vector<8x1x144xbf16>
    %11 = vector.shape_cast %10 : vector<8x1x144xbf16> to vector<8x144xbf16>
    %c1_10 = arith.constant 1 : index
    %c0_11 = arith.constant 0 : index
    %c0_12 = arith.constant 0 : index
    %12 = vector.load %arg3[%c1_10, %c0_11, %c0_12] : memref<8x144x128xbf16, #tpu.memory_space<vmem>>, vector<1x144x128xbf16>
    %13 = vector.shape_cast %12 : vector<1x144x128xbf16> to vector<144x128xbf16>
    %cst_13 = arith.constant dense<0.000000e+00> : vector<8x128xf32>
    %14 = tpu.matmul %11, %13, %cst_13 {dimension_numbers = #tpu.dot_dimension_numbers<[1], [0], [0], [1], [0, 0, 1, 1], [], []>} : vector<8x144xbf16>, vector<144x128xbf16>, vector<8x128xf32> -> vector<8x128xf32>
    %15 = arith.addf %9, %14 : vector<8x128xf32>
    %c0_14 = arith.constant 0 : index
    %c2 = arith.constant 2 : index
    %c0_15 = arith.constant 0 : index
    %16 = vector.load %arg2[%c0_14, %c2, %c0_15] : memref<8x8x144xbf16, #tpu.memory_space<vmem>>, vector<8x1x144xbf16>
    %17 = vector.shape_cast %16 : vector<8x1x144xbf16> to vector<8x144xbf16>
    %c2_16 = arith.constant 2 : index
    %c0_17 = arith.constant 0 : index
    %c0_18 = arith.constant 0 : index
    %18 = vector.load %arg3[%c2_16, %c0_17, %c0_18] : memref<8x144x128xbf16, #tpu.memory_space<vmem>>, vector<1x144x128xbf16>
    %19 = vector.shape_cast %18 : vector<1x144x128xbf16> to vector<144x128xbf16>
    %cst_19 = arith.constant dense<0.000000e+00> : vector<8x128xf32>
    %20 = tpu.matmul %17, %19, %cst_19 {dimension_numbers = #tpu.dot_dimension_numbers<[1], [0], [0], [1], [0, 0, 1, 1], [], []>} : vector<8x144xbf16>, vector<144x128xbf16>, vector<8x128xf32> -> vector<8x128xf32>
    %21 = arith.addf %15, %20 : vector<8x128xf32>
    %c0_20 = arith.constant 0 : index
    %c3 = arith.constant 3 : index
    %c0_21 = arith.constant 0 : index
    %22 = vector.load %arg2[%c0_20, %c3, %c0_21] : memref<8x8x144xbf16, #tpu.memory_space<vmem>>, vector<8x1x144xbf16>
    %23 = vector.shape_cast %22 : vector<8x1x144xbf16> to vector<8x144xbf16>
    %c3_22 = arith.constant 3 : index
    %c0_23 = arith.constant 0 : index
    %c0_24 = arith.constant 0 : index
    %24 = vector.load %arg3[%c3_22, %c0_23, %c0_24] : memref<8x144x128xbf16, #tpu.memory_space<vmem>>, vector<1x144x128xbf16>
    %25 = vector.shape_cast %24 : vector<1x144x128xbf16> to vector<144x128xbf16>
    %cst_25 = arith.constant dense<0.000000e+00> : vector<8x128xf32>
    %26 = tpu.matmul %23, %25, %cst_25 {dimension_numbers = #tpu.dot_dimension_numbers<[1], [0], [0], [1], [0, 0, 1, 1], [], []>} : vector<8x144xbf16>, vector<144x128xbf16>, vector<8x128xf32> -> vector<8x128xf32>
    %27 = arith.addf %21, %26 : vector<8x128xf32>
    %c0_26 = arith.constant 0 : index
    %c4 = arith.constant 4 : index
    %c0_27 = arith.constant 0 : index
    %28 = vector.load %arg2[%c0_26, %c4, %c0_27] : memref<8x8x144xbf16, #tpu.memory_space<vmem>>, vector<8x1x144xbf16>
    %29 = vector.shape_cast %28 : vector<8x1x144xbf16> to vector<8x144xbf16>
    %c4_28 = arith.constant 4 : index
    %c0_29 = arith.constant 0 : index
    %c0_30 = arith.constant 0 : index
    %30 = vector.load %arg3[%c4_28, %c0_29, %c0_30] : memref<8x144x128xbf16, #tpu.memory_space<vmem>>, vector<1x144x128xbf16>
    %31 = vector.shape_cast %30 : vector<1x144x128xbf16> to vector<144x128xbf16>
    %cst_31 = arith.constant dense<0.000000e+00> : vector<8x128xf32>
    %32 = tpu.matmul %29, %31, %cst_31 {dimension_numbers = #tpu.dot_dimension_numbers<[1], [0], [0], [1], [0, 0, 1, 1], [], []>} : vector<8x144xbf16>, vector<144x128xbf16>, vector<8x128xf32> -> vector<8x128xf32>
    %33 = arith.addf %27, %32 : vector<8x128xf32>
    %c0_32 = arith.constant 0 : index
    %c5 = arith.constant 5 : index
    %c0_33 = arith.constant 0 : index
    %34 = vector.load %arg2[%c0_32, %c5, %c0_33] : memref<8x8x144xbf16, #tpu.memory_space<vmem>>, vector<8x1x144xbf16>
    %35 = vector.shape_cast %34 : vector<8x1x144xbf16> to vector<8x144xbf16>
    %c5_34 = arith.constant 5 : index
    %c0_35 = arith.constant 0 : index
    %c0_36 = arith.constant 0 : index
    %36 = vector.load %arg3[%c5_34, %c0_35, %c0_36] : memref<8x144x128xbf16, #tpu.memory_space<vmem>>, vector<1x144x128xbf16>
    %37 = vector.shape_cast %36 : vector<1x144x128xbf16> to vector<144x128xbf16>
    %cst_37 = arith.constant dense<0.000000e+00> : vector<8x128xf32>
    %38 = tpu.matmul %35, %37, %cst_37 {dimension_numbers = #tpu.dot_dimension_numbers<[1], [0], [0], [1], [0, 0, 1, 1], [], []>} : vector<8x144xbf16>, vector<144x128xbf16>, vector<8x128xf32> -> vector<8x128xf32>
    %39 = arith.addf %33, %38 : vector<8x128xf32>
    %c0_38 = arith.constant 0 : index
    %c6 = arith.constant 6 : index
    %c0_39 = arith.constant 0 : index
    %40 = vector.load %arg2[%c0_38, %c6, %c0_39] : memref<8x8x144xbf16, #tpu.memory_space<vmem>>, vector<8x1x144xbf16>
    %41 = vector.shape_cast %40 : vector<8x1x144xbf16> to vector<8x144xbf16>
    %c6_40 = arith.constant 6 : index
    %c0_41 = arith.constant 0 : index
    %c0_42 = arith.constant 0 : index
    %42 = vector.load %arg3[%c6_40, %c0_41, %c0_42] : memref<8x144x128xbf16, #tpu.memory_space<vmem>>, vector<1x144x128xbf16>
    %43 = vector.shape_cast %42 : vector<1x144x128xbf16> to vector<144x128xbf16>
    %cst_43 = arith.constant dense<0.000000e+00> : vector<8x128xf32>
    %44 = tpu.matmul %41, %43, %cst_43 {dimension_numbers = #tpu.dot_dimension_numbers<[1], [0], [0], [1], [0, 0, 1, 1], [], []>} : vector<8x144xbf16>, vector<144x128xbf16>, vector<8x128xf32> -> vector<8x128xf32>
    %45 = arith.addf %39, %44 : vector<8x128xf32>
    %c0_44 = arith.constant 0 : index
    %c7 = arith.constant 7 : index
    %c0_45 = arith.constant 0 : index
    %46 = vector.load %arg2[%c0_44, %c7, %c0_45] : memref<8x8x144xbf16, #tpu.memory_space<vmem>>, vector<8x1x144xbf16>
    %47 = vector.shape_cast %46 : vector<8x1x144xbf16> to vector<8x144xbf16>
    %c7_46 = arith.constant 7 : index
    %c0_47 = arith.constant 0 : index
    %c0_48 = arith.constant 0 : index
    %48 = vector.load %arg3[%c7_46, %c0_47, %c0_48] : memref<8x144x128xbf16, #tpu.memory_space<vmem>>, vector<1x144x128xbf16>
    %49 = vector.shape_cast %48 : vector<1x144x128xbf16> to vector<144x128xbf16>
    %cst_49 = arith.constant dense<0.000000e+00> : vector<8x128xf32>
    %50 = tpu.matmul %47, %49, %cst_49 {dimension_numbers = #tpu.dot_dimension_numbers<[1], [0], [0], [1], [0, 0, 1, 1], [], []>} : vector<8x144xbf16>, vector<144x128xbf16>, vector<8x128xf32> -> vector<8x128xf32>
    %51 = arith.addf %45, %50 : vector<8x128xf32>
    %c0_50 = arith.constant 0 : index
    %c0_51 = arith.constant 0 : index
    %52 = vector.load %arg8[%c0_50, %c0_51] : memref<8x128xf32, #tpu.memory_space<vmem>>, vector<8x128xf32>
    tpu.vector_store %arg8[%c0_50, %c0_51], %51 {strides = array<i32>} : memref<8x128xf32, #tpu.memory_space<vmem>>, vector<8x128xf32>,
    %c7_i32 = arith.constant 7 : i32
    %53 = arith.cmpi eq, %arg1, %c7_i32 : i32
    %54 = arith.extui %53 : i1 to i32
    %c0_i32_52 = arith.constant 0 : i32
    %55 = arith.cmpi ne, %54, %c0_i32_52 : i32
    scf.if %55 {
      %c0_53 = arith.constant 0 : index
      %c0_54 = arith.constant 0 : index
      %56 = vector.load %arg8[%c0_53, %c0_54] : memref<8x128xf32, #tpu.memory_space<vmem>>, vector<8x128xf32>
      %c0_55 = arith.constant 0 : index
      %c0_56 = arith.constant 0 : index
      %57 = vector.load %arg4[%c0_55, %c0_56] : memref<1x128xf32, #tpu.memory_space<vmem>>, vector<1x128xf32>
      %58 = vector.broadcast %57 : vector<1x128xf32> to vector<8x128xf32>
      %59 = arith.addf %56, %58 : vector<8x128xf32>
      %cst_57 = arith.constant 0.000000e+00 : f32
      %60 = vector.broadcast %cst_57 : f32 to vector<8x128xf32>
      %61 = arith.maximumf %59, %60 : vector<8x128xf32>
      %62 = arith.truncf %61 : vector<8x128xf32> to vector<8x128xbf16>
      %c0_58 = arith.constant 0 : index
      %c0_59 = arith.constant 0 : index
      %63 = vector.load %arg5[%c0_58, %c0_59] : memref<128x10xbf16, #tpu.memory_space<vmem>>, vector<128x10xbf16>
      %cst_60 = arith.constant dense<0.000000e+00> : vector<8x10xf32>
      %64 = tpu.matmul %62, %63, %cst_60 {dimension_numbers = #tpu.dot_dimension_numbers<[1], [0], [0], [1], [0, 0, 1, 1], [], []>} : vector<8x128xbf16>, vector<128x10xbf16>, vector<8x10xf32> -> vector<8x10xf32>
      %c0_61 = arith.constant 0 : index
      %c0_62 = arith.constant 0 : index
      %65 = vector.load %arg6[%c0_61, %c0_62] : memref<1x10xf32, #tpu.memory_space<vmem>>, vector<1x10xf32>
      %66 = vector.broadcast %65 : vector<1x10xf32> to vector<8x10xf32>
      %67 = arith.addf %64, %66 : vector<8x10xf32>
      %cst_63 = arith.constant dense<0xFF800000> : vector<8xf32>
      %68 = vector.multi_reduction <maximumf>, %67, %cst_63 [1] : vector<8x10xf32> to vector<8xf32>
      %69 = vector.shape_cast %68 : vector<8xf32> to vector<8x1xf32>
      %70 = vector.broadcast %69 : vector<8x1xf32> to vector<8x10xf32>
      %71 = arith.subf %67, %70 : vector<8x10xf32>
      %72 = math.exp %71 : vector<8x10xf32>
      %cst_64 = arith.constant dense<0.000000e+00> : vector<8xf32>
      %73 = vector.multi_reduction <add>, %72, %cst_64 [1] : vector<8x10xf32> to vector<8xf32>
      %74 = vector.shape_cast %73 : vector<8xf32> to vector<8x1xf32>
      %75 = math.log %74 : vector<8x1xf32>
      %76 = arith.addf %69, %75 : vector<8x1xf32>
      %77 = vector.broadcast %76 : vector<8x1xf32> to vector<8x10xf32>
      %78 = arith.subf %67, %77 : vector<8x10xf32>
      %c0_65 = arith.constant 0 : index
      %c0_66 = arith.constant 0 : index
      %79 = vector.load %arg7[%c0_65, %c0_66] : memref<8x10xf32, #tpu.memory_space<vmem>>, vector<8x10xf32>
      tpu.vector_store %arg7[%c0_65, %c0_66], %78 {strides = array<i32>} : memref<8x10xf32, #tpu.memory_space<vmem>>, vector<8x10xf32>,
    } else {
    }
    return
  }
  func.func @transform_0(%arg0: i32, %arg1: i32) -> (i32, i32, i32) {
    %c0_i32 = arith.constant 0 : i32
    %c0_i32_0 = arith.constant 0 : i32
    return %arg0, %arg1, %c0_i32 : i32, i32, i32
  }
  func.func @transform_1(%arg0: i32, %arg1: i32) -> (i32, i32, i32) {
    %c0_i32 = arith.constant 0 : i32
    %c0_i32_0 = arith.constant 0 : i32
    %c0_i32_1 = arith.constant 0 : i32
    return %arg1, %c0_i32, %c0_i32_0 : i32, i32, i32
  }
  func.func @transform_2(%arg0: i32, %arg1: i32) -> (i32, i32) {
    %c0_i32 = arith.constant 0 : i32
    %c0_i32_0 = arith.constant 0 : i32
    %c0_i32_1 = arith.constant 0 : i32
    return %c0_i32, %c0_i32_0 : i32, i32
  }
  func.func @transform_3(%arg0: i32, %arg1: i32) -> (i32, i32) {
    %c0_i32 = arith.constant 0 : i32
    %c0_i32_0 = arith.constant 0 : i32
    %c0_i32_1 = arith.constant 0 : i32
    return %c0_i32, %c0_i32_0 : i32, i32
  }
  func.func @transform_4(%arg0: i32, %arg1: i32) -> (i32, i32) {
    %c0_i32 = arith.constant 0 : i32
    %c0_i32_0 = arith.constant 0 : i32
    %c0_i32_1 = arith.constant 0 : i32
    return %c0_i32, %c0_i32_0 : i32, i32
  }
  func.func @transform_5(%arg0: i32, %arg1: i32) -> (i32, i32) {
    %c0_i32 = arith.constant 0 : i32
    %c0_i32_0 = arith.constant 0 : i32
    return %arg0, %c0_i32 : i32, i32
  }
}

</mosaic_0001>

<llo_original>
// kernel: net_forward.3
$region0: #{net_forward.3}
  #allocation0 [shape = 'u32[]', space=smem, size = 0x4, offset = 0x4, fixed_abs, tag = 'smem constant byte address 0x4 - core index']
  #allocation1 [shape = 'u32[72,128]{1,0:T(1,128)}', space=vmem, size = 0x9000, scoped, tag = 'internal scratch']
  #allocation2 [shape = 'f32[8,128]{1,0:T(8,128)}', space=vmem, size = 0x1000, scoped, tag = 'scratch operand']
  %s0 = inlined_call_operand.vmem [shape: bf16[8,64,144], index: 0, kind: input, shape index: {}]
  %s1 = inlined_call_operand.hbm [shape: bf16[64,144,128], index: 1, kind: input, shape index: {}]
  %s2 = inlined_call_operand.hbm [shape: f32[1,128], index: 2, kind: input, shape index: {}]
  %s3 = inlined_call_operand.vmem [shape: bf16[128,10], index: 3, kind: input, shape index: {}]
  %s4 = inlined_call_operand.hbm [shape: f32[1,10], index: 4, kind: input, shape index: {}]
  %s5 = inlined_call_operand.vmem [shape: f32[8,10], index: 5, kind: output, shape index: {}]
  %s6 = sld [smem:[#allocation0]]
  $region111: #{net_forward.3} parent=0
    _
  %s8 = ssub.s32 1, %s6
  %s9 = scalar_select 0, %s8, %s6
  $region1: #{net_forward.3} parent=0
    #allocation3 [shape = 'u8[65536]{0}', space=vmem, size = 0x10000, scoped, tag = 'input window, operand 0']
    #allocation4 [shape = 'u8[589824]{0}', space=vmem, size = 0x90000, scoped, tag = 'input window, operand 1']
    #allocation5 [shape = 's32[2]{0}', space=sflag, size = 0x8, scoped, tag = 'scoped memory for net_forward.3']
    #allocation6 [shape = 'u8[512]{0}', space=vmem, size = 0x400, scoped, tag = 'input window, operand 2, single buffered']
    #allocation7 [shape = 's32[1]{0}', space=sflag, size = 0x4, scoped, tag = 'scoped memory for net_forward.3']
    #allocation8 [shape = 'u8[512]{0}', space=vmem, size = 0x400, scoped, tag = 'input window, operand 4, single buffered']
    %10 = vsyncpa [#allocation5], 0
    %s11 = scalar_lea.sflag [#allocation5], 1
    %12 = vsyncpa %s11, 0
    %13 = vsyncpa [#allocation7], 0
    loop: start=0, step=1, limit=10
    $region2: #{net_forward.3} parent=1 // loop_pre_header
      _
    $region3: #{net_forward.3} parent=1 // loop_header
      %s15 = sphi 0, %s19
      %p16 = scmp.ge.s32.totalorder %s15, 10
      %s22 = sphi 0, %s34
      %s23 = sphi 0, %s30
      %s24 = sphi 0, %s22
      %s25 = sphi 0, %s23
      %s26 = sphi 0, %s24
      %s27 = sphi 0, %s25
      %s39 = sphi 0, %s41
      %s42 = sphi 0, %s39
      %s43 = sphi 0, %s42
      %s59 = sphi 0, %s43
      %s65 = sphi 0, %s67
      %s68 = sphi 0, %s65
      %s69 = sphi 0, %s68
      %s85 = sphi 0, %s69
      %s89 = sphi 0, %s89
      %s91 = sphi 0, %s89
      %s92 = sphi 0, %s91
      %s106 = sphi 0, %s92
      %s110 = sphi 0, %s110
      %s112 = sphi 0, %s110
      %s113 = sphi 0, %s112
      %s127 = sphi 0, %s113
      %s131 = sphi 0, %s131
      %s133 = sphi 0, %s131
      %s134 = sphi 0, %s133
      %s148 = sphi 0, %s134
      %s154 = sphi 0, %s156
      %s157 = sphi 0, %s154
      %s158 = sphi 0, %s157
      %s174 = sphi 0, %s158
    $region4: #{net_forward.3} parent=1 // loop_header_branch
      %18 = sbr.rel (%p16) target = $region8
    $region5: #{net_forward.3} parent=1 // loop_body
      %s20 = ssub.s32 %s15, 1
      %s21 = ssub.s32 %s15, 2
      %s28 = sadd.s32 1, %s23
      %p29 = scmp.ge.s32.totalorder %s28, 8
      %s30 = scalar_select %p29, 0, %s28
      %s31 = sadd.s32 1, %s22
      %s32 = scalar_select %p29, %s31, %s22
      %p33 = scmp.ge.s32.totalorder %s32, 1
      %s34 = scalar_select %p33, 0, %s32
      %s35 = ssub.s32 %s22, %s34
      %s36 = ssub.s32 %s23, %s30
      %s37 = sor.u32 %s35, %s36
      %p38 = scmp.eq.s32.totalorder %s37, 0
      %s40 = sadd.s32 %s39, 1
      %s41 = scalar_select %p38, %s39, %s40
      %p44 = pneg %p38
      %p45 = scmp.eq.s32.totalorder %s15, 7
      %p46 = por %p44, %p45
      %p47 = scmp.ne.s32.totalorder %s39, %s42
      %p48 = scmp.eq.s32.totalorder %s15, 0
      %p49 = por %p47, %p48
      %p50 = scmp.ne.s32.totalorder %s39, %s42
      %p51 = scmp.eq.s32.totalorder %s20, 7
      %p52 = por %p50, %p51
      %p53 = scmp.ne.s32.totalorder %s42, %s43
      %p54 = scmp.eq.s32.totalorder %s20, 0
      %p55 = por %p53, %p54
      %p56 = scmp.ne.s32.totalorder %s42, %s43
      %p57 = scmp.eq.s32.totalorder %s21, 7
      %p58 = por %p56, %p57
      %p60 = scmp.ne.s32.totalorder %s43, %s59
      %p61 = scmp.eq.s32.totalorder %s21, 0
      %p62 = por %p60, %p61
      %s63 = ssub.s32 %s23, %s30
      %p64 = scmp.eq.s32.totalorder %s63, 0
      %s66 = sadd.s32 %s65, 1
      %s67 = scalar_select %p64, %s65, %s66
      %p70 = pneg %p64
      %p71 = scmp.eq.s32.totalorder %s15, 7
      %p72 = por %p70, %p71
      %p73 = scmp.ne.s32.totalorder %s65, %s68
      %p74 = scmp.eq.s32.totalorder %s15, 0
      %p75 = por %p73, %p74
      %p76 = scmp.ne.s32.totalorder %s65, %s68
      %p77 = scmp.eq.s32.totalorder %s20, 7
      %p78 = por %p76, %p77
      %p79 = scmp.ne.s32.totalorder %s68, %s69
      %p80 = scmp.eq.s32.totalorder %s20, 0
      %p81 = por %p79, %p80
      %p82 = scmp.ne.s32.totalorder %s68, %s69
      %p83 = scmp.eq.s32.totalorder %s21, 7
      %p84 = por %p82, %p83
      %p86 = scmp.ne.s32.totalorder %s69, %s85
      %p87 = scmp.eq.s32.totalorder %s21, 0
      %p88 = por %p86, %p87
      %s90 = sadd.s32 %s89, 1
      %p93 = scmp.eq.s32.totalorder %s15, 7
      %p94 = scmp.ne.s32.totalorder %s89, %s91
      %p95 = scmp.eq.s32.totalorder %s15, 0
      %p96 = por %p94, %p95
      %p97 = scmp.ne.s32.totalorder %s89, %s91
      %p98 = scmp.eq.s32.totalorder %s20, 7
      %p99 = por %p97, %p98
      %p100 = scmp.ne.s32.totalorder %s91, %s92
      %p101 = scmp.eq.s32.totalorder %s20, 0
      %p102 = por %p100, %p101
      %p103 = scmp.ne.s32.totalorder %s91, %s92
      %p104 = scmp.eq.s32.totalorder %s21, 7
      %p105 = por %p103, %p104
      %p107 = scmp.ne.s32.totalorder %s92, %s106
      %p108 = scmp.eq.s32.totalorder %s21, 0
      %p109 = por %p107, %p108
      %s111 = sadd.s32 %s110, 1
      %p114 = scmp.eq.s32.totalorder %s15, 7
      %p115 = scmp.ne.s32.totalorder %s110, %s112
      %p116 = scmp.eq.s32.totalorder %s15, 0
      %p117 = por %p115, %p116
      %p118 = scmp.ne.s32.totalorder %s110, %s112
      %p119 = scmp.eq.s32.totalorder %s20, 7
      %p120 = por %p118, %p119
      %p121 = scmp.ne.s32.totalorder %s112, %s113
      %p122 = scmp.eq.s32.totalorder %s20, 0
      %p123 = por %p121, %p122
      %p124 = scmp.ne.s32.totalorder %s112, %s113
      %p125 = scmp.eq.s32.totalorder %s21, 7
      %p126 = por %p124, %p125
      %p128 = scmp.ne.s32.totalorder %s113, %s127
      %p129 = scmp.eq.s32.totalorder %s21, 0
      %p130 = por %p128, %p129
      %s132 = sadd.s32 %s131, 1
      %p135 = scmp.eq.s32.totalorder %s15, 7
      %p136 = scmp.ne.s32.totalorder %s131, %s133
      %p137 = scmp.eq.s32.totalorder %s15, 0
      %p138 = por %p136, %p137
      %p139 = scmp.ne.s32.totalorder %s131, %s133
      %p140 = scmp.eq.s32.totalorder %s20, 7
      %p141 = por %p139, %p140
      %p142 = scmp.ne.s32.totalorder %s133, %s134
      %p143 = scmp.eq.s32.totalorder %s20, 0
      %p144 = por %p142, %p143
      %p145 = scmp.ne.s32.totalorder %s133, %s134
      %p146 = scmp.eq.s32.totalorder %s21, 7
      %p147 = por %p145, %p146
      %p149 = scmp.ne.s32.totalorder %s134, %s148
      %p150 = scmp.eq.s32.totalorder %s21, 0
      %p151 = por %p149, %p150
      %s152 = ssub.s32 %s22, %s34
      %p153 = scmp.eq.s32.totalorder %s152, 0
      %s155 = sadd.s32 %s154, 1
      %s156 = scalar_select %p153, %s154, %s155
      %p159 = pneg %p153
      %p160 = scmp.eq.s32.totalorder %s15, 7
      %p161 = por %p159, %p160
      %p162 = scmp.ne.s32.totalorder %s154, %s157
      %p163 = scmp.eq.s32.totalorder %s15, 0
      %p164 = por %p162, %p163
      %p165 = scmp.ne.s32.totalorder %s154, %s157
      %p166 = scmp.eq.s32.totalorder %s20, 7
      %p167 = por %p165, %p166
      %p168 = scmp.ne.s32.totalorder %s157, %s158
      %p169 = scmp.eq.s32.totalorder %s20, 0
      %p170 = por %p168, %p169
      %p171 = scmp.ne.s32.totalorder %s157, %s158
      %p172 = scmp.eq.s32.totalorder %s21, 7
      %p173 = por %p171, %p172
      %p175 = scmp.ne.s32.totalorder %s158, %s174
      %p176 = scmp.eq.s32.totalorder %s21, 0
      %p177 = por %p175, %p176
      %p178 = scmp.le.s32.totalorder 1, %s15
      %p179 = scmp.lt.s32.totalorder %s15, 9
      %p180 = pnand %p178, %p179
      %p181 = pneg %p180
      // Predicated region
      $region9: #{net_forward.3} parent=5 // pred_check
        _
      $region10: #{net_forward.3} parent=5 // pred_check_branch
        %183 = sbr.rel (%p180) target = $region12
      $region11: #{net_forward.3} parent=5 // pred_region
        %s184 = ssub.s32 %s15, 1
        // Predicated region
        $region13: #{net_forward.3} parent=11 // pred_check
          %p185 = pneg %p102
        $region14: #{net_forward.3} parent=11 // pred_check_branch
          %187 = sbr.rel (%p185) target = $region16
        $region15: #{net_forward.3} parent=11 // pred_region
          %189 = vsyncadd [#allocation7], 0
          %s191 = sshll.u32 %s2, 4
          %s192 = int_to_ptr.hbm [resolvable:$true] %s191
          %s193 = sshll.u32 [#allocation6], 4
          %s194 = int_to_ptr.vmem [resolvable:$true] %s193
          %196 = dma.hbm_to_vmem [thread:$0]  %s192, 16, %s194, [#allocation7]
        $region16: #{net_forward.3} parent=11 // pred_fallthru
          _
        // Predicated region
        $region17: #{net_forward.3} parent=11 // pred_check
          %p197 = pneg %p123
        $region18: #{net_forward.3} parent=11 // pred_check_branch
          %199 = sbr.rel (%p197) target = $region20
        $region19: #{net_forward.3} parent=11 // pred_region
          _
        $region20: #{net_forward.3} parent=11 // pred_fallthru
          _
        // Predicated region
        $region21: #{net_forward.3} parent=11 // pred_check
          %p200 = pneg %p144
        $region22: #{net_forward.3} parent=11 // pred_check_branch
          %202 = sbr.rel (%p200) target = $region24
        $region23: #{net_forward.3} parent=11 // pred_region
          %204 = vsyncadd [#allocation7], 0
          %s206 = sshll.u32 %s4, 4
          %s207 = int_to_ptr.hbm [resolvable:$true] %s206
          %s208 = sshll.u32 [#allocation8], 4
          %s209 = int_to_ptr.vmem [resolvable:$true] %s208
          %211 = dma.hbm_to_vmem [thread:$0]  %s207, 16, %s209, [#allocation7]
        $region24: #{net_forward.3} parent=11 // pred_fallthru
          _
      $region12: #{net_forward.3} parent=5 // pred_fallthru
        _
      %p212 = scmp.lt.s32.totalorder %s15, 8
      // Predicated region
      $region25: #{net_forward.3} parent=5 // pred_check
        %p213 = pneg %p212
      $region26: #{net_forward.3} parent=5 // pred_check_branch
        %215 = sbr.rel (%p213) target = $region28
      $region27: #{net_forward.3} parent=5 // pred_region
        // Predicated region
        $region29: #{net_forward.3} parent=27 // pred_check
          %p216 = pneg %p49
        $region30: #{net_forward.3} parent=27 // pred_check_branch
          %218 = sbr.rel (%p216) target = $region32
        $region31: #{net_forward.3} parent=27 // pred_region
          %s219 = sand.u32 %s39, 1
          %s220 = sand.u32 %s39, 1
          %s221 = smul.addr %s220, 64
          %s222 = scalar_lea.vmem [#allocation3], %s221
          %s223 = smul.u32 8, %s22
          %s224 = smul.addr %s23, 2
          %s225 = smul.addr %s223, 16
          %s226 = sadd.s32 %s224, %s225
          %s227 = smul.addr %s226, 4
          %s228 = scalar_lea.vmem %s0, %s227
          // Predicated region
          $region33: #{net_forward.3} parent=31 // pred_check
            _
          $region34: #{net_forward.3} parent=31 // pred_check_branch
            %230 = sbr.rel (0) target = $region36
          $region35: #{net_forward.3} parent=31 // pred_region
            // Predicated region
            $region37: #{net_forward.3} parent=35 // pred_check
              _
            $region38: #{net_forward.3} parent=35 // pred_check_branch
              %232 = sbr.rel (0) target = $region40
            $region39: #{net_forward.3} parent=35 // pred_region
              // Predicated region
              $region52: #{net_forward.3} parent=39 // pred_check
                _
              $region53: #{net_forward.3} parent=39 // pred_check_branch
                %262 = sbr.rel (0) target = $region55
              $region54: #{net_forward.3} parent=39 // pred_region
                loop: start=0, step=1, limit=1
                $region56: #{net_forward.3} parent=54 // loop_pre_header
                  _
                $region57: #{net_forward.3} parent=54 // loop_header
                  %s264 = sphi 0, %s268
                  %p265 = scmp.ge.s32.totalorder %s264, 1
                  %s269 = sphi %s228, %s228
                  %s270 = sphi %s222, %s222
                $region58: #{net_forward.3} parent=54 // loop_header_branch
                  %267 = sbr.rel (%p265) target = $region62
                $region59: #{net_forward.3} parent=54 // loop_body
                  %v271 = vld [vmem:[%s269] sm:$0xff]
                  %272 = vst [vmem:[%s270] sm:$0xff] %v271
                  %v273 = vld [vmem:[%s269 + $0x40] sm:$0xff]
                  %274 = vst [vmem:[%s270 + $0x8] sm:$0xff] %v273
                  %v275 = vld [vmem:[%s269 + $0x80] sm:$0xff]
                  %276 = vst [vmem:[%s270 + $0x10] sm:$0xff] %v275
                  %v277 = vld [vmem:[%s269 + $0xc0] sm:$0xff]
                  %278 = vst [vmem:[%s270 + $0x18] sm:$0xff] %v277
                  %v279 = vld [vmem:[%s269 + $0x100] sm:$0xff]
                  %280 = vst [vmem:[%s270 + $0x20] sm:$0xff] %v279
                  %v281 = vld [vmem:[%s269 + $0x140] sm:$0xff]
                  %282 = vst [vmem:[%s270 + $0x28] sm:$0xff] %v281
                  %v283 = vld [vmem:[%s269 + $0x180] sm:$0xff]
                  %284 = vst [vmem:[%s270 + $0x30] sm:$0xff] %v283
                  %v285 = vld [vmem:[%s269 + $0x1c0] sm:$0xff]
                  %286 = vst [vmem:[%s270 + $0x38] sm:$0xff] %v285
                $region60: #{net_forward.3} parent=54 // loop_footer
                  %s268 = sadd.s32 1, %s264
                $region61: #{net_forward.3} parent=54 // loop_footer_branch
                  %263 = sbr.rel target = $region57
                $region62: #{net_forward.3} parent=54 // loop_exit
                  _
              $region55: #{net_forward.3} parent=39 // pred_fallthru
                _
              // Predicated region
              $region63: #{net_forward.3} parent=39 // pred_check
                _
              $region64: #{net_forward.3} parent=39 // pred_check_branch
                %288 = sbr.rel target = $region66
              $region65: #{net_forward.3} parent=39 // pred_region
                _
              $region66: #{net_forward.3} parent=39 // pred_fallthru
                _
            $region40: #{net_forward.3} parent=35 // pred_fallthru
              _
            // Predicated region
            $region41: #{net_forward.3} parent=35 // pred_check
              _
            $region42: #{net_forward.3} parent=35 // pred_check_branch
              %234 = sbr.rel target = $region44
            $region43: #{net_forward.3} parent=35 // pred_region
              %s236 = ssub.s32 256, 1
              loop: start=0, step=1, limit=1
              $region45: #{net_forward.3} parent=43 // loop_pre_header
                _
              $region46: #{net_forward.3} parent=43 // loop_header
                %s238 = sphi 0, %s242
                %p239 = scmp.ge.s32.totalorder %s238, 1
                %s243 = sphi %s228, %s228
                %s244 = sphi %s222, %s222
              $region47: #{net_forward.3} parent=43 // loop_header_branch
                %241 = sbr.rel (%p239) target = $region51
              $region48: #{net_forward.3} parent=43 // loop_body
                %v245 = vld [vmem:[%s243] sm:%s236]
                %246 = vst [vmem:[%s244] sm:%s236] %v245
                %v247 = vld [vmem:[%s243 + $0x40] sm:%s236]
                %248 = vst [vmem:[%s244 + $0x8] sm:%s236] %v247
                %v249 = vld [vmem:[%s243 + $0x80] sm:%s236]
                %250 = vst [vmem:[%s244 + $0x10] sm:%s236] %v249
                %v251 = vld [vmem:[%s243 + $0xc0] sm:%s236]
                %252 = vst [vmem:[%s244 + $0x18] sm:%s236] %v251
                %v253 = vld [vmem:[%s243 + $0x100] sm:%s236]
                %254 = vst [vmem:[%s244 + $0x20] sm:%s236] %v253
                %v255 = vld [vmem:[%s243 + $0x140] sm:%s236]
                %256 = vst [vmem:[%s244 + $0x28] sm:%s236] %v255
                %v257 = vld [vmem:[%s243 + $0x180] sm:%s236]
                %258 = vst [vmem:[%s244 + $0x30] sm:%s236] %v257
                %v259 = vld [vmem:[%s243 + $0x1c0] sm:%s236]
                %260 = vst [vmem:[%s244 + $0x38] sm:%s236] %v259
              $region49: #{net_forward.3} parent=43 // loop_footer
                %s242 = sadd.s32 1, %s238
              $region50: #{net_forward.3} parent=43 // loop_footer_branch
                %237 = sbr.rel target = $region46
              $region51: #{net_forward.3} parent=43 // loop_exit
                _
            $region44: #{net_forward.3} parent=35 // pred_fallthru
              _
          $region36: #{net_forward.3} parent=31 // pred_fallthru
            _
          %289 = vnop
        $region32: #{net_forward.3} parent=27 // pred_fallthru
          _
        // Predicated region
        $region67: #{net_forward.3} parent=27 // pred_check
          %p290 = pneg %p75
        $region68: #{net_forward.3} parent=27 // pred_check_branch
          %292 = sbr.rel (%p290) target = $region70
        $region69: #{net_forward.3} parent=27 // pred_region
          %s293 = sand.u32 %s65, 1
          %s294 = scalar_lea.sflag [#allocation5], %s293
          %s295 = sand.u32 %s65, 1
          %s296 = smul.addr %s295, 576
          %s297 = scalar_lea.vmem [#allocation4], %s296
          %s298 = smul.u32 8, %s23
          %300 = vsyncadd %s294, 0
          %s301 = smul.addr %s298, 18
          %s302 = smul.addr %s301, 4
          %s303 = scalar_lea.hbm %s1, %s302
          %s304 = sshll.u32 %s303, 4
          %s305 = int_to_ptr.hbm [resolvable:$true] %s304
          %s306 = sshll.u32 %s297, 4
          %s307 = int_to_ptr.vmem [resolvable:$true] %s306
          %312 = dma.hbm_to_vmem [thread:$0]  %s305, 9216, %s307, %s294, 64, 64, 4
        $region70: #{net_forward.3} parent=27 // pred_fallthru
          _
      $region28: #{net_forward.3} parent=5 // pred_fallthru
        _
      %p313 = scmp.le.s32.totalorder 1, %s15
      %p314 = scmp.lt.s32.totalorder %s15, 9
      %p315 = pnand %p313, %p314
      %p316 = pneg %p315
      // Predicated region
      $region71: #{net_forward.3} parent=5 // pred_check
        _
      $region72: #{net_forward.3} parent=5 // pred_check_branch
        %318 = sbr.rel (%p315) target = $region74
      $region73: #{net_forward.3} parent=5 // pred_region
        %s319 = ssub.s32 %s15, 1
        %s320 = sand.u32 %s42, 1
        %s321 = sand.u32 %s42, 1
        %s322 = smul.addr %s321, 64
        %s323 = scalar_lea.vmem [#allocation3], %s322
        // Predicated region
        $region75: #{net_forward.3} parent=73 // pred_check
          %p324 = pneg %p55
        $region76: #{net_forward.3} parent=73 // pred_check_branch
          %326 = sbr.rel (%p324) target = $region78
        $region77: #{net_forward.3} parent=73 // pred_region
          _
        $region78: #{net_forward.3} parent=73 // pred_fallthru
          _
        %s327 = sand.u32 %s68, 1
        %s328 = scalar_lea.sflag [#allocation5], %s327
        %s329 = sand.u32 %s68, 1
        %s330 = smul.addr %s329, 576
        %s331 = scalar_lea.vmem [#allocation4], %s330
        // Predicated region
        $region79: #{net_forward.3} parent=73 // pred_check
          %p332 = pneg %p81
        $region80: #{net_forward.3} parent=73 // pred_check_branch
          %334 = sbr.rel (%p332) target = $region82
        $region81: #{net_forward.3} parent=73 // pred_region
          %336 = dma.done %s328, 9216
        $region82: #{net_forward.3} parent=73 // pred_fallthru
          _
        // Predicated region
        $region83: #{net_forward.3} parent=73 // pred_check
          %p337 = pneg %p102
        $region84: #{net_forward.3} parent=73 // pred_check_branch
          %339 = sbr.rel (%p337) target = $region86
        $region85: #{net_forward.3} parent=73 // pred_region
          %341 = dma.done [#allocation7], 16
        $region86: #{net_forward.3} parent=73 // pred_fallthru
          _
        // Predicated region
        $region87: #{net_forward.3} parent=73 // pred_check
          %p342 = pneg %p144
        $region88: #{net_forward.3} parent=73 // pred_check_branch
          %344 = sbr.rel (%p342) target = $region90
        $region89: #{net_forward.3} parent=73 // pred_region
          %346 = dma.done [#allocation7], 16
        $region90: #{net_forward.3} parent=73 // pred_fallthru
          _
        %s347 = sand.u32 %s42, 1
        %s348 = sand.u32 %s42, 1
        %s349 = smul.addr %s348, 64
        %s350 = scalar_lea.vmem [#allocation3], %s349
        %p351 = pneg %p55
        %p352 = pneg %p52
        %s353 = sand.u32 %s68, 1
        %s354 = scalar_lea.sflag [#allocation5], %s353
        %s355 = sand.u32 %s68, 1
        %s356 = smul.addr %s355, 576
        %s357 = scalar_lea.vmem [#allocation4], %s356
        %p358 = pneg %p81
        %p359 = pneg %p78
        %p360 = pneg %p102
        %p361 = pneg %p99
        %p362 = pneg %p123
        %p363 = pneg %p120
        %p364 = pneg %p144
        %p365 = pneg %p141
        %p366 = pneg %p170
        %p367 = pneg %p167
        %p368 = scmp.lt.s32.totalorder %s24, 0
        %s369 = scalar_select %p368, %s24, 0
        %s370 = smul.addr %s369, 8
        %s371 = scalar_lea.vmem %s5, %s370
        %s372 = smul.u32 8, %s24
        %s373 = smul.u32 8, %s25
        %p374 = scmp.lt.s32.totalorder %s24, 0
        %s375 = scalar_select %p374, %s24, 0
        %s376 = smul.addr %s375, 8
        %s377 = scalar_lea.vmem %s5, %s376
        %p379 = scmp.eq.s32.totalorder %s25, 0
        // Predicated region
        $region91: #{net_forward.3} parent=73 // pred_check
          %p380 = pneg %p379
        $region92: #{net_forward.3} parent=73 // pred_check_branch
          %382 = sbr.rel (%p380) target = $region94
        $region93: #{net_forward.3} parent=73 // pred_region
          %383 = vst [vmem:[#allocation2] sm:$0xff] 0.0
        $region94: #{net_forward.3} parent=73 // pred_fallthru
          _
        %v384 = vld [vmem:[#allocation2] sm:$0xff]
        %v385 = vld [vmem:[%s323] sm:$0x11]
        %v386 = vld [vmem:[%s323 + $0x8] sm:$0x11]
        %v387 = vld [vmem:[%s323 + $0x10] sm:$0x11]
        %v388 = vld [vmem:[%s323 + $0x18] sm:$0x11]
        %v389 = vld [vmem:[%s323 + $0x20] sm:$0x11]
        %v390 = vld [vmem:[%s323 + $0x28] sm:$0x11]
        %v391 = vld [vmem:[%s323 + $0x30] sm:$0x11]
        %v392 = vld [vmem:[%s323 + $0x38] sm:$0x11]
        %v393 = vld [vmem:[%s331] sm:$0xf]
        %v394 = vld [vmem:[%s331 + $0x4] sm:$0xf]
        %v395 = vld [vmem:[%s331 + $0x8] sm:$0xf]
        %v396 = vld [vmem:[%s331 + $0xc] sm:$0xf]
        %v397 = vld [vmem:[%s331 + $0x10] sm:$0xf]
        %v398 = vld [vmem:[%s331 + $0x14] sm:$0xf]
        %v399 = vld [vmem:[%s331 + $0x18] sm:$0xf]
        %v400 = vld [vmem:[%s331 + $0x1c] sm:$0xf]
        %v401 = vld [vmem:[%s331 + $0x20] sm:$0xf]
        %v402 = vld [vmem:[%s331 + $0x24] sm:$0xf]
        %v403 = vld [vmem:[%s331 + $0x28] sm:$0xf]
        %v404 = vld [vmem:[%s331 + $0x2c] sm:$0xf]
        %v405 = vld [vmem:[%s331 + $0x30] sm:$0xf]
        %v406 = vld [vmem:[%s331 + $0x34] sm:$0xf]
        %v407 = vld [vmem:[%s331 + $0x38] sm:$0xf]
        %v408 = vld [vmem:[%s331 + $0x3c] sm:$0xf]
        %v409 = vld [vmem:[%s331 + $0x40] sm:$0xf]
        %v410 = vld [vmem:[%s331 + $0x44] sm:$0xf]
        %v419 = vunpack.c.l.b16 %v385
        %v420 = vunpack.c.h.b16 %v385
        %v421 = vunpack.c.l.b16 %v386
        %v422 = vunpack.c.h.b16 %v386
        %v423 = vunpack.c.l.b16 %v387
        %v424 = vunpack.c.h.b16 %v387
        %v425 = vunpack.c.l.b16 %v388
        %v426 = vunpack.c.h.b16 %v388
        %v427 = vunpack.c.l.b16 %v389
        %v428 = vunpack.c.h.b16 %v389
        %v429 = vunpack.c.l.b16 %v390
        %v430 = vunpack.c.h.b16 %v390
        %v431 = vunpack.c.l.b16 %v391
        %v432 = vunpack.c.h.b16 %v391
        %v433 = vunpack.c.l.b16 %v392
        %v434 = vunpack.c.h.b16 %v392
        %v435 = vpack.c.b16 %v419, %v419
        %v436 = vpack.c.b16 %v420, %v420
        %v437 = vpack.c.b16 %v421, %v421
        %v438 = vpack.c.b16 %v422, %v422
        %v439 = vpack.c.b16 %v423, %v423
        %v440 = vpack.c.b16 %v424, %v424
        %v441 = vpack.c.b16 %v425, %v425
        %v442 = vpack.c.b16 %v426, %v426
        %v443 = vpack.c.b16 %v427, %v427
        %v444 = vpack.c.b16 %v428, %v428
        %v445 = vpack.c.b16 %v429, %v429
        %v446 = vpack.c.b16 %v430, %v430
        %v447 = vpack.c.b16 %v431, %v431
        %v448 = vpack.c.b16 %v432, %v432
        %v449 = vpack.c.b16 %v433, %v433
        %v450 = vpack.c.b16 %v434, %v434
        %v451 = vunpack.c.l.b16 %v435
        %v452 = vunpack.c.l.b16 %v436
        %v453 = vunpack.c.l.b16 %v437
        %v454 = vunpack.c.l.b16 %v438
        %v455 = vunpack.c.l.b16 %v439
        %v456 = vunpack.c.l.b16 %v440
        %v457 = vunpack.c.l.b16 %v441
        %v458 = vunpack.c.l.b16 %v442
        %v459 = vunpack.c.l.b16 %v443
        %v460 = vunpack.c.l.b16 %v444
        %v461 = vunpack.c.l.b16 %v445
        %v462 = vunpack.c.l.b16 %v446
        %v463 = vunpack.c.l.b16 %v447
        %v464 = vunpack.c.l.b16 %v448
        %v465 = vunpack.c.l.b16 %v449
        %v466 = vunpack.c.l.b16 %v450
        %v467 = vrot.slane %v453, 7
        %vm468 = vcmask 1041409
        %v469 = vsel %vm468, %v467, %v451
        %v470 = vrot.slane %v455, 6
        %vm471 = vcmask 1042434
        %v472 = vsel %vm471, %v470, %v469
        %v473 = vrot.slane %v457, 5
        %vm474 = vcmask 1043459
        %v475 = vsel %vm474, %v473, %v472
        %v476 = vrot.slane %v459, 4
        %vm477 = vcmask 1044484
        %v478 = vsel %vm477, %v476, %v475
        %v479 = vrot.slane %v461, 3
        %vm480 = vcmask 1045509
        %v481 = vsel %vm480, %v479, %v478
        %v482 = vrot.slane %v463, 2
        %vm483 = vcmask 1046534
        %v484 = vsel %vm483, %v482, %v481
        %v485 = vrot.slane %v465, 1
        %vm486 = vcmask 1047559
        %v487 = vsel %vm486, %v485, %v484
        %v488 = vrot.slane %v454, 7
        %v489 = vsel %vm468, %v488, %v452
        %v490 = vrot.slane %v456, 6
        %v491 = vsel %vm471, %v490, %v489
        %v492 = vrot.slane %v458, 5
        %v493 = vsel %vm474, %v492, %v491
        %v494 = vrot.slane %v460, 4
        %v495 = vsel %vm477, %v494, %v493
        %v496 = vrot.slane %v462, 3
        %v497 = vsel %vm480, %v496, %v495
        %v498 = vrot.slane %v464, 2
        %v499 = vsel %vm483, %v498, %v497
        %v500 = vrot.slane %v466, 1
        %v501 = vsel %vm486, %v500, %v499
        %v502 = vpack.c.b16 %v487, %v487
        %v503 = vpack.c.b16 %v501, %v501
        %v523 = vunpack.c.l.b16 %v393
        %v524 = vunpack.c.l.b16 %v394
        %v525 = vunpack.c.l.b16 %v395
        %v526 = vunpack.c.l.b16 %v396
        %v527 = vunpack.c.l.b16 %v397
        %v528 = vunpack.c.l.b16 %v398
        %v529 = vunpack.c.l.b16 %v399
        %v530 = vunpack.c.l.b16 %v400
        %v531 = vunpack.c.l.b16 %v401
        %v532 = vunpack.c.l.b16 %v402
        %v533 = vunpack.c.l.b16 %v403
        %v534 = vunpack.c.l.b16 %v404
        %v535 = vunpack.c.l.b16 %v405
        %v536 = vunpack.c.l.b16 %v406
        %v537 = vunpack.c.l.b16 %v407
        %v538 = vunpack.c.l.b16 %v408
        %v539 = vunpack.c.l.b16 %v409
        %v540 = vunpack.c.l.b16 %v410
        %v541 = vpack.c.b16 %v524, %v523
        %v542 = vpack.c.b16 %v526, %v525
        %v543 = vpack.c.b16 %v528, %v527
        %v544 = vpack.c.b16 %v530, %v529
        %v545 = vpack.c.b16 %v532, %v531
        %v546 = vpack.c.b16 %v534, %v533
        %v547 = vpack.c.b16 %v536, %v535
        %v548 = vpack.c.b16 %v538, %v537
        %v549 = vpack.c.b16 %v540, %v539
        %vm559 = vcmask 130048
        %v561 = vsel %vm559, %v503, 0
        %563 = vmatpush.bf16.msra.mxu0 %v548
        %564 = vmatpush.bf16.msra.mxu0 %v547
        %565 = vmatpush.bf16.msra.mxu0 %v546
        %566 = vmatpush.bf16.msra.mxu0 %v545
        %567 = vmatpush.bf16.msra.mxu0 %v544
        %568 = vmatpush.bf16.msra.mxu0 %v543
        %569 = vmatpush.bf16.msra.mxu0 %v542
        %570 = vmatpush.bf16.msra.mxu0 %v541
        %571 = vmatmul.bf16.gmra.mxu0 %v502
        %v572 = vpop.f32.mrf.mxu0
        %v573 = vadd.f32 0.0, %v572
        %v574 = vpop.f32.mrf.mxu0
        %575 = vdwg.mxu0
        %576 = vmatpush.bf16.msra.mxu0 0
        %577 = vmatpush.bf16.msra.mxu0 0
        %578 = vmatpush.bf16.msra.mxu0 0
        %579 = vmatpush.bf16.msra.mxu0 0
        %580 = vmatpush.bf16.msra.mxu0 0
        %581 = vmatpush.bf16.msra.mxu0 0
        %582 = vmatpush.bf16.msra.mxu0 0
        %583 = vmatpush.bf16.msra.mxu0 %v549
        %584 = vmatmul.bf16.gmra.mxu0 %v561
        %v585 = vpop.f32.mrf.mxu0
        %v586 = vadd.f32 %v573, %v585
        %v587 = vpop.f32.mrf.mxu0
        %588 = vdwg.mxu0
        %v589 = vadd.f32 %v384, %v586
        %s590 = scalar_lea.vmem %s331, 72 [#allocation4]
        %v591 = vld [vmem:[%s590] sm:$0xf]
        %v592 = vld [vmem:[%s590 + $0x4] sm:$0xf]
        %v593 = vld [vmem:[%s590 + $0x8] sm:$0xf]
        %v594 = vld [vmem:[%s590 + $0xc] sm:$0xf]
        %v595 = vld [vmem:[%s590 + $0x10] sm:$0xf]
        %v596 = vld [vmem:[%s590 + $0x14] sm:$0xf]
        %v597 = vld [vmem:[%s590 + $0x18] sm:$0xf]
        %v598 = vld [vmem:[%s590 + $0x1c] sm:$0xf]
        %v599 = vld [vmem:[%s590 + $0x20] sm:$0xf]
        %v600 = vld [vmem:[%s590 + $0x24] sm:$0xf]
        %v601 = vld [vmem:[%s590 + $0x28] sm:$0xf]
        %v602 = vld [vmem:[%s590 + $0x2c] sm:$0xf]
        %v603 = vld [vmem:[%s590 + $0x30] sm:$0xf]
        %v604 = vld [vmem:[%s590 + $0x34] sm:$0xf]
        %v605 = vld [vmem:[%s590 + $0x38] sm:$0xf]
        %v606 = vld [vmem:[%s590 + $0x3c] sm:$0xf]
        %v607 = vld [vmem:[%s590 + $0x40] sm:$0xf]
        %v608 = vld [vmem:[%s590 + $0x44] sm:$0xf]
        %v609 = vrot.slane %v451, 1
        %v610 = vsel %vm468, %v453, %v609
        %v611 = vrot.slane %v455, 7
        %v612 = vsel %vm471, %v611, %v610
        %v613 = vrot.slane %v457, 6
        %v614 = vsel %vm474, %v613, %v612
        %v615 = vrot.slane %v459, 5
        %v616 = vsel %vm477, %v615, %v614
        %v617 = vrot.slane %v461, 4
        %v618 = vsel %vm480, %v617, %v616
        %v619 = vrot.slane %v463, 3
        %v620 = vsel %vm483, %v619, %v618
        %v621 = vrot.slane %v465, 2
        %v622 = vsel %vm486, %v621, %v620
        %v623 = vrot.slane %v452, 1
        %v624 = vsel %vm468, %v454, %v623
        %v625 = vrot.slane %v456, 7
        %v626 = vsel %vm471, %v625, %v624
        %v627 = vrot.slane %v458, 6
        %v628 = vsel %vm474, %v627, %v626
        %v629 = vrot.slane %v460, 5
        %v630 = vsel %vm477, %v629, %v628
        %v631 = vrot.slane %v462, 4
        %v632 = vsel %vm480, %v631, %v630
        %v633 = vrot.slane %v464, 3
        %v634 = vsel %vm483, %v633, %v632
        %v635 = vrot.slane %v466, 2
        %v636 = vsel %vm486, %v635, %v634
        %v637 = vpack.c.b16 %v622, %v622
        %v638 = vpack.c.b16 %v636, %v636
        %v658 = vunpack.c.l.b16 %v591
        %v659 = vunpack.c.l.b16 %v592
        %v660 = vunpack.c.l.b16 %v593
        %v661 = vunpack.c.l.b16 %v594
        %v662 = vunpack.c.l.b16 %v595
        %v663 = vunpack.c.l.b16 %v596
        %v664 = vunpack.c.l.b16 %v597
        %v665 = vunpack.c.l.b16 %v598
        %v666 = vunpack.c.l.b16 %v599
        %v667 = vunpack.c.l.b16 %v600
        %v668 = vunpack.c.l.b16 %v601
        %v669 = vunpack.c.l.b16 %v602
        %v670 = vunpack.c.l.b16 %v603
        %v671 = vunpack.c.l.b16 %v604
        %v672 = vunpack.c.l.b16 %v605
        %v673 = vunpack.c.l.b16 %v606
        %v674 = vunpack.c.l.b16 %v607
        %v675 = vunpack.c.l.b16 %v608
        %v676 = vpack.c.b16 %v659, %v658
        %v677 = vpack.c.b16 %v661, %v660
        %v678 = vpack.c.b16 %v663, %v662
        %v679 = vpack.c.b16 %v665, %v664
        %v680 = vpack.c.b16 %v667, %v666
        %v681 = vpack.c.b16 %v669, %v668
        %v682 = vpack.c.b16 %v671, %v670
        %v683 = vpack.c.b16 %v673, %v672
        %v684 = vpack.c.b16 %v675, %v674
        %v695 = vsel %vm559, %v638, 0
        %697 = vmatpush.bf16.msra.mxu0 %v683
        %698 = vmatpush.bf16.msra.mxu0 %v682
        %699 = vmatpush.bf16.msra.mxu0 %v681
        %700 = vmatpush.bf16.msra.mxu0 %v680
        %701 = vmatpush.bf16.msra.mxu0 %v679
        %702 = vmatpush.bf16.msra.mxu0 %v678
        %703 = vmatpush.bf16.msra.mxu0 %v677
        %704 = vmatpush.bf16.msra.mxu0 %v676
        %705 = vmatmul.bf16.gmra.mxu0 %v637
        %v706 = vpop.f32.mrf.mxu0
        %v707 = vadd.f32 0.0, %v706
        %v708 = vpop.f32.mrf.mxu0
        %709 = vdwg.mxu0
        %710 = vmatpush.bf16.msra.mxu0 0
        %711 = vmatpush.bf16.msra.mxu0 0
        %712 = vmatpush.bf16.msra.mxu0 0
        %713 = vmatpush.bf16.msra.mxu0 0
        %714 = vmatpush.bf16.msra.mxu0 0
        %715 = vmatpush.bf16.msra.mxu0 0
        %716 = vmatpush.bf16.msra.mxu0 0
        %717 = vmatpush.bf16.msra.mxu0 %v684
        %718 = vmatmul.bf16.gmra.mxu0 %v695
        %v719 = vpop.f32.mrf.mxu0
        %v720 = vadd.f32 %v707, %v719
        %v721 = vpop.f32.mrf.mxu0
        %722 = vdwg.mxu0
        %v723 = vadd.f32 %v589, %v720
        %v724 = vld [vmem:[%s323] sm:$0x22]
        %v725 = vld [vmem:[%s323 + $0x8] sm:$0x22]
        %v726 = vld [vmem:[%s323 + $0x10] sm:$0x22]
        %v727 = vld [vmem:[%s323 + $0x18] sm:$0x22]
        %v728 = vld [vmem:[%s323 + $0x20] sm:$0x22]
        %v729 = vld [vmem:[%s323 + $0x28] sm:$0x22]
        %v730 = vld [vmem:[%s323 + $0x30] sm:$0x22]
        %v731 = vld [vmem:[%s323 + $0x38] sm:$0x22]
        %s732 = scalar_lea.vmem %s331, 144 [#allocation4]
        %v733 = vld [vmem:[%s732] sm:$0xf]
        %v734 = vld [vmem:[%s732 + $0x4] sm:$0xf]
        %v735 = vld [vmem:[%s732 + $0x8] sm:$0xf]
        %v736 = vld [vmem:[%s732 + $0xc] sm:$0xf]
        %v737 = vld [vmem:[%s732 + $0x10] sm:$0xf]
        %v738 = vld [vmem:[%s732 + $0x14] sm:$0xf]
        %v739 = vld [vmem:[%s732 + $0x18] sm:$0xf]
        %v740 = vld [vmem:[%s732 + $0x1c] sm:$0xf]
        %v741 = vld [vmem:[%s732 + $0x20] sm:$0xf]
        %v742 = vld [vmem:[%s732 + $0x24] sm:$0xf]
        %v743 = vld [vmem:[%s732 + $0x28] sm:$0xf]
        %v744 = vld [vmem:[%s732 + $0x2c] sm:$0xf]
        %v745 = vld [vmem:[%s732 + $0x30] sm:$0xf]
        %v746 = vld [vmem:[%s732 + $0x34] sm:$0xf]
        %v747 = vld [vmem:[%s732 + $0x38] sm:$0xf]
        %v748 = vld [vmem:[%s732 + $0x3c] sm:$0xf]
        %v749 = vld [vmem:[%s732 + $0x40] sm:$0xf]
        %v750 = vld [vmem:[%s732 + $0x44] sm:$0xf]
        %v759 = vunpack.c.l.b16 %v724
        %v760 = vunpack.c.h.b16 %v724
        %v761 = vunpack.c.l.b16 %v725
        %v762 = vunpack.c.h.b16 %v725
        %v763 = vunpack.c.l.b16 %v726
        %v764 = vunpack.c.h.b16 %v726
        %v765 = vunpack.c.l.b16 %v727
        %v766 = vunpack.c.h.b16 %v727
        %v767 = vunpack.c.l.b16 %v728
        %v768 = vunpack.c.h.b16 %v728
        %v769 = vunpack.c.l.b16 %v729
        %v770 = vunpack.c.h.b16 %v729
        %v771 = vunpack.c.l.b16 %v730
        %v772 = vunpack.c.h.b16 %v730
        %v773 = vunpack.c.l.b16 %v731
        %v774 = vunpack.c.h.b16 %v731
        %v775 = vpack.c.b16 %v759, %v759
        %v776 = vpack.c.b16 %v760, %v760
        %v777 = vpack.c.b16 %v761, %v761
        %v778 = vpack.c.b16 %v762, %v762
        %v779 = vpack.c.b16 %v763, %v763
        %v780 = vpack.c.b16 %v764, %v764
        %v781 = vpack.c.b16 %v765, %v765
        %v782 = vpack.c.b16 %v766, %v766
        %v783 = vpack.c.b16 %v767, %v767
        %v784 = vpack.c.b16 %v768, %v768
        %v785 = vpack.c.b16 %v769, %v769
        %v786 = vpack.c.b16 %v770, %v770
        %v787 = vpack.c.b16 %v771, %v771
        %v788 = vpack.c.b16 %v772, %v772
        %v789 = vpack.c.b16 %v773, %v773
        %v790 = vpack.c.b16 %v774, %v774
        %v791 = vunpack.c.l.b16 %v775
        %v792 = vunpack.c.l.b16 %v776
        %v793 = vunpack.c.l.b16 %v777
        %v794 = vunpack.c.l.b16 %v778
        %v795 = vunpack.c.l.b16 %v779
        %v796 = vunpack.c.l.b16 %v780
        %v797 = vunpack.c.l.b16 %v781
        %v798 = vunpack.c.l.b16 %v782
        %v799 = vunpack.c.l.b16 %v783
        %v800 = vunpack.c.l.b16 %v784
        %v801 = vunpack.c.l.b16 %v785
        %v802 = vunpack.c.l.b16 %v786
        %v803 = vunpack.c.l.b16 %v787
        %v804 = vunpack.c.l.b16 %v788
        %v805 = vunpack.c.l.b16 %v789
        %v806 = vunpack.c.l.b16 %v790
        %v807 = vrot.slane %v791, 2
        %v808 = vrot.slane %v793, 1
        %v809 = vsel %vm468, %v808, %v807
        %v810 = vsel %vm471, %v795, %v809
        %v811 = vrot.slane %v797, 7
        %v812 = vsel %vm474, %v811, %v810
        %v813 = vrot.slane %v799, 6
        %v814 = vsel %vm477, %v813, %v812
        %v815 = vrot.slane %v801, 5
        %v816 = vsel %vm480, %v815, %v814
        %v817 = vrot.slane %v803, 4
        %v818 = vsel %vm483, %v817, %v816
        %v819 = vrot.slane %v805, 3
        %v820 = vsel %vm486, %v819, %v818
        %v821 = vrot.slane %v792, 2
        %v822 = vrot.slane %v794, 1
        %v823 = vsel %vm468, %v822, %v821
        %v824 = vsel %vm471, %v796, %v823
        %v825 = vrot.slane %v798, 7
        %v826 = vsel %vm474, %v825, %v824
        %v827 = vrot.slane %v800, 6
        %v828 = vsel %vm477, %v827, %v826
        %v829 = vrot.slane %v802, 5
        %v830 = vsel %vm480, %v829, %v828
        %v831 = vrot.slane %v804, 4
        %v832 = vsel %vm483, %v831, %v830
        %v833 = vrot.slane %v806, 3
        %v834 = vsel %vm486, %v833, %v832
        %v835 = vpack.c.b16 %v820, %v820
        %v836 = vpack.c.b16 %v834, %v834
        %v856 = vunpack.c.l.b16 %v733
        %v857 = vunpack.c.l.b16 %v734
        %v858 = vunpack.c.l.b16 %v735
        %v859 = vunpack.c.l.b16 %v736
        %v860 = vunpack.c.l.b16 %v737
        %v861 = vunpack.c.l.b16 %v738
        %v862 = vunpack.c.l.b16 %v739
        %v863 = vunpack.c.l.b16 %v740
        %v864 = vunpack.c.l.b16 %v741
        %v865 = vunpack.c.l.b16 %v742
        %v866 = vunpack.c.l.b16 %v743
        %v867 = vunpack.c.l.b16 %v744
        %v868 = vunpack.c.l.b16 %v745
        %v869 = vunpack.c.l.b16 %v746
        %v870 = vunpack.c.l.b16 %v747
        %v871 = vunpack.c.l.b16 %v748
        %v872 = vunpack.c.l.b16 %v749
        %v873 = vunpack.c.l.b16 %v750
        %v874 = vpack.c.b16 %v857, %v856
        %v875 = vpack.c.b16 %v859, %v858
        %v876 = vpack.c.b16 %v861, %v860
        %v877 = vpack.c.b16 %v863, %v862
        %v878 = vpack.c.b16 %v865, %v864
        %v879 = vpack.c.b16 %v867, %v866
        %v880 = vpack.c.b16 %v869, %v868
        %v881 = vpack.c.b16 %v871, %v870
        %v882 = vpack.c.b16 %v873, %v872
        %v893 = vsel %vm559, %v836, 0
        %895 = vmatpush.bf16.msra.mxu0 %v881
        %896 = vmatpush.bf16.msra.mxu0 %v880
        %897 = vmatpush.bf16.msra.mxu0 %v879
        %898 = vmatpush.bf16.msra.mxu0 %v878
        %899 = vmatpush.bf16.msra.mxu0 %v877
        %900 = vmatpush.bf16.msra.mxu0 %v876
        %901 = vmatpush.bf16.msra.mxu0 %v875
        %902 = vmatpush.bf16.msra.mxu0 %v874
        %903 = vmatmul.bf16.gmra.mxu0 %v835
        %v904 = vpop.f32.mrf.mxu0
        %v905 = vadd.f32 0.0, %v904
        %v906 = vpop.f32.mrf.mxu0
        %907 = vdwg.mxu0
        %908 = vmatpush.bf16.msra.mxu0 0
        %909 = vmatpush.bf16.msra.mxu0 0
        %910 = vmatpush.bf16.msra.mxu0 0
        %911 = vmatpush.bf16.msra.mxu0 0
        %912 = vmatpush.bf16.msra.mxu0 0
        %913 = vmatpush.bf16.msra.mxu0 0
        %914 = vmatpush.bf16.msra.mxu0 0
        %915 = vmatpush.bf16.msra.mxu0 %v882
        %916 = vmatmul.bf16.gmra.mxu0 %v893
        %v917 = vpop.f32.mrf.mxu0
        %v918 = vadd.f32 %v905, %v917
        %v919 = vpop.f32.mrf.mxu0
        %920 = vdwg.mxu0
        %v921 = vadd.f32 %v723, %v918
        %s922 = scalar_lea.vmem %s331, 216 [#allocation4]
        %v923 = vld [vmem:[%s922] sm:$0xf]
        %v924 = vld [vmem:[%s922 + $0x4] sm:$0xf]
        %v925 = vld [vmem:[%s922 + $0x8] sm:$0xf]
        %v926 = vld [vmem:[%s922 + $0xc] sm:$0xf]
        %v927 = vld [vmem:[%s922 + $0x10] sm:$0xf]
        %v928 = vld [vmem:[%s922 + $0x14] sm:$0xf]
        %v929 = vld [vmem:[%s922 + $0x18] sm:$0xf]
        %v930 = vld [vmem:[%s922 + $0x1c] sm:$0xf]
        %v931 = vld [vmem:[%s922 + $0x20] sm:$0xf]
        %v932 = vld [vmem:[%s922 + $0x24] sm:$0xf]
        %v933 = vld [vmem:[%s922 + $0x28] sm:$0xf]
        %v934 = vld [vmem:[%s922 + $0x2c] sm:$0xf]
        %v935 = vld [vmem:[%s922 + $0x30] sm:$0xf]
        %v936 = vld [vmem:[%s922 + $0x34] sm:$0xf]
        %v937 = vld [vmem:[%s922 + $0x38] sm:$0xf]
        %v938 = vld [vmem:[%s922 + $0x3c] sm:$0xf]
        %v939 = vld [vmem:[%s922 + $0x40] sm:$0xf]
        %v940 = vld [vmem:[%s922 + $0x44] sm:$0xf]
        %v941 = vrot.slane %v791, 3
        %v942 = vrot.slane %v793, 2
        %v943 = vsel %vm468, %v942, %v941
        %v944 = vrot.slane %v795, 1
        %v945 = vsel %vm471, %v944, %v943
        %v946 = vsel %vm474, %v797, %v945
        %v947 = vrot.slane %v799, 7
        %v948 = vsel %vm477, %v947, %v946
        %v949 = vrot.slane %v801, 6
        %v950 = vsel %vm480, %v949, %v948
        %v951 = vrot.slane %v803, 5
        %v952 = vsel %vm483, %v951, %v950
        %v953 = vrot.slane %v805, 4
        %v954 = vsel %vm486, %v953, %v952
        %v955 = vrot.slane %v792, 3
        %v956 = vrot.slane %v794, 2
        %v957 = vsel %vm468, %v956, %v955
        %v958 = vrot.slane %v796, 1
        %v959 = vsel %vm471, %v958, %v957
        %v960 = vsel %vm474, %v798, %v959
        %v961 = vrot.slane %v800, 7
        %v962 = vsel %vm477, %v961, %v960
        %v963 = vrot.slane %v802, 6
        %v964 = vsel %vm480, %v963, %v962
        %v965 = vrot.slane %v804, 5
        %v966 = vsel %vm483, %v965, %v964
        %v967 = vrot.slane %v806, 4
        %v968 = vsel %vm486, %v967, %v966
        %v969 = vpack.c.b16 %v954, %v954
        %v970 = vpack.c.b16 %v968, %v968
        %v990 = vunpack.c.l.b16 %v923
        %v991 = vunpack.c.l.b16 %v924
        %v992 = vunpack.c.l.b16 %v925
        %v993 = vunpack.c.l.b16 %v926
        %v994 = vunpack.c.l.b16 %v927
        %v995 = vunpack.c.l.b16 %v928
        %v996 = vunpack.c.l.b16 %v929
        %v997 = vunpack.c.l.b16 %v930
        %v998 = vunpack.c.l.b16 %v931
        %v999 = vunpack.c.l.b16 %v932
        %v1000 = vunpack.c.l.b16 %v933
        %v1001 = vunpack.c.l.b16 %v934
        %v1002 = vunpack.c.l.b16 %v935
        %v1003 = vunpack.c.l.b16 %v936
        %v1004 = vunpack.c.l.b16 %v937
        %v1005 = vunpack.c.l.b16 %v938
        %v1006 = vunpack.c.l.b16 %v939
        %v1007 = vunpack.c.l.b16 %v940
        %v1008 = vpack.c.b16 %v991, %v990
        %v1009 = vpack.c.b16 %v993, %v992
        %v1010 = vpack.c.b16 %v995, %v994
        %v1011 = vpack.c.b16 %v997, %v996
        %v1012 = vpack.c.b16 %v999, %v998
        %v1013 = vpack.c.b16 %v1001, %v1000
        %v1014 = vpack.c.b16 %v1003, %v1002
        %v1015 = vpack.c.b16 %v1005, %v1004
        %v1016 = vpack.c.b16 %v1007, %v1006
        %v1027 = vsel %vm559, %v970, 0
        %1029 = vmatpush.bf16.msra.mxu0 %v1015
        %1030 = vmatpush.bf16.msra.mxu0 %v1014
        %1031 = vmatpush.bf16.msra.mxu0 %v1013
        %1032 = vmatpush.bf16.msra.mxu0 %v1012
        %1033 = vmatpush.bf16.msra.mxu0 %v1011
        %1034 = vmatpush.bf16.msra.mxu0 %v1010
        %1035 = vmatpush.bf16.msra.mxu0 %v1009
        %1036 = vmatpush.bf16.msra.mxu0 %v1008
        %1037 = vmatmul.bf16.gmra.mxu0 %v969
        %v1038 = vpop.f32.mrf.mxu0
        %v1039 = vadd.f32 0.0, %v1038
        %v1040 = vpop.f32.mrf.mxu0
        %1041 = vdwg.mxu0
        %1042 = vmatpush.bf16.msra.mxu0 0
        %1043 = vmatpush.bf16.msra.mxu0 0
        %1044 = vmatpush.bf16.msra.mxu0 0
        %1045 = vmatpush.bf16.msra.mxu0 0
        %1046 = vmatpush.bf16.msra.mxu0 0
        %1047 = vmatpush.bf16.msra.mxu0 0
        %1048 = vmatpush.bf16.msra.mxu0 0
        %1049 = vmatpush.bf16.msra.mxu0 %v1016
        %1050 = vmatmul.bf16.gmra.mxu0 %v1027
        %v1051 = vpop.f32.mrf.mxu0
        %v1052 = vadd.f32 %v1039, %v1051
        %v1053 = vpop.f32.mrf.mxu0
        %1054 = vdwg.mxu0
        %v1055 = vadd.f32 %v921, %v1052
        %v1056 = vld [vmem:[%s323] sm:$0x44]
        %v1057 = vld [vmem:[%s323 + $0x8] sm:$0x44]
        %v1058 = vld [vmem:[%s323 + $0x10] sm:$0x44]
        %v1059 = vld [vmem:[%s323 + $0x18] sm:$0x44]
        %v1060 = vld [vmem:[%s323 + $0x20] sm:$0x44]
        %v1061 = vld [vmem:[%s323 + $0x28] sm:$0x44]
        %v1062 = vld [vmem:[%s323 + $0x30] sm:$0x44]
        %v1063 = vld [vmem:[%s323 + $0x38] sm:$0x44]
        %s1064 = scalar_lea.vmem %s331, 288 [#allocation4]
        %v1065 = vld [vmem:[%s1064] sm:$0xf]
        %v1066 = vld [vmem:[%s1064 + $0x4] sm:$0xf]
        %v1067 = vld [vmem:[%s1064 + $0x8] sm:$0xf]
        %v1068 = vld [vmem:[%s1064 + $0xc] sm:$0xf]
        %v1069 = vld [vmem:[%s1064 + $0x10] sm:$0xf]
        %v1070 = vld [vmem:[%s1064 + $0x14] sm:$0xf]
        %v1071 = vld [vmem:[%s1064 + $0x18] sm:$0xf]
        %v1072 = vld [vmem:[%s1064 + $0x1c] sm:$0xf]
        %v1073 = vld [vmem:[%s1064 + $0x20] sm:$0xf]
        %v1074 = vld [vmem:[%s1064 + $0x24] sm:$0xf]
        %v1075 = vld [vmem:[%s1064 + $0x28] sm:$0xf]
        %v1076 = vld [vmem:[%s1064 + $0x2c] sm:$0xf]
        %v1077 = vld [vmem:[%s1064 + $0x30] sm:$0xf]
        %v1078 = vld [vmem:[%s1064 + $0x34] sm:$0xf]
        %v1079 = vld [vmem:[%s1064 + $0x38] sm:$0xf]
        %v1080 = vld [vmem:[%s1064 + $0x3c] sm:$0xf]
        %v1081 = vld [vmem:[%s1064 + $0x40] sm:$0xf]
        %v1082 = vld [vmem:[%s1064 + $0x44] sm:$0xf]
        %v1091 = vunpack.c.l.b16 %v1056
        %v1092 = vunpack.c.h.b16 %v1056
        %v1093 = vunpack.c.l.b16 %v1057
        %v1094 = vunpack.c.h.b16 %v1057
        %v1095 = vunpack.c.l.b16 %v1058
        %v1096 = vunpack.c.h.b16 %v1058
        %v1097 = vunpack.c.l.b16 %v1059
        %v1098 = vunpack.c.h.b16 %v1059
        %v1099 = vunpack.c.l.b16 %v1060
        %v1100 = vunpack.c.h.b16 %v1060
        %v1101 = vunpack.c.l.b16 %v1061
        %v1102 = vunpack.c.h.b16 %v1061
        %v1103 = vunpack.c.l.b16 %v1062
        %v1104 = vunpack.c.h.b16 %v1062
        %v1105 = vunpack.c.l.b16 %v1063
        %v1106 = vunpack.c.h.b16 %v1063
        %v1107 = vpack.c.b16 %v1091, %v1091
        %v1108 = vpack.c.b16 %v1092, %v1092
        %v1109 = vpack.c.b16 %v1093, %v1093
        %v1110 = vpack.c.b16 %v1094, %v1094
        %v1111 = vpack.c.b16 %v1095, %v1095
        %v1112 = vpack.c.b16 %v1096, %v1096
        %v1113 = vpack.c.b16 %v1097, %v1097
        %v1114 = vpack.c.b16 %v1098, %v1098
        %v1115 = vpack.c.b16 %v1099, %v1099
        %v1116 = vpack.c.b16 %v1100, %v1100
        %v1117 = vpack.c.b16 %v1101, %v1101
        %v1118 = vpack.c.b16 %v1102, %v1102
        %v1119 = vpack.c.b16 %v1103, %v1103
        %v1120 = vpack.c.b16 %v1104, %v1104
        %v1121 = vpack.c.b16 %v1105, %v1105
        %v1122 = vpack.c.b16 %v1106, %v1106
        %v1123 = vunpack.c.l.b16 %v1107
        %v1124 = vunpack.c.l.b16 %v1108
        %v1125 = vunpack.c.l.b16 %v1109
        %v1126 = vunpack.c.l.b16 %v1110
        %v1127 = vunpack.c.l.b16 %v1111
        %v1128 = vunpack.c.l.b16 %v1112
        %v1129 = vunpack.c.l.b16 %v1113
        %v1130 = vunpack.c.l.b16 %v1114
        %v1131 = vunpack.c.l.b16 %v1115
        %v1132 = vunpack.c.l.b16 %v1116
        %v1133 = vunpack.c.l.b16 %v1117
        %v1134 = vunpack.c.l.b16 %v1118
        %v1135 = vunpack.c.l.b16 %v1119
        %v1136 = vunpack.c.l.b16 %v1120
        %v1137 = vunpack.c.l.b16 %v1121
        %v1138 = vunpack.c.l.b16 %v1122
        %v1139 = vrot.slane %v1123, 4
        %v1140 = vrot.slane %v1125, 3
        %v1141 = vsel %vm468, %v1140, %v1139
        %v1142 = vrot.slane %v1127, 2
        %v1143 = vsel %vm471, %v1142, %v1141
        %v1144 = vrot.slane %v1129, 1
        %v1145 = vsel %vm474, %v1144, %v1143
        %v1146 = vsel %vm477, %v1131, %v1145
        %v1147 = vrot.slane %v1133, 7
        %v1148 = vsel %vm480, %v1147, %v1146
        %v1149 = vrot.slane %v1135, 6
        %v1150 = vsel %vm483, %v1149, %v1148
        %v1151 = vrot.slane %v1137, 5
        %v1152 = vsel %vm486, %v1151, %v1150
        %v1153 = vrot.slane %v1124, 4
        %v1154 = vrot.slane %v1126, 3
        %v1155 = vsel %vm468, %v1154, %v1153
        %v1156 = vrot.slane %v1128, 2
        %v1157 = vsel %vm471, %v1156, %v1155
        %v1158 = vrot.slane %v1130, 1
        %v1159 = vsel %vm474, %v1158, %v1157
        %v1160 = vsel %vm477, %v1132, %v1159
        %v1161 = vrot.slane %v1134, 7
        %v1162 = vsel %vm480, %v1161, %v1160
        %v1163 = vrot.slane %v1136, 6
        %v1164 = vsel %vm483, %v1163, %v1162
        %v1165 = vrot.slane %v1138, 5
        %v1166 = vsel %vm486, %v1165, %v1164
        %v1167 = vpack.c.b16 %v1152, %v1152
        %v1168 = vpack.c.b16 %v1166, %v1166
        %v1188 = vunpack.c.l.b16 %v1065
        %v1189 = vunpack.c.l.b16 %v1066
        %v1190 = vunpack.c.l.b16 %v1067
        %v1191 = vunpack.c.l.b16 %v1068
        %v1192 = vunpack.c.l.b16 %v1069
        %v1193 = vunpack.c.l.b16 %v1070
        %v1194 = vunpack.c.l.b16 %v1071
        %v1195 = vunpack.c.l.b16 %v1072
        %v1196 = vunpack.c.l.b16 %v1073
        %v1197 = vunpack.c.l.b16 %v1074
        %v1198 = vunpack.c.l.b16 %v1075
        %v1199 = vunpack.c.l.b16 %v1076
        %v1200 = vunpack.c.l.b16 %v1077
        %v1201 = vunpack.c.l.b16 %v1078
        %v1202 = vunpack.c.l.b16 %v1079
        %v1203 = vunpack.c.l.b16 %v1080
        %v1204 = vunpack.c.l.b16 %v1081
        %v1205 = vunpack.c.l.b16 %v1082
        %v1206 = vpack.c.b16 %v1189, %v1188
        %v1207 = vpack.c.b16 %v1191, %v1190
        %v1208 = vpack.c.b16 %v1193, %v1192
        %v1209 = vpack.c.b16 %v1195, %v1194
        %v1210 = vpack.c.b16 %v1197, %v1196
        %v1211 = vpack.c.b16 %v1199, %v1198
        %v1212 = vpack.c.b16 %v1201, %v1200
        %v1213 = vpack.c.b16 %v1203, %v1202
        %v1214 = vpack.c.b16 %v1205, %v1204
        %v1225 = vsel %vm559, %v1168, 0
        %1227 = vmatpush.bf16.msra.mxu0 %v1213
        %1228 = vmatpush.bf16.msra.mxu0 %v1212
        %1229 = vmatpush.bf16.msra.mxu0 %v1211
        %1230 = vmatpush.bf16.msra.mxu0 %v1210
        %1231 = vmatpush.bf16.msra.mxu0 %v1209
        %1232 = vmatpush.bf16.msra.mxu0 %v1208
        %1233 = vmatpush.bf16.msra.mxu0 %v1207
        %1234 = vmatpush.bf16.msra.mxu0 %v1206
        %1235 = vmatmul.bf16.gmra.mxu0 %v1167
        %v1236 = vpop.f32.mrf.mxu0
        %v1237 = vadd.f32 0.0, %v1236
        %v1238 = vpop.f32.mrf.mxu0
        %1239 = vdwg.mxu0
        %1240 = vmatpush.bf16.msra.mxu0 0
        %1241 = vmatpush.bf16.msra.mxu0 0
        %1242 = vmatpush.bf16.msra.mxu0 0
        %1243 = vmatpush.bf16.msra.mxu0 0
        %1244 = vmatpush.bf16.msra.mxu0 0
        %1245 = vmatpush.bf16.msra.mxu0 0
        %1246 = vmatpush.bf16.msra.mxu0 0
        %1247 = vmatpush.bf16.msra.mxu0 %v1214
        %1248 = vmatmul.bf16.gmra.mxu0 %v1225
        %v1249 = vpop.f32.mrf.mxu0
        %v1250 = vadd.f32 %v1237, %v1249
        %v1251 = vpop.f32.mrf.mxu0
        %1252 = vdwg.mxu0
        %v1253 = vadd.f32 %v1055, %v1250
        %s1254 = scalar_lea.vmem %s331, 360 [#allocation4]
        %v1255 = vld [vmem:[%s1254] sm:$0xf]
        %v1256 = vld [vmem:[%s1254 + $0x4] sm:$0xf]
        %v1257 = vld [vmem:[%s1254 + $0x8] sm:$0xf]
        %v1258 = vld [vmem:[%s1254 + $0xc] sm:$0xf]
        %v1259 = vld [vmem:[%s1254 + $0x10] sm:$0xf]
        %v1260 = vld [vmem:[%s1254 + $0x14] sm:$0xf]
        %v1261 = vld [vmem:[%s1254 + $0x18] sm:$0xf]
        %v1262 = vld [vmem:[%s1254 + $0x1c] sm:$0xf]
        %v1263 = vld [vmem:[%s1254 + $0x20] sm:$0xf]
        %v1264 = vld [vmem:[%s1254 + $0x24] sm:$0xf]
        %v1265 = vld [vmem:[%s1254 + $0x28] sm:$0xf]
        %v1266 = vld [vmem:[%s1254 + $0x2c] sm:$0xf]
        %v1267 = vld [vmem:[%s1254 + $0x30] sm:$0xf]
        %v1268 = vld [vmem:[%s1254 + $0x34] sm:$0xf]
        %v1269 = vld [vmem:[%s1254 + $0x38] sm:$0xf]
        %v1270 = vld [vmem:[%s1254 + $0x3c] sm:$0xf]
        %v1271 = vld [vmem:[%s1254 + $0x40] sm:$0xf]
        %v1272 = vld [vmem:[%s1254 + $0x44] sm:$0xf]
        %v1273 = vrot.slane %v1123, 5
        %v1274 = vrot.slane %v1125, 4
        %v1275 = vsel %vm468, %v1274, %v1273
        %v1276 = vrot.slane %v1127, 3
        %v1277 = vsel %vm471, %v1276, %v1275
        %v1278 = vrot.slane %v1129, 2
        %v1279 = vsel %vm474, %v1278, %v1277
        %v1280 = vrot.slane %v1131, 1
        %v1281 = vsel %vm477, %v1280, %v1279
        %v1282 = vsel %vm480, %v1133, %v1281
        %v1283 = vrot.slane %v1135, 7
        %v1284 = vsel %vm483, %v1283, %v1282
        %v1285 = vrot.slane %v1137, 6
        %v1286 = vsel %vm486, %v1285, %v1284
        %v1287 = vrot.slane %v1124, 5
        %v1288 = vrot.slane %v1126, 4
        %v1289 = vsel %vm468, %v1288, %v1287
        %v1290 = vrot.slane %v1128, 3
        %v1291 = vsel %vm471, %v1290, %v1289
        %v1292 = vrot.slane %v1130, 2
        %v1293 = vsel %vm474, %v1292, %v1291
        %v1294 = vrot.slane %v1132, 1
        %v1295 = vsel %vm477, %v1294, %v1293
        %v1296 = vsel %vm480, %v1134, %v1295
        %v1297 = vrot.slane %v1136, 7
        %v1298 = vsel %vm483, %v1297, %v1296
        %v1299 = vrot.slane %v1138, 6
        %v1300 = vsel %vm486, %v1299, %v1298
        %v1301 = vpack.c.b16 %v1286, %v1286
        %v1302 = vpack.c.b16 %v1300, %v1300
        %v1322 = vunpack.c.l.b16 %v1255
        %v1323 = vunpack.c.l.b16 %v1256
        %v1324 = vunpack.c.l.b16 %v1257
        %v1325 = vunpack.c.l.b16 %v1258
        %v1326 = vunpack.c.l.b16 %v1259
        %v1327 = vunpack.c.l.b16 %v1260
        %v1328 = vunpack.c.l.b16 %v1261
        %v1329 = vunpack.c.l.b16 %v1262
        %v1330 = vunpack.c.l.b16 %v1263
        %v1331 = vunpack.c.l.b16 %v1264
        %v1332 = vunpack.c.l.b16 %v1265
        %v1333 = vunpack.c.l.b16 %v1266
        %v1334 = vunpack.c.l.b16 %v1267
        %v1335 = vunpack.c.l.b16 %v1268
        %v1336 = vunpack.c.l.b16 %v1269
        %v1337 = vunpack.c.l.b16 %v1270
        %v1338 = vunpack.c.l.b16 %v1271
        %v1339 = vunpack.c.l.b16 %v1272
        %v1340 = vpack.c.b16 %v1323, %v1322
        %v1341 = vpack.c.b16 %v1325, %v1324
        %v1342 = vpack.c.b16 %v1327, %v1326
        %v1343 = vpack.c.b16 %v1329, %v1328
        %v1344 = vpack.c.b16 %v1331, %v1330
        %v1345 = vpack.c.b16 %v1333, %v1332
        %v1346 = vpack.c.b16 %v1335, %v1334
        %v1347 = vpack.c.b16 %v1337, %v1336
        %v1348 = vpack.c.b16 %v1339, %v1338
        %v1359 = vsel %vm559, %v1302, 0
        %1361 = vmatpush.bf16.msra.mxu0 %v1347
        %1362 = vmatpush.bf16.msra.mxu0 %v1346
        %1363 = vmatpush.bf16.msra.mxu0 %v1345
        %1364 = vmatpush.bf16.msra.mxu0 %v1344
        %1365 = vmatpush.bf16.msra.mxu0 %v1343
        %1366 = vmatpush.bf16.msra.mxu0 %v1342
        %1367 = vmatpush.bf16.msra.mxu0 %v1341
        %1368 = vmatpush.bf16.msra.mxu0 %v1340
        %1369 = vmatmul.bf16.gmra.mxu0 %v1301
        %v1370 = vpop.f32.mrf.mxu0
        %v1371 = vadd.f32 0.0, %v1370
        %v1372 = vpop.f32.mrf.mxu0
        %1373 = vdwg.mxu0
        %1374 = vmatpush.bf16.msra.mxu0 0
        %1375 = vmatpush.bf16.msra.mxu0 0
        %1376 = vmatpush.bf16.msra.mxu0 0
        %1377 = vmatpush.bf16.msra.mxu0 0
        %1378 = vmatpush.bf16.msra.mxu0 0
        %1379 = vmatpush.bf16.msra.mxu0 0
        %1380 = vmatpush.bf16.msra.mxu0 0
        %1381 = vmatpush.bf16.msra.mxu0 %v1348
        %1382 = vmatmul.bf16.gmra.mxu0 %v1359
        %v1383 = vpop.f32.mrf.mxu0
        %v1384 = vadd.f32 %v1371, %v1383
        %v1385 = vpop.f32.mrf.mxu0
        %1386 = vdwg.mxu0
        %v1387 = vadd.f32 %v1253, %v1384
        %v1388 = vld [vmem:[%s323] sm:$0x88]
        %v1389 = vld [vmem:[%s323 + $0x8] sm:$0x88]
        %v1390 = vld [vmem:[%s323 + $0x10] sm:$0x88]
        %v1391 = vld [vmem:[%s323 + $0x18] sm:$0x88]
        %v1392 = vld [vmem:[%s323 + $0x20] sm:$0x88]
        %v1393 = vld [vmem:[%s323 + $0x28] sm:$0x88]
        %v1394 = vld [vmem:[%s323 + $0x30] sm:$0x88]
        %v1395 = vld [vmem:[%s323 + $0x38] sm:$0x88]
        %s1396 = scalar_lea.vmem %s331, 432 [#allocation4]
        %v1397 = vld [vmem:[%s1396] sm:$0xf]
        %v1398 = vld [vmem:[%s1396 + $0x4] sm:$0xf]
        %v1399 = vld [vmem:[%s1396 + $0x8] sm:$0xf]
        %v1400 = vld [vmem:[%s1396 + $0xc] sm:$0xf]
        %v1401 = vld [vmem:[%s1396 + $0x10] sm:$0xf]
        %v1402 = vld [vmem:[%s1396 + $0x14] sm:$0xf]
        %v1403 = vld [vmem:[%s1396 + $0x18] sm:$0xf]
        %v1404 = vld [vmem:[%s1396 + $0x1c] sm:$0xf]
        %v1405 = vld [vmem:[%s1396 + $0x20] sm:$0xf]
        %v1406 = vld [vmem:[%s1396 + $0x24] sm:$0xf]
        %v1407 = vld [vmem:[%s1396 + $0x28] sm:$0xf]
        %v1408 = vld [vmem:[%s1396 + $0x2c] sm:$0xf]
        %v1409 = vld [vmem:[%s1396 + $0x30] sm:$0xf]
        %v1410 = vld [vmem:[%s1396 + $0x34] sm:$0xf]
        %v1411 = vld [vmem:[%s1396 + $0x38] sm:$0xf]
        %v1412 = vld [vmem:[%s1396 + $0x3c] sm:$0xf]
        %v1413 = vld [vmem:[%s1396 + $0x40] sm:$0xf]
        %v1414 = vld [vmem:[%s1396 + $0x44] sm:$0xf]
        %v1423 = vunpack.c.l.b16 %v1388
        %v1424 = vunpack.c.h.b16 %v1388
        %v1425 = vunpack.c.l.b16 %v1389
        %v1426 = vunpack.c.h.b16 %v1389
        %v1427 = vunpack.c.l.b16 %v1390
        %v1428 = vunpack.c.h.b16 %v1390
        %v1429 = vunpack.c.l.b16 %v1391
        %v1430 = vunpack.c.h.b16 %v1391
        %v1431 = vunpack.c.l.b16 %v1392
        %v1432 = vunpack.c.h.b16 %v1392
        %v1433 = vunpack.c.l.b16 %v1393
        %v1434 = vunpack.c.h.b16 %v1393
        %v1435 = vunpack.c.l.b16 %v1394
        %v1436 = vunpack.c.h.b16 %v1394
        %v1437 = vunpack.c.l.b16 %v1395
        %v1438 = vunpack.c.h.b16 %v1395
        %v1439 = vpack.c.b16 %v1423, %v1423
        %v1440 = vpack.c.b16 %v1424, %v1424
        %v1441 = vpack.c.b16 %v1425, %v1425
        %v1442 = vpack.c.b16 %v1426, %v1426
        %v1443 = vpack.c.b16 %v1427, %v1427
        %v1444 = vpack.c.b16 %v1428, %v1428
        %v1445 = vpack.c.b16 %v1429, %v1429
        %v1446 = vpack.c.b16 %v1430, %v1430
        %v1447 = vpack.c.b16 %v1431, %v1431
        %v1448 = vpack.c.b16 %v1432, %v1432
        %v1449 = vpack.c.b16 %v1433, %v1433
        %v1450 = vpack.c.b16 %v1434, %v1434
        %v1451 = vpack.c.b16 %v1435, %v1435
        %v1452 = vpack.c.b16 %v1436, %v1436
        %v1453 = vpack.c.b16 %v1437, %v1437
        %v1454 = vpack.c.b16 %v1438, %v1438
        %v1455 = vunpack.c.l.b16 %v1439
        %v1456 = vunpack.c.l.b16 %v1440
        %v1457 = vunpack.c.l.b16 %v1441
        %v1458 = vunpack.c.l.b16 %v1442
        %v1459 = vunpack.c.l.b16 %v1443
        %v1460 = vunpack.c.l.b16 %v1444
        %v1461 = vunpack.c.l.b16 %v1445
        %v1462 = vunpack.c.l.b16 %v1446
        %v1463 = vunpack.c.l.b16 %v1447
        %v1464 = vunpack.c.l.b16 %v1448
        %v1465 = vunpack.c.l.b16 %v1449
        %v1466 = vunpack.c.l.b16 %v1450
        %v1467 = vunpack.c.l.b16 %v1451
        %v1468 = vunpack.c.l.b16 %v1452
        %v1469 = vunpack.c.l.b16 %v1453
        %v1470 = vunpack.c.l.b16 %v1454
        %v1471 = vrot.slane %v1455, 6
        %v1472 = vrot.slane %v1457, 5
        %v1473 = vsel %vm468, %v1472, %v1471
        %v1474 = vrot.slane %v1459, 4
        %v1475 = vsel %vm471, %v1474, %v1473
        %v1476 = vrot.slane %v1461, 3
        %v1477 = vsel %vm474, %v1476, %v1475
        %v1478 = vrot.slane %v1463, 2
        %v1479 = vsel %vm477, %v1478, %v1477
        %v1480 = vrot.slane %v1465, 1
        %v1481 = vsel %vm480, %v1480, %v1479
        %v1482 = vsel %vm483, %v1467, %v1481
        %v1483 = vrot.slane %v1469, 7
        %v1484 = vsel %vm486, %v1483, %v1482
        %v1485 = vrot.slane %v1456, 6
        %v1486 = vrot.slane %v1458, 5
        %v1487 = vsel %vm468, %v1486, %v1485
        %v1488 = vrot.slane %v1460, 4
        %v1489 = vsel %vm471, %v1488, %v1487
        %v1490 = vrot.slane %v1462, 3
        %v1491 = vsel %vm474, %v1490, %v1489
        %v1492 = vrot.slane %v1464, 2
        %v1493 = vsel %vm477, %v1492, %v1491
        %v1494 = vrot.slane %v1466, 1
        %v1495 = vsel %vm480, %v1494, %v1493
        %v1496 = vsel %vm483, %v1468, %v1495
        %v1497 = vrot.slane %v1470, 7
        %v1498 = vsel %vm486, %v1497, %v1496
        %v1499 = vpack.c.b16 %v1484, %v1484
        %v1500 = vpack.c.b16 %v1498, %v1498
        %v1520 = vunpack.c.l.b16 %v1397
        %v1521 = vunpack.c.l.b16 %v1398
        %v1522 = vunpack.c.l.b16 %v1399
        %v1523 = vunpack.c.l.b16 %v1400
        %v1524 = vunpack.c.l.b16 %v1401
        %v1525 = vunpack.c.l.b16 %v1402
        %v1526 = vunpack.c.l.b16 %v1403
        %v1527 = vunpack.c.l.b16 %v1404
        %v1528 = vunpack.c.l.b16 %v1405
        %v1529 = vunpack.c.l.b16 %v1406
        %v1530 = vunpack.c.l.b16 %v1407
        %v1531 = vunpack.c.l.b16 %v1408
        %v1532 = vunpack.c.l.b16 %v1409
        %v1533 = vunpack.c.l.b16 %v1410
        %v1534 = vunpack.c.l.b16 %v1411
        %v1535 = vunpack.c.l.b16 %v1412
        %v1536 = vunpack.c.l.b16 %v1413
        %v1537 = vunpack.c.l.b16 %v1414
        %v1538 = vpack.c.b16 %v1521, %v1520
        %v1539 = vpack.c.b16 %v1523, %v1522
        %v1540 = vpack.c.b16 %v1525, %v1524
        %v1541 = vpack.c.b16 %v1527, %v1526
        %v1542 = vpack.c.b16 %v1529, %v1528
        %v1543 = vpack.c.b16 %v1531, %v1530
        %v1544 = vpack.c.b16 %v1533, %v1532
        %v1545 = vpack.c.b16 %v1535, %v1534
        %v1546 = vpack.c.b16 %v1537, %v1536
        %v1557 = vsel %vm559, %v1500, 0
        %1559 = vmatpush.bf16.msra.mxu0 %v1545
        %1560 = vmatpush.bf16.msra.mxu0 %v1544
        %1561 = vmatpush.bf16.msra.mxu0 %v1543
        %1562 = vmatpush.bf16.msra.mxu0 %v1542
        %1563 = vmatpush.bf16.msra.mxu0 %v1541
        %1564 = vmatpush.bf16.msra.mxu0 %v1540
        %1565 = vmatpush.bf16.msra.mxu0 %v1539
        %1566 = vmatpush.bf16.msra.mxu0 %v1538
        %1567 = vmatmul.bf16.gmra.mxu0 %v1499
        %v1568 = vpop.f32.mrf.mxu0
        %v1569 = vadd.f32 0.0, %v1568
        %v1570 = vpop.f32.mrf.mxu0
        %1571 = vdwg.mxu0
        %1572 = vmatpush.bf16.msra.mxu0 0
        %1573 = vmatpush.bf16.msra.mxu0 0
        %1574 = vmatpush.bf16.msra.mxu0 0
        %1575 = vmatpush.bf16.msra.mxu0 0
        %1576 = vmatpush.bf16.msra.mxu0 0
        %1577 = vmatpush.bf16.msra.mxu0 0
        %1578 = vmatpush.bf16.msra.mxu0 0
        %1579 = vmatpush.bf16.msra.mxu0 %v1546
        %1580 = vmatmul.bf16.gmra.mxu0 %v1557
        %v1581 = vpop.f32.mrf.mxu0
        %v1582 = vadd.f32 %v1569, %v1581
        %v1583 = vpop.f32.mrf.mxu0
        %1584 = vdwg.mxu0
        %v1585 = vadd.f32 %v1387, %v1582
        %s1586 = scalar_lea.vmem %s331, 504 [#allocation4]
        %v1587 = vld [vmem:[%s1586] sm:$0xf]
        %v1588 = vld [vmem:[%s1586 + $0x4] sm:$0xf]
        %v1589 = vld [vmem:[%s1586 + $0x8] sm:$0xf]
        %v1590 = vld [vmem:[%s1586 + $0xc] sm:$0xf]
        %v1591 = vld [vmem:[%s1586 + $0x10] sm:$0xf]
        %v1592 = vld [vmem:[%s1586 + $0x14] sm:$0xf]
        %v1593 = vld [vmem:[%s1586 + $0x18] sm:$0xf]
        %v1594 = vld [vmem:[%s1586 + $0x1c] sm:$0xf]
        %v1595 = vld [vmem:[%s1586 + $0x20] sm:$0xf]
        %v1596 = vld [vmem:[%s1586 + $0x24] sm:$0xf]
        %v1597 = vld [vmem:[%s1586 + $0x28] sm:$0xf]
        %v1598 = vld [vmem:[%s1586 + $0x2c] sm:$0xf]
        %v1599 = vld [vmem:[%s1586 + $0x30] sm:$0xf]
        %v1600 = vld [vmem:[%s1586 + $0x34] sm:$0xf]
        %v1601 = vld [vmem:[%s1586 + $0x38] sm:$0xf]
        %v1602 = vld [vmem:[%s1586 + $0x3c] sm:$0xf]
        %v1603 = vld [vmem:[%s1586 + $0x40] sm:$0xf]
        %v1604 = vld [vmem:[%s1586 + $0x44] sm:$0xf]
        %v1605 = vrot.slane %v1455, 7
        %v1606 = vrot.slane %v1457, 6
        %v1607 = vsel %vm468, %v1606, %v1605
        %v1608 = vrot.slane %v1459, 5
        %v1609 = vsel %vm471, %v1608, %v1607
        %v1610 = vrot.slane %v1461, 4
        %v1611 = vsel %vm474, %v1610, %v1609
        %v1612 = vrot.slane %v1463, 3
        %v1613 = vsel %vm477, %v1612, %v1611
        %v1614 = vrot.slane %v1465, 2
        %v1615 = vsel %vm480, %v1614, %v1613
        %v1616 = vrot.slane %v1467, 1
        %v1617 = vsel %vm483, %v1616, %v1615
        %v1618 = vsel %vm486, %v1469, %v1617
        %v1619 = vrot.slane %v1456, 7
        %v1620 = vrot.slane %v1458, 6
        %v1621 = vsel %vm468, %v1620, %v1619
        %v1622 = vrot.slane %v1460, 5
        %v1623 = vsel %vm471, %v1622, %v1621
        %v1624 = vrot.slane %v1462, 4
        %v1625 = vsel %vm474, %v1624, %v1623
        %v1626 = vrot.slane %v1464, 3
        %v1627 = vsel %vm477, %v1626, %v1625
        %v1628 = vrot.slane %v1466, 2
        %v1629 = vsel %vm480, %v1628, %v1627
        %v1630 = vrot.slane %v1468, 1
        %v1631 = vsel %vm483, %v1630, %v1629
        %v1632 = vsel %vm486, %v1470, %v1631
        %v1633 = vpack.c.b16 %v1618, %v1618
        %v1634 = vpack.c.b16 %v1632, %v1632
        %v1654 = vunpack.c.l.b16 %v1587
        %v1655 = vunpack.c.l.b16 %v1588
        %v1656 = vunpack.c.l.b16 %v1589
        %v1657 = vunpack.c.l.b16 %v1590
        %v1658 = vunpack.c.l.b16 %v1591
        %v1659 = vunpack.c.l.b16 %v1592
        %v1660 = vunpack.c.l.b16 %v1593
        %v1661 = vunpack.c.l.b16 %v1594
        %v1662 = vunpack.c.l.b16 %v1595
        %v1663 = vunpack.c.l.b16 %v1596
        %v1664 = vunpack.c.l.b16 %v1597
        %v1665 = vunpack.c.l.b16 %v1598
        %v1666 = vunpack.c.l.b16 %v1599
        %v1667 = vunpack.c.l.b16 %v1600
        %v1668 = vunpack.c.l.b16 %v1601
        %v1669 = vunpack.c.l.b16 %v1602
        %v1670 = vunpack.c.l.b16 %v1603
        %v1671 = vunpack.c.l.b16 %v1604
        %v1672 = vpack.c.b16 %v1655, %v1654
        %v1673 = vpack.c.b16 %v1657, %v1656
        %v1674 = vpack.c.b16 %v1659, %v1658
        %v1675 = vpack.c.b16 %v1661, %v1660
        %v1676 = vpack.c.b16 %v1663, %v1662
        %v1677 = vpack.c.b16 %v1665, %v1664
        %v1678 = vpack.c.b16 %v1667, %v1666
        %v1679 = vpack.c.b16 %v1669, %v1668
        %v1680 = vpack.c.b16 %v1671, %v1670
        %v1691 = vsel %vm559, %v1634, 0
        %1693 = vmatpush.bf16.msra.mxu0 %v1679
        %1694 = vmatpush.bf16.msra.mxu0 %v1678
        %1695 = vmatpush.bf16.msra.mxu0 %v1677
        %1696 = vmatpush.bf16.msra.mxu0 %v1676
        %1697 = vmatpush.bf16.msra.mxu0 %v1675
        %1698 = vmatpush.bf16.msra.mxu0 %v1674
        %1699 = vmatpush.bf16.msra.mxu0 %v1673
        %1700 = vmatpush.bf16.msra.mxu0 %v1672
        %1701 = vmatmul.bf16.gmra.mxu0 %v1633
        %v1702 = vpop.f32.mrf.mxu0
        %v1703 = vadd.f32 0.0, %v1702
        %v1704 = vpop.f32.mrf.mxu0
        %1705 = vdwg.mxu0
        %1706 = vmatpush.bf16.msra.mxu0 0
        %1707 = vmatpush.bf16.msra.mxu0 0
        %1708 = vmatpush.bf16.msra.mxu0 0
        %1709 = vmatpush.bf16.msra.mxu0 0
        %1710 = vmatpush.bf16.msra.mxu0 0
        %1711 = vmatpush.bf16.msra.mxu0 0
        %1712 = vmatpush.bf16.msra.mxu0 0
        %1713 = vmatpush.bf16.msra.mxu0 %v1680
        %1714 = vmatmul.bf16.gmra.mxu0 %v1691
        %v1715 = vpop.f32.mrf.mxu0
        %v1716 = vadd.f32 %v1703, %v1715
        %v1717 = vpop.f32.mrf.mxu0
        %1718 = vdwg.mxu0
        %v1719 = vadd.f32 %v1585, %v1716
        %1720 = vst [vmem:[#allocation2] sm:$0xff] %v1719
        %p1721 = scmp.eq.s32.totalorder %s25, 7
        // Predicated region
        $region95: #{net_forward.3} parent=73 // pred_check
          %p1722 = pneg %p1721
        $region96: #{net_forward.3} parent=73 // pred_check_branch
          %1724 = sbr.rel (%p1722) target = $region98
        $region97: #{net_forward.3} parent=73 // pred_region
          %v1725 = vld [vmem:[#allocation2] sm:$0xff]
          %v1726 = vld [vmem:[#allocation6] sm:$0x1]
          %v1728 = vperm.slane %v1726, 0
          %v1730 = vadd.f32 %v1725, %v1728
          %v1731 = vmax.f32 %v1730, 0.0
          %v1732 = vpack.c.bf16 %v1731, %v1731
          %v1733 = vld [vmem:[%s3] sm:$0xf]
          %v1734 = vld [vmem:[%s3 + $0x4] sm:$0xf]
          %v1735 = vld [vmem:[%s3 + $0x8] sm:$0xf]
          %v1736 = vld [vmem:[%s3 + $0xc] sm:$0xf]
          %v1737 = vld [vmem:[%s3 + $0x10] sm:$0xf]
          %v1738 = vld [vmem:[%s3 + $0x14] sm:$0xf]
          %v1739 = vld [vmem:[%s3 + $0x18] sm:$0xf]
          %v1740 = vld [vmem:[%s3 + $0x1c] sm:$0xf]
          %v1741 = vld [vmem:[%s3 + $0x20] sm:$0xf]
          %v1742 = vld [vmem:[%s3 + $0x24] sm:$0xf]
          %v1743 = vld [vmem:[%s3 + $0x28] sm:$0xf]
          %v1744 = vld [vmem:[%s3 + $0x2c] sm:$0xf]
          %v1745 = vld [vmem:[%s3 + $0x30] sm:$0xf]
          %v1746 = vld [vmem:[%s3 + $0x34] sm:$0xf]
          %v1747 = vld [vmem:[%s3 + $0x38] sm:$0xf]
          %v1748 = vld [vmem:[%s3 + $0x3c] sm:$0xf]
          %v1749 = vld [vmem:[#allocation8] sm:$0x1]
          %v1751 = vperm.slane %v1749, 0
          %v1769 = vunpack.c.l.b16 %v1733
          %v1770 = vunpack.c.l.b16 %v1734
          %v1771 = vunpack.c.l.b16 %v1735
          %v1772 = vunpack.c.l.b16 %v1736
          %v1773 = vunpack.c.l.b16 %v1737
          %v1774 = vunpack.c.l.b16 %v1738
          %v1775 = vunpack.c.l.b16 %v1739
          %v1776 = vunpack.c.l.b16 %v1740
          %v1777 = vunpack.c.l.b16 %v1741
          %v1778 = vunpack.c.l.b16 %v1742
          %v1779 = vunpack.c.l.b16 %v1743
          %v1780 = vunpack.c.l.b16 %v1744
          %v1781 = vunpack.c.l.b16 %v1745
          %v1782 = vunpack.c.l.b16 %v1746
          %v1783 = vunpack.c.l.b16 %v1747
          %v1784 = vunpack.c.l.b16 %v1748
          %v1785 = vpack.c.b16 %v1770, %v1769
          %v1786 = vpack.c.b16 %v1772, %v1771
          %v1787 = vpack.c.b16 %v1774, %v1773
          %v1788 = vpack.c.b16 %v1776, %v1775
          %v1789 = vpack.c.b16 %v1778, %v1777
          %v1790 = vpack.c.b16 %v1780, %v1779
          %v1791 = vpack.c.b16 %v1782, %v1781
          %v1792 = vpack.c.b16 %v1784, %v1783
          %1801 = vmatpush.bf16.msra.mxu0 %v1792
          %1802 = vmatpush.bf16.msra.mxu0 %v1791
          %1803 = vmatpush.bf16.msra.mxu0 %v1790
          %1804 = vmatpush.bf16.msra.mxu0 %v1789
          %1805 = vmatpush.bf16.msra.mxu0 %v1788
          %1806 = vmatpush.bf16.msra.mxu0 %v1787
          %1807 = vmatpush.bf16.msra.mxu0 %v1786
          %1808 = vmatpush.bf16.msra.mxu0 %v1785
          %1809 = vmatmul.bf16.gmra.mxu0 %v1732
          %v1810 = vpop.f32.mrf.mxu0
          %v1811 = vadd.f32 %v1751, %v1810
          %v1812 = vpop.f32.mrf.mxu0
          %1813 = vdwg.mxu0
          %vm1814 = vcmask 80896
          %v1815 = vsel %vm1814, %v1811, -inf
          %1816 = vmax.xlane.f32.xlu0 %v1815
          %v1817 = vpop.xlane.xlu0 %1816
          %v1818 = vsub.f32 %v1811, %v1817
          %v1819 = vmul.f32 %v1818, 1.442695
          %v1820 = vpow.pop %v1819
          %v1821 = vsel %vm1814, %v1820, 0.0
          %1822 = vadd.xlane.f32.xlu0 %v1821
          %v1823 = vpop.xlane.xlu0 %1822
          %v1824 = vlog2.pop %v1823
          %v1825 = vmul.f32 %v1824, 0.6931472
          %v1826 = vadd.f32 %v1817, %v1825
          %v1827 = vsub.f32 %v1811, %v1826
          %1828 = vst.msk [vmem:[%s377] sm:$0xff] %vm1814, %v1827
        $region98: #{net_forward.3} parent=73 // pred_fallthru
          _
        %p1829 = scmp.lt.s32.totalorder %s24, 0
        %s1830 = scalar_select %p1829, %s24, 0
        %s1831 = smul.addr %s1830, 8
        %s1832 = scalar_lea.vmem %s5, %s1831
        // Predicated region
        $region99: #{net_forward.3} parent=73 // pred_check
          %p1833 = pneg %p167
        $region100: #{net_forward.3} parent=73 // pred_check_branch
          %1835 = sbr.rel (%p1833) target = $region102
        $region101: #{net_forward.3} parent=73 // pred_region
          _
        $region102: #{net_forward.3} parent=73 // pred_fallthru
          _
        // Predicated region
        $region103: #{net_forward.3} parent=73 // pred_check
          %p1836 = pneg %p167
        $region104: #{net_forward.3} parent=73 // pred_check_branch
          %1838 = sbr.rel (%p1836) target = $region106
        $region105: #{net_forward.3} parent=73 // pred_region
          %p1839 = scmp.lt.s32.totalorder %s24, 0
          %s1840 = scalar_select %p1839, %s24, 0
          %s1841 = smul.addr %s1840, 8
          %s1842 = scalar_lea.vmem %s5, %s1841
        $region106: #{net_forward.3} parent=73 // pred_fallthru
          _
      $region74: #{net_forward.3} parent=5 // pred_fallthru
        _
      %p1843 = scmp.le.s32.totalorder 2, %s15
      // Predicated region
      $region107: #{net_forward.3} parent=5 // pred_check
        %p1844 = pneg %p1843
      $region108: #{net_forward.3} parent=5 // pred_check_branch
        %1846 = sbr.rel (%p1844) target = $region110
      $region109: #{net_forward.3} parent=5 // pred_region
        %s1847 = ssub.s32 %s15, 2
      $region110: #{net_forward.3} parent=5 // pred_fallthru
        _
    $region6: #{net_forward.3} parent=1 // loop_footer
      %s19 = sadd.s32 1, %s15
    $region7: #{net_forward.3} parent=1 // loop_footer_branch
      %14 = sbr.rel target = $region3
    $region8: #{net_forward.3} parent=1 // loop_exit
      _
    %1848 = vsyncpa [#allocation5], 1
    %s1849 = scalar_lea.sflag [#allocation5], 1
    %1850 = vsyncpa %s1849, 1
    %1851 = vsyncpa [#allocation7], 1

// kernel: net_forward.2
$region0: #{net_forward.2}
  #allocation0 [shape = 'u32[]', space=smem, size = 0x4, offset = 0x4, fixed_abs, tag = 'smem constant byte address 0x4 - core index']
  #allocation1 [shape = 'u32[72,128]{1,0:T(1,128)}', space=vmem, size = 0x9000, scoped, tag = 'internal scratch']
  #allocation2 [shape = 'bf16[32,726]{1,0:T(8,128)(2,1)}', space=vmem, size = 0xc000, scoped, tag = 'scratch operand']
  #allocation3 [shape = 'bf16[288,668]{1,0:T(8,128)(2,1)}', space=vmem, size = 0x6c000, scoped, tag = 'scratch operand']
  #allocation4 [shape = 'f32[64,668]{1,0:T(8,128)}', space=vmem, size = 0x30000, scoped, tag = 'scratch operand']
  %s0 = inlined_call_operand.vmem [shape: f32[8,784], index: 0, kind: input, shape index: {}]
  %s1 = inlined_call_operand.vmem [shape: f32[32,9], index: 1, kind: input, shape index: {}]
  %s2 = inlined_call_operand.vmem [shape: f32[32,1], index: 2, kind: input, shape index: {}]
  %s3 = inlined_call_operand.hbm [shape: bf16[64,288], index: 3, kind: input, shape index: {}]
  %s4 = inlined_call_operand.vmem [shape: f32[64,1], index: 4, kind: input, shape index: {}]
  %s5 = inlined_call_operand.vmem [shape: bf16[639,144], index: 5, kind: input, shape index: {}]
  %s6 = inlined_call_operand.vmem [shape: bf16[8,64,144], index: 6, kind: output, shape index: {}]
  %s7 = sld [smem:[#allocation0]]
  $region45: #{net_forward.2} parent=0
    _
  %s9 = ssub.s32 1, %s7
  %s10 = scalar_select 0, %s9, %s7
  $region1: #{net_forward.2} parent=0
    #allocation5 [shape = 'u8[49152]{0}', space=vmem, size = 0xc000, scoped, tag = 'input window, operand 3, single buffered']
    #allocation6 [shape = 's32[1]{0}', space=sflag, size = 0x4, scoped, tag = 'scoped memory for net_forward.2']
    %11 = vsyncpa [#allocation6], 0
    // Predicated region
    $region2: #{net_forward.2} parent=1 // pred_check
      _
    $region3: #{net_forward.2} parent=1 // pred_check_branch
      %13 = sbr.rel (0) target = $region5
    $region4: #{net_forward.2} parent=1 // pred_region
      _
    $region5: #{net_forward.2} parent=1 // pred_fallthru
      _
    // Predicated region
    $region6: #{net_forward.2} parent=1 // pred_check
      _
    $region7: #{net_forward.2} parent=1 // pred_check_branch
      %15 = sbr.rel (0) target = $region9
    $region8: #{net_forward.2} parent=1 // pred_region
      _
    $region9: #{net_forward.2} parent=1 // pred_fallthru
      _
    // Predicated region
    $region10: #{net_forward.2} parent=1 // pred_check
      _
    $region11: #{net_forward.2} parent=1 // pred_check_branch
      %17 = sbr.rel (0) target = $region13
    $region12: #{net_forward.2} parent=1 // pred_region
      _
    $region13: #{net_forward.2} parent=1 // pred_fallthru
      _
    // Predicated region
    $region14: #{net_forward.2} parent=1 // pred_check
      _
    $region15: #{net_forward.2} parent=1 // pred_check_branch
      %19 = sbr.rel (0) target = $region17
    $region16: #{net_forward.2} parent=1 // pred_region
      %21 = vsyncadd [#allocation6], 0
      %s22 = sshll.u32 %s3, 4
      %s23 = int_to_ptr.hbm [resolvable:$true] %s22
      %s24 = sshll.u32 [#allocation5], 4
      %s25 = int_to_ptr.vmem [resolvable:$true] %s24
      %30 = dma.hbm_to_vmem [thread:$0]  %s23, 1536, %s25, [#allocation6], 192, 192, 12
    $region17: #{net_forward.2} parent=1 // pred_fallthru
      _
    // Predicated region
    $region18: #{net_forward.2} parent=1 // pred_check
      _
    $region19: #{net_forward.2} parent=1 // pred_check_branch
      %32 = sbr.rel (0) target = $region21
    $region20: #{net_forward.2} parent=1 // pred_region
      _
    $region21: #{net_forward.2} parent=1 // pred_fallthru
      _
    // Predicated region
    $region22: #{net_forward.2} parent=1 // pred_check
      _
    $region23: #{net_forward.2} parent=1 // pred_check_branch
      %34 = sbr.rel (0) target = $region25
    $region24: #{net_forward.2} parent=1 // pred_region
      _
    $region25: #{net_forward.2} parent=1 // pred_fallthru
      _
    // Predicated region
    $region26: #{net_forward.2} parent=1 // pred_check
      _
    $region27: #{net_forward.2} parent=1 // pred_check_branch
      %36 = sbr.rel (0) target = $region29
    $region28: #{net_forward.2} parent=1 // pred_region
      %38 = dma.done [#allocation6], 1536
    $region29: #{net_forward.2} parent=1 // pred_fallthru
      _
    loop: start=0, step=1, limit=8
    $region30: #{net_forward.2} parent=1 // loop_pre_header
      _
    $region31: #{net_forward.2} parent=1 // loop_header
      %s41 = sphi 0, %s45
      %p42 = scmp.ge.s32.totalorder %s41, 8
    $region32: #{net_forward.2} parent=1 // loop_header_branch
      %44 = sbr.rel (%p42) target = $region36
    $region33: #{net_forward.2} parent=1 // loop_body
      %s46 = sshra.s32 %s41, 3
      %s47 = sand.u32 %s41, 7
      %s48 = sshra.s32 %s41, 3
      %s49 = sand.u32 %s41, 7
      %s50 = smul.u32 %s46, 7
      %s51 = smul.u32 %s50, 8
      %s52 = sadd.s32 %s51, %s49
      %s53 = scalar_lea.vmem %s0, %s52
      %v54 = vld [vmem:[%s53] ss:$8 sm:$0xf]
      %v55 = vld [vmem:[%s53] ss:$8 sm:$0x70]
      %v56 = vor.u32 %v54, %v55
      %v57 = vld [vmem:[%s1] sm:$0xff]
      %v58 = vld [vmem:[%s1 + $0x8] sm:$0xff]
      %v59 = vld [vmem:[%s1 + $0x10] sm:$0xff]
      %v60 = vld [vmem:[%s1 + $0x18] sm:$0xff]
      %62 = vset.pattern.permute.xlu0 0
      %63 = vperm.xlu0 %62, %v57
      %v64 = vpop.permute.xlu0 %63
      %67 = vset.pattern.permute.xlu0 0
      %68 = vperm.xlu0 %67, %v58
      %v69 = vpop.permute.xlu0 %68
      %72 = vset.pattern.permute.xlu0 0
      %73 = vperm.xlu0 %72, %v59
      %v74 = vpop.permute.xlu0 %73
      %77 = vset.pattern.permute.xlu0 0
      %78 = vperm.xlu0 %77, %v60
      %v79 = vpop.permute.xlu0 %78
      %v82 = vperm.slane %v56, 0
      %v83 = vperm.slane %v56, 1
      %v84 = vperm.slane %v56, 2
      %v85 = vperm.slane %v56, 3
      %v86 = vperm.slane %v56, 4
      %v87 = vperm.slane %v56, 5
      %v94 = vmul.f32 %v64, %v82
      %v95 = vmul.f32 %v64, %v83
      %v96 = vmul.f32 %v64, %v84
      %v97 = vmul.f32 %v64, %v85
      %v98 = vmul.f32 %v64, %v86
      %v99 = vmul.f32 %v64, %v87
      %v100 = vmul.f32 %v69, %v82
      %v101 = vmul.f32 %v69, %v83
      %v102 = vmul.f32 %v69, %v84
      %v103 = vmul.f32 %v69, %v85
      %v104 = vmul.f32 %v69, %v86
      %v105 = vmul.f32 %v69, %v87
      %v106 = vmul.f32 %v74, %v82
      %v107 = vmul.f32 %v74, %v83
      %v108 = vmul.f32 %v74, %v84
      %v109 = vmul.f32 %v74, %v85
      %v110 = vmul.f32 %v74, %v86
      %v111 = vmul.f32 %v74, %v87
      %v112 = vmul.f32 %v79, %v82
      %v113 = vmul.f32 %v79, %v83
      %v114 = vmul.f32 %v79, %v84
      %v115 = vmul.f32 %v79, %v85
      %v116 = vmul.f32 %v79, %v86
      %v117 = vmul.f32 %v79, %v87
      %118 = vset.pattern.permute.xlu0 1
      %119 = vperm.xlu0 %118, %v57
      %v120 = vpop.permute.xlu0 %119
      %122 = vset.pattern.permute.xlu0 1
      %123 = vperm.xlu0 %122, %v58
      %v124 = vpop.permute.xlu0 %123
      %126 = vset.pattern.permute.xlu0 1
      %127 = vperm.xlu0 %126, %v59
      %v128 = vpop.permute.xlu0 %127
      %130 = vset.pattern.permute.xlu0 1
      %131 = vperm.xlu0 %130, %v60
      %v132 = vpop.permute.xlu0 %131
      %v134 = vmul.f32 %v120, %v82
      %v135 = vmul.f32 %v120, %v83
      %v136 = vmul.f32 %v120, %v84
      %v137 = vmul.f32 %v120, %v85
      %v138 = vmul.f32 %v120, %v86
      %v139 = vmul.f32 %v120, %v87
      %v140 = vmul.f32 %v124, %v82
      %v141 = vmul.f32 %v124, %v83
      %v142 = vmul.f32 %v124, %v84
      %v143 = vmul.f32 %v124, %v85
      %v144 = vmul.f32 %v124, %v86
      %v145 = vmul.f32 %v124, %v87
      %v146 = vmul.f32 %v128, %v82
      %v147 = vmul.f32 %v128, %v83
      %v148 = vmul.f32 %v128, %v84
      %v149 = vmul.f32 %v128, %v85
      %v150 = vmul.f32 %v128, %v86
      %v151 = vmul.f32 %v128, %v87
      %v152 = vmul.f32 %v132, %v82
      %v153 = vmul.f32 %v132, %v83
      %v154 = vmul.f32 %v132, %v84
      %v155 = vmul.f32 %v132, %v85
      %v156 = vmul.f32 %v132, %v86
      %v157 = vmul.f32 %v132, %v87
      %182 = vrot.lane.b32.xlu0 %v134, 127
      %v183 = vpop.permute.xlu0 %182
      %184 = vrot.lane.b32.xlu0 %v135, 127
      %v185 = vpop.permute.xlu0 %184
      %186 = vrot.lane.b32.xlu0 %v136, 127
      %v187 = vpop.permute.xlu0 %186
      %188 = vrot.lane.b32.xlu0 %v137, 127
      %v189 = vpop.permute.xlu0 %188
      %190 = vrot.lane.b32.xlu0 %v138, 127
      %v191 = vpop.permute.xlu0 %190
      %192 = vrot.lane.b32.xlu0 %v139, 127
      %v193 = vpop.permute.xlu0 %192
      %194 = vrot.lane.b32.xlu0 %v140, 127
      %v195 = vpop.permute.xlu0 %194
      %196 = vrot.lane.b32.xlu0 %v141, 127
      %v197 = vpop.permute.xlu0 %196
      %198 = vrot.lane.b32.xlu0 %v142, 127
      %v199 = vpop.permute.xlu0 %198
      %200 = vrot.lane.b32.xlu0 %v143, 127
      %v201 = vpop.permute.xlu0 %200
      %202 = vrot.lane.b32.xlu0 %v144, 127
      %v203 = vpop.permute.xlu0 %202
      %204 = vrot.lane.b32.xlu0 %v145, 127
      %v205 = vpop.permute.xlu0 %204
      %206 = vrot.lane.b32.xlu0 %v146, 127
      %v207 = vpop.permute.xlu0 %206
      %208 = vrot.lane.b32.xlu0 %v147, 127
      %v209 = vpop.permute.xlu0 %208
      %210 = vrot.lane.b32.xlu0 %v148, 127
      %v211 = vpop.permute.xlu0 %210
      %212 = vrot.lane.b32.xlu0 %v149, 127
      %v213 = vpop.permute.xlu0 %212
      %214 = vrot.lane.b32.xlu0 %v150, 127
      %v215 = vpop.permute.xlu0 %214
      %216 = vrot.lane.b32.xlu0 %v151, 127
      %v217 = vpop.permute.xlu0 %216
      %218 = vrot.lane.b32.xlu0 %v152, 127
      %v219 = vpop.permute.xlu0 %218
      %220 = vrot.lane.b32.xlu0 %v153, 127
      %v221 = vpop.permute.xlu0 %220
      %222 = vrot.lane.b32.xlu0 %v154, 127
      %v223 = vpop.permute.xlu0 %222
      %224 = vrot.lane.b32.xlu0 %v155, 127
      %v225 = vpop.permute.xlu0 %224
      %226 = vrot.lane.b32.xlu0 %v156, 127
      %v227 = vpop.permute.xlu0 %226
      %228 = vrot.lane.b32.xlu0 %v157, 127
      %v229 = vpop.permute.xlu0 %228
      %vm230 = vcmask 1039360
      %v231 = vsel %vm230, %v183, %v185
      %v232 = vsel %vm230, %v185, %v187
      %v233 = vsel %vm230, %v187, %v189
      %v234 = vsel %vm230, %v189, %v191
      %v235 = vsel %vm230, %v191, %v193
      %v236 = vsel %vm230, %v195, %v197
      %v237 = vsel %vm230, %v197, %v199
      %v238 = vsel %vm230, %v199, %v201
      %v239 = vsel %vm230, %v201, %v203
      %v240 = vsel %vm230, %v203, %v205
      %v241 = vsel %vm230, %v207, %v209
      %v242 = vsel %vm230, %v209, %v211
      %v243 = vsel %vm230, %v211, %v213
      %v244 = vsel %vm230, %v213, %v215
      %v245 = vsel %vm230, %v215, %v217
      %v246 = vsel %vm230, %v219, %v221
      %v247 = vsel %vm230, %v221, %v223
      %v248 = vsel %vm230, %v223, %v225
      %v249 = vsel %vm230, %v225, %v227
      %v250 = vsel %vm230, %v227, %v229
      %v275 = vadd.f32 %v94, %v231
      %v276 = vadd.f32 %v95, %v232
      %v277 = vadd.f32 %v96, %v233
      %v278 = vadd.f32 %v97, %v234
      %v279 = vadd.f32 %v98, %v235
      %v280 = vadd.f32 %v99, %v193
      %v281 = vadd.f32 %v100, %v236
      %v282 = vadd.f32 %v101, %v237
      %v283 = vadd.f32 %v102, %v238
      %v284 = vadd.f32 %v103, %v239
      %v285 = vadd.f32 %v104, %v240
      %v286 = vadd.f32 %v105, %v205
      %v287 = vadd.f32 %v106, %v241
      %v288 = vadd.f32 %v107, %v242
      %v289 = vadd.f32 %v108, %v243
      %v290 = vadd.f32 %v109, %v244
      %v291 = vadd.f32 %v110, %v245
      %v292 = vadd.f32 %v111, %v217
      %v293 = vadd.f32 %v112, %v246
      %v294 = vadd.f32 %v113, %v247
      %v295 = vadd.f32 %v114, %v248
      %v296 = vadd.f32 %v115, %v249
      %v297 = vadd.f32 %v116, %v250
      %v298 = vadd.f32 %v117, %v229
      %299 = vset.pattern.permute.xlu0 2
      %300 = vperm.xlu0 %299, %v57
      %v301 = vpop.permute.xlu0 %300
      %303 = vset.pattern.permute.xlu0 2
      %304 = vperm.xlu0 %303, %v58
      %v305 = vpop.permute.xlu0 %304
      %307 = vset.pattern.permute.xlu0 2
      %308 = vperm.xlu0 %307, %v59
      %v309 = vpop.permute.xlu0 %308
      %311 = vset.pattern.permute.xlu0 2
      %312 = vperm.xlu0 %311, %v60
      %v313 = vpop.permute.xlu0 %312
      %v315 = vmul.f32 %v301, %v82
      %v316 = vmul.f32 %v301, %v83
      %v317 = vmul.f32 %v301, %v84
      %v318 = vmul.f32 %v301, %v85
      %v319 = vmul.f32 %v301, %v86
      %v320 = vmul.f32 %v301, %v87
      %v321 = vmul.f32 %v305, %v82
      %v322 = vmul.f32 %v305, %v83
      %v323 = vmul.f32 %v305, %v84
      %v324 = vmul.f32 %v305, %v85
      %v325 = vmul.f32 %v305, %v86
      %v326 = vmul.f32 %v305, %v87
      %v327 = vmul.f32 %v309, %v82
      %v328 = vmul.f32 %v309, %v83
      %v329 = vmul.f32 %v309, %v84
      %v330 = vmul.f32 %v309, %v85
      %v331 = vmul.f32 %v309, %v86
      %v332 = vmul.f32 %v309, %v87
      %v333 = vmul.f32 %v313, %v82
      %v334 = vmul.f32 %v313, %v83
      %v335 = vmul.f32 %v313, %v84
      %v336 = vmul.f32 %v313, %v85
      %v337 = vmul.f32 %v313, %v86
      %v338 = vmul.f32 %v313, %v87
      %363 = vrot.lane.b32.xlu0 %v315, 126
      %v364 = vpop.permute.xlu0 %363
      %365 = vrot.lane.b32.xlu0 %v316, 126
      %v366 = vpop.permute.xlu0 %365
      %367 = vrot.lane.b32.xlu0 %v317, 126
      %v368 = vpop.permute.xlu0 %367
      %369 = vrot.lane.b32.xlu0 %v318, 126
      %v370 = vpop.permute.xlu0 %369
      %371 = vrot.lane.b32.xlu0 %v319, 126
      %v372 = vpop.permute.xlu0 %371
      %373 = vrot.lane.b32.xlu0 %v320, 126
      %v374 = vpop.permute.xlu0 %373
      %375 = vrot.lane.b32.xlu0 %v321, 126
      %v376 = vpop.permute.xlu0 %375
      %377 = vrot.lane.b32.xlu0 %v322, 126
      %v378 = vpop.permute.xlu0 %377
      %379 = vrot.lane.b32.xlu0 %v323, 126
      %v380 = vpop.permute.xlu0 %379
      %381 = vrot.lane.b32.xlu0 %v324, 126
      %v382 = vpop.permute.xlu0 %381
      %383 = vrot.lane.b32.xlu0 %v325, 126
      %v384 = vpop.permute.xlu0 %383
      %385 = vrot.lane.b32.xlu0 %v326, 126
      %v386 = vpop.permute.xlu0 %385
      %387 = vrot.lane.b32.xlu0 %v327, 126
      %v388 = vpop.permute.xlu0 %387
      %389 = vrot.lane.b32.xlu0 %v328, 126
      %v390 = vpop.permute.xlu0 %389
      %391 = vrot.lane.b32.xlu0 %v329, 126
      %v392 = vpop.permute.xlu0 %391
      %393 = vrot.lane.b32.xlu0 %v330, 126
      %v394 = vpop.permute.xlu0 %393
      %395 = vrot.lane.b32.xlu0 %v331, 126
      %v396 = vpop.permute.xlu0 %395
      %397 = vrot.lane.b32.xlu0 %v332, 126
      %v398 = vpop.permute.xlu0 %397
      %399 = vrot.lane.b32.xlu0 %v333, 126
      %v400 = vpop.permute.xlu0 %399
      %401 = vrot.lane.b32.xlu0 %v334, 126
      %v402 = vpop.permute.xlu0 %401
      %403 = vrot.lane.b32.xlu0 %v335, 126
      %v404 = vpop.permute.xlu0 %403
      %405 = vrot.lane.b32.xlu0 %v336, 126
      %v406 = vpop.permute.xlu0 %405
      %407 = vrot.lane.b32.xlu0 %v337, 126
      %v408 = vpop.permute.xlu0 %407
      %409 = vrot.lane.b32.xlu0 %v338, 126
      %v410 = vpop.permute.xlu0 %409
      %vm411 = vcmask 1031168
      %v412 = vsel %vm411, %v364, %v366
      %v413 = vsel %vm411, %v366, %v368
      %v414 = vsel %vm411, %v368, %v370
      %v415 = vsel %vm411, %v370, %v372
      %v416 = vsel %vm411, %v372, %v374
      %v417 = vsel %vm411, %v376, %v378
      %v418 = vsel %vm411, %v378, %v380
      %v419 = vsel %vm411, %v380, %v382
      %v420 = vsel %vm411, %v382, %v384
      %v421 = vsel %vm411, %v384, %v386
      %v422 = vsel %vm411, %v388, %v390
      %v423 = vsel %vm411, %v390, %v392
      %v424 = vsel %vm411, %v392, %v394
      %v425 = vsel %vm411, %v394, %v396
      %v426 = vsel %vm411, %v396, %v398
      %v427 = vsel %vm411, %v400, %v402
      %v428 = vsel %vm411, %v402, %v404
      %v429 = vsel %vm411, %v404, %v406
      %v430 = vsel %vm411, %v406, %v408
      %v431 = vsel %vm411, %v408, %v410
      %v456 = vadd.f32 %v275, %v412
      %v457 = vadd.f32 %v276, %v413
      %v458 = vadd.f32 %v277, %v414
      %v459 = vadd.f32 %v278, %v415
      %v460 = vadd.f32 %v279, %v416
      %v461 = vadd.f32 %v280, %v374
      %v462 = vadd.f32 %v281, %v417
      %v463 = vadd.f32 %v282, %v418
      %v464 = vadd.f32 %v283, %v419
      %v465 = vadd.f32 %v284, %v420
      %v466 = vadd.f32 %v285, %v421
      %v467 = vadd.f32 %v286, %v386
      %v468 = vadd.f32 %v287, %v422
      %v469 = vadd.f32 %v288, %v423
      %v470 = vadd.f32 %v289, %v424
      %v471 = vadd.f32 %v290, %v425
      %v472 = vadd.f32 %v291, %v426
      %v473 = vadd.f32 %v292, %v398
      %v474 = vadd.f32 %v293, %v427
      %v475 = vadd.f32 %v294, %v428
      %v476 = vadd.f32 %v295, %v429
      %v477 = vadd.f32 %v296, %v430
      %v478 = vadd.f32 %v297, %v431
      %v479 = vadd.f32 %v298, %v410
      %480 = vset.pattern.permute.xlu0 3
      %481 = vperm.xlu0 %480, %v57
      %v482 = vpop.permute.xlu0 %481
      %484 = vset.pattern.permute.xlu0 3
      %485 = vperm.xlu0 %484, %v58
      %v486 = vpop.permute.xlu0 %485
      %488 = vset.pattern.permute.xlu0 3
      %489 = vperm.xlu0 %488, %v59
      %v490 = vpop.permute.xlu0 %489
      %492 = vset.pattern.permute.xlu0 3
      %493 = vperm.xlu0 %492, %v60
      %v494 = vpop.permute.xlu0 %493
      %v496 = vmul.f32 %v482, %v82
      %v497 = vmul.f32 %v482, %v83
      %v498 = vmul.f32 %v482, %v84
      %v499 = vmul.f32 %v482, %v85
      %v500 = vmul.f32 %v482, %v86
      %v501 = vmul.f32 %v482, %v87
      %v502 = vmul.f32 %v486, %v82
      %v503 = vmul.f32 %v486, %v83
      %v504 = vmul.f32 %v486, %v84
      %v505 = vmul.f32 %v486, %v85
      %v506 = vmul.f32 %v486, %v86
      %v507 = vmul.f32 %v486, %v87
      %v508 = vmul.f32 %v490, %v82
      %v509 = vmul.f32 %v490, %v83
      %v510 = vmul.f32 %v490, %v84
      %v511 = vmul.f32 %v490, %v85
      %v512 = vmul.f32 %v490, %v86
      %v513 = vmul.f32 %v490, %v87
      %v514 = vmul.f32 %v494, %v82
      %v515 = vmul.f32 %v494, %v83
      %v516 = vmul.f32 %v494, %v84
      %v517 = vmul.f32 %v494, %v85
      %v518 = vmul.f32 %v494, %v86
      %v519 = vmul.f32 %v494, %v87
      %544 = vrot.lane.b32.xlu0 %v496, 100
      %v545 = vpop.permute.xlu0 %544
      %546 = vrot.lane.b32.xlu0 %v497, 100
      %v547 = vpop.permute.xlu0 %546
      %548 = vrot.lane.b32.xlu0 %v498, 100
      %v549 = vpop.permute.xlu0 %548
      %550 = vrot.lane.b32.xlu0 %v499, 100
      %v551 = vpop.permute.xlu0 %550
      %552 = vrot.lane.b32.xlu0 %v500, 100
      %v553 = vpop.permute.xlu0 %552
      %554 = vrot.lane.b32.xlu0 %v501, 100
      %v555 = vpop.permute.xlu0 %554
      %556 = vrot.lane.b32.xlu0 %v502, 100
      %v557 = vpop.permute.xlu0 %556
      %558 = vrot.lane.b32.xlu0 %v503, 100
      %v559 = vpop.permute.xlu0 %558
      %560 = vrot.lane.b32.xlu0 %v504, 100
      %v561 = vpop.permute.xlu0 %560
      %562 = vrot.lane.b32.xlu0 %v505, 100
      %v563 = vpop.permute.xlu0 %562
      %564 = vrot.lane.b32.xlu0 %v506, 100
      %v565 = vpop.permute.xlu0 %564
      %566 = vrot.lane.b32.xlu0 %v507, 100
      %v567 = vpop.permute.xlu0 %566
      %568 = vrot.lane.b32.xlu0 %v508, 100
      %v569 = vpop.permute.xlu0 %568
      %570 = vrot.lane.b32.xlu0 %v509, 100
      %v571 = vpop.permute.xlu0 %570
      %572 = vrot.lane.b32.xlu0 %v510, 100
      %v573 = vpop.permute.xlu0 %572
      %574 = vrot.lane.b32.xlu0 %v511, 100
      %v575 = vpop.permute.xlu0 %574
      %576 = vrot.lane.b32.xlu0 %v512, 100
      %v577 = vpop.permute.xlu0 %576
      %578 = vrot.lane.b32.xlu0 %v513, 100
      %v579 = vpop.permute.xlu0 %578
      %580 = vrot.lane.b32.xlu0 %v514, 100
      %v581 = vpop.permute.xlu0 %580
      %582 = vrot.lane.b32.xlu0 %v515, 100
      %v583 = vpop.permute.xlu0 %582
      %584 = vrot.lane.b32.xlu0 %v516, 100
      %v585 = vpop.permute.xlu0 %584
      %586 = vrot.lane.b32.xlu0 %v517, 100
      %v587 = vpop.permute.xlu0 %586
      %588 = vrot.lane.b32.xlu0 %v518, 100
      %v589 = vpop.permute.xlu0 %588
      %590 = vrot.lane.b32.xlu0 %v519, 100
      %v591 = vpop.permute.xlu0 %590
      %vm592 = vcmask 818176
      %v593 = vsel %vm592, %v545, %v547
      %v594 = vsel %vm592, %v547, %v549
      %v595 = vsel %vm592, %v549, %v551
      %v596 = vsel %vm592, %v551, %v553
      %v597 = vsel %vm592, %v553, %v555
      %v598 = vsel %vm592, %v557, %v559
      %v599 = vsel %vm592, %v559, %v561
      %v600 = vsel %vm592, %v561, %v563
      %v601 = vsel %vm592, %v563, %v565
      %v602 = vsel %vm592, %v565, %v567
      %v603 = vsel %vm592, %v569, %v571
      %v604 = vsel %vm592, %v571, %v573
      %v605 = vsel %vm592, %v573, %v575
      %v606 = vsel %vm592, %v575, %v577
      %v607 = vsel %vm592, %v577, %v579
      %v608 = vsel %vm592, %v581, %v583
      %v609 = vsel %vm592, %v583, %v585
      %v610 = vsel %vm592, %v585, %v587
      %v611 = vsel %vm592, %v587, %v589
      %v612 = vsel %vm592, %v589, %v591
      %v637 = vadd.f32 %v456, %v593
      %v638 = vadd.f32 %v457, %v594
      %v639 = vadd.f32 %v458, %v595
      %v640 = vadd.f32 %v459, %v596
      %v641 = vadd.f32 %v460, %v597
      %v642 = vadd.f32 %v461, %v555
      %v643 = vadd.f32 %v462, %v598
      %v644 = vadd.f32 %v463, %v599
      %v645 = vadd.f32 %v464, %v600
      %v646 = vadd.f32 %v465, %v601
      %v647 = vadd.f32 %v466, %v602
      %v648 = vadd.f32 %v467, %v567
      %v649 = vadd.f32 %v468, %v603
      %v650 = vadd.f32 %v469, %v604
      %v651 = vadd.f32 %v470, %v605
      %v652 = vadd.f32 %v471, %v606
      %v653 = vadd.f32 %v472, %v607
      %v654 = vadd.f32 %v473, %v579
      %v655 = vadd.f32 %v474, %v608
      %v656 = vadd.f32 %v475, %v609
      %v657 = vadd.f32 %v476, %v610
      %v658 = vadd.f32 %v477, %v611
      %v659 = vadd.f32 %v478, %v612
      %v660 = vadd.f32 %v479, %v591
      %661 = vset.pattern.permute.xlu0 4
      %662 = vperm.xlu0 %661, %v57
      %v663 = vpop.permute.xlu0 %662
      %665 = vset.pattern.permute.xlu0 4
      %666 = vperm.xlu0 %665, %v58
      %v667 = vpop.permute.xlu0 %666
      %669 = vset.pattern.permute.xlu0 4
      %670 = vperm.xlu0 %669, %v59
      %v671 = vpop.permute.xlu0 %670
      %673 = vset.pattern.permute.xlu0 4
      %674 = vperm.xlu0 %673, %v60
      %v675 = vpop.permute.xlu0 %674
      %v677 = vmul.f32 %v663, %v82
      %v678 = vmul.f32 %v663, %v83
      %v679 = vmul.f32 %v663, %v84
      %v680 = vmul.f32 %v663, %v85
      %v681 = vmul.f32 %v663, %v86
      %v682 = vmul.f32 %v663, %v87
      %v683 = vmul.f32 %v667, %v82
      %v684 = vmul.f32 %v667, %v83
      %v685 = vmul.f32 %v667, %v84
      %v686 = vmul.f32 %v667, %v85
      %v687 = vmul.f32 %v667, %v86
      %v688 = vmul.f32 %v667, %v87
      %v689 = vmul.f32 %v671, %v82
      %v690 = vmul.f32 %v671, %v83
      %v691 = vmul.f32 %v671, %v84
      %v692 = vmul.f32 %v671, %v85
      %v693 = vmul.f32 %v671, %v86
      %v694 = vmul.f32 %v671, %v87
      %v695 = vmul.f32 %v675, %v82
      %v696 = vmul.f32 %v675, %v83
      %v697 = vmul.f32 %v675, %v84
      %v698 = vmul.f32 %v675, %v85
      %v699 = vmul.f32 %v675, %v86
      %v700 = vmul.f32 %v675, %v87
      %725 = vrot.lane.b32.xlu0 %v677, 99
      %v726 = vpop.permute.xlu0 %725
      %727 = vrot.lane.b32.xlu0 %v678, 99
      %v728 = vpop.permute.xlu0 %727
      %729 = vrot.lane.b32.xlu0 %v679, 99
      %v730 = vpop.permute.xlu0 %729
      %731 = vrot.lane.b32.xlu0 %v680, 99
      %v732 = vpop.permute.xlu0 %731
      %733 = vrot.lane.b32.xlu0 %v681, 99
      %v734 = vpop.permute.xlu0 %733
      %735 = vrot.lane.b32.xlu0 %v682, 99
      %v736 = vpop.permute.xlu0 %735
      %737 = vrot.lane.b32.xlu0 %v683, 99
      %v738 = vpop.permute.xlu0 %737
      %739 = vrot.lane.b32.xlu0 %v684, 99
      %v740 = vpop.permute.xlu0 %739
      %741 = vrot.lane.b32.xlu0 %v685, 99
      %v742 = vpop.permute.xlu0 %741
      %743 = vrot.lane.b32.xlu0 %v686, 99
      %v744 = vpop.permute.xlu0 %743
      %745 = vrot.lane.b32.xlu0 %v687, 99
      %v746 = vpop.permute.xlu0 %745
      %747 = vrot.lane.b32.xlu0 %v688, 99
      %v748 = vpop.permute.xlu0 %747
      %749 = vrot.lane.b32.xlu0 %v689, 99
      %v750 = vpop.permute.xlu0 %749
      %751 = vrot.lane.b32.xlu0 %v690, 99
      %v752 = vpop.permute.xlu0 %751
      %753 = vrot.lane.b32.xlu0 %v691, 99
      %v754 = vpop.permute.xlu0 %753
      %755 = vrot.lane.b32.xlu0 %v692, 99
      %v756 = vpop.permute.xlu0 %755
      %757 = vrot.lane.b32.xlu0 %v693, 99
      %v758 = vpop.permute.xlu0 %757
      %759 = vrot.lane.b32.xlu0 %v694, 99
      %v760 = vpop.permute.xlu0 %759
      %761 = vrot.lane.b32.xlu0 %v695, 99
      %v762 = vpop.permute.xlu0 %761
      %763 = vrot.lane.b32.xlu0 %v696, 99
      %v764 = vpop.permute.xlu0 %763
      %765 = vrot.lane.b32.xlu0 %v697, 99
      %v766 = vpop.permute.xlu0 %765
      %767 = vrot.lane.b32.xlu0 %v698, 99
      %v768 = vpop.permute.xlu0 %767
      %769 = vrot.lane.b32.xlu0 %v699, 99
      %v770 = vpop.permute.xlu0 %769
      %771 = vrot.lane.b32.xlu0 %v700, 99
      %v772 = vpop.permute.xlu0 %771
      %vm773 = vcmask 809984
      %v774 = vsel %vm773, %v726, %v728
      %v775 = vsel %vm773, %v728, %v730
      %v776 = vsel %vm773, %v730, %v732
      %v777 = vsel %vm773, %v732, %v734
      %v778 = vsel %vm773, %v734, %v736
      %v779 = vsel %vm773, %v738, %v740
      %v780 = vsel %vm773, %v740, %v742
      %v781 = vsel %vm773, %v742, %v744
      %v782 = vsel %vm773, %v744, %v746
      %v783 = vsel %vm773, %v746, %v748
      %v784 = vsel %vm773, %v750, %v752
      %v785 = vsel %vm773, %v752, %v754
      %v786 = vsel %vm773, %v754, %v756
      %v787 = vsel %vm773, %v756, %v758
      %v788 = vsel %vm773, %v758, %v760
      %v789 = vsel %vm773, %v762, %v764
      %v790 = vsel %vm773, %v764, %v766
      %v791 = vsel %vm773, %v766, %v768
      %v792 = vsel %vm773, %v768, %v770
      %v793 = vsel %vm773, %v770, %v772
      %v818 = vadd.f32 %v637, %v774
      %v819 = vadd.f32 %v638, %v775
      %v820 = vadd.f32 %v639, %v776
      %v821 = vadd.f32 %v640, %v777
      %v822 = vadd.f32 %v641, %v778
      %v823 = vadd.f32 %v642, %v736
      %v824 = vadd.f32 %v643, %v779
      %v825 = vadd.f32 %v644, %v780
      %v826 = vadd.f32 %v645, %v781
      %v827 = vadd.f32 %v646, %v782
      %v828 = vadd.f32 %v647, %v783
      %v829 = vadd.f32 %v648, %v748
      %v830 = vadd.f32 %v649, %v784
      %v831 = vadd.f32 %v650, %v785
      %v832 = vadd.f32 %v651, %v786
      %v833 = vadd.f32 %v652, %v787
      %v834 = vadd.f32 %v653, %v788
      %v835 = vadd.f32 %v654, %v760
      %v836 = vadd.f32 %v655, %v789
      %v837 = vadd.f32 %v656, %v790
      %v838 = vadd.f32 %v657, %v791
      %v839 = vadd.f32 %v658, %v792
      %v840 = vadd.f32 %v659, %v793
      %v841 = vadd.f32 %v660, %v772
      %842 = vset.pattern.permute.xlu0 5
      %843 = vperm.xlu0 %842, %v57
      %v844 = vpop.permute.xlu0 %843
      %846 = vset.pattern.permute.xlu0 5
      %847 = vperm.xlu0 %846, %v58
      %v848 = vpop.permute.xlu0 %847
      %850 = vset.pattern.permute.xlu0 5
      %851 = vperm.xlu0 %850, %v59
      %v852 = vpop.permute.xlu0 %851
      %854 = vset.pattern.permute.xlu0 5
      %855 = vperm.xlu0 %854, %v60
      %v856 = vpop.permute.xlu0 %855
      %v858 = vmul.f32 %v844, %v82
      %v859 = vmul.f32 %v844, %v83
      %v860 = vmul.f32 %v844, %v84
      %v861 = vmul.f32 %v844, %v85
      %v862 = vmul.f32 %v844, %v86
      %v863 = vmul.f32 %v844, %v87
      %v864 = vmul.f32 %v848, %v82
      %v865 = vmul.f32 %v848, %v83
      %v866 = vmul.f32 %v848, %v84
      %v867 = vmul.f32 %v848, %v85
      %v868 = vmul.f32 %v848, %v86
      %v869 = vmul.f32 %v848, %v87
      %v870 = vmul.f32 %v852, %v82
      %v871 = vmul.f32 %v852, %v83
      %v872 = vmul.f32 %v852, %v84
      %v873 = vmul.f32 %v852, %v85
      %v874 = vmul.f32 %v852, %v86
      %v875 = vmul.f32 %v852, %v87
      %v876 = vmul.f32 %v856, %v82
      %v877 = vmul.f32 %v856, %v83
      %v878 = vmul.f32 %v856, %v84
      %v879 = vmul.f32 %v856, %v85
      %v880 = vmul.f32 %v856, %v86
      %v881 = vmul.f32 %v856, %v87
      %906 = vrot.lane.b32.xlu0 %v858, 98
      %v907 = vpop.permute.xlu0 %906
      %908 = vrot.lane.b32.xlu0 %v859, 98
      %v909 = vpop.permute.xlu0 %908
      %910 = vrot.lane.b32.xlu0 %v860, 98
      %v911 = vpop.permute.xlu0 %910
      %912 = vrot.lane.b32.xlu0 %v861, 98
      %v913 = vpop.permute.xlu0 %912
      %914 = vrot.lane.b32.xlu0 %v862, 98
      %v915 = vpop.permute.xlu0 %914
      %916 = vrot.lane.b32.xlu0 %v863, 98
      %v917 = vpop.permute.xlu0 %916
      %918 = vrot.lane.b32.xlu0 %v864, 98
      %v919 = vpop.permute.xlu0 %918
      %920 = vrot.lane.b32.xlu0 %v865, 98
      %v921 = vpop.permute.xlu0 %920
      %922 = vrot.lane.b32.xlu0 %v866, 98
      %v923 = vpop.permute.xlu0 %922
      %924 = vrot.lane.b32.xlu0 %v867, 98
      %v925 = vpop.permute.xlu0 %924
      %926 = vrot.lane.b32.xlu0 %v868, 98
      %v927 = vpop.permute.xlu0 %926
      %928 = vrot.lane.b32.xlu0 %v869, 98
      %v929 = vpop.permute.xlu0 %928
      %930 = vrot.lane.b32.xlu0 %v870, 98
      %v931 = vpop.permute.xlu0 %930
      %932 = vrot.lane.b32.xlu0 %v871, 98
      %v933 = vpop.permute.xlu0 %932
      %934 = vrot.lane.b32.xlu0 %v872, 98
      %v935 = vpop.permute.xlu0 %934
      %936 = vrot.lane.b32.xlu0 %v873, 98
      %v937 = vpop.permute.xlu0 %936
      %938 = vrot.lane.b32.xlu0 %v874, 98
      %v939 = vpop.permute.xlu0 %938
      %940 = vrot.lane.b32.xlu0 %v875, 98
      %v941 = vpop.permute.xlu0 %940
      %942 = vrot.lane.b32.xlu0 %v876, 98
      %v943 = vpop.permute.xlu0 %942
      %944 = vrot.lane.b32.xlu0 %v877, 98
      %v945 = vpop.permute.xlu0 %944
      %946 = vrot.lane.b32.xlu0 %v878, 98
      %v947 = vpop.permute.xlu0 %946
      %948 = vrot.lane.b32.xlu0 %v879, 98
      %v949 = vpop.permute.xlu0 %948
      %950 = vrot.lane.b32.xlu0 %v880, 98
      %v951 = vpop.permute.xlu0 %950
      %952 = vrot.lane.b32.xlu0 %v881, 98
      %v953 = vpop.permute.xlu0 %952
      %vm954 = vcmask 801792
      %v955 = vsel %vm954, %v907, %v909
      %v956 = vsel %vm954, %v909, %v911
      %v957 = vsel %vm954, %v911, %v913
      %v958 = vsel %vm954, %v913, %v915
      %v959 = vsel %vm954, %v915, %v917
      %v960 = vsel %vm954, %v919, %v921
      %v961 = vsel %vm954, %v921, %v923
      %v962 = vsel %vm954, %v923, %v925
      %v963 = vsel %vm954, %v925, %v927
      %v964 = vsel %vm954, %v927, %v929
      %v965 = vsel %vm954, %v931, %v933
      %v966 = vsel %vm954, %v933, %v935
      %v967 = vsel %vm954, %v935, %v937
      %v968 = vsel %vm954, %v937, %v939
      %v969 = vsel %vm954, %v939, %v941
      %v970 = vsel %vm954, %v943, %v945
      %v971 = vsel %vm954, %v945, %v947
      %v972 = vsel %vm954, %v947, %v949
      %v973 = vsel %vm954, %v949, %v951
      %v974 = vsel %vm954, %v951, %v953
      %v999 = vadd.f32 %v818, %v955
      %v1000 = vadd.f32 %v819, %v956
      %v1001 = vadd.f32 %v820, %v957
      %v1002 = vadd.f32 %v821, %v958
      %v1003 = vadd.f32 %v822, %v959
      %v1004 = vadd.f32 %v823, %v917
      %v1005 = vadd.f32 %v824, %v960
      %v1006 = vadd.f32 %v825, %v961
      %v1007 = vadd.f32 %v826, %v962
      %v1008 = vadd.f32 %v827, %v963
      %v1009 = vadd.f32 %v828, %v964
      %v1010 = vadd.f32 %v829, %v929
      %v1011 = vadd.f32 %v830, %v965
      %v1012 = vadd.f32 %v831, %v966
      %v1013 = vadd.f32 %v832, %v967
      %v1014 = vadd.f32 %v833, %v968
      %v1015 = vadd.f32 %v834, %v969
      %v1016 = vadd.f32 %v835, %v941
      %v1017 = vadd.f32 %v836, %v970
      %v1018 = vadd.f32 %v837, %v971
      %v1019 = vadd.f32 %v838, %v972
      %v1020 = vadd.f32 %v839, %v973
      %v1021 = vadd.f32 %v840, %v974
      %v1022 = vadd.f32 %v841, %v953
      %1023 = vset.pattern.permute.xlu0 6
      %1024 = vperm.xlu0 %1023, %v57
      %v1025 = vpop.permute.xlu0 %1024
      %1027 = vset.pattern.permute.xlu0 6
      %1028 = vperm.xlu0 %1027, %v58
      %v1029 = vpop.permute.xlu0 %1028
      %1031 = vset.pattern.permute.xlu0 6
      %1032 = vperm.xlu0 %1031, %v59
      %v1033 = vpop.permute.xlu0 %1032
      %1035 = vset.pattern.permute.xlu0 6
      %1036 = vperm.xlu0 %1035, %v60
      %v1037 = vpop.permute.xlu0 %1036
      %v1039 = vperm.slane %v56, 6
      %v1041 = vmul.f32 %v1025, %v82
      %v1042 = vmul.f32 %v1025, %v83
      %v1043 = vmul.f32 %v1025, %v84
      %v1044 = vmul.f32 %v1025, %v85
      %v1045 = vmul.f32 %v1025, %v86
      %v1046 = vmul.f32 %v1025, %v87
      %v1047 = vmul.f32 %v1025, %v1039
      %v1048 = vmul.f32 %v1029, %v82
      %v1049 = vmul.f32 %v1029, %v83
      %v1050 = vmul.f32 %v1029, %v84
      %v1051 = vmul.f32 %v1029, %v85
      %v1052 = vmul.f32 %v1029, %v86
      %v1053 = vmul.f32 %v1029, %v87
      %v1054 = vmul.f32 %v1029, %v1039
      %v1055 = vmul.f32 %v1033, %v82
      %v1056 = vmul.f32 %v1033, %v83
      %v1057 = vmul.f32 %v1033, %v84
      %v1058 = vmul.f32 %v1033, %v85
      %v1059 = vmul.f32 %v1033, %v86
      %v1060 = vmul.f32 %v1033, %v87
      %v1061 = vmul.f32 %v1033, %v1039
      %v1062 = vmul.f32 %v1037, %v82
      %v1063 = vmul.f32 %v1037, %v83
      %v1064 = vmul.f32 %v1037, %v84
      %v1065 = vmul.f32 %v1037, %v85
      %v1066 = vmul.f32 %v1037, %v86
      %v1067 = vmul.f32 %v1037, %v87
      %v1068 = vmul.f32 %v1037, %v1039
      %1097 = vrot.lane.b32.xlu0 %v1041, 72
      %v1098 = vpop.permute.xlu0 %1097
      %1099 = vrot.lane.b32.xlu0 %v1042, 72
      %v1100 = vpop.permute.xlu0 %1099
      %1101 = vrot.lane.b32.xlu0 %v1043, 72
      %v1102 = vpop.permute.xlu0 %1101
      %1103 = vrot.lane.b32.xlu0 %v1044, 72
      %v1104 = vpop.permute.xlu0 %1103
      %1105 = vrot.lane.b32.xlu0 %v1045, 72
      %v1106 = vpop.permute.xlu0 %1105
      %1107 = vrot.lane.b32.xlu0 %v1046, 72
      %v1108 = vpop.permute.xlu0 %1107
      %1109 = vrot.lane.b32.xlu0 %v1047, 72
      %v1110 = vpop.permute.xlu0 %1109
      %1111 = vrot.lane.b32.xlu0 %v1048, 72
      %v1112 = vpop.permute.xlu0 %1111
      %1113 = vrot.lane.b32.xlu0 %v1049, 72
      %v1114 = vpop.permute.xlu0 %1113
      %1115 = vrot.lane.b32.xlu0 %v1050, 72
      %v1116 = vpop.permute.xlu0 %1115
      %1117 = vrot.lane.b32.xlu0 %v1051, 72
      %v1118 = vpop.permute.xlu0 %1117
      %1119 = vrot.lane.b32.xlu0 %v1052, 72
      %v1120 = vpop.permute.xlu0 %1119
      %1121 = vrot.lane.b32.xlu0 %v1053, 72
      %v1122 = vpop.permute.xlu0 %1121
      %1123 = vrot.lane.b32.xlu0 %v1054, 72
      %v1124 = vpop.permute.xlu0 %1123
      %1125 = vrot.lane.b32.xlu0 %v1055, 72
      %v1126 = vpop.permute.xlu0 %1125
      %1127 = vrot.lane.b32.xlu0 %v1056, 72
      %v1128 = vpop.permute.xlu0 %1127
      %1129 = vrot.lane.b32.xlu0 %v1057, 72
      %v1130 = vpop.permute.xlu0 %1129
      %1131 = vrot.lane.b32.xlu0 %v1058, 72
      %v1132 = vpop.permute.xlu0 %1131
      %1133 = vrot.lane.b32.xlu0 %v1059, 72
      %v1134 = vpop.permute.xlu0 %1133
      %1135 = vrot.lane.b32.xlu0 %v1060, 72
      %v1136 = vpop.permute.xlu0 %1135
      %1137 = vrot.lane.b32.xlu0 %v1061, 72
      %v1138 = vpop.permute.xlu0 %1137
      %1139 = vrot.lane.b32.xlu0 %v1062, 72
      %v1140 = vpop.permute.xlu0 %1139
      %1141 = vrot.lane.b32.xlu0 %v1063, 72
      %v1142 = vpop.permute.xlu0 %1141
      %1143 = vrot.lane.b32.xlu0 %v1064, 72
      %v1144 = vpop.permute.xlu0 %1143
      %1145 = vrot.lane.b32.xlu0 %v1065, 72
      %v1146 = vpop.permute.xlu0 %1145
      %1147 = vrot.lane.b32.xlu0 %v1066, 72
      %v1148 = vpop.permute.xlu0 %1147
      %1149 = vrot.lane.b32.xlu0 %v1067, 72
      %v1150 = vpop.permute.xlu0 %1149
      %1151 = vrot.lane.b32.xlu0 %v1068, 72
      %v1152 = vpop.permute.xlu0 %1151
      %vm1153 = vcmask 588800
      %v1154 = vsel %vm1153, %v1098, %v1100
      %v1155 = vsel %vm1153, %v1100, %v1102
      %v1156 = vsel %vm1153, %v1102, %v1104
      %v1157 = vsel %vm1153, %v1104, %v1106
      %v1158 = vsel %vm1153, %v1106, %v1108
      %v1159 = vsel %vm1153, %v1108, %v1110
      %v1160 = vsel %vm1153, %v1112, %v1114
      %v1161 = vsel %vm1153, %v1114, %v1116
      %v1162 = vsel %vm1153, %v1116, %v1118
      %v1163 = vsel %vm1153, %v1118, %v1120
      %v1164 = vsel %vm1153, %v1120, %v1122
      %v1165 = vsel %vm1153, %v1122, %v1124
      %v1166 = vsel %vm1153, %v1126, %v1128
      %v1167 = vsel %vm1153, %v1128, %v1130
      %v1168 = vsel %vm1153, %v1130, %v1132
      %v1169 = vsel %vm1153, %v1132, %v1134
      %v1170 = vsel %vm1153, %v1134, %v1136
      %v1171 = vsel %vm1153, %v1136, %v1138
      %v1172 = vsel %vm1153, %v1140, %v1142
      %v1173 = vsel %vm1153, %v1142, %v1144
      %v1174 = vsel %vm1153, %v1144, %v1146
      %v1175 = vsel %vm1153, %v1146, %v1148
      %v1176 = vsel %vm1153, %v1148, %v1150
      %v1177 = vsel %vm1153, %v1150, %v1152
      %v1202 = vadd.f32 %v999, %v1154
      %v1203 = vadd.f32 %v1000, %v1155
      %v1204 = vadd.f32 %v1001, %v1156
      %v1205 = vadd.f32 %v1002, %v1157
      %v1206 = vadd.f32 %v1003, %v1158
      %v1207 = vadd.f32 %v1004, %v1159
      %v1208 = vadd.f32 %v1005, %v1160
      %v1209 = vadd.f32 %v1006, %v1161
      %v1210 = vadd.f32 %v1007, %v1162
      %v1211 = vadd.f32 %v1008, %v1163
      %v1212 = vadd.f32 %v1009, %v1164
      %v1213 = vadd.f32 %v1010, %v1165
      %v1214 = vadd.f32 %v1011, %v1166
      %v1215 = vadd.f32 %v1012, %v1167
      %v1216 = vadd.f32 %v1013, %v1168
      %v1217 = vadd.f32 %v1014, %v1169
      %v1218 = vadd.f32 %v1015, %v1170
      %v1219 = vadd.f32 %v1016, %v1171
      %v1220 = vadd.f32 %v1017, %v1172
      %v1221 = vadd.f32 %v1018, %v1173
      %v1222 = vadd.f32 %v1019, %v1174
      %v1223 = vadd.f32 %v1020, %v1175
      %v1224 = vadd.f32 %v1021, %v1176
      %v1225 = vadd.f32 %v1022, %v1177
      %1226 = vset.pattern.permute.xlu0 7
      %1227 = vperm.xlu0 %1226, %v57
      %v1228 = vpop.permute.xlu0 %1227
      %1230 = vset.pattern.permute.xlu0 7
      %1231 = vperm.xlu0 %1230, %v58
      %v1232 = vpop.permute.xlu0 %1231
      %1234 = vset.pattern.permute.xlu0 7
      %1235 = vperm.xlu0 %1234, %v59
      %v1236 = vpop.permute.xlu0 %1235
      %1238 = vset.pattern.permute.xlu0 7
      %1239 = vperm.xlu0 %1238, %v60
      %v1240 = vpop.permute.xlu0 %1239
      %v1242 = vmul.f32 %v1228, %v82
      %v1243 = vmul.f32 %v1228, %v83
      %v1244 = vmul.f32 %v1228, %v84
      %v1245 = vmul.f32 %v1228, %v85
      %v1246 = vmul.f32 %v1228, %v86
      %v1247 = vmul.f32 %v1228, %v87
      %v1248 = vmul.f32 %v1228, %v1039
      %v1249 = vmul.f32 %v1232, %v82
      %v1250 = vmul.f32 %v1232, %v83
      %v1251 = vmul.f32 %v1232, %v84
      %v1252 = vmul.f32 %v1232, %v85
      %v1253 = vmul.f32 %v1232, %v86
      %v1254 = vmul.f32 %v1232, %v87
      %v1255 = vmul.f32 %v1232, %v1039
      %v1256 = vmul.f32 %v1236, %v82
      %v1257 = vmul.f32 %v1236, %v83
      %v1258 = vmul.f32 %v1236, %v84
      %v1259 = vmul.f32 %v1236, %v85
      %v1260 = vmul.f32 %v1236, %v86
      %v1261 = vmul.f32 %v1236, %v87
      %v1262 = vmul.f32 %v1236, %v1039
      %v1263 = vmul.f32 %v1240, %v82
      %v1264 = vmul.f32 %v1240, %v83
      %v1265 = vmul.f32 %v1240, %v84
      %v1266 = vmul.f32 %v1240, %v85
      %v1267 = vmul.f32 %v1240, %v86
      %v1268 = vmul.f32 %v1240, %v87
      %v1269 = vmul.f32 %v1240, %v1039
      %1298 = vrot.lane.b32.xlu0 %v1242, 71
      %v1299 = vpop.permute.xlu0 %1298
      %1300 = vrot.lane.b32.xlu0 %v1243, 71
      %v1301 = vpop.permute.xlu0 %1300
      %1302 = vrot.lane.b32.xlu0 %v1244, 71
      %v1303 = vpop.permute.xlu0 %1302
      %1304 = vrot.lane.b32.xlu0 %v1245, 71
      %v1305 = vpop.permute.xlu0 %1304
      %1306 = vrot.lane.b32.xlu0 %v1246, 71
      %v1307 = vpop.permute.xlu0 %1306
      %1308 = vrot.lane.b32.xlu0 %v1247, 71
      %v1309 = vpop.permute.xlu0 %1308
      %1310 = vrot.lane.b32.xlu0 %v1248, 71
      %v1311 = vpop.permute.xlu0 %1310
      %1312 = vrot.lane.b32.xlu0 %v1249, 71
      %v1313 = vpop.permute.xlu0 %1312
      %1314 = vrot.lane.b32.xlu0 %v1250, 71
      %v1315 = vpop.permute.xlu0 %1314
      %1316 = vrot.lane.b32.xlu0 %v1251, 71
      %v1317 = vpop.permute.xlu0 %1316
      %1318 = vrot.lane.b32.xlu0 %v1252, 71
      %v1319 = vpop.permute.xlu0 %1318
      %1320 = vrot.lane.b32.xlu0 %v1253, 71
      %v1321 = vpop.permute.xlu0 %1320
      %1322 = vrot.lane.b32.xlu0 %v1254, 71
      %v1323 = vpop.permute.xlu0 %1322
      %1324 = vrot.lane.b32.xlu0 %v1255, 71
      %v1325 = vpop.permute.xlu0 %1324
      %1326 = vrot.lane.b32.xlu0 %v1256, 71
      %v1327 = vpop.permute.xlu0 %1326
      %1328 = vrot.lane.b32.xlu0 %v1257, 71
      %v1329 = vpop.permute.xlu0 %1328
      %1330 = vrot.lane.b32.xlu0 %v1258, 71
      %v1331 = vpop.permute.xlu0 %1330
      %1332 = vrot.lane.b32.xlu0 %v1259, 71
      %v1333 = vpop.permute.xlu0 %1332
      %1334 = vrot.lane.b32.xlu0 %v1260, 71
      %v1335 = vpop.permute.xlu0 %1334
      %1336 = vrot.lane.b32.xlu0 %v1261, 71
      %v1337 = vpop.permute.xlu0 %1336
      %1338 = vrot.lane.b32.xlu0 %v1262, 71
      %v1339 = vpop.permute.xlu0 %1338
      %1340 = vrot.lane.b32.xlu0 %v1263, 71
      %v1341 = vpop.permute.xlu0 %1340
      %1342 = vrot.lane.b32.xlu0 %v1264, 71
      %v1343 = vpop.permute.xlu0 %1342
      %1344 = vrot.lane.b32.xlu0 %v1265, 71
      %v1345 = vpop.permute.xlu0 %1344
      %1346 = vrot.lane.b32.xlu0 %v1266, 71
      %v1347 = vpop.permute.xlu0 %1346
      %1348 = vrot.lane.b32.xlu0 %v1267, 71
      %v1349 = vpop.permute.xlu0 %1348
      %1350 = vrot.lane.b32.xlu0 %v1268, 71
      %v1351 = vpop.permute.xlu0 %1350
      %1352 = vrot.lane.b32.xlu0 %v1269, 71
      %v1353 = vpop.permute.xlu0 %1352
      %vm1354 = vcmask 580608
      %v1355 = vsel %vm1354, %v1299, %v1301
      %v1356 = vsel %vm1354, %v1301, %v1303
      %v1357 = vsel %vm1354, %v1303, %v1305
      %v1358 = vsel %vm1354, %v1305, %v1307
      %v1359 = vsel %vm1354, %v1307, %v1309
      %v1360 = vsel %vm1354, %v1309, %v1311
      %v1361 = vsel %vm1354, %v1313, %v1315
      %v1362 = vsel %vm1354, %v1315, %v1317
      %v1363 = vsel %vm1354, %v1317, %v1319
      %v1364 = vsel %vm1354, %v1319, %v1321
      %v1365 = vsel %vm1354, %v1321, %v1323
      %v1366 = vsel %vm1354, %v1323, %v1325
      %v1367 = vsel %vm1354, %v1327, %v1329
      %v1368 = vsel %vm1354, %v1329, %v1331
      %v1369 = vsel %vm1354, %v1331, %v1333
      %v1370 = vsel %vm1354, %v1333, %v1335
      %v1371 = vsel %vm1354, %v1335, %v1337
      %v1372 = vsel %vm1354, %v1337, %v1339
      %v1373 = vsel %vm1354, %v1341, %v1343
      %v1374 = vsel %vm1354, %v1343, %v1345
      %v1375 = vsel %vm1354, %v1345, %v1347
      %v1376 = vsel %vm1354, %v1347, %v1349
      %v1377 = vsel %vm1354, %v1349, %v1351
      %v1378 = vsel %vm1354, %v1351, %v1353
      %v1403 = vadd.f32 %v1202, %v1355
      %v1404 = vadd.f32 %v1203, %v1356
      %v1405 = vadd.f32 %v1204, %v1357
      %v1406 = vadd.f32 %v1205, %v1358
      %v1407 = vadd.f32 %v1206, %v1359
      %v1408 = vadd.f32 %v1207, %v1360
      %v1409 = vadd.f32 %v1208, %v1361
      %v1410 = vadd.f32 %v1209, %v1362
      %v1411 = vadd.f32 %v1210, %v1363
      %v1412 = vadd.f32 %v1211, %v1364
      %v1413 = vadd.f32 %v1212, %v1365
      %v1414 = vadd.f32 %v1213, %v1366
      %v1415 = vadd.f32 %v1214, %v1367
      %v1416 = vadd.f32 %v1215, %v1368
      %v1417 = vadd.f32 %v1216, %v1369
      %v1418 = vadd.f32 %v1217, %v1370
      %v1419 = vadd.f32 %v1218, %v1371
      %v1420 = vadd.f32 %v1219, %v1372
      %v1421 = vadd.f32 %v1220, %v1373
      %v1422 = vadd.f32 %v1221, %v1374
      %v1423 = vadd.f32 %v1222, %v1375
      %v1424 = vadd.f32 %v1223, %v1376
      %v1425 = vadd.f32 %v1224, %v1377
      %v1426 = vadd.f32 %v1225, %v1378
      %1427 = vset.pattern.permute.xlu0 8
      %1428 = vperm.xlu0 %1427, %v57
      %v1429 = vpop.permute.xlu0 %1428
      %1431 = vset.pattern.permute.xlu0 8
      %1432 = vperm.xlu0 %1431, %v58
      %v1433 = vpop.permute.xlu0 %1432
      %1435 = vset.pattern.permute.xlu0 8
      %1436 = vperm.xlu0 %1435, %v59
      %v1437 = vpop.permute.xlu0 %1436
      %1439 = vset.pattern.permute.xlu0 8
      %1440 = vperm.xlu0 %1439, %v60
      %v1441 = vpop.permute.xlu0 %1440
      %v1443 = vmul.f32 %v1429, %v82
      %v1444 = vmul.f32 %v1429, %v83
      %v1445 = vmul.f32 %v1429, %v84
      %v1446 = vmul.f32 %v1429, %v85
      %v1447 = vmul.f32 %v1429, %v86
      %v1448 = vmul.f32 %v1429, %v87
      %v1449 = vmul.f32 %v1429, %v1039
      %v1450 = vmul.f32 %v1433, %v82
      %v1451 = vmul.f32 %v1433, %v83
      %v1452 = vmul.f32 %v1433, %v84
      %v1453 = vmul.f32 %v1433, %v85
      %v1454 = vmul.f32 %v1433, %v86
      %v1455 = vmul.f32 %v1433, %v87
      %v1456 = vmul.f32 %v1433, %v1039
      %v1457 = vmul.f32 %v1437, %v82
      %v1458 = vmul.f32 %v1437, %v83
      %v1459 = vmul.f32 %v1437, %v84
      %v1460 = vmul.f32 %v1437, %v85
      %v1461 = vmul.f32 %v1437, %v86
      %v1462 = vmul.f32 %v1437, %v87
      %v1463 = vmul.f32 %v1437, %v1039
      %v1464 = vmul.f32 %v1441, %v82
      %v1465 = vmul.f32 %v1441, %v83
      %v1466 = vmul.f32 %v1441, %v84
      %v1467 = vmul.f32 %v1441, %v85
      %v1468 = vmul.f32 %v1441, %v86
      %v1469 = vmul.f32 %v1441, %v87
      %v1470 = vmul.f32 %v1441, %v1039
      %1499 = vrot.lane.b32.xlu0 %v1443, 70
      %v1500 = vpop.permute.xlu0 %1499
      %1501 = vrot.lane.b32.xlu0 %v1444, 70
      %v1502 = vpop.permute.xlu0 %1501
      %1503 = vrot.lane.b32.xlu0 %v1445, 70
      %v1504 = vpop.permute.xlu0 %1503
      %1505 = vrot.lane.b32.xlu0 %v1446, 70
      %v1506 = vpop.permute.xlu0 %1505
      %1507 = vrot.lane.b32.xlu0 %v1447, 70
      %v1508 = vpop.permute.xlu0 %1507
      %1509 = vrot.lane.b32.xlu0 %v1448, 70
      %v1510 = vpop.permute.xlu0 %1509
      %1511 = vrot.lane.b32.xlu0 %v1449, 70
      %v1512 = vpop.permute.xlu0 %1511
      %1513 = vrot.lane.b32.xlu0 %v1450, 70
      %v1514 = vpop.permute.xlu0 %1513
      %1515 = vrot.lane.b32.xlu0 %v1451, 70
      %v1516 = vpop.permute.xlu0 %1515
      %1517 = vrot.lane.b32.xlu0 %v1452, 70
      %v1518 = vpop.permute.xlu0 %1517
      %1519 = vrot.lane.b32.xlu0 %v1453, 70
      %v1520 = vpop.permute.xlu0 %1519
      %1521 = vrot.lane.b32.xlu0 %v1454, 70
      %v1522 = vpop.permute.xlu0 %1521
      %1523 = vrot.lane.b32.xlu0 %v1455, 70
      %v1524 = vpop.permute.xlu0 %1523
      %1525 = vrot.lane.b32.xlu0 %v1456, 70
      %v1526 = vpop.permute.xlu0 %1525
      %1527 = vrot.lane.b32.xlu0 %v1457, 70
      %v1528 = vpop.permute.xlu0 %1527
      %1529 = vrot.lane.b32.xlu0 %v1458, 70
      %v1530 = vpop.permute.xlu0 %1529
      %1531 = vrot.lane.b32.xlu0 %v1459, 70
      %v1532 = vpop.permute.xlu0 %1531
      %1533 = vrot.lane.b32.xlu0 %v1460, 70
      %v1534 = vpop.permute.xlu0 %1533
      %1535 = vrot.lane.b32.xlu0 %v1461, 70
      %v1536 = vpop.permute.xlu0 %1535
      %1537 = vrot.lane.b32.xlu0 %v1462, 70
      %v1538 = vpop.permute.xlu0 %1537
      %1539 = vrot.lane.b32.xlu0 %v1463, 70
      %v1540 = vpop.permute.xlu0 %1539
      %1541 = vrot.lane.b32.xlu0 %v1464, 70
      %v1542 = vpop.permute.xlu0 %1541
      %1543 = vrot.lane.b32.xlu0 %v1465, 70
      %v1544 = vpop.permute.xlu0 %1543
      %1545 = vrot.lane.b32.xlu0 %v1466, 70
      %v1546 = vpop.permute.xlu0 %1545
      %1547 = vrot.lane.b32.xlu0 %v1467, 70
      %v1548 = vpop.permute.xlu0 %1547
      %1549 = vrot.lane.b32.xlu0 %v1468, 70
      %v1550 = vpop.permute.xlu0 %1549
      %1551 = vrot.lane.b32.xlu0 %v1469, 70
      %v1552 = vpop.permute.xlu0 %1551
      %1553 = vrot.lane.b32.xlu0 %v1470, 70
      %v1554 = vpop.permute.xlu0 %1553
      %vm1555 = vcmask 572416
      %v1556 = vsel %vm1555, %v1500, %v1502
      %v1557 = vsel %vm1555, %v1502, %v1504
      %v1558 = vsel %vm1555, %v1504, %v1506
      %v1559 = vsel %vm1555, %v1506, %v1508
      %v1560 = vsel %vm1555, %v1508, %v1510
      %v1561 = vsel %vm1555, %v1510, %v1512
      %v1562 = vsel %vm1555, %v1514, %v1516
      %v1563 = vsel %vm1555, %v1516, %v1518
      %v1564 = vsel %vm1555, %v1518, %v1520
      %v1565 = vsel %vm1555, %v1520, %v1522
      %v1566 = vsel %vm1555, %v1522, %v1524
      %v1567 = vsel %vm1555, %v1524, %v1526
      %v1568 = vsel %vm1555, %v1528, %v1530
      %v1569 = vsel %vm1555, %v1530, %v1532
      %v1570 = vsel %vm1555, %v1532, %v1534
      %v1571 = vsel %vm1555, %v1534, %v1536
      %v1572 = vsel %vm1555, %v1536, %v1538
      %v1573 = vsel %vm1555, %v1538, %v1540
      %v1574 = vsel %vm1555, %v1542, %v1544
      %v1575 = vsel %vm1555, %v1544, %v1546
      %v1576 = vsel %vm1555, %v1546, %v1548
      %v1577 = vsel %vm1555, %v1548, %v1550
      %v1578 = vsel %vm1555, %v1550, %v1552
      %v1579 = vsel %vm1555, %v1552, %v1554
      %v1604 = vadd.f32 %v1403, %v1556
      %v1605 = vadd.f32 %v1404, %v1557
      %v1606 = vadd.f32 %v1405, %v1558
      %v1607 = vadd.f32 %v1406, %v1559
      %v1608 = vadd.f32 %v1407, %v1560
      %v1609 = vadd.f32 %v1408, %v1561
      %v1610 = vadd.f32 %v1409, %v1562
      %v1611 = vadd.f32 %v1410, %v1563
      %v1612 = vadd.f32 %v1411, %v1564
      %v1613 = vadd.f32 %v1412, %v1565
      %v1614 = vadd.f32 %v1413, %v1566
      %v1615 = vadd.f32 %v1414, %v1567
      %v1616 = vadd.f32 %v1415, %v1568
      %v1617 = vadd.f32 %v1416, %v1569
      %v1618 = vadd.f32 %v1417, %v1570
      %v1619 = vadd.f32 %v1418, %v1571
      %v1620 = vadd.f32 %v1419, %v1572
      %v1621 = vadd.f32 %v1420, %v1573
      %v1622 = vadd.f32 %v1421, %v1574
      %v1623 = vadd.f32 %v1422, %v1575
      %v1624 = vadd.f32 %v1423, %v1576
      %v1625 = vadd.f32 %v1424, %v1577
      %v1626 = vadd.f32 %v1425, %v1578
      %v1627 = vadd.f32 %v1426, %v1579
      %v1628 = vld [vmem:[%s2] sm:$0xff]
      %v1629 = vld [vmem:[%s2 + $0x8] sm:$0xff]
      %v1630 = vld [vmem:[%s2 + $0x10] sm:$0xff]
      %v1631 = vld [vmem:[%s2 + $0x18] sm:$0xff]
      %1633 = vset.pattern.permute.xlu0 0
      %1634 = vperm.xlu0 %1633, %v1628
      %v1635 = vpop.permute.xlu0 %1634
      %1638 = vset.pattern.permute.xlu0 0
      %1639 = vperm.xlu0 %1638, %v1629
      %v1640 = vpop.permute.xlu0 %1639
      %1643 = vset.pattern.permute.xlu0 0
      %1644 = vperm.xlu0 %1643, %v1630
      %v1645 = vpop.permute.xlu0 %1644
      %1648 = vset.pattern.permute.xlu0 0
      %1649 = vperm.xlu0 %1648, %v1631
      %v1650 = vpop.permute.xlu0 %1649
      %v1652 = vadd.f32 %v1604, %v1635
      %v1653 = vadd.f32 %v1605, %v1635
      %v1654 = vadd.f32 %v1606, %v1635
      %v1655 = vadd.f32 %v1607, %v1635
      %v1656 = vadd.f32 %v1608, %v1635
      %v1657 = vadd.f32 %v1609, %v1635
      %v1658 = vadd.f32 %v1610, %v1640
      %v1659 = vadd.f32 %v1611, %v1640
      %v1660 = vadd.f32 %v1612, %v1640
      %v1661 = vadd.f32 %v1613, %v1640
      %v1662 = vadd.f32 %v1614, %v1640
      %v1663 = vadd.f32 %v1615, %v1640
      %v1664 = vadd.f32 %v1616, %v1645
      %v1665 = vadd.f32 %v1617, %v1645
      %v1666 = vadd.f32 %v1618, %v1645
      %v1667 = vadd.f32 %v1619, %v1645
      %v1668 = vadd.f32 %v1620, %v1645
      %v1669 = vadd.f32 %v1621, %v1645
      %v1670 = vadd.f32 %v1622, %v1650
      %v1671 = vadd.f32 %v1623, %v1650
      %v1672 = vadd.f32 %v1624, %v1650
      %v1673 = vadd.f32 %v1625, %v1650
      %v1674 = vadd.f32 %v1626, %v1650
      %v1675 = vadd.f32 %v1627, %v1650
      %v1676 = vmax.f32 %v1652, 0.0
      %v1677 = vmax.f32 %v1653, 0.0
      %v1678 = vmax.f32 %v1654, 0.0
      %v1679 = vmax.f32 %v1655, 0.0
      %v1680 = vmax.f32 %v1656, 0.0
      %v1681 = vmax.f32 %v1657, 0.0
      %v1682 = vmax.f32 %v1658, 0.0
      %v1683 = vmax.f32 %v1659, 0.0
      %v1684 = vmax.f32 %v1660, 0.0
      %v1685 = vmax.f32 %v1661, 0.0
      %v1686 = vmax.f32 %v1662, 0.0
      %v1687 = vmax.f32 %v1663, 0.0
      %v1688 = vmax.f32 %v1664, 0.0
      %v1689 = vmax.f32 %v1665, 0.0
      %v1690 = vmax.f32 %v1666, 0.0
      %v1691 = vmax.f32 %v1667, 0.0
      %v1692 = vmax.f32 %v1668, 0.0
      %v1693 = vmax.f32 %v1669, 0.0
      %v1694 = vmax.f32 %v1670, 0.0
      %v1695 = vmax.f32 %v1671, 0.0
      %v1696 = vmax.f32 %v1672, 0.0
      %v1697 = vmax.f32 %v1673, 0.0
      %v1698 = vmax.f32 %v1674, 0.0
      %v1699 = vmax.f32 %v1675, 0.0
      %v1700 = vpack.c.bf16 %v1677, %v1676
      %v1701 = vpack.c.bf16 %v1679, %v1678
      %v1702 = vpack.c.bf16 %v1681, %v1680
      %v1703 = vpack.c.bf16 %v1683, %v1682
      %v1704 = vpack.c.bf16 %v1685, %v1684
      %v1705 = vpack.c.bf16 %v1687, %v1686
      %v1706 = vpack.c.bf16 %v1689, %v1688
      %v1707 = vpack.c.bf16 %v1691, %v1690
      %v1708 = vpack.c.bf16 %v1693, %v1692
      %v1709 = vpack.c.bf16 %v1695, %v1694
      %v1710 = vpack.c.bf16 %v1697, %v1696
      %v1711 = vpack.c.bf16 %v1699, %v1698
      %1712 = vst [vmem:[#allocation2] sm:$0xff] %v1700
      %1713 = vst [vmem:[#allocation2 + $0x8] sm:$0xff] %v1701
      %vm1714 = vcmask 1043456
      %vm1715 = vcmask 703492
      %vm1716 = vmor %vm1715, %vm1714
      %1717 = vst.msk [vmem:[#allocation2 + $0x10] sm:$0xff] %vm1716, %v1702
      %1718 = vst [vmem:[#allocation2 + $0x18] sm:$0xff] %v1703
      %1719 = vst [vmem:[#allocation2 + $0x20] sm:$0xff] %v1704
      %1720 = vst.msk [vmem:[#allocation2 + $0x28] sm:$0xff] %vm1716, %v1705
      %1721 = vst [vmem:[#allocation2 + $0x30] sm:$0xff] %v1706
      %1722 = vst [vmem:[#allocation2 + $0x38] sm:$0xff] %v1707
      %1723 = vst.msk [vmem:[#allocation2 + $0x40] sm:$0xff] %vm1716, %v1708
      %1724 = vst [vmem:[#allocation2 + $0x48] sm:$0xff] %v1709
      %1725 = vst [vmem:[#allocation2 + $0x50] sm:$0xff] %v1710
      %1726 = vst.msk [vmem:[#allocation2 + $0x58] sm:$0xff] %vm1716, %v1711
      %v1727 = vld [vmem:[#allocation2] sm:$0xff]
      %v1728 = vld [vmem:[#allocation2 + $0x8] sm:$0xff]
      %v1729 = vld [vmem:[#allocation2 + $0x10] sm:$0xff]
      %v1730 = vld [vmem:[#allocation2 + $0x18] sm:$0xff]
      %v1731 = vld [vmem:[#allocation2 + $0x20] sm:$0xff]
      %v1732 = vld [vmem:[#allocation2 + $0x28] sm:$0xff]
      %v1733 = vld [vmem:[#allocation2 + $0x30] sm:$0xff]
      %v1734 = vld [vmem:[#allocation2 + $0x38] sm:$0xff]
      %v1735 = vld [vmem:[#allocation2 + $0x40] sm:$0xff]
      %v1736 = vld [vmem:[#allocation2 + $0x48] sm:$0xff]
      %v1737 = vld [vmem:[#allocation2 + $0x50] sm:$0xff]
      %v1738 = vld [vmem:[#allocation2 + $0x58] sm:$0xff]
      %1739 = vst [vmem:[#allocation3] sm:$0xff] %v1727
      %1740 = vst [vmem:[#allocation3 + $0x8] sm:$0xff] %v1728
      %vm1741 = vcmask 228356
      %vm1742 = vmor %vm1741, %vm1714
      %1743 = vst.msk [vmem:[#allocation3 + $0x10] sm:$0xff] %vm1742, %v1729
      %1744 = vst [vmem:[#allocation3 + $0x18] sm:$0xff] %v1730
      %1745 = vst [vmem:[#allocation3 + $0x20] sm:$0xff] %v1731
      %1746 = vst.msk [vmem:[#allocation3 + $0x28] sm:$0xff] %vm1742, %v1732
      %1747 = vst [vmem:[#allocation3 + $0x30] sm:$0xff] %v1733
      %1748 = vst [vmem:[#allocation3 + $0x38] sm:$0xff] %v1734
      %1749 = vst.msk [vmem:[#allocation3 + $0x40] sm:$0xff] %vm1742, %v1735
      %1750 = vst [vmem:[#allocation3 + $0x48] sm:$0xff] %v1736
      %1751 = vst [vmem:[#allocation3 + $0x50] sm:$0xff] %v1737
      %1752 = vst.msk [vmem:[#allocation3 + $0x58] sm:$0xff] %vm1742, %v1738
      %v1753 = vld [vmem:[#allocation2] sm:$0xff]
      %v1754 = vld [vmem:[#allocation2 + $0x8] sm:$0xff]
      %v1755 = vld [vmem:[#allocation2 + $0x10] sm:$0xff]
      %v1756 = vld [vmem:[#allocation2 + $0x18] sm:$0xff]
      %v1757 = vld [vmem:[#allocation2 + $0x20] sm:$0xff]
      %v1758 = vld [vmem:[#allocation2 + $0x28] sm:$0xff]
      %v1759 = vld [vmem:[#allocation2 + $0x30] sm:$0xff]
      %v1760 = vld [vmem:[#allocation2 + $0x38] sm:$0xff]
      %v1761 = vld [vmem:[#allocation2 + $0x40] sm:$0xff]
      %v1762 = vld [vmem:[#allocation2 + $0x48] sm:$0xff]
      %v1763 = vld [vmem:[#allocation2 + $0x50] sm:$0xff]
      %v1764 = vld [vmem:[#allocation2 + $0x58] sm:$0xff]
      %1777 = vrot.lane.b32.xlu0 %v1753, 127
      %v1778 = vpop.permute.xlu0 %1777
      %1779 = vrot.lane.b32.xlu0 %v1754, 127
      %v1780 = vpop.permute.xlu0 %1779
      %1781 = vrot.lane.b32.xlu0 %v1755, 127
      %v1782 = vpop.permute.xlu0 %1781
      %1783 = vrot.lane.b32.xlu0 %v1756, 127
      %v1784 = vpop.permute.xlu0 %1783
      %1785 = vrot.lane.b32.xlu0 %v1757, 127
      %v1786 = vpop.permute.xlu0 %1785
      %1787 = vrot.lane.b32.xlu0 %v1758, 127
      %v1788 = vpop.permute.xlu0 %1787
      %1789 = vrot.lane.b32.xlu0 %v1759, 127
      %v1790 = vpop.permute.xlu0 %1789
      %1791 = vrot.lane.b32.xlu0 %v1760, 127
      %v1792 = vpop.permute.xlu0 %1791
      %1793 = vrot.lane.b32.xlu0 %v1761, 127
      %v1794 = vpop.permute.xlu0 %1793
      %1795 = vrot.lane.b32.xlu0 %v1762, 127
      %v1796 = vpop.permute.xlu0 %1795
      %1797 = vrot.lane.b32.xlu0 %v1763, 127
      %v1798 = vpop.permute.xlu0 %1797
      %1799 = vrot.lane.b32.xlu0 %v1764, 127
      %v1800 = vpop.permute.xlu0 %1799
      %v1801 = vrot.slane %v1778, 4
      %v1802 = vrot.slane %v1780, 4
      %v1803 = vrot.slane %v1782, 4
      %v1804 = vrot.slane %v1784, 4
      %v1805 = vrot.slane %v1786, 4
      %v1806 = vrot.slane %v1788, 4
      %v1807 = vrot.slane %v1790, 4
      %v1808 = vrot.slane %v1792, 4
      %v1809 = vrot.slane %v1794, 4
      %v1810 = vrot.slane %v1796, 4
      %v1811 = vrot.slane %v1798, 4
      %v1812 = vrot.slane %v1800, 4
      %vm1813 = vcmask 1043456
      %v1814 = vsel %vm1813, %v1801, %v1802
      %vm1815 = vcmask 1039360
      %v1816 = vsel %vm1815, %v1778, %v1814
      %v1817 = vsel %vm1813, %v1802, %v1803
      %v1818 = vsel %vm1815, %v1780, %v1817
      %v1819 = vsel %vm1815, %v1782, %v1803
      %v1820 = vsel %vm1813, %v1804, %v1805
      %v1821 = vsel %vm1815, %v1784, %v1820
      %v1822 = vsel %vm1813, %v1805, %v1806
      %v1823 = vsel %vm1815, %v1786, %v1822
      %v1824 = vsel %vm1815, %v1788, %v1806
      %v1825 = vsel %vm1813, %v1807, %v1808
      %v1826 = vsel %vm1815, %v1790, %v1825
      %v1827 = vsel %vm1813, %v1808, %v1809
      %v1828 = vsel %vm1815, %v1792, %v1827
      %v1829 = vsel %vm1815, %v1794, %v1809
      %v1830 = vsel %vm1813, %v1810, %v1811
      %v1831 = vsel %vm1815, %v1796, %v1830
      %v1832 = vsel %vm1813, %v1811, %v1812
      %v1833 = vsel %vm1815, %v1798, %v1832
      %v1834 = vsel %vm1815, %v1800, %v1812
      %1847 = vst [vmem:[#allocation3 + $0x60] sm:$0xff] %v1816
      %1848 = vst [vmem:[#allocation3 + $0x68] sm:$0xff] %v1818
      %1849 = vst.msk [vmem:[#allocation3 + $0x70] sm:$0xff] %vm1742, %v1819
      %1850 = vst [vmem:[#allocation3 + $0x78] sm:$0xff] %v1821
      %1851 = vst [vmem:[#allocation3 + $0x80] sm:$0xff] %v1823
      %1852 = vst.msk [vmem:[#allocation3 + $0x88] sm:$0xff] %vm1742, %v1824
      %1853 = vst [vmem:[#allocation3 + $0x90] sm:$0xff] %v1826
      %1854 = vst [vmem:[#allocation3 + $0x98] sm:$0xff] %v1828
      %1855 = vst.msk [vmem:[#allocation3 + $0xa0] sm:$0xff] %vm1742, %v1829
      %1856 = vst [vmem:[#allocation3 + $0xa8] sm:$0xff] %v1831
      %1857 = vst [vmem:[#allocation3 + $0xb0] sm:$0xff] %v1833
      %1858 = vst.msk [vmem:[#allocation3 + $0xb8] sm:$0xff] %vm1742, %v1834
      %v1859 = vld [vmem:[#allocation2] sm:$0xff]
      %v1860 = vld [vmem:[#allocation2 + $0x8] sm:$0xff]
      %v1861 = vld [vmem:[#allocation2 + $0x10] sm:$0xff]
      %v1862 = vld [vmem:[#allocation2 + $0x18] sm:$0xff]
      %v1863 = vld [vmem:[#allocation2 + $0x20] sm:$0xff]
      %v1864 = vld [vmem:[#allocation2 + $0x28] sm:$0xff]
      %v1865 = vld [vmem:[#allocation2 + $0x30] sm:$0xff]
      %v1866 = vld [vmem:[#allocation2 + $0x38] sm:$0xff]
      %v1867 = vld [vmem:[#allocation2 + $0x40] sm:$0xff]
      %v1868 = vld [vmem:[#allocation2 + $0x48] sm:$0xff]
      %v1869 = vld [vmem:[#allocation2 + $0x50] sm:$0xff]
      %v1870 = vld [vmem:[#allocation2 + $0x58] sm:$0xff]
      %1883 = vrot.lane.b32.xlu0 %v1859, 126
      %v1884 = vpop.permute.xlu0 %1883
      %1885 = vrot.lane.b32.xlu0 %v1860, 126
      %v1886 = vpop.permute.xlu0 %1885
      %1887 = vrot.lane.b32.xlu0 %v1861, 126
      %v1888 = vpop.permute.xlu0 %1887
      %1889 = vrot.lane.b32.xlu0 %v1862, 126
      %v1890 = vpop.permute.xlu0 %1889
      %1891 = vrot.lane.b32.xlu0 %v1863, 126
      %v1892 = vpop.permute.xlu0 %1891
      %1893 = vrot.lane.b32.xlu0 %v1864, 126
      %v1894 = vpop.permute.xlu0 %1893
      %1895 = vrot.lane.b32.xlu0 %v1865, 126
      %v1896 = vpop.permute.xlu0 %1895
      %1897 = vrot.lane.b32.xlu0 %v1866, 126
      %v1898 = vpop.permute.xlu0 %1897
      %1899 = vrot.lane.b32.xlu0 %v1867, 126
      %v1900 = vpop.permute.xlu0 %1899
      %1901 = vrot.lane.b32.xlu0 %v1868, 126
      %v1902 = vpop.permute.xlu0 %1901
      %1903 = vrot.lane.b32.xlu0 %v1869, 126
      %v1904 = vpop.permute.xlu0 %1903
      %1905 = vrot.lane.b32.xlu0 %v1870, 126
      %v1906 = vpop.permute.xlu0 %1905
      %v1907 = vrot.slane %v1884, 4
      %v1908 = vrot.slane %v1886, 4
      %v1909 = vrot.slane %v1888, 4
      %v1910 = vrot.slane %v1890, 4
      %v1911 = vrot.slane %v1892, 4
      %v1912 = vrot.slane %v1894, 4
      %v1913 = vrot.slane %v1896, 4
      %v1914 = vrot.slane %v1898, 4
      %v1915 = vrot.slane %v1900, 4
      %v1916 = vrot.slane %v1902, 4
      %v1917 = vrot.slane %v1904, 4
      %v1918 = vrot.slane %v1906, 4
      %v1919 = vsel %vm1813, %v1907, %v1908
      %vm1920 = vcmask 1031168
      %v1921 = vsel %vm1920, %v1884, %v1919
      %v1922 = vsel %vm1813, %v1908, %v1909
      %v1923 = vsel %vm1920, %v1886, %v1922
      %v1924 = vsel %vm1920, %v1888, %v1909
      %v1925 = vsel %vm1813, %v1910, %v1911
      %v1926 = vsel %vm1920, %v1890, %v1925
      %v1927 = vsel %vm1813, %v1911, %v1912
      %v1928 = vsel %vm1920, %v1892, %v1927
      %v1929 = vsel %vm1920, %v1894, %v1912
      %v1930 = vsel %vm1813, %v1913, %v1914
      %v1931 = vsel %vm1920, %v1896, %v1930
      %v1932 = vsel %vm1813, %v1914, %v1915
      %v1933 = vsel %vm1920, %v1898, %v1932
      %v1934 = vsel %vm1920, %v1900, %v1915
      %v1935 = vsel %vm1813, %v1916, %v1917
      %v1936 = vsel %vm1920, %v1902, %v1935
      %v1937 = vsel %vm1813, %v1917, %v1918
      %v1938 = vsel %vm1920, %v1904, %v1937
      %v1939 = vsel %vm1920, %v1906, %v1918
      %1952 = vst [vmem:[#allocation3 + $0xc0] sm:$0xff] %v1921
      %1953 = vst [vmem:[#allocation3 + $0xc8] sm:$0xff] %v1923
      %1954 = vst.msk [vmem:[#allocation3 + $0xd0] sm:$0xff] %vm1742, %v1924
      %1955 = vst [vmem:[#allocation3 + $0xd8] sm:$0xff] %v1926
      %1956 = vst [vmem:[#allocation3 + $0xe0] sm:$0xff] %v1928
      %1957 = vst.msk [vmem:[#allocation3 + $0xe8] sm:$0xff] %vm1742, %v1929
      %1958 = vst [vmem:[#allocation3 + $0xf0] sm:$0xff] %v1931
      %1959 = vst [vmem:[#allocation3 + $0xf8] sm:$0xff] %v1933
      %1960 = vst.msk [vmem:[#allocation3 + $0x100] sm:$0xff] %vm1742, %v1934
      %1961 = vst [vmem:[#allocation3 + $0x108] sm:$0xff] %v1936
      %1962 = vst [vmem:[#allocation3 + $0x110] sm:$0xff] %v1938
      %1963 = vst.msk [vmem:[#allocation3 + $0x118] sm:$0xff] %vm1742, %v1939
      %v1964 = vld [vmem:[#allocation2] sm:$0xff]
      %v1965 = vld [vmem:[#allocation2 + $0x8] sm:$0xff]
      %v1966 = vld [vmem:[#allocation2 + $0x10] sm:$0xff]
      %v1967 = vld [vmem:[#allocation2 + $0x18] sm:$0xff]
      %v1968 = vld [vmem:[#allocation2 + $0x20] sm:$0xff]
      %v1969 = vld [vmem:[#allocation2 + $0x28] sm:$0xff]
      %v1970 = vld [vmem:[#allocation2 + $0x30] sm:$0xff]
      %v1971 = vld [vmem:[#allocation2 + $0x38] sm:$0xff]
      %v1972 = vld [vmem:[#allocation2 + $0x40] sm:$0xff]
      %v1973 = vld [vmem:[#allocation2 + $0x48] sm:$0xff]
      %v1974 = vld [vmem:[#allocation2 + $0x50] sm:$0xff]
      %v1975 = vld [vmem:[#allocation2 + $0x58] sm:$0xff]
      %1988 = vrot.lane.b32.xlu0 %v1964, 100
      %v1989 = vpop.permute.xlu0 %1988
      %1990 = vrot.lane.b32.xlu0 %v1965, 100
      %v1991 = vpop.permute.xlu0 %1990
      %1992 = vrot.lane.b32.xlu0 %v1966, 100
      %v1993 = vpop.permute.xlu0 %1992
      %1994 = vrot.lane.b32.xlu0 %v1967, 100
      %v1995 = vpop.permute.xlu0 %1994
      %1996 = vrot.lane.b32.xlu0 %v1968, 100
      %v1997 = vpop.permute.xlu0 %1996
      %1998 = vrot.lane.b32.xlu0 %v1969, 100
      %v1999 = vpop.permute.xlu0 %1998
      %2000 = vrot.lane.b32.xlu0 %v1970, 100
      %v2001 = vpop.permute.xlu0 %2000
      %2002 = vrot.lane.b32.xlu0 %v1971, 100
      %v2003 = vpop.permute.xlu0 %2002
      %2004 = vrot.lane.b32.xlu0 %v1972, 100
      %v2005 = vpop.permute.xlu0 %2004
      %2006 = vrot.lane.b32.xlu0 %v1973, 100
      %v2007 = vpop.permute.xlu0 %2006
      %2008 = vrot.lane.b32.xlu0 %v1974, 100
      %v2009 = vpop.permute.xlu0 %2008
      %2010 = vrot.lane.b32.xlu0 %v1975, 100
      %v2011 = vpop.permute.xlu0 %2010
      %v2012 = vrot.slane %v1989, 4
      %v2013 = vrot.slane %v1991, 4
      %v2014 = vrot.slane %v1993, 4
      %v2015 = vrot.slane %v1995, 4
      %v2016 = vrot.slane %v1997, 4
      %v2017 = vrot.slane %v1999, 4
      %v2018 = vrot.slane %v2001, 4
      %v2019 = vrot.slane %v2003, 4
      %v2020 = vrot.slane %v2005, 4
      %v2021 = vrot.slane %v2007, 4
      %v2022 = vrot.slane %v2009, 4
      %v2023 = vrot.slane %v2011, 4
      %v2024 = vsel %vm1813, %v2012, %v2013
      %vm2025 = vcmask 818176
      %v2026 = vsel %vm2025, %v1989, %v2024
      %v2027 = vsel %vm1813, %v2013, %v2014
      %v2028 = vsel %vm2025, %v1991, %v2027
      %v2029 = vsel %vm2025, %v1993, %v2014
      %v2030 = vsel %vm1813, %v2015, %v2016
      %v2031 = vsel %vm2025, %v1995, %v2030
      %v2032 = vsel %vm1813, %v2016, %v2017
      %v2033 = vsel %vm2025, %v1997, %v2032
      %v2034 = vsel %vm2025, %v1999, %v2017
      %v2035 = vsel %vm1813, %v2018, %v2019
      %v2036 = vsel %vm2025, %v2001, %v2035
      %v2037 = vsel %vm1813, %v2019, %v2020
      %v2038 = vsel %vm2025, %v2003, %v2037
      %v2039 = vsel %vm2025, %v2005, %v2020
      %v2040 = vsel %vm1813, %v2021, %v2022
      %v2041 = vsel %vm2025, %v2007, %v2040
      %v2042 = vsel %vm1813, %v2022, %v2023
      %v2043 = vsel %vm2025, %v2009, %v2042
      %v2044 = vsel %vm2025, %v2011, %v2023
      %2057 = vst [vmem:[#allocation3 + $0x120] sm:$0xff] %v2026
      %2058 = vst [vmem:[#allocation3 + $0x128] sm:$0xff] %v2028
      %2059 = vst.msk [vmem:[#allocation3 + $0x130] sm:$0xff] %vm1742, %v2029
      %2060 = vst [vmem:[#allocation3 + $0x138] sm:$0xff] %v2031
      %2061 = vst [vmem:[#allocation3 + $0x140] sm:$0xff] %v2033
      %2062 = vst.msk [vmem:[#allocation3 + $0x148] sm:$0xff] %vm1742, %v2034
      %2063 = vst [vmem:[#allocation3 + $0x150] sm:$0xff] %v2036
      %2064 = vst [vmem:[#allocation3 + $0x158] sm:$0xff] %v2038
      %2065 = vst.msk [vmem:[#allocation3 + $0x160] sm:$0xff] %vm1742, %v2039
      %2066 = vst [vmem:[#allocation3 + $0x168] sm:$0xff] %v2041
      %2067 = vst [vmem:[#allocation3 + $0x170] sm:$0xff] %v2043
      %2068 = vst.msk [vmem:[#allocation3 + $0x178] sm:$0xff] %vm1742, %v2044
      %v2069 = vld [vmem:[#allocation2] sm:$0xff]
      %v2070 = vld [vmem:[#allocation2 + $0x8] sm:$0xff]
      %v2071 = vld [vmem:[#allocation2 + $0x10] sm:$0xff]
      %v2072 = vld [vmem:[#allocation2 + $0x18] sm:$0xff]
      %v2073 = vld [vmem:[#allocation2 + $0x20] sm:$0xff]
      %v2074 = vld [vmem:[#allocation2 + $0x28] sm:$0xff]
      %v2075 = vld [vmem:[#allocation2 + $0x30] sm:$0xff]
      %v2076 = vld [vmem:[#allocation2 + $0x38] sm:$0xff]
      %v2077 = vld [vmem:[#allocation2 + $0x40] sm:$0xff]
      %v2078 = vld [vmem:[#allocation2 + $0x48] sm:$0xff]
      %v2079 = vld [vmem:[#allocation2 + $0x50] sm:$0xff]
      %v2080 = vld [vmem:[#allocation2 + $0x58] sm:$0xff]
      %2093 = vrot.lane.b32.xlu0 %v2069, 99
      %v2094 = vpop.permute.xlu0 %2093
      %2095 = vrot.lane.b32.xlu0 %v2070, 99
      %v2096 = vpop.permute.xlu0 %2095
      %2097 = vrot.lane.b32.xlu0 %v2071, 99
      %v2098 = vpop.permute.xlu0 %2097
      %2099 = vrot.lane.b32.xlu0 %v2072, 99
      %v2100 = vpop.permute.xlu0 %2099
      %2101 = vrot.lane.b32.xlu0 %v2073, 99
      %v2102 = vpop.permute.xlu0 %2101
      %2103 = vrot.lane.b32.xlu0 %v2074, 99
      %v2104 = vpop.permute.xlu0 %2103
      %2105 = vrot.lane.b32.xlu0 %v2075, 99
      %v2106 = vpop.permute.xlu0 %2105
      %2107 = vrot.lane.b32.xlu0 %v2076, 99
      %v2108 = vpop.permute.xlu0 %2107
      %2109 = vrot.lane.b32.xlu0 %v2077, 99
      %v2110 = vpop.permute.xlu0 %2109
      %2111 = vrot.lane.b32.xlu0 %v2078, 99
      %v2112 = vpop.permute.xlu0 %2111
      %2113 = vrot.lane.b32.xlu0 %v2079, 99
      %v2114 = vpop.permute.xlu0 %2113
      %2115 = vrot.lane.b32.xlu0 %v2080, 99
      %v2116 = vpop.permute.xlu0 %2115
      %v2117 = vrot.slane %v2094, 4
      %v2118 = vrot.slane %v2096, 4
      %v2119 = vrot.slane %v2098, 4
      %v2120 = vrot.slane %v2100, 4
      %v2121 = vrot.slane %v2102, 4
      %v2122 = vrot.slane %v2104, 4
      %v2123 = vrot.slane %v2106, 4
      %v2124 = vrot.slane %v2108, 4
      %v2125 = vrot.slane %v2110, 4
      %v2126 = vrot.slane %v2112, 4
      %v2127 = vrot.slane %v2114, 4
      %v2128 = vrot.slane %v2116, 4
      %v2129 = vsel %vm1813, %v2117, %v2118
      %vm2130 = vcmask 809984
      %v2131 = vsel %vm2130, %v2094, %v2129
      %v2132 = vsel %vm1813, %v2118, %v2119
      %v2133 = vsel %vm2130, %v2096, %v2132
      %v2134 = vsel %vm2130, %v2098, %v2119
      %v2135 = vsel %vm1813, %v2120, %v2121
      %v2136 = vsel %vm2130, %v2100, %v2135
      %v2137 = vsel %vm1813, %v2121, %v2122
      %v2138 = vsel %vm2130, %v2102, %v2137
      %v2139 = vsel %vm2130, %v2104, %v2122
      %v2140 = vsel %vm1813, %v2123, %v2124
      %v2141 = vsel %vm2130, %v2106, %v2140
      %v2142 = vsel %vm1813, %v2124, %v2125
      %v2143 = vsel %vm2130, %v2108, %v2142
      %v2144 = vsel %vm2130, %v2110, %v2125
      %v2145 = vsel %vm1813, %v2126, %v2127
      %v2146 = vsel %vm2130, %v2112, %v2145
      %v2147 = vsel %vm1813, %v2127, %v2128
      %v2148 = vsel %vm2130, %v2114, %v2147
      %v2149 = vsel %vm2130, %v2116, %v2128
      %2162 = vst [vmem:[#allocation3 + $0x180] sm:$0xff] %v2131
      %2163 = vst [vmem:[#allocation3 + $0x188] sm:$0xff] %v2133
      %2164 = vst.msk [vmem:[#allocation3 + $0x190] sm:$0xff] %vm1742, %v2134
      %2165 = vst [vmem:[#allocation3 + $0x198] sm:$0xff] %v2136
      %2166 = vst [vmem:[#allocation3 + $0x1a0] sm:$0xff] %v2138
      %2167 = vst.msk [vmem:[#allocation3 + $0x1a8] sm:$0xff] %vm1742, %v2139
      %2168 = vst [vmem:[#allocation3 + $0x1b0] sm:$0xff] %v2141
      %2169 = vst [vmem:[#allocation3 + $0x1b8] sm:$0xff] %v2143
      %2170 = vst.msk [vmem:[#allocation3 + $0x1c0] sm:$0xff] %vm1742, %v2144
      %2171 = vst [vmem:[#allocation3 + $0x1c8] sm:$0xff] %v2146
      %2172 = vst [vmem:[#allocation3 + $0x1d0] sm:$0xff] %v2148
      %2173 = vst.msk [vmem:[#allocation3 + $0x1d8] sm:$0xff] %vm1742, %v2149
      %v2174 = vld [vmem:[#allocation2] sm:$0xff]
      %v2175 = vld [vmem:[#allocation2 + $0x8] sm:$0xff]
      %v2176 = vld [vmem:[#allocation2 + $0x10] sm:$0xff]
      %v2177 = vld [vmem:[#allocation2 + $0x18] sm:$0xff]
      %v2178 = vld [vmem:[#allocation2 + $0x20] sm:$0xff]
      %v2179 = vld [vmem:[#allocation2 + $0x28] sm:$0xff]
      %v2180 = vld [vmem:[#allocation2 + $0x30] sm:$0xff]
      %v2181 = vld [vmem:[#allocation2 + $0x38] sm:$0xff]
      %v2182 = vld [vmem:[#allocation2 + $0x40] sm:$0xff]
      %v2183 = vld [vmem:[#allocation2 + $0x48] sm:$0xff]
      %v2184 = vld [vmem:[#allocation2 + $0x50] sm:$0xff]
      %v2185 = vld [vmem:[#allocation2 + $0x58] sm:$0xff]
      %2198 = vrot.lane.b32.xlu0 %v2174, 98
      %v2199 = vpop.permute.xlu0 %2198
      %2200 = vrot.lane.b32.xlu0 %v2175, 98
      %v2201 = vpop.permute.xlu0 %2200
      %2202 = vrot.lane.b32.xlu0 %v2176, 98
      %v2203 = vpop.permute.xlu0 %2202
      %2204 = vrot.lane.b32.xlu0 %v2177, 98
      %v2205 = vpop.permute.xlu0 %2204
      %2206 = vrot.lane.b32.xlu0 %v2178, 98
      %v2207 = vpop.permute.xlu0 %2206
      %2208 = vrot.lane.b32.xlu0 %v2179, 98
      %v2209 = vpop.permute.xlu0 %2208
      %2210 = vrot.lane.b32.xlu0 %v2180, 98
      %v2211 = vpop.permute.xlu0 %2210
      %2212 = vrot.lane.b32.xlu0 %v2181, 98
      %v2213 = vpop.permute.xlu0 %2212
      %2214 = vrot.lane.b32.xlu0 %v2182, 98
      %v2215 = vpop.permute.xlu0 %2214
      %2216 = vrot.lane.b32.xlu0 %v2183, 98
      %v2217 = vpop.permute.xlu0 %2216
      %2218 = vrot.lane.b32.xlu0 %v2184, 98
      %v2219 = vpop.permute.xlu0 %2218
      %2220 = vrot.lane.b32.xlu0 %v2185, 98
      %v2221 = vpop.permute.xlu0 %2220
      %v2222 = vrot.slane %v2199, 4
      %v2223 = vrot.slane %v2201, 4
      %v2224 = vrot.slane %v2203, 4
      %v2225 = vrot.slane %v2205, 4
      %v2226 = vrot.slane %v2207, 4
      %v2227 = vrot.slane %v2209, 4
      %v2228 = vrot.slane %v2211, 4
      %v2229 = vrot.slane %v2213, 4
      %v2230 = vrot.slane %v2215, 4
      %v2231 = vrot.slane %v2217, 4
      %v2232 = vrot.slane %v2219, 4
      %v2233 = vrot.slane %v2221, 4
      %v2234 = vsel %vm1813, %v2222, %v2223
      %vm2235 = vcmask 801792
      %v2236 = vsel %vm2235, %v2199, %v2234
      %v2237 = vsel %vm1813, %v2223, %v2224
      %v2238 = vsel %vm2235, %v2201, %v2237
      %v2239 = vsel %vm2235, %v2203, %v2224
      %v2240 = vsel %vm1813, %v2225, %v2226
      %v2241 = vsel %vm2235, %v2205, %v2240
      %v2242 = vsel %vm1813, %v2226, %v2227
      %v2243 = vsel %vm2235, %v2207, %v2242
      %v2244 = vsel %vm2235, %v2209, %v2227
      %v2245 = vsel %vm1813, %v2228, %v2229
      %v2246 = vsel %vm2235, %v2211, %v2245
      %v2247 = vsel %vm1813, %v2229, %v2230
      %v2248 = vsel %vm2235, %v2213, %v2247
      %v2249 = vsel %vm2235, %v2215, %v2230
      %v2250 = vsel %vm1813, %v2231, %v2232
      %v2251 = vsel %vm2235, %v2217, %v2250
      %v2252 = vsel %vm1813, %v2232, %v2233
      %v2253 = vsel %vm2235, %v2219, %v2252
      %v2254 = vsel %vm2235, %v2221, %v2233
      %2267 = vst [vmem:[#allocation3 + $0x1e0] sm:$0xff] %v2236
      %2268 = vst [vmem:[#allocation3 + $0x1e8] sm:$0xff] %v2238
      %2269 = vst.msk [vmem:[#allocation3 + $0x1f0] sm:$0xff] %vm1742, %v2239
      %2270 = vst [vmem:[#allocation3 + $0x1f8] sm:$0xff] %v2241
      %2271 = vst [vmem:[#allocation3 + $0x200] sm:$0xff] %v2243
      %2272 = vst.msk [vmem:[#allocation3 + $0x208] sm:$0xff] %vm1742, %v2244
      %2273 = vst [vmem:[#allocation3 + $0x210] sm:$0xff] %v2246
      %2274 = vst [vmem:[#allocation3 + $0x218] sm:$0xff] %v2248
      %2275 = vst.msk [vmem:[#allocation3 + $0x220] sm:$0xff] %vm1742, %v2249
      %2276 = vst [vmem:[#allocation3 + $0x228] sm:$0xff] %v2251
      %2277 = vst [vmem:[#allocation3 + $0x230] sm:$0xff] %v2253
      %2278 = vst.msk [vmem:[#allocation3 + $0x238] sm:$0xff] %vm1742, %v2254
      %v2279 = vld [vmem:[#allocation2] sm:$0xff]
      %v2280 = vld [vmem:[#allocation2 + $0x8] sm:$0xff]
      %v2281 = vld [vmem:[#allocation2 + $0x10] sm:$0xff]
      %v2282 = vld [vmem:[#allocation2 + $0x18] sm:$0xff]
      %v2283 = vld [vmem:[#allocation2 + $0x20] sm:$0xff]
      %v2284 = vld [vmem:[#allocation2 + $0x28] sm:$0xff]
      %v2285 = vld [vmem:[#allocation2 + $0x30] sm:$0xff]
      %v2286 = vld [vmem:[#allocation2 + $0x38] sm:$0xff]
      %v2287 = vld [vmem:[#allocation2 + $0x40] sm:$0xff]
      %v2288 = vld [vmem:[#allocation2 + $0x48] sm:$0xff]
      %v2289 = vld [vmem:[#allocation2 + $0x50] sm:$0xff]
      %v2290 = vld [vmem:[#allocation2 + $0x58] sm:$0xff]
      %2303 = vrot.lane.b32.xlu0 %v2279, 72
      %v2304 = vpop.permute.xlu0 %2303
      %2305 = vrot.lane.b32.xlu0 %v2280, 72
      %v2306 = vpop.permute.xlu0 %2305
      %2307 = vrot.lane.b32.xlu0 %v2281, 72
      %v2308 = vpop.permute.xlu0 %2307
      %2309 = vrot.lane.b32.xlu0 %v2282, 72
      %v2310 = vpop.permute.xlu0 %2309
      %2311 = vrot.lane.b32.xlu0 %v2283, 72
      %v2312 = vpop.permute.xlu0 %2311
      %2313 = vrot.lane.b32.xlu0 %v2284, 72
      %v2314 = vpop.permute.xlu0 %2313
      %2315 = vrot.lane.b32.xlu0 %v2285, 72
      %v2316 = vpop.permute.xlu0 %2315
      %2317 = vrot.lane.b32.xlu0 %v2286, 72
      %v2318 = vpop.permute.xlu0 %2317
      %2319 = vrot.lane.b32.xlu0 %v2287, 72
      %v2320 = vpop.permute.xlu0 %2319
      %2321 = vrot.lane.b32.xlu0 %v2288, 72
      %v2322 = vpop.permute.xlu0 %2321
      %2323 = vrot.lane.b32.xlu0 %v2289, 72
      %v2324 = vpop.permute.xlu0 %2323
      %2325 = vrot.lane.b32.xlu0 %v2290, 72
      %v2326 = vpop.permute.xlu0 %2325
      %v2327 = vrot.slane %v2304, 4
      %v2328 = vrot.slane %v2306, 4
      %v2329 = vrot.slane %v2308, 4
      %v2330 = vrot.slane %v2310, 4
      %v2331 = vrot.slane %v2312, 4
      %v2332 = vrot.slane %v2314, 4
      %v2333 = vrot.slane %v2316, 4
      %v2334 = vrot.slane %v2318, 4
      %v2335 = vrot.slane %v2320, 4
      %v2336 = vrot.slane %v2322, 4
      %v2337 = vrot.slane %v2324, 4
      %v2338 = vrot.slane %v2326, 4
      %v2339 = vsel %vm1813, %v2327, %v2328
      %vm2340 = vcmask 588800
      %v2341 = vsel %vm2340, %v2304, %v2339
      %v2342 = vsel %vm1813, %v2328, %v2329
      %v2343 = vsel %vm2340, %v2306, %v2342
      %v2344 = vsel %vm2340, %v2308, %v2329
      %v2345 = vsel %vm1813, %v2330, %v2331
      %v2346 = vsel %vm2340, %v2310, %v2345
      %v2347 = vsel %vm1813, %v2331, %v2332
      %v2348 = vsel %vm2340, %v2312, %v2347
      %v2349 = vsel %vm2340, %v2314, %v2332
      %v2350 = vsel %vm1813, %v2333, %v2334
      %v2351 = vsel %vm2340, %v2316, %v2350
      %v2352 = vsel %vm1813, %v2334, %v2335
      %v2353 = vsel %vm2340, %v2318, %v2352
      %v2354 = vsel %vm2340, %v2320, %v2335
      %v2355 = vsel %vm1813, %v2336, %v2337
      %v2356 = vsel %vm2340, %v2322, %v2355
      %v2357 = vsel %vm1813, %v2337, %v2338
      %v2358 = vsel %vm2340, %v2324, %v2357
      %v2359 = vsel %vm2340, %v2326, %v2338
      %2372 = vst [vmem:[#allocation3 + $0x240] sm:$0xff] %v2341
      %2373 = vst [vmem:[#allocation3 + $0x248] sm:$0xff] %v2343
      %2374 = vst.msk [vmem:[#allocation3 + $0x250] sm:$0xff] %vm1742, %v2344
      %2375 = vst [vmem:[#allocation3 + $0x258] sm:$0xff] %v2346
      %2376 = vst [vmem:[#allocation3 + $0x260] sm:$0xff] %v2348
      %2377 = vst.msk [vmem:[#allocation3 + $0x268] sm:$0xff] %vm1742, %v2349
      %2378 = vst [vmem:[#allocation3 + $0x270] sm:$0xff] %v2351
      %2379 = vst [vmem:[#allocation3 + $0x278] sm:$0xff] %v2353
      %2380 = vst.msk [vmem:[#allocation3 + $0x280] sm:$0xff] %vm1742, %v2354
      %2381 = vst [vmem:[#allocation3 + $0x288] sm:$0xff] %v2356
      %2382 = vst [vmem:[#allocation3 + $0x290] sm:$0xff] %v2358
      %2383 = vst.msk [vmem:[#allocation3 + $0x298] sm:$0xff] %vm1742, %v2359
      %v2384 = vld [vmem:[#allocation2] sm:$0xff]
      %v2385 = vld [vmem:[#allocation2 + $0x8] sm:$0xff]
      %v2386 = vld [vmem:[#allocation2 + $0x10] sm:$0xff]
      %v2387 = vld [vmem:[#allocation2 + $0x18] sm:$0xff]
      %v2388 = vld [vmem:[#allocation2 + $0x20] sm:$0xff]
      %v2389 = vld [vmem:[#allocation2 + $0x28] sm:$0xff]
      %v2390 = vld [vmem:[#allocation2 + $0x30] sm:$0xff]
      %v2391 = vld [vmem:[#allocation2 + $0x38] sm:$0xff]
      %v2392 = vld [vmem:[#allocation2 + $0x40] sm:$0xff]
      %v2393 = vld [vmem:[#allocation2 + $0x48] sm:$0xff]
      %v2394 = vld [vmem:[#allocation2 + $0x50] sm:$0xff]
      %v2395 = vld [vmem:[#allocation2 + $0x58] sm:$0xff]
      %2408 = vrot.lane.b32.xlu0 %v2384, 71
      %v2409 = vpop.permute.xlu0 %2408
      %2410 = vrot.lane.b32.xlu0 %v2385, 71
      %v2411 = vpop.permute.xlu0 %2410
      %2412 = vrot.lane.b32.xlu0 %v2386, 71
      %v2413 = vpop.permute.xlu0 %2412
      %2414 = vrot.lane.b32.xlu0 %v2387, 71
      %v2415 = vpop.permute.xlu0 %2414
      %2416 = vrot.lane.b32.xlu0 %v2388, 71
      %v2417 = vpop.permute.xlu0 %2416
      %2418 = vrot.lane.b32.xlu0 %v2389, 71
      %v2419 = vpop.permute.xlu0 %2418
      %2420 = vrot.lane.b32.xlu0 %v2390, 71
      %v2421 = vpop.permute.xlu0 %2420
      %2422 = vrot.lane.b32.xlu0 %v2391, 71
      %v2423 = vpop.permute.xlu0 %2422
      %2424 = vrot.lane.b32.xlu0 %v2392, 71
      %v2425 = vpop.permute.xlu0 %2424
      %2426 = vrot.lane.b32.xlu0 %v2393, 71
      %v2427 = vpop.permute.xlu0 %2426
      %2428 = vrot.lane.b32.xlu0 %v2394, 71
      %v2429 = vpop.permute.xlu0 %2428
      %2430 = vrot.lane.b32.xlu0 %v2395, 71
      %v2431 = vpop.permute.xlu0 %2430
      %v2432 = vrot.slane %v2409, 4
      %v2433 = vrot.slane %v2411, 4
      %v2434 = vrot.slane %v2413, 4
      %v2435 = vrot.slane %v2415, 4
      %v2436 = vrot.slane %v2417, 4
      %v2437 = vrot.slane %v2419, 4
      %v2438 = vrot.slane %v2421, 4
      %v2439 = vrot.slane %v2423, 4
      %v2440 = vrot.slane %v2425, 4
      %v2441 = vrot.slane %v2427, 4
      %v2442 = vrot.slane %v2429, 4
      %v2443 = vrot.slane %v2431, 4
      %v2444 = vsel %vm1813, %v2432, %v2433
      %vm2445 = vcmask 580608
      %v2446 = vsel %vm2445, %v2409, %v2444
      %v2447 = vsel %vm1813, %v2433, %v2434
      %v2448 = vsel %vm2445, %v2411, %v2447
      %v2449 = vsel %vm2445, %v2413, %v2434
      %v2450 = vsel %vm1813, %v2435, %v2436
      %v2451 = vsel %vm2445, %v2415, %v2450
      %v2452 = vsel %vm1813, %v2436, %v2437
      %v2453 = vsel %vm2445, %v2417, %v2452
      %v2454 = vsel %vm2445, %v2419, %v2437
      %v2455 = vsel %vm1813, %v2438, %v2439
      %v2456 = vsel %vm2445, %v2421, %v2455
      %v2457 = vsel %vm1813, %v2439, %v2440
      %v2458 = vsel %vm2445, %v2423, %v2457
      %v2459 = vsel %vm2445, %v2425, %v2440
      %v2460 = vsel %vm1813, %v2441, %v2442
      %v2461 = vsel %vm2445, %v2427, %v2460
      %v2462 = vsel %vm1813, %v2442, %v2443
      %v2463 = vsel %vm2445, %v2429, %v2462
      %v2464 = vsel %vm2445, %v2431, %v2443
      %2477 = vst [vmem:[#allocation3 + $0x2a0] sm:$0xff] %v2446
      %2478 = vst [vmem:[#allocation3 + $0x2a8] sm:$0xff] %v2448
      %2479 = vst.msk [vmem:[#allocation3 + $0x2b0] sm:$0xff] %vm1742, %v2449
      %2480 = vst [vmem:[#allocation3 + $0x2b8] sm:$0xff] %v2451
      %2481 = vst [vmem:[#allocation3 + $0x2c0] sm:$0xff] %v2453
      %2482 = vst.msk [vmem:[#allocation3 + $0x2c8] sm:$0xff] %vm1742, %v2454
      %2483 = vst [vmem:[#allocation3 + $0x2d0] sm:$0xff] %v2456
      %2484 = vst [vmem:[#allocation3 + $0x2d8] sm:$0xff] %v2458
      %2485 = vst.msk [vmem:[#allocation3 + $0x2e0] sm:$0xff] %vm1742, %v2459
      %2486 = vst [vmem:[#allocation3 + $0x2e8] sm:$0xff] %v2461
      %2487 = vst [vmem:[#allocation3 + $0x2f0] sm:$0xff] %v2463
      %2488 = vst.msk [vmem:[#allocation3 + $0x2f8] sm:$0xff] %vm1742, %v2464
      %v2489 = vld [vmem:[#allocation2] sm:$0xff]
      %v2490 = vld [vmem:[#allocation2 + $0x8] sm:$0xff]
      %v2491 = vld [vmem:[#allocation2 + $0x10] sm:$0xff]
      %v2492 = vld [vmem:[#allocation2 + $0x18] sm:$0xff]
      %v2493 = vld [vmem:[#allocation2 + $0x20] sm:$0xff]
      %v2494 = vld [vmem:[#allocation2 + $0x28] sm:$0xff]
      %v2495 = vld [vmem:[#allocation2 + $0x30] sm:$0xff]
      %v2496 = vld [vmem:[#allocation2 + $0x38] sm:$0xff]
      %v2497 = vld [vmem:[#allocation2 + $0x40] sm:$0xff]
      %v2498 = vld [vmem:[#allocation2 + $0x48] sm:$0xff]
      %v2499 = vld [vmem:[#allocation2 + $0x50] sm:$0xff]
      %v2500 = vld [vmem:[#allocation2 + $0x58] sm:$0xff]
      %2513 = vrot.lane.b32.xlu0 %v2489, 70
      %v2514 = vpop.permute.xlu0 %2513
      %2515 = vrot.lane.b32.xlu0 %v2490, 70
      %v2516 = vpop.permute.xlu0 %2515
      %2517 = vrot.lane.b32.xlu0 %v2491, 70
      %v2518 = vpop.permute.xlu0 %2517
      %2519 = vrot.lane.b32.xlu0 %v2492, 70
      %v2520 = vpop.permute.xlu0 %2519
      %2521 = vrot.lane.b32.xlu0 %v2493, 70
      %v2522 = vpop.permute.xlu0 %2521
      %2523 = vrot.lane.b32.xlu0 %v2494, 70
      %v2524 = vpop.permute.xlu0 %2523
      %2525 = vrot.lane.b32.xlu0 %v2495, 70
      %v2526 = vpop.permute.xlu0 %2525
      %2527 = vrot.lane.b32.xlu0 %v2496, 70
      %v2528 = vpop.permute.xlu0 %2527
      %2529 = vrot.lane.b32.xlu0 %v2497, 70
      %v2530 = vpop.permute.xlu0 %2529
      %2531 = vrot.lane.b32.xlu0 %v2498, 70
      %v2532 = vpop.permute.xlu0 %2531
      %2533 = vrot.lane.b32.xlu0 %v2499, 70
      %v2534 = vpop.permute.xlu0 %2533
      %2535 = vrot.lane.b32.xlu0 %v2500, 70
      %v2536 = vpop.permute.xlu0 %2535
      %v2537 = vrot.slane %v2514, 4
      %v2538 = vrot.slane %v2516, 4
      %v2539 = vrot.slane %v2518, 4
      %v2540 = vrot.slane %v2520, 4
      %v2541 = vrot.slane %v2522, 4
      %v2542 = vrot.slane %v2524, 4
      %v2543 = vrot.slane %v2526, 4
      %v2544 = vrot.slane %v2528, 4
      %v2545 = vrot.slane %v2530, 4
      %v2546 = vrot.slane %v2532, 4
      %v2547 = vrot.slane %v2534, 4
      %v2548 = vrot.slane %v2536, 4
      %v2549 = vsel %vm1813, %v2537, %v2538
      %vm2550 = vcmask 572416
      %v2551 = vsel %vm2550, %v2514, %v2549
      %v2552 = vsel %vm1813, %v2538, %v2539
      %v2553 = vsel %vm2550, %v2516, %v2552
      %v2554 = vsel %vm2550, %v2518, %v2539
      %v2555 = vsel %vm1813, %v2540, %v2541
      %v2556 = vsel %vm2550, %v2520, %v2555
      %v2557 = vsel %vm1813, %v2541, %v2542
      %v2558 = vsel %vm2550, %v2522, %v2557
      %v2559 = vsel %vm2550, %v2524, %v2542
      %v2560 = vsel %vm1813, %v2543, %v2544
      %v2561 = vsel %vm2550, %v2526, %v2560
      %v2562 = vsel %vm1813, %v2544, %v2545
      %v2563 = vsel %vm2550, %v2528, %v2562
      %v2564 = vsel %vm2550, %v2530, %v2545
      %v2565 = vsel %vm1813, %v2546, %v2547
      %v2566 = vsel %vm2550, %v2532, %v2565
      %v2567 = vsel %vm1813, %v2547, %v2548
      %v2568 = vsel %vm2550, %v2534, %v2567
      %v2569 = vsel %vm2550, %v2536, %v2548
      %2582 = vst [vmem:[#allocation3 + $0x300] sm:$0xff] %v2551
      %2583 = vst [vmem:[#allocation3 + $0x308] sm:$0xff] %v2553
      %2584 = vst.msk [vmem:[#allocation3 + $0x310] sm:$0xff] %vm1742, %v2554
      %2585 = vst [vmem:[#allocation3 + $0x318] sm:$0xff] %v2556
      %2586 = vst [vmem:[#allocation3 + $0x320] sm:$0xff] %v2558
      %2587 = vst.msk [vmem:[#allocation3 + $0x328] sm:$0xff] %vm1742, %v2559
      %2588 = vst [vmem:[#allocation3 + $0x330] sm:$0xff] %v2561
      %2589 = vst [vmem:[#allocation3 + $0x338] sm:$0xff] %v2563
      %2590 = vst.msk [vmem:[#allocation3 + $0x340] sm:$0xff] %vm1742, %v2564
      %2591 = vst [vmem:[#allocation3 + $0x348] sm:$0xff] %v2566
      %2592 = vst [vmem:[#allocation3 + $0x350] sm:$0xff] %v2568
      %2593 = vst.msk [vmem:[#allocation3 + $0x358] sm:$0xff] %vm1742, %v2569
      %v2594 = vld [vmem:[#allocation5] sm:$0xff]
      %v2595 = vld [vmem:[#allocation5 + $0x8] sm:$0xf]
      %v2596 = vld [vmem:[#allocation5 + $0xc] sm:$0xff]
      %v2597 = vld [vmem:[#allocation5 + $0x14] sm:$0xf]
      %v2598 = vld [vmem:[#allocation5 + $0x18] sm:$0xff]
      %v2599 = vld [vmem:[#allocation5 + $0x20] sm:$0xf]
      %v2600 = vld [vmem:[#allocation5 + $0x24] sm:$0xff]
      %v2601 = vld [vmem:[#allocation5 + $0x2c] sm:$0xf]
      %v2602 = vld [vmem:[#allocation5 + $0x30] sm:$0xff]
      %v2603 = vld [vmem:[#allocation5 + $0x38] sm:$0xf]
      %v2604 = vld [vmem:[#allocation5 + $0x3c] sm:$0xff]
      %v2605 = vld [vmem:[#allocation5 + $0x44] sm:$0xf]
      %v2606 = vld [vmem:[#allocation5 + $0x48] sm:$0xff]
      %v2607 = vld [vmem:[#allocation5 + $0x50] sm:$0xf]
      %v2608 = vld [vmem:[#allocation5 + $0x54] sm:$0xff]
      %v2609 = vld [vmem:[#allocation5 + $0x5c] sm:$0xf]
      %v2610 = vld [vmem:[#allocation3] sm:$0xff]
      %v2611 = vld [vmem:[#allocation3 + $0x8] sm:$0xff]
      %v2612 = vld [vmem:[#allocation3 + $0x10] sm:$0xff]
      %v2613 = vld [vmem:[#allocation3 + $0x18] sm:$0xff]
      %v2614 = vld [vmem:[#allocation3 + $0x20] sm:$0xff]
      %v2615 = vld [vmem:[#allocation3 + $0x28] sm:$0xff]
      %v2616 = vld [vmem:[#allocation3 + $0x30] sm:$0xff]
      %v2617 = vld [vmem:[#allocation3 + $0x38] sm:$0xff]
      %v2618 = vld [vmem:[#allocation3 + $0x40] sm:$0xff]
      %v2619 = vld [vmem:[#allocation3 + $0x48] sm:$0xff]
      %v2620 = vld [vmem:[#allocation3 + $0x50] sm:$0xff]
      %v2621 = vld [vmem:[#allocation3 + $0x58] sm:$0xff]
      %v2622 = vld [vmem:[#allocation3 + $0x60] sm:$0xff]
      %v2623 = vld [vmem:[#allocation3 + $0x68] sm:$0xff]
      %v2624 = vld [vmem:[#allocation3 + $0x70] sm:$0xff]
      %v2625 = vld [vmem:[#allocation3 + $0x78] sm:$0xff]
      %v2626 = vld [vmem:[#allocation3 + $0x80] sm:$0xff]
      %v2627 = vld [vmem:[#allocation3 + $0x88] sm:$0xff]
      %v2628 = vld [vmem:[#allocation3 + $0x90] sm:$0xff]
      %v2629 = vld [vmem:[#allocation3 + $0x98] sm:$0xff]
      %v2630 = vld [vmem:[#allocation3 + $0xa0] sm:$0xff]
      %v2631 = vld [vmem:[#allocation3 + $0xa8] sm:$0xff]
      %v2632 = vld [vmem:[#allocation3 + $0xb0] sm:$0xff]
      %v2633 = vld [vmem:[#allocation3 + $0xb8] sm:$0xff]
      %v2634 = vld [vmem:[#allocation3 + $0xc0] sm:$0xff]
      %v2635 = vld [vmem:[#allocation3 + $0xc8] sm:$0xff]
      %v2636 = vld [vmem:[#allocation3 + $0xd0] sm:$0xff]
      %v2637 = vld [vmem:[#allocation3 + $0xd8] sm:$0xff]
      %v2638 = vld [vmem:[#allocation3 + $0xe0] sm:$0xff]
      %v2639 = vld [vmem:[#allocation3 + $0xe8] sm:$0xff]
      %v2640 = vld [vmem:[#allocation3 + $0xf0] sm:$0xff]
      %v2641 = vld [vmem:[#allocation3 + $0xf8] sm:$0xff]
      %v2642 = vld [vmem:[#allocation3 + $0x100] sm:$0xff]
      %v2643 = vld [vmem:[#allocation3 + $0x108] sm:$0xff]
      %v2644 = vld [vmem:[#allocation3 + $0x110] sm:$0xff]
      %v2645 = vld [vmem:[#allocation3 + $0x118] sm:$0xff]
      %v2646 = vld [vmem:[#allocation3 + $0x120] sm:$0xff]
      %v2647 = vld [vmem:[#allocation3 + $0x128] sm:$0xff]
      %v2648 = vld [vmem:[#allocation3 + $0x130] sm:$0xff]
      %v2649 = vld [vmem:[#allocation3 + $0x138] sm:$0xff]
      %v2650 = vld [vmem:[#allocation3 + $0x140] sm:$0xff]
      %v2651 = vld [vmem:[#allocation3 + $0x148] sm:$0xff]
      %v2652 = vld [vmem:[#allocation3 + $0x150] sm:$0xff]
      %v2653 = vld [vmem:[#allocation3 + $0x158] sm:$0xff]
      %v2654 = vld [vmem:[#allocation3 + $0x160] sm:$0xff]
      %v2655 = vld [vmem:[#allocation3 + $0x168] sm:$0xff]
      %v2656 = vld [vmem:[#allocation3 + $0x170] sm:$0xff]
      %v2657 = vld [vmem:[#allocation3 + $0x178] sm:$0xff]
      %v2658 = vld [vmem:[#allocation3 + $0x180] sm:$0xff]
      %v2659 = vld [vmem:[#allocation3 + $0x188] sm:$0xff]
      %v2660 = vld [vmem:[#allocation3 + $0x190] sm:$0xff]
      %v2661 = vld [vmem:[#allocation3 + $0x198] sm:$0xff]
      %v2662 = vld [vmem:[#allocation3 + $0x1a0] sm:$0xff]
      %v2663 = vld [vmem:[#allocation3 + $0x1a8] sm:$0xff]
      %v2664 = vld [vmem:[#allocation3 + $0x1b0] sm:$0xff]
      %v2665 = vld [vmem:[#allocation3 + $0x1b8] sm:$0xff]
      %v2666 = vld [vmem:[#allocation3 + $0x1c0] sm:$0xff]
      %v2667 = vld [vmem:[#allocation3 + $0x1c8] sm:$0xff]
      %v2668 = vld [vmem:[#allocation3 + $0x1d0] sm:$0xff]
      %v2669 = vld [vmem:[#allocation3 + $0x1d8] sm:$0xff]
      %v2670 = vld [vmem:[#allocation3 + $0x1e0] sm:$0xff]
      %v2671 = vld [vmem:[#allocation3 + $0x1e8] sm:$0xff]
      %v2672 = vld [vmem:[#allocation3 + $0x1f0] sm:$0xff]
      %v2673 = vld [vmem:[#allocation3 + $0x1f8] sm:$0xff]
      %v2674 = vld [vmem:[#allocation3 + $0x200] sm:$0xff]
      %v2675 = vld [vmem:[#allocation3 + $0x208] sm:$0xff]
      %v2676 = vld [vmem:[#allocation3 + $0x210] sm:$0xff]
      %v2677 = vld [vmem:[#allocation3 + $0x218] sm:$0xff]
      %v2678 = vld [vmem:[#allocation3 + $0x220] sm:$0xff]
      %v2679 = vld [vmem:[#allocation3 + $0x228] sm:$0xff]
      %v2680 = vld [vmem:[#allocation3 + $0x230] sm:$0xff]
      %v2681 = vld [vmem:[#allocation3 + $0x238] sm:$0xff]
      %v2682 = vld [vmem:[#allocation3 + $0x240] sm:$0xff]
      %v2683 = vld [vmem:[#allocation3 + $0x248] sm:$0xff]
      %v2684 = vld [vmem:[#allocation3 + $0x250] sm:$0xff]
      %v2685 = vld [vmem:[#allocation3 + $0x258] sm:$0xff]
      %v2686 = vld [vmem:[#allocation3 + $0x260] sm:$0xff]
      %v2687 = vld [vmem:[#allocation3 + $0x268] sm:$0xff]
      %v2688 = vld [vmem:[#allocation3 + $0x270] sm:$0xff]
      %v2689 = vld [vmem:[#allocation3 + $0x278] sm:$0xff]
      %v2690 = vld [vmem:[#allocation3 + $0x280] sm:$0xff]
      %v2691 = vld [vmem:[#allocation3 + $0x288] sm:$0xff]
      %v2692 = vld [vmem:[#allocation3 + $0x290] sm:$0xff]
      %v2693 = vld [vmem:[#allocation3 + $0x298] sm:$0xff]
      %v2694 = vld [vmem:[#allocation3 + $0x2a0] sm:$0xff]
      %v2695 = vld [vmem:[#allocation3 + $0x2a8] sm:$0xff]
      %v2696 = vld [vmem:[#allocation3 + $0x2b0] sm:$0xff]
      %v2697 = vld [vmem:[#allocation3 + $0x2b8] sm:$0xff]
      %v2698 = vld [vmem:[#allocation3 + $0x2c0] sm:$0xff]
      %v2699 = vld [vmem:[#allocation3 + $0x2c8] sm:$0xff]
      %v2700 = vld [vmem:[#allocation3 + $0x2d0] sm:$0xff]
      %v2701 = vld [vmem:[#allocation3 + $0x2d8] sm:$0xff]
      %v2702 = vld [vmem:[#allocation3 + $0x2e0] sm:$0xff]
      %v2703 = vld [vmem:[#allocation3 + $0x2e8] sm:$0xff]
      %v2704 = vld [vmem:[#allocation3 + $0x2f0] sm:$0xff]
      %v2705 = vld [vmem:[#allocation3 + $0x2f8] sm:$0xff]
      %v2706 = vld [vmem:[#allocation3 + $0x300] sm:$0xff]
      %v2707 = vld [vmem:[#allocation3 + $0x308] sm:$0xff]
      %v2708 = vld [vmem:[#allocation3 + $0x310] sm:$0xff]
      %v2709 = vld [vmem:[#allocation3 + $0x318] sm:$0xff]
      %v2710 = vld [vmem:[#allocation3 + $0x320] sm:$0xff]
      %v2711 = vld [vmem:[#allocation3 + $0x328] sm:$0xff]
      %v2712 = vld [vmem:[#allocation3 + $0x330] sm:$0xff]
      %v2713 = vld [vmem:[#allocation3 + $0x338] sm:$0xff]
      %v2714 = vld [vmem:[#allocation3 + $0x340] sm:$0xff]
      %v2715 = vld [vmem:[#allocation3 + $0x348] sm:$0xff]
      %v2716 = vld [vmem:[#allocation3 + $0x350] sm:$0xff]
      %v2717 = vld [vmem:[#allocation3 + $0x358] sm:$0xff]
      %v2718 = vld [vmem:[%s4] sm:$0xff]
      %v2719 = vld [vmem:[%s4 + $0x8] sm:$0xff]
      %v2720 = vld [vmem:[%s4 + $0x10] sm:$0xff]
      %v2721 = vld [vmem:[%s4 + $0x18] sm:$0xff]
      %v2722 = vld [vmem:[%s4 + $0x20] sm:$0xff]
      %v2723 = vld [vmem:[%s4 + $0x28] sm:$0xff]
      %v2724 = vld [vmem:[%s4 + $0x30] sm:$0xff]
      %v2725 = vld [vmem:[%s4 + $0x38] sm:$0xff]
      %2727 = vset.pattern.permute.xlu0 0
      %2728 = vperm.xlu0 %2727, %v2718
      %v2729 = vpop.permute.xlu0 %2728
      %2732 = vset.pattern.permute.xlu0 0
      %2733 = vperm.xlu0 %2732, %v2719
      %v2734 = vpop.permute.xlu0 %2733
      %2737 = vset.pattern.permute.xlu0 0
      %2738 = vperm.xlu0 %2737, %v2720
      %v2739 = vpop.permute.xlu0 %2738
      %2742 = vset.pattern.permute.xlu0 0
      %2743 = vperm.xlu0 %2742, %v2721
      %v2744 = vpop.permute.xlu0 %2743
      %2747 = vset.pattern.permute.xlu0 0
      %2748 = vperm.xlu0 %2747, %v2722
      %v2749 = vpop.permute.xlu0 %2748
      %2752 = vset.pattern.permute.xlu0 0
      %2753 = vperm.xlu0 %2752, %v2723
      %v2754 = vpop.permute.xlu0 %2753
      %2757 = vset.pattern.permute.xlu0 0
      %2758 = vperm.xlu0 %2757, %v2724
      %v2759 = vpop.permute.xlu0 %2758
      %2762 = vset.pattern.permute.xlu0 0
      %2763 = vperm.xlu0 %2762, %v2725
      %v2764 = vpop.permute.xlu0 %2763
      %v2782 = vunpack.c.l.b16 %v2594
      %v2783 = vunpack.c.h.b16 %v2594
      %v2784 = vunpack.c.l.b16 %v2595
      %v2785 = vunpack.c.l.b16 %v2596
      %v2786 = vunpack.c.h.b16 %v2596
      %v2787 = vunpack.c.l.b16 %v2597
      %v2788 = vunpack.c.l.b16 %v2598
      %v2789 = vunpack.c.h.b16 %v2598
      %v2790 = vunpack.c.l.b16 %v2599
      %v2791 = vunpack.c.l.b16 %v2600
      %v2792 = vunpack.c.h.b16 %v2600
      %v2793 = vunpack.c.l.b16 %v2601
      %v2794 = vunpack.c.l.b16 %v2602
      %v2795 = vunpack.c.h.b16 %v2602
      %v2796 = vunpack.c.l.b16 %v2603
      %v2797 = vunpack.c.l.b16 %v2604
      %v2798 = vunpack.c.h.b16 %v2604
      %v2799 = vunpack.c.l.b16 %v2605
      %v2800 = vunpack.c.l.b16 %v2606
      %v2801 = vunpack.c.h.b16 %v2606
      %v2802 = vunpack.c.l.b16 %v2607
      %v2803 = vunpack.c.l.b16 %v2608
      %v2804 = vunpack.c.h.b16 %v2608
      %v2805 = vunpack.c.l.b16 %v2609
      %v2806 = vpack.c.b16 %v2785, %v2782
      %v2807 = vpack.c.b16 %v2786, %v2783
      %v2808 = vpack.c.b16 %v2787, %v2784
      %v2809 = vpack.c.b16 %v2791, %v2788
      %v2810 = vpack.c.b16 %v2792, %v2789
      %v2811 = vpack.c.b16 %v2793, %v2790
      %v2812 = vpack.c.b16 %v2797, %v2794
      %v2813 = vpack.c.b16 %v2798, %v2795
      %v2814 = vpack.c.b16 %v2799, %v2796
      %v2815 = vpack.c.b16 %v2803, %v2800
      %v2816 = vpack.c.b16 %v2804, %v2801
      %v2817 = vpack.c.b16 %v2805, %v2802
      %v2934 = vunpack.c.l.b16 %v2610
      %v2935 = vunpack.c.h.b16 %v2610
      %v2936 = vunpack.c.l.b16 %v2611
      %v2937 = vunpack.c.h.b16 %v2611
      %v2938 = vunpack.c.l.b16 %v2612
      %v2939 = vunpack.c.h.b16 %v2612
      %v2940 = vunpack.c.l.b16 %v2613
      %v2941 = vunpack.c.h.b16 %v2613
      %v2942 = vunpack.c.l.b16 %v2614
      %v2943 = vunpack.c.h.b16 %v2614
      %v2944 = vunpack.c.l.b16 %v2615
      %v2945 = vunpack.c.h.b16 %v2615
      %v2946 = vunpack.c.l.b16 %v2616
      %v2947 = vunpack.c.h.b16 %v2616
      %v2948 = vunpack.c.l.b16 %v2617
      %v2949 = vunpack.c.h.b16 %v2617
      %v2950 = vunpack.c.l.b16 %v2618
      %v2951 = vunpack.c.h.b16 %v2618
      %v2952 = vunpack.c.l.b16 %v2619
      %v2953 = vunpack.c.h.b16 %v2619
      %v2954 = vunpack.c.l.b16 %v2620
      %v2955 = vunpack.c.h.b16 %v2620
      %v2956 = vunpack.c.l.b16 %v2621
      %v2957 = vunpack.c.h.b16 %v2621
      %v2958 = vunpack.c.l.b16 %v2622
      %v2959 = vunpack.c.h.b16 %v2622
      %v2960 = vunpack.c.l.b16 %v2623
      %v2961 = vunpack.c.h.b16 %v2623
      %v2962 = vunpack.c.l.b16 %v2624
      %v2963 = vunpack.c.h.b16 %v2624
      %v2964 = vunpack.c.l.b16 %v2625
      %v2965 = vunpack.c.h.b16 %v2625
      %v2966 = vunpack.c.l.b16 %v2626
      %v2967 = vunpack.c.h.b16 %v2626
      %v2968 = vunpack.c.l.b16 %v2627
      %v2969 = vunpack.c.h.b16 %v2627
      %v2970 = vunpack.c.l.b16 %v2628
      %v2971 = vunpack.c.h.b16 %v2628
      %v2972 = vunpack.c.l.b16 %v2629
      %v2973 = vunpack.c.h.b16 %v2629
      %v2974 = vunpack.c.l.b16 %v2630
      %v2975 = vunpack.c.h.b16 %v2630
      %v2976 = vunpack.c.l.b16 %v2631
      %v2977 = vunpack.c.h.b16 %v2631
      %v2978 = vunpack.c.l.b16 %v2632
      %v2979 = vunpack.c.h.b16 %v2632
      %v2980 = vunpack.c.l.b16 %v2633
      %v2981 = vunpack.c.h.b16 %v2633
      %v2982 = vunpack.c.l.b16 %v2634
      %v2983 = vunpack.c.h.b16 %v2634
      %v2984 = vunpack.c.l.b16 %v2635
      %v2985 = vunpack.c.h.b16 %v2635
      %v2986 = vunpack.c.l.b16 %v2636
      %v2987 = vunpack.c.h.b16 %v2636
      %v2988 = vunpack.c.l.b16 %v2637
      %v2989 = vunpack.c.h.b16 %v2637
      %v2990 = vunpack.c.l.b16 %v2638
      %v2991 = vunpack.c.h.b16 %v2638
      %v2992 = vunpack.c.l.b16 %v2639
      %v2993 = vunpack.c.h.b16 %v2639
      %v2994 = vunpack.c.l.b16 %v2640
      %v2995 = vunpack.c.h.b16 %v2640
      %v2996 = vunpack.c.l.b16 %v2641
      %v2997 = vunpack.c.h.b16 %v2641
      %v2998 = vunpack.c.l.b16 %v2642
      %v2999 = vunpack.c.h.b16 %v2642
      %v3000 = vunpack.c.l.b16 %v2643
      %v3001 = vunpack.c.h.b16 %v2643
      %v3002 = vunpack.c.l.b16 %v2644
      %v3003 = vunpack.c.h.b16 %v2644
      %v3004 = vunpack.c.l.b16 %v2645
      %v3005 = vunpack.c.h.b16 %v2645
      %v3006 = vunpack.c.l.b16 %v2646
      %v3007 = vunpack.c.h.b16 %v2646
      %v3008 = vunpack.c.l.b16 %v2647
      %v3009 = vunpack.c.h.b16 %v2647
      %v3010 = vunpack.c.l.b16 %v2648
      %v3011 = vunpack.c.h.b16 %v2648
      %v3012 = vunpack.c.l.b16 %v2649
      %v3013 = vunpack.c.h.b16 %v2649
      %v3014 = vunpack.c.l.b16 %v2650
      %v3015 = vunpack.c.h.b16 %v2650
      %v3016 = vunpack.c.l.b16 %v2651
      %v3017 = vunpack.c.h.b16 %v2651
      %v3018 = vunpack.c.l.b16 %v2652
      %v3019 = vunpack.c.h.b16 %v2652
      %v3020 = vunpack.c.l.b16 %v2653
      %v3021 = vunpack.c.h.b16 %v2653
      %v3022 = vunpack.c.l.b16 %v2654
      %v3023 = vunpack.c.h.b16 %v2654
      %v3024 = vunpack.c.l.b16 %v2655
      %v3025 = vunpack.c.h.b16 %v2655
      %v3026 = vunpack.c.l.b16 %v2656
      %v3027 = vunpack.c.h.b16 %v2656
      %v3028 = vunpack.c.l.b16 %v2657
      %v3029 = vunpack.c.h.b16 %v2657
      %v3030 = vunpack.c.l.b16 %v2658
      %v3031 = vunpack.c.h.b16 %v2658
      %v3032 = vunpack.c.l.b16 %v2659
      %v3033 = vunpack.c.h.b16 %v2659
      %v3034 = vunpack.c.l.b16 %v2660
      %v3035 = vunpack.c.h.b16 %v2660
      %v3036 = vunpack.c.l.b16 %v2661
      %v3037 = vunpack.c.h.b16 %v2661
      %v3038 = vunpack.c.l.b16 %v2662
      %v3039 = vunpack.c.h.b16 %v2662
      %v3040 = vunpack.c.l.b16 %v2663
      %v3041 = vunpack.c.h.b16 %v2663
      %v3042 = vunpack.c.l.b16 %v2664
      %v3043 = vunpack.c.h.b16 %v2664
      %v3044 = vunpack.c.l.b16 %v2665
      %v3045 = vunpack.c.h.b16 %v2665
      %v3046 = vunpack.c.l.b16 %v2666
      %v3047 = vunpack.c.h.b16 %v2666
      %v3048 = vunpack.c.l.b16 %v2667
      %v3049 = vunpack.c.h.b16 %v2667
      %v3050 = vunpack.c.l.b16 %v2668
      %v3051 = vunpack.c.h.b16 %v2668
      %v3052 = vunpack.c.l.b16 %v2669
      %v3053 = vunpack.c.h.b16 %v2669
      %v3054 = vunpack.c.l.b16 %v2670
      %v3055 = vunpack.c.h.b16 %v2670
      %v3056 = vunpack.c.l.b16 %v2671
      %v3057 = vunpack.c.h.b16 %v2671
      %v3058 = vunpack.c.l.b16 %v2672
      %v3059 = vunpack.c.h.b16 %v2672
      %v3060 = vunpack.c.l.b16 %v2673
      %v3061 = vunpack.c.h.b16 %v2673
      %v3062 = vunpack.c.l.b16 %v2674
      %v3063 = vunpack.c.h.b16 %v2674
      %v3064 = vunpack.c.l.b16 %v2675
      %v3065 = vunpack.c.h.b16 %v2675
      %v3066 = vunpack.c.l.b16 %v2676
      %v3067 = vunpack.c.h.b16 %v2676
      %v3068 = vunpack.c.l.b16 %v2677
      %v3069 = vunpack.c.h.b16 %v2677
      %v3070 = vunpack.c.l.b16 %v2678
      %v3071 = vunpack.c.h.b16 %v2678
      %v3072 = vunpack.c.l.b16 %v2679
      %v3073 = vunpack.c.h.b16 %v2679
      %v3074 = vunpack.c.l.b16 %v2680
      %v3075 = vunpack.c.h.b16 %v2680
      %v3076 = vunpack.c.l.b16 %v2681
      %v3077 = vunpack.c.h.b16 %v2681
      %v3078 = vunpack.c.l.b16 %v2682
      %v3079 = vunpack.c.h.b16 %v2682
      %v3080 = vunpack.c.l.b16 %v2683
      %v3081 = vunpack.c.h.b16 %v2683
      %v3082 = vunpack.c.l.b16 %v2684
      %v3083 = vunpack.c.h.b16 %v2684
      %v3084 = vunpack.c.l.b16 %v2685
      %v3085 = vunpack.c.h.b16 %v2685
      %v3086 = vunpack.c.l.b16 %v2686
      %v3087 = vunpack.c.h.b16 %v2686
      %v3088 = vunpack.c.l.b16 %v2687
      %v3089 = vunpack.c.h.b16 %v2687
      %v3090 = vunpack.c.l.b16 %v2688
      %v3091 = vunpack.c.h.b16 %v2688
      %v3092 = vunpack.c.l.b16 %v2689
      %v3093 = vunpack.c.h.b16 %v2689
      %v3094 = vunpack.c.l.b16 %v2690
      %v3095 = vunpack.c.h.b16 %v2690
      %v3096 = vunpack.c.l.b16 %v2691
      %v3097 = vunpack.c.h.b16 %v2691
      %v3098 = vunpack.c.l.b16 %v2692
      %v3099 = vunpack.c.h.b16 %v2692
      %v3100 = vunpack.c.l.b16 %v2693
      %v3101 = vunpack.c.h.b16 %v2693
      %v3102 = vunpack.c.l.b16 %v2694
      %v3103 = vunpack.c.h.b16 %v2694
      %v3104 = vunpack.c.l.b16 %v2695
      %v3105 = vunpack.c.h.b16 %v2695
      %v3106 = vunpack.c.l.b16 %v2696
      %v3107 = vunpack.c.h.b16 %v2696
      %v3108 = vunpack.c.l.b16 %v2697
      %v3109 = vunpack.c.h.b16 %v2697
      %v3110 = vunpack.c.l.b16 %v2698
      %v3111 = vunpack.c.h.b16 %v2698
      %v3112 = vunpack.c.l.b16 %v2699
      %v3113 = vunpack.c.h.b16 %v2699
      %v3114 = vunpack.c.l.b16 %v2700
      %v3115 = vunpack.c.h.b16 %v2700
      %v3116 = vunpack.c.l.b16 %v2701
      %v3117 = vunpack.c.h.b16 %v2701
      %v3118 = vunpack.c.l.b16 %v2702
      %v3119 = vunpack.c.h.b16 %v2702
      %v3120 = vunpack.c.l.b16 %v2703
      %v3121 = vunpack.c.h.b16 %v2703
      %v3122 = vunpack.c.l.b16 %v2704
      %v3123 = vunpack.c.h.b16 %v2704
      %v3124 = vunpack.c.l.b16 %v2705
      %v3125 = vunpack.c.h.b16 %v2705
      %v3126 = vunpack.c.l.b16 %v2706
      %v3127 = vunpack.c.h.b16 %v2706
      %v3128 = vunpack.c.l.b16 %v2707
      %v3129 = vunpack.c.h.b16 %v2707
      %v3130 = vunpack.c.l.b16 %v2708
      %v3131 = vunpack.c.h.b16 %v2708
      %v3132 = vunpack.c.l.b16 %v2709
      %v3133 = vunpack.c.h.b16 %v2709
      %v3134 = vunpack.c.l.b16 %v2710
      %v3135 = vunpack.c.h.b16 %v2710
      %v3136 = vunpack.c.l.b16 %v2711
      %v3137 = vunpack.c.h.b16 %v2711
      %v3138 = vunpack.c.l.b16 %v2712
      %v3139 = vunpack.c.h.b16 %v2712
      %v3140 = vunpack.c.l.b16 %v2713
      %v3141 = vunpack.c.h.b16 %v2713
      %v3142 = vunpack.c.l.b16 %v2714
      %v3143 = vunpack.c.h.b16 %v2714
      %v3144 = vunpack.c.l.b16 %v2715
      %v3145 = vunpack.c.h.b16 %v2715
      %v3146 = vunpack.c.l.b16 %v2716
      %v3147 = vunpack.c.h.b16 %v2716
      %v3148 = vunpack.c.l.b16 %v2717
      %v3149 = vunpack.c.h.b16 %v2717
      %v3150 = vpack.c.b16 %v2940, %v2934
      %v3151 = vpack.c.b16 %v2941, %v2935
      %v3152 = vpack.c.b16 %v2942, %v2936
      %v3153 = vpack.c.b16 %v2943, %v2937
      %v3154 = vpack.c.b16 %v2944, %v2938
      %v3155 = vpack.c.b16 %v2945, %v2939
      %v3156 = vpack.c.b16 %v2952, %v2946
      %v3157 = vpack.c.b16 %v2953, %v2947
      %v3158 = vpack.c.b16 %v2954, %v2948
      %v3159 = vpack.c.b16 %v2955, %v2949
      %v3160 = vpack.c.b16 %v2956, %v2950
      %v3161 = vpack.c.b16 %v2957, %v2951
      %v3162 = vpack.c.b16 %v2964, %v2958
      %v3163 = vpack.c.b16 %v2965, %v2959
      %v3164 = vpack.c.b16 %v2966, %v2960
      %v3165 = vpack.c.b16 %v2967, %v2961
      %v3166 = vpack.c.b16 %v2968, %v2962
      %v3167 = vpack.c.b16 %v2969, %v2963
      %v3168 = vpack.c.b16 %v2976, %v2970
      %v3169 = vpack.c.b16 %v2977, %v2971
      %v3170 = vpack.c.b16 %v2978, %v2972
      %v3171 = vpack.c.b16 %v2979, %v2973
      %v3172 = vpack.c.b16 %v2980, %v2974
      %v3173 = vpack.c.b16 %v2981, %v2975
      %v3174 = vpack.c.b16 %v2988, %v2982
      %v3175 = vpack.c.b16 %v2989, %v2983
      %v3176 = vpack.c.b16 %v2990, %v2984
      %v3177 = vpack.c.b16 %v2991, %v2985
      %v3178 = vpack.c.b16 %v2992, %v2986
      %v3179 = vpack.c.b16 %v2993, %v2987
      %v3180 = vpack.c.b16 %v3000, %v2994
      %v3181 = vpack.c.b16 %v3001, %v2995
      %v3182 = vpack.c.b16 %v3002, %v2996
      %v3183 = vpack.c.b16 %v3003, %v2997
      %v3184 = vpack.c.b16 %v3004, %v2998
      %v3185 = vpack.c.b16 %v3005, %v2999
      %v3186 = vpack.c.b16 %v3012, %v3006
      %v3187 = vpack.c.b16 %v3013, %v3007
      %v3188 = vpack.c.b16 %v3014, %v3008
      %v3189 = vpack.c.b16 %v3015, %v3009
      %v3190 = vpack.c.b16 %v3016, %v3010
      %v3191 = vpack.c.b16 %v3017, %v3011
      %v3192 = vpack.c.b16 %v3024, %v3018
      %v3193 = vpack.c.b16 %v3025, %v3019
      %v3194 = vpack.c.b16 %v3026, %v3020
      %v3195 = vpack.c.b16 %v3027, %v3021
      %v3196 = vpack.c.b16 %v3028, %v3022
      %v3197 = vpack.c.b16 %v3029, %v3023
      %v3198 = vpack.c.b16 %v3036, %v3030
      %v3199 = vpack.c.b16 %v3037, %v3031
      %v3200 = vpack.c.b16 %v3038, %v3032
      %v3201 = vpack.c.b16 %v3039, %v3033
      %v3202 = vpack.c.b16 %v3040, %v3034
      %v3203 = vpack.c.b16 %v3041, %v3035
      %v3204 = vpack.c.b16 %v3048, %v3042
      %v3205 = vpack.c.b16 %v3049, %v3043
      %v3206 = vpack.c.b16 %v3050, %v3044
      %v3207 = vpack.c.b16 %v3051, %v3045
      %v3208 = vpack.c.b16 %v3052, %v3046
      %v3209 = vpack.c.b16 %v3053, %v3047
      %v3210 = vpack.c.b16 %v3060, %v3054
      %v3211 = vpack.c.b16 %v3061, %v3055
      %v3212 = vpack.c.b16 %v3062, %v3056
      %v3213 = vpack.c.b16 %v3063, %v3057
      %v3214 = vpack.c.b16 %v3064, %v3058
      %v3215 = vpack.c.b16 %v3065, %v3059
      %v3216 = vpack.c.b16 %v3072, %v3066
      %v3217 = vpack.c.b16 %v3073, %v3067
      %v3218 = vpack.c.b16 %v3074, %v3068
      %v3219 = vpack.c.b16 %v3075, %v3069
      %v3220 = vpack.c.b16 %v3076, %v3070
      %v3221 = vpack.c.b16 %v3077, %v3071
      %v3222 = vpack.c.b16 %v3084, %v3078
      %v3223 = vpack.c.b16 %v3085, %v3079
      %v3224 = vpack.c.b16 %v3086, %v3080
      %v3225 = vpack.c.b16 %v3087, %v3081
      %v3226 = vpack.c.b16 %v3088, %v3082
      %v3227 = vpack.c.b16 %v3089, %v3083
      %v3228 = vpack.c.b16 %v3096, %v3090
      %v3229 = vpack.c.b16 %v3097, %v3091
      %v3230 = vpack.c.b16 %v3098, %v3092
      %v3231 = vpack.c.b16 %v3099, %v3093
      %v3232 = vpack.c.b16 %v3100, %v3094
      %v3233 = vpack.c.b16 %v3101, %v3095
      %v3234 = vpack.c.b16 %v3108, %v3102
      %v3235 = vpack.c.b16 %v3109, %v3103
      %v3236 = vpack.c.b16 %v3110, %v3104
      %v3237 = vpack.c.b16 %v3111, %v3105
      %v3238 = vpack.c.b16 %v3112, %v3106
      %v3239 = vpack.c.b16 %v3113, %v3107
      %v3240 = vpack.c.b16 %v3120, %v3114
      %v3241 = vpack.c.b16 %v3121, %v3115
      %v3242 = vpack.c.b16 %v3122, %v3116
      %v3243 = vpack.c.b16 %v3123, %v3117
      %v3244 = vpack.c.b16 %v3124, %v3118
      %v3245 = vpack.c.b16 %v3125, %v3119
      %v3246 = vpack.c.b16 %v3132, %v3126
      %v3247 = vpack.c.b16 %v3133, %v3127
      %v3248 = vpack.c.b16 %v3134, %v3128
      %v3249 = vpack.c.b16 %v3135, %v3129
      %v3250 = vpack.c.b16 %v3136, %v3130
      %v3251 = vpack.c.b16 %v3137, %v3131
      %v3252 = vpack.c.b16 %v3144, %v3138
      %v3253 = vpack.c.b16 %v3145, %v3139
      %v3254 = vpack.c.b16 %v3146, %v3140
      %v3255 = vpack.c.b16 %v3147, %v3141
      %v3256 = vpack.c.b16 %v3148, %v3142
      %v3257 = vpack.c.b16 %v3149, %v3143
      %vm3366 = vcmask 261120
      %v3368 = vsel %vm3366, %v2808, 0
      %v3371 = vsel %vm3366, %v2811, 0
      %v3374 = vsel %vm3366, %v2814, 0
      %v3377 = vsel %vm3366, %v2817, 0
      %3379 = vmatpush.bf16.msra.mxu0 %v3192
      %3380 = vmatpush.bf16.msra.mxu0 %v3186
      %3381 = vmatpush.bf16.msra.mxu0 %v3180
      %3382 = vmatpush.bf16.msra.mxu0 %v3174
      %3383 = vmatpush.bf16.msra.mxu0 %v3168
      %3384 = vmatpush.bf16.msra.mxu0 %v3162
      %3385 = vmatpush.bf16.msra.mxu0 %v3156
      %3386 = vmatpush.bf16.msra.mxu0 %v3150
      %3387 = vmatmul.bf16.gmra.mxu0 %v2806
      %v3388 = vpop.f32.mrf.mxu0
      %v3389 = vadd.f32 %v2729, %v3388
      %v3390 = vpop.f32.mrf.mxu0
      %v3391 = vadd.f32 %v2734, %v3390
      %3392 = vmatmul.bf16.gmra.mxu0 %v2809
      %v3393 = vpop.f32.mrf.mxu0
      %v3394 = vadd.f32 %v2739, %v3393
      %v3395 = vpop.f32.mrf.mxu0
      %v3396 = vadd.f32 %v2744, %v3395
      %3397 = vmatmul.bf16.gmra.mxu0 %v2812
      %v3398 = vpop.f32.mrf.mxu0
      %v3399 = vadd.f32 %v2749, %v3398
      %v3400 = vpop.f32.mrf.mxu0
      %v3401 = vadd.f32 %v2754, %v3400
      %3402 = vmatmul.bf16.gmra.mxu0 %v2815
      %v3403 = vpop.f32.mrf.mxu0
      %v3404 = vadd.f32 %v2759, %v3403
      %v3405 = vpop.f32.mrf.mxu0
      %v3406 = vadd.f32 %v2764, %v3405
      %3407 = vdwg.mxu0
      %3408 = vmatpush.bf16.msra.mxu0 %v3240
      %3409 = vmatpush.bf16.msra.mxu0 %v3234
      %3410 = vmatpush.bf16.msra.mxu0 %v3228
      %3411 = vmatpush.bf16.msra.mxu0 %v3222
      %3412 = vmatpush.bf16.msra.mxu0 %v3216
      %3413 = vmatpush.bf16.msra.mxu0 %v3210
      %3414 = vmatpush.bf16.msra.mxu0 %v3204
      %3415 = vmatpush.bf16.msra.mxu0 %v3198
      %3416 = vmatmul.bf16.gmra.mxu0 %v2807
      %v3417 = vpop.f32.mrf.mxu0
      %v3418 = vadd.f32 %v3389, %v3417
      %v3419 = vpop.f32.mrf.mxu0
      %v3420 = vadd.f32 %v3391, %v3419
      %3421 = vmatmul.bf16.gmra.mxu0 %v2810
      %v3422 = vpop.f32.mrf.mxu0
      %v3423 = vadd.f32 %v3394, %v3422
      %v3424 = vpop.f32.mrf.mxu0
      %v3425 = vadd.f32 %v3396, %v3424
      %3426 = vmatmul.bf16.gmra.mxu0 %v2813
      %v3427 = vpop.f32.mrf.mxu0
      %v3428 = vadd.f32 %v3399, %v3427
      %v3429 = vpop.f32.mrf.mxu0
      %v3430 = vadd.f32 %v3401, %v3429
      %3431 = vmatmul.bf16.gmra.mxu0 %v2816
      %v3432 = vpop.f32.mrf.mxu0
      %v3433 = vadd.f32 %v3404, %v3432
      %v3434 = vpop.f32.mrf.mxu0
      %v3435 = vadd.f32 %v3406, %v3434
      %3436 = vdwg.mxu0
      %3437 = vmatpush.bf16.msra.mxu0 0
      %3438 = vmatpush.bf16.msra.mxu0 0
      %3439 = vmatpush.bf16.msra.mxu0 0
      %3440 = vmatpush.bf16.msra.mxu0 0
      %3441 = vmatpush.bf16.msra.mxu0 0
      %3442 = vmatpush.bf16.msra.mxu0 0
      %3443 = vmatpush.bf16.msra.mxu0 %v3252
      %3444 = vmatpush.bf16.msra.mxu0 %v3246
      %3445 = vmatmul.bf16.gmra.mxu0 %v3368
      %v3446 = vpop.f32.mrf.mxu0
      %v3447 = vadd.f32 %v3418, %v3446
      %v3448 = vpop.f32.mrf.mxu0
      %v3449 = vadd.f32 %v3420, %v3448
      %3450 = vmatmul.bf16.gmra.mxu0 %v3371
      %v3451 = vpop.f32.mrf.mxu0
      %v3452 = vadd.f32 %v3423, %v3451
      %v3453 = vpop.f32.mrf.mxu0
      %v3454 = vadd.f32 %v3425, %v3453
      %3455 = vmatmul.bf16.gmra.mxu0 %v3374
      %v3456 = vpop.f32.mrf.mxu0
      %v3457 = vadd.f32 %v3428, %v3456
      %v3458 = vpop.f32.mrf.mxu0
      %v3459 = vadd.f32 %v3430, %v3458
      %3460 = vmatmul.bf16.gmra.mxu0 %v3377
      %v3461 = vpop.f32.mrf.mxu0
      %v3462 = vadd.f32 %v3433, %v3461
      %v3463 = vpop.f32.mrf.mxu0
      %v3464 = vadd.f32 %v3435, %v3463
      %3465 = vdwg.mxu0
      %3466 = vmatpush.bf16.msra.mxu0 %v3193
      %3467 = vmatpush.bf16.msra.mxu0 %v3187
      %3468 = vmatpush.bf16.msra.mxu0 %v3181
      %3469 = vmatpush.bf16.msra.mxu0 %v3175
      %3470 = vmatpush.bf16.msra.mxu0 %v3169
      %3471 = vmatpush.bf16.msra.mxu0 %v3163
      %3472 = vmatpush.bf16.msra.mxu0 %v3157
      %3473 = vmatpush.bf16.msra.mxu0 %v3151
      %3474 = vmatmul.bf16.gmra.mxu0 %v2806
      %v3475 = vpop.f32.mrf.mxu0
      %v3476 = vadd.f32 %v2729, %v3475
      %v3477 = vpop.f32.mrf.mxu0
      %v3478 = vadd.f32 %v2734, %v3477
      %3479 = vmatmul.bf16.gmra.mxu0 %v2809
      %v3480 = vpop.f32.mrf.mxu0
      %v3481 = vadd.f32 %v2739, %v3480
      %v3482 = vpop.f32.mrf.mxu0
      %v3483 = vadd.f32 %v2744, %v3482
      %3484 = vmatmul.bf16.gmra.mxu0 %v2812
      %v3485 = vpop.f32.mrf.mxu0
      %v3486 = vadd.f32 %v2749, %v3485
      %v3487 = vpop.f32.mrf.mxu0
      %v3488 = vadd.f32 %v2754, %v3487
      %3489 = vmatmul.bf16.gmra.mxu0 %v2815
      %v3490 = vpop.f32.mrf.mxu0
      %v3491 = vadd.f32 %v2759, %v3490
      %v3492 = vpop.f32.mrf.mxu0
      %v3493 = vadd.f32 %v2764, %v3492
      %3494 = vdwg.mxu0
      %3495 = vmatpush.bf16.msra.mxu0 %v3241
      %3496 = vmatpush.bf16.msra.mxu0 %v3235
      %3497 = vmatpush.bf16.msra.mxu0 %v3229
      %3498 = vmatpush.bf16.msra.mxu0 %v3223
      %3499 = vmatpush.bf16.msra.mxu0 %v3217
      %3500 = vmatpush.bf16.msra.mxu0 %v3211
      %3501 = vmatpush.bf16.msra.mxu0 %v3205
      %3502 = vmatpush.bf16.msra.mxu0 %v3199
      %3503 = vmatmul.bf16.gmra.mxu0 %v2807
      %v3504 = vpop.f32.mrf.mxu0
      %v3505 = vadd.f32 %v3476, %v3504
      %v3506 = vpop.f32.mrf.mxu0
      %v3507 = vadd.f32 %v3478, %v3506
      %3508 = vmatmul.bf16.gmra.mxu0 %v2810
      %v3509 = vpop.f32.mrf.mxu0
      %v3510 = vadd.f32 %v3481, %v3509
      %v3511 = vpop.f32.mrf.mxu0
      %v3512 = vadd.f32 %v3483, %v3511
      %3513 = vmatmul.bf16.gmra.mxu0 %v2813
      %v3514 = vpop.f32.mrf.mxu0
      %v3515 = vadd.f32 %v3486, %v3514
      %v3516 = vpop.f32.mrf.mxu0
      %v3517 = vadd.f32 %v3488, %v3516
      %3518 = vmatmul.bf16.gmra.mxu0 %v2816
      %v3519 = vpop.f32.mrf.mxu0
      %v3520 = vadd.f32 %v3491, %v3519
      %v3521 = vpop.f32.mrf.mxu0
      %v3522 = vadd.f32 %v3493, %v3521
      %3523 = vdwg.mxu0
      %3524 = vmatpush.bf16.msra.mxu0 0
      %3525 = vmatpush.bf16.msra.mxu0 0
      %3526 = vmatpush.bf16.msra.mxu0 0
      %3527 = vmatpush.bf16.msra.mxu0 0
      %3528 = vmatpush.bf16.msra.mxu0 0
      %3529 = vmatpush.bf16.msra.mxu0 0
      %3530 = vmatpush.bf16.msra.mxu0 %v3253
      %3531 = vmatpush.bf16.msra.mxu0 %v3247
      %3532 = vmatmul.bf16.gmra.mxu0 %v3368
      %v3533 = vpop.f32.mrf.mxu0
      %v3534 = vadd.f32 %v3505, %v3533
      %v3535 = vpop.f32.mrf.mxu0
      %v3536 = vadd.f32 %v3507, %v3535
      %3537 = vmatmul.bf16.gmra.mxu0 %v3371
      %v3538 = vpop.f32.mrf.mxu0
      %v3539 = vadd.f32 %v3510, %v3538
      %v3540 = vpop.f32.mrf.mxu0
      %v3541 = vadd.f32 %v3512, %v3540
      %3542 = vmatmul.bf16.gmra.mxu0 %v3374
      %v3543 = vpop.f32.mrf.mxu0
      %v3544 = vadd.f32 %v3515, %v3543
      %v3545 = vpop.f32.mrf.mxu0
      %v3546 = vadd.f32 %v3517, %v3545
      %3547 = vmatmul.bf16.gmra.mxu0 %v3377
      %v3548 = vpop.f32.mrf.mxu0
      %v3549 = vadd.f32 %v3520, %v3548
      %v3550 = vpop.f32.mrf.mxu0
      %v3551 = vadd.f32 %v3522, %v3550
      %3552 = vdwg.mxu0
      %3553 = vmatpush.bf16.msra.mxu0 %v3194
      %3554 = vmatpush.bf16.msra.mxu0 %v3188
      %3555 = vmatpush.bf16.msra.mxu0 %v3182
      %3556 = vmatpush.bf16.msra.mxu0 %v3176
      %3557 = vmatpush.bf16.msra.mxu0 %v3170
      %3558 = vmatpush.bf16.msra.mxu0 %v3164
      %3559 = vmatpush.bf16.msra.mxu0 %v3158
      %3560 = vmatpush.bf16.msra.mxu0 %v3152
      %3561 = vmatmul.bf16.gmra.mxu0 %v2806
      %v3562 = vpop.f32.mrf.mxu0
      %v3563 = vadd.f32 %v2729, %v3562
      %v3564 = vpop.f32.mrf.mxu0
      %v3565 = vadd.f32 %v2734, %v3564
      %3566 = vmatmul.bf16.gmra.mxu0 %v2809
      %v3567 = vpop.f32.mrf.mxu0
      %v3568 = vadd.f32 %v2739, %v3567
      %v3569 = vpop.f32.mrf.mxu0
      %v3570 = vadd.f32 %v2744, %v3569
      %3571 = vmatmul.bf16.gmra.mxu0 %v2812
      %v3572 = vpop.f32.mrf.mxu0
      %v3573 = vadd.f32 %v2749, %v3572
      %v3574 = vpop.f32.mrf.mxu0
      %v3575 = vadd.f32 %v2754, %v3574
      %3576 = vmatmul.bf16.gmra.mxu0 %v2815
      %v3577 = vpop.f32.mrf.mxu0
      %v3578 = vadd.f32 %v2759, %v3577
      %v3579 = vpop.f32.mrf.mxu0
      %v3580 = vadd.f32 %v2764, %v3579
      %3581 = vdwg.mxu0
      %3582 = vmatpush.bf16.msra.mxu0 %v3242
      %3583 = vmatpush.bf16.msra.mxu0 %v3236
      %3584 = vmatpush.bf16.msra.mxu0 %v3230
      %3585 = vmatpush.bf16.msra.mxu0 %v3224
      %3586 = vmatpush.bf16.msra.mxu0 %v3218
      %3587 = vmatpush.bf16.msra.mxu0 %v3212
      %3588 = vmatpush.bf16.msra.mxu0 %v3206
      %3589 = vmatpush.bf16.msra.mxu0 %v3200
      %3590 = vmatmul.bf16.gmra.mxu0 %v2807
      %v3591 = vpop.f32.mrf.mxu0
      %v3592 = vadd.f32 %v3563, %v3591
      %v3593 = vpop.f32.mrf.mxu0
      %v3594 = vadd.f32 %v3565, %v3593
      %3595 = vmatmul.bf16.gmra.mxu0 %v2810
      %v3596 = vpop.f32.mrf.mxu0
      %v3597 = vadd.f32 %v3568, %v3596
      %v3598 = vpop.f32.mrf.mxu0
      %v3599 = vadd.f32 %v3570, %v3598
      %3600 = vmatmul.bf16.gmra.mxu0 %v2813
      %v3601 = vpop.f32.mrf.mxu0
      %v3602 = vadd.f32 %v3573, %v3601
      %v3603 = vpop.f32.mrf.mxu0
      %v3604 = vadd.f32 %v3575, %v3603
      %3605 = vmatmul.bf16.gmra.mxu0 %v2816
      %v3606 = vpop.f32.mrf.mxu0
      %v3607 = vadd.f32 %v3578, %v3606
      %v3608 = vpop.f32.mrf.mxu0
      %v3609 = vadd.f32 %v3580, %v3608
      %3610 = vdwg.mxu0
      %3611 = vmatpush.bf16.msra.mxu0 0
      %3612 = vmatpush.bf16.msra.mxu0 0
      %3613 = vmatpush.bf16.msra.mxu0 0
      %3614 = vmatpush.bf16.msra.mxu0 0
      %3615 = vmatpush.bf16.msra.mxu0 0
      %3616 = vmatpush.bf16.msra.mxu0 0
      %3617 = vmatpush.bf16.msra.mxu0 %v3254
      %3618 = vmatpush.bf16.msra.mxu0 %v3248
      %3619 = vmatmul.bf16.gmra.mxu0 %v3368
      %v3620 = vpop.f32.mrf.mxu0
      %v3621 = vadd.f32 %v3592, %v3620
      %v3622 = vpop.f32.mrf.mxu0
      %v3623 = vadd.f32 %v3594, %v3622
      %3624 = vmatmul.bf16.gmra.mxu0 %v3371
      %v3625 = vpop.f32.mrf.mxu0
      %v3626 = vadd.f32 %v3597, %v3625
      %v3627 = vpop.f32.mrf.mxu0
      %v3628 = vadd.f32 %v3599, %v3627
      %3629 = vmatmul.bf16.gmra.mxu0 %v3374
      %v3630 = vpop.f32.mrf.mxu0
      %v3631 = vadd.f32 %v3602, %v3630
      %v3632 = vpop.f32.mrf.mxu0
      %v3633 = vadd.f32 %v3604, %v3632
      %3634 = vmatmul.bf16.gmra.mxu0 %v3377
      %v3635 = vpop.f32.mrf.mxu0
      %v3636 = vadd.f32 %v3607, %v3635
      %v3637 = vpop.f32.mrf.mxu0
      %v3638 = vadd.f32 %v3609, %v3637
      %3639 = vdwg.mxu0
      %3640 = vmatpush.bf16.msra.mxu0 %v3195
      %3641 = vmatpush.bf16.msra.mxu0 %v3189
      %3642 = vmatpush.bf16.msra.mxu0 %v3183
      %3643 = vmatpush.bf16.msra.mxu0 %v3177
      %3644 = vmatpush.bf16.msra.mxu0 %v3171
      %3645 = vmatpush.bf16.msra.mxu0 %v3165
      %3646 = vmatpush.bf16.msra.mxu0 %v3159
      %3647 = vmatpush.bf16.msra.mxu0 %v3153
      %3648 = vmatmul.bf16.gmra.mxu0 %v2806
      %v3649 = vpop.f32.mrf.mxu0
      %v3650 = vadd.f32 %v2729, %v3649
      %v3651 = vpop.f32.mrf.mxu0
      %v3652 = vadd.f32 %v2734, %v3651
      %3653 = vmatmul.bf16.gmra.mxu0 %v2809
      %v3654 = vpop.f32.mrf.mxu0
      %v3655 = vadd.f32 %v2739, %v3654
      %v3656 = vpop.f32.mrf.mxu0
      %v3657 = vadd.f32 %v2744, %v3656
      %3658 = vmatmul.bf16.gmra.mxu0 %v2812
      %v3659 = vpop.f32.mrf.mxu0
      %v3660 = vadd.f32 %v2749, %v3659
      %v3661 = vpop.f32.mrf.mxu0
      %v3662 = vadd.f32 %v2754, %v3661
      %3663 = vmatmul.bf16.gmra.mxu0 %v2815
      %v3664 = vpop.f32.mrf.mxu0
      %v3665 = vadd.f32 %v2759, %v3664
      %v3666 = vpop.f32.mrf.mxu0
      %v3667 = vadd.f32 %v2764, %v3666
      %3668 = vdwg.mxu0
      %3669 = vmatpush.bf16.msra.mxu0 %v3243
      %3670 = vmatpush.bf16.msra.mxu0 %v3237
      %3671 = vmatpush.bf16.msra.mxu0 %v3231
      %3672 = vmatpush.bf16.msra.mxu0 %v3225
      %3673 = vmatpush.bf16.msra.mxu0 %v3219
      %3674 = vmatpush.bf16.msra.mxu0 %v3213
      %3675 = vmatpush.bf16.msra.mxu0 %v3207
      %3676 = vmatpush.bf16.msra.mxu0 %v3201
      %3677 = vmatmul.bf16.gmra.mxu0 %v2807
      %v3678 = vpop.f32.mrf.mxu0
      %v3679 = vadd.f32 %v3650, %v3678
      %v3680 = vpop.f32.mrf.mxu0
      %v3681 = vadd.f32 %v3652, %v3680
      %3682 = vmatmul.bf16.gmra.mxu0 %v2810
      %v3683 = vpop.f32.mrf.mxu0
      %v3684 = vadd.f32 %v3655, %v3683
      %v3685 = vpop.f32.mrf.mxu0
      %v3686 = vadd.f32 %v3657, %v3685
      %3687 = vmatmul.bf16.gmra.mxu0 %v2813
      %v3688 = vpop.f32.mrf.mxu0
      %v3689 = vadd.f32 %v3660, %v3688
      %v3690 = vpop.f32.mrf.mxu0
      %v3691 = vadd.f32 %v3662, %v3690
      %3692 = vmatmul.bf16.gmra.mxu0 %v2816
      %v3693 = vpop.f32.mrf.mxu0
      %v3694 = vadd.f32 %v3665, %v3693
      %v3695 = vpop.f32.mrf.mxu0
      %v3696 = vadd.f32 %v3667, %v3695
      %3697 = vdwg.mxu0
      %3698 = vmatpush.bf16.msra.mxu0 0
      %3699 = vmatpush.bf16.msra.mxu0 0
      %3700 = vmatpush.bf16.msra.mxu0 0
      %3701 = vmatpush.bf16.msra.mxu0 0
      %3702 = vmatpush.bf16.msra.mxu0 0
      %3703 = vmatpush.bf16.msra.mxu0 0
      %3704 = vmatpush.bf16.msra.mxu0 %v3255
      %3705 = vmatpush.bf16.msra.mxu0 %v3249
      %3706 = vmatmul.bf16.gmra.mxu0 %v3368
      %v3707 = vpop.f32.mrf.mxu0
      %v3708 = vadd.f32 %v3679, %v3707
      %v3709 = vpop.f32.mrf.mxu0
      %v3710 = vadd.f32 %v3681, %v3709
      %3711 = vmatmul.bf16.gmra.mxu0 %v3371
      %v3712 = vpop.f32.mrf.mxu0
      %v3713 = vadd.f32 %v3684, %v3712
      %v3714 = vpop.f32.mrf.mxu0
      %v3715 = vadd.f32 %v3686, %v3714
      %3716 = vmatmul.bf16.gmra.mxu0 %v3374
      %v3717 = vpop.f32.mrf.mxu0
      %v3718 = vadd.f32 %v3689, %v3717
      %v3719 = vpop.f32.mrf.mxu0
      %v3720 = vadd.f32 %v3691, %v3719
      %3721 = vmatmul.bf16.gmra.mxu0 %v3377
      %v3722 = vpop.f32.mrf.mxu0
      %v3723 = vadd.f32 %v3694, %v3722
      %v3724 = vpop.f32.mrf.mxu0
      %v3725 = vadd.f32 %v3696, %v3724
      %3726 = vdwg.mxu0
      %3727 = vmatpush.bf16.msra.mxu0 %v3196
      %3728 = vmatpush.bf16.msra.mxu0 %v3190
      %3729 = vmatpush.bf16.msra.mxu0 %v3184
      %3730 = vmatpush.bf16.msra.mxu0 %v3178
      %3731 = vmatpush.bf16.msra.mxu0 %v3172
      %3732 = vmatpush.bf16.msra.mxu0 %v3166
      %3733 = vmatpush.bf16.msra.mxu0 %v3160
      %3734 = vmatpush.bf16.msra.mxu0 %v3154
      %3735 = vmatmul.bf16.gmra.mxu0 %v2806
      %v3736 = vpop.f32.mrf.mxu0
      %v3737 = vadd.f32 %v2729, %v3736
      %v3738 = vpop.f32.mrf.mxu0
      %v3739 = vadd.f32 %v2734, %v3738
      %3740 = vmatmul.bf16.gmra.mxu0 %v2809
      %v3741 = vpop.f32.mrf.mxu0
      %v3742 = vadd.f32 %v2739, %v3741
      %v3743 = vpop.f32.mrf.mxu0
      %v3744 = vadd.f32 %v2744, %v3743
      %3745 = vmatmul.bf16.gmra.mxu0 %v2812
      %v3746 = vpop.f32.mrf.mxu0
      %v3747 = vadd.f32 %v2749, %v3746
      %v3748 = vpop.f32.mrf.mxu0
      %v3749 = vadd.f32 %v2754, %v3748
      %3750 = vmatmul.bf16.gmra.mxu0 %v2815
      %v3751 = vpop.f32.mrf.mxu0
      %v3752 = vadd.f32 %v2759, %v3751
      %v3753 = vpop.f32.mrf.mxu0
      %v3754 = vadd.f32 %v2764, %v3753
      %3755 = vdwg.mxu0
      %3756 = vmatpush.bf16.msra.mxu0 %v3244
      %3757 = vmatpush.bf16.msra.mxu0 %v3238
      %3758 = vmatpush.bf16.msra.mxu0 %v3232
      %3759 = vmatpush.bf16.msra.mxu0 %v3226
      %3760 = vmatpush.bf16.msra.mxu0 %v3220
      %3761 = vmatpush.bf16.msra.mxu0 %v3214
      %3762 = vmatpush.bf16.msra.mxu0 %v3208
      %3763 = vmatpush.bf16.msra.mxu0 %v3202
      %3764 = vmatmul.bf16.gmra.mxu0 %v2807
      %v3765 = vpop.f32.mrf.mxu0
      %v3766 = vadd.f32 %v3737, %v3765
      %v3767 = vpop.f32.mrf.mxu0
      %v3768 = vadd.f32 %v3739, %v3767
      %3769 = vmatmul.bf16.gmra.mxu0 %v2810
      %v3770 = vpop.f32.mrf.mxu0
      %v3771 = vadd.f32 %v3742, %v3770
      %v3772 = vpop.f32.mrf.mxu0
      %v3773 = vadd.f32 %v3744, %v3772
      %3774 = vmatmul.bf16.gmra.mxu0 %v2813
      %v3775 = vpop.f32.mrf.mxu0
      %v3776 = vadd.f32 %v3747, %v3775
      %v3777 = vpop.f32.mrf.mxu0
      %v3778 = vadd.f32 %v3749, %v3777
      %3779 = vmatmul.bf16.gmra.mxu0 %v2816
      %v3780 = vpop.f32.mrf.mxu0
      %v3781 = vadd.f32 %v3752, %v3780
      %v3782 = vpop.f32.mrf.mxu0
      %v3783 = vadd.f32 %v3754, %v3782
      %3784 = vdwg.mxu0
      %3785 = vmatpush.bf16.msra.mxu0 0
      %3786 = vmatpush.bf16.msra.mxu0 0
      %3787 = vmatpush.bf16.msra.mxu0 0
      %3788 = vmatpush.bf16.msra.mxu0 0
      %3789 = vmatpush.bf16.msra.mxu0 0
      %3790 = vmatpush.bf16.msra.mxu0 0
      %3791 = vmatpush.bf16.msra.mxu0 %v3256
      %3792 = vmatpush.bf16.msra.mxu0 %v3250
      %3793 = vmatmul.bf16.gmra.mxu0 %v3368
      %v3794 = vpop.f32.mrf.mxu0
      %v3795 = vadd.f32 %v3766, %v3794
      %v3796 = vpop.f32.mrf.mxu0
      %v3797 = vadd.f32 %v3768, %v3796
      %3798 = vmatmul.bf16.gmra.mxu0 %v3371
      %v3799 = vpop.f32.mrf.mxu0
      %v3800 = vadd.f32 %v3771, %v3799
      %v3801 = vpop.f32.mrf.mxu0
      %v3802 = vadd.f32 %v3773, %v3801
      %3803 = vmatmul.bf16.gmra.mxu0 %v3374
      %v3804 = vpop.f32.mrf.mxu0
      %v3805 = vadd.f32 %v3776, %v3804
      %v3806 = vpop.f32.mrf.mxu0
      %v3807 = vadd.f32 %v3778, %v3806
      %3808 = vmatmul.bf16.gmra.mxu0 %v3377
      %v3809 = vpop.f32.mrf.mxu0
      %v3810 = vadd.f32 %v3781, %v3809
      %v3811 = vpop.f32.mrf.mxu0
      %v3812 = vadd.f32 %v3783, %v3811
      %3813 = vdwg.mxu0
      %3814 = vmatpush.bf16.msra.mxu0 %v3197
      %3815 = vmatpush.bf16.msra.mxu0 %v3191
      %3816 = vmatpush.bf16.msra.mxu0 %v3185
      %3817 = vmatpush.bf16.msra.mxu0 %v3179
      %3818 = vmatpush.bf16.msra.mxu0 %v3173
      %3819 = vmatpush.bf16.msra.mxu0 %v3167
      %3820 = vmatpush.bf16.msra.mxu0 %v3161
      %3821 = vmatpush.bf16.msra.mxu0 %v3155
      %3822 = vmatmul.bf16.gmra.mxu0 %v2806
      %v3823 = vpop.f32.mrf.mxu0
      %v3824 = vadd.f32 %v2729, %v3823
      %v3825 = vpop.f32.mrf.mxu0
      %v3826 = vadd.f32 %v2734, %v3825
      %3827 = vmatmul.bf16.gmra.mxu0 %v2809
      %v3828 = vpop.f32.mrf.mxu0
      %v3829 = vadd.f32 %v2739, %v3828
      %v3830 = vpop.f32.mrf.mxu0
      %v3831 = vadd.f32 %v2744, %v3830
      %3832 = vmatmul.bf16.gmra.mxu0 %v2812
      %v3833 = vpop.f32.mrf.mxu0
      %v3834 = vadd.f32 %v2749, %v3833
      %v3835 = vpop.f32.mrf.mxu0
      %v3836 = vadd.f32 %v2754, %v3835
      %3837 = vmatmul.bf16.gmra.mxu0 %v2815
      %v3838 = vpop.f32.mrf.mxu0
      %v3839 = vadd.f32 %v2759, %v3838
      %v3840 = vpop.f32.mrf.mxu0
      %v3841 = vadd.f32 %v2764, %v3840
      %3842 = vdwg.mxu0
      %3843 = vmatpush.bf16.msra.mxu0 %v3245
      %3844 = vmatpush.bf16.msra.mxu0 %v3239
      %3845 = vmatpush.bf16.msra.mxu0 %v3233
      %3846 = vmatpush.bf16.msra.mxu0 %v3227
      %3847 = vmatpush.bf16.msra.mxu0 %v3221
      %3848 = vmatpush.bf16.msra.mxu0 %v3215
      %3849 = vmatpush.bf16.msra.mxu0 %v3209
      %3850 = vmatpush.bf16.msra.mxu0 %v3203
      %3851 = vmatmul.bf16.gmra.mxu0 %v2807
      %v3852 = vpop.f32.mrf.mxu0
      %v3853 = vadd.f32 %v3824, %v3852
      %v3854 = vpop.f32.mrf.mxu0
      %v3855 = vadd.f32 %v3826, %v3854
      %3856 = vmatmul.bf16.gmra.mxu0 %v2810
      %v3857 = vpop.f32.mrf.mxu0
      %v3858 = vadd.f32 %v3829, %v3857
      %v3859 = vpop.f32.mrf.mxu0
      %v3860 = vadd.f32 %v3831, %v3859
      %3861 = vmatmul.bf16.gmra.mxu0 %v2813
      %v3862 = vpop.f32.mrf.mxu0
      %v3863 = vadd.f32 %v3834, %v3862
      %v3864 = vpop.f32.mrf.mxu0
      %v3865 = vadd.f32 %v3836, %v3864
      %3866 = vmatmul.bf16.gmra.mxu0 %v2816
      %v3867 = vpop.f32.mrf.mxu0
      %v3868 = vadd.f32 %v3839, %v3867
      %v3869 = vpop.f32.mrf.mxu0
      %v3870 = vadd.f32 %v3841, %v3869
      %3871 = vdwg.mxu0
      %3872 = vmatpush.bf16.msra.mxu0 0
      %3873 = vmatpush.bf16.msra.mxu0 0
      %3874 = vmatpush.bf16.msra.mxu0 0
      %3875 = vmatpush.bf16.msra.mxu0 0
      %3876 = vmatpush.bf16.msra.mxu0 0
      %3877 = vmatpush.bf16.msra.mxu0 0
      %3878 = vmatpush.bf16.msra.mxu0 %v3257
      %3879 = vmatpush.bf16.msra.mxu0 %v3251
      %3880 = vmatmul.bf16.gmra.mxu0 %v3368
      %v3881 = vpop.f32.mrf.mxu0
      %v3882 = vadd.f32 %v3853, %v3881
      %v3883 = vpop.f32.mrf.mxu0
      %v3884 = vadd.f32 %v3855, %v3883
      %3885 = vmatmul.bf16.gmra.mxu0 %v3371
      %v3886 = vpop.f32.mrf.mxu0
      %v3887 = vadd.f32 %v3858, %v3886
      %v3888 = vpop.f32.mrf.mxu0
      %v3889 = vadd.f32 %v3860, %v3888
      %3890 = vmatmul.bf16.gmra.mxu0 %v3374
      %v3891 = vpop.f32.mrf.mxu0
      %v3892 = vadd.f32 %v3863, %v3891
      %v3893 = vpop.f32.mrf.mxu0
      %v3894 = vadd.f32 %v3865, %v3893
      %3895 = vmatmul.bf16.gmra.mxu0 %v3377
      %v3896 = vpop.f32.mrf.mxu0
      %v3897 = vadd.f32 %v3868, %v3896
      %v3898 = vpop.f32.mrf.mxu0
      %v3899 = vadd.f32 %v3870, %v3898
      %3900 = vdwg.mxu0
      %v3901 = vmax.f32 %v3447, 0.0
      %v3902 = vmax.f32 %v3534, 0.0
      %v3903 = vmax.f32 %v3621, 0.0
      %v3904 = vmax.f32 %v3708, 0.0
      %v3905 = vmax.f32 %v3795, 0.0
      %v3906 = vmax.f32 %v3882, 0.0
      %v3907 = vmax.f32 %v3449, 0.0
      %v3908 = vmax.f32 %v3536, 0.0
      %v3909 = vmax.f32 %v3623, 0.0
      %v3910 = vmax.f32 %v3710, 0.0
      %v3911 = vmax.f32 %v3797, 0.0
      %v3912 = vmax.f32 %v3884, 0.0
      %v3913 = vmax.f32 %v3452, 0.0
      %v3914 = vmax.f32 %v3539, 0.0
      %v3915 = vmax.f32 %v3626, 0.0
      %v3916 = vmax.f32 %v3713, 0.0
      %v3917 = vmax.f32 %v3800, 0.0
      %v3918 = vmax.f32 %v3887, 0.0
      %v3919 = vmax.f32 %v3454, 0.0
      %v3920 = vmax.f32 %v3541, 0.0
      %v3921 = vmax.f32 %v3628, 0.0
      %v3922 = vmax.f32 %v3715, 0.0
      %v3923 = vmax.f32 %v3802, 0.0
      %v3924 = vmax.f32 %v3889, 0.0
      %v3925 = vmax.f32 %v3457, 0.0
      %v3926 = vmax.f32 %v3544, 0.0
      %v3927 = vmax.f32 %v3631, 0.0
      %v3928 = vmax.f32 %v3718, 0.0
      %v3929 = vmax.f32 %v3805, 0.0
      %v3930 = vmax.f32 %v3892, 0.0
      %v3931 = vmax.f32 %v3459, 0.0
      %v3932 = vmax.f32 %v3546, 0.0
      %v3933 = vmax.f32 %v3633, 0.0
      %v3934 = vmax.f32 %v3720, 0.0
      %v3935 = vmax.f32 %v3807, 0.0
      %v3936 = vmax.f32 %v3894, 0.0
      %v3937 = vmax.f32 %v3462, 0.0
      %v3938 = vmax.f32 %v3549, 0.0
      %v3939 = vmax.f32 %v3636, 0.0
      %v3940 = vmax.f32 %v3723, 0.0
      %v3941 = vmax.f32 %v3810, 0.0
      %v3942 = vmax.f32 %v3897, 0.0
      %v3943 = vmax.f32 %v3464, 0.0
      %v3944 = vmax.f32 %v3551, 0.0
      %v3945 = vmax.f32 %v3638, 0.0
      %v3946 = vmax.f32 %v3725, 0.0
      %v3947 = vmax.f32 %v3812, 0.0
      %v3948 = vmax.f32 %v3899, 0.0
      %3949 = vst [vmem:[#allocation4] sm:$0xff] %v3901
      %3950 = vst [vmem:[#allocation4 + $0x8] sm:$0xff] %v3902
      %3951 = vst [vmem:[#allocation4 + $0x10] sm:$0xff] %v3903
      %3952 = vst [vmem:[#allocation4 + $0x18] sm:$0xff] %v3904
      %3953 = vst [vmem:[#allocation4 + $0x20] sm:$0xff] %v3905
      %vm3954 = vcmask 228352
      %3955 = vst.msk [vmem:[#allocation4 + $0x28] sm:$0xff] %vm3954, %v3906
      %3956 = vst [vmem:[#allocation4 + $0x30] sm:$0xff] %v3907
      %3957 = vst [vmem:[#allocation4 + $0x38] sm:$0xff] %v3908
      %3958 = vst [vmem:[#allocation4 + $0x40] sm:$0xff] %v3909
      %3959 = vst [vmem:[#allocation4 + $0x48] sm:$0xff] %v3910
      %3960 = vst [vmem:[#allocation4 + $0x50] sm:$0xff] %v3911
      %3961 = vst.msk [vmem:[#allocation4 + $0x58] sm:$0xff] %vm3954, %v3912
      %3962 = vst [vmem:[#allocation4 + $0x60] sm:$0xff] %v3913
      %3963 = vst [vmem:[#allocation4 + $0x68] sm:$0xff] %v3914
      %3964 = vst [vmem:[#allocation4 + $0x70] sm:$0xff] %v3915
      %3965 = vst [vmem:[#allocation4 + $0x78] sm:$0xff] %v3916
      %3966 = vst [vmem:[#allocation4 + $0x80] sm:$0xff] %v3917
      %3967 = vst.msk [vmem:[#allocation4 + $0x88] sm:$0xff] %vm3954, %v3918
      %3968 = vst [vmem:[#allocation4 + $0x90] sm:$0xff] %v3919
      %3969 = vst [vmem:[#allocation4 + $0x98] sm:$0xff] %v3920
      %3970 = vst [vmem:[#allocation4 + $0xa0] sm:$0xff] %v3921
      %3971 = vst [vmem:[#allocation4 + $0xa8] sm:$0xff] %v3922
      %3972 = vst [vmem:[#allocation4 + $0xb0] sm:$0xff] %v3923
      %3973 = vst.msk [vmem:[#allocation4 + $0xb8] sm:$0xff] %vm3954, %v3924
      %3974 = vst [vmem:[#allocation4 + $0xc0] sm:$0xff] %v3925
      %3975 = vst [vmem:[#allocation4 + $0xc8] sm:$0xff] %v3926
      %3976 = vst [vmem:[#allocation4 + $0xd0] sm:$0xff] %v3927
      %3977 = vst [vmem:[#allocation4 + $0xd8] sm:$0xff] %v3928
      %3978 = vst [vmem:[#allocation4 + $0xe0] sm:$0xff] %v3929
      %3979 = vst.msk [vmem:[#allocation4 + $0xe8] sm:$0xff] %vm3954, %v3930
      %3980 = vst [vmem:[#allocation4 + $0xf0] sm:$0xff] %v3931
      %3981 = vst [vmem:[#allocation4 + $0xf8] sm:$0xff] %v3932
      %3982 = vst [vmem:[#allocation4 + $0x100] sm:$0xff] %v3933
      %3983 = vst [vmem:[#allocation4 + $0x108] sm:$0xff] %v3934
      %3984 = vst [vmem:[#allocation4 + $0x110] sm:$0xff] %v3935
      %3985 = vst.msk [vmem:[#allocation4 + $0x118] sm:$0xff] %vm3954, %v3936
      %3986 = vst [vmem:[#allocation4 + $0x120] sm:$0xff] %v3937
      %3987 = vst [vmem:[#allocation4 + $0x128] sm:$0xff] %v3938
      %3988 = vst [vmem:[#allocation4 + $0x130] sm:$0xff] %v3939
      %3989 = vst [vmem:[#allocation4 + $0x138] sm:$0xff] %v3940
      %3990 = vst [vmem:[#allocation4 + $0x140] sm:$0xff] %v3941
      %3991 = vst.msk [vmem:[#allocation4 + $0x148] sm:$0xff] %vm3954, %v3942
      %3992 = vst [vmem:[#allocation4 + $0x150] sm:$0xff] %v3943
      %3993 = vst [vmem:[#allocation4 + $0x158] sm:$0xff] %v3944
      %3994 = vst [vmem:[#allocation4 + $0x160] sm:$0xff] %v3945
      %3995 = vst [vmem:[#allocation4 + $0x168] sm:$0xff] %v3946
      %3996 = vst [vmem:[#allocation4 + $0x170] sm:$0xff] %v3947
      %3997 = vst.msk [vmem:[#allocation4 + $0x178] sm:$0xff] %vm3954, %v3948
      %v3998 = vld [vmem:[#allocation4] sm:$0xff]
      %v3999 = vld [vmem:[#allocation4 + $0x8] sm:$0xff]
      %v4000 = vld [vmem:[#allocation4 + $0x10] sm:$0xff]
      %v4001 = vld [vmem:[#allocation4 + $0x18] sm:$0xff]
      %v4002 = vld [vmem:[#allocation4 + $0x20] sm:$0xff]
      %v4003 = vld [vmem:[#allocation4 + $0x30] sm:$0xff]
      %v4004 = vld [vmem:[#allocation4 + $0x38] sm:$0xff]
      %v4005 = vld [vmem:[#allocation4 + $0x40] sm:$0xff]
      %v4006 = vld [vmem:[#allocation4 + $0x48] sm:$0xff]
      %v4007 = vld [vmem:[#allocation4 + $0x50] sm:$0xff]
      %v4008 = vld [vmem:[#allocation4 + $0x60] sm:$0xff]
      %v4009 = vld [vmem:[#allocation4 + $0x68] sm:$0xff]
      %v4010 = vld [vmem:[#allocation4 + $0x70] sm:$0xff]
      %v4011 = vld [vmem:[#allocation4 + $0x78] sm:$0xff]
      %v4012 = vld [vmem:[#allocation4 + $0x80] sm:$0xff]
      %v4013 = vld [vmem:[#allocation4 + $0x90] sm:$0xff]
      %v4014 = vld [vmem:[#allocation4 + $0x98] sm:$0xff]
      %v4015 = vld [vmem:[#allocation4 + $0xa0] sm:$0xff]
      %v4016 = vld [vmem:[#allocation4 + $0xa8] sm:$0xff]
      %v4017 = vld [vmem:[#allocation4 + $0xb0] sm:$0xff]
      %v4018 = vld [vmem:[#allocation4 + $0xc0] sm:$0xff]
      %v4019 = vld [vmem:[#allocation4 + $0xc8] sm:$0xff]
      %v4020 = vld [vmem:[#allocation4 + $0xd0] sm:$0xff]
      %v4021 = vld [vmem:[#allocation4 + $0xd8] sm:$0xff]
      %v4022 = vld [vmem:[#allocation4 + $0xe0] sm:$0xff]
      %v4023 = vld [vmem:[#allocation4 + $0xf0] sm:$0xff]
      %v4024 = vld [vmem:[#allocation4 + $0xf8] sm:$0xff]
      %v4025 = vld [vmem:[#allocation4 + $0x100] sm:$0xff]
      %v4026 = vld [vmem:[#allocation4 + $0x108] sm:$0xff]
      %v4027 = vld [vmem:[#allocation4 + $0x110] sm:$0xff]
      %v4028 = vld [vmem:[#allocation4 + $0x120] sm:$0xff]
      %v4029 = vld [vmem:[#allocation4 + $0x128] sm:$0xff]
      %v4030 = vld [vmem:[#allocation4 + $0x130] sm:$0xff]
      %v4031 = vld [vmem:[#allocation4 + $0x138] sm:$0xff]
      %v4032 = vld [vmem:[#allocation4 + $0x140] sm:$0xff]
      %v4033 = vld [vmem:[#allocation4 + $0x150] sm:$0xff]
      %v4034 = vld [vmem:[#allocation4 + $0x158] sm:$0xff]
      %v4035 = vld [vmem:[#allocation4 + $0x160] sm:$0xff]
      %v4036 = vld [vmem:[#allocation4 + $0x168] sm:$0xff]
      %v4037 = vld [vmem:[#allocation4 + $0x170] sm:$0xff]
      %4078 = vrot.lane.b32.xlu0 %v3998, 127
      %v4079 = vpop.permute.xlu0 %4078
      %4080 = vrot.lane.b32.xlu0 %v3999, 127
      %v4081 = vpop.permute.xlu0 %4080
      %4082 = vrot.lane.b32.xlu0 %v4000, 127
      %v4083 = vpop.permute.xlu0 %4082
      %4084 = vrot.lane.b32.xlu0 %v4001, 127
      %v4085 = vpop.permute.xlu0 %4084
      %4086 = vrot.lane.b32.xlu0 %v4002, 127
      %v4087 = vpop.permute.xlu0 %4086
      %4088 = vrot.lane.b32.xlu0 %v4003, 127
      %v4089 = vpop.permute.xlu0 %4088
      %4090 = vrot.lane.b32.xlu0 %v4004, 127
      %v4091 = vpop.permute.xlu0 %4090
      %4092 = vrot.lane.b32.xlu0 %v4005, 127
      %v4093 = vpop.permute.xlu0 %4092
      %4094 = vrot.lane.b32.xlu0 %v4006, 127
      %v4095 = vpop.permute.xlu0 %4094
      %4096 = vrot.lane.b32.xlu0 %v4007, 127
      %v4097 = vpop.permute.xlu0 %4096
      %4098 = vrot.lane.b32.xlu0 %v4008, 127
      %v4099 = vpop.permute.xlu0 %4098
      %4100 = vrot.lane.b32.xlu0 %v4009, 127
      %v4101 = vpop.permute.xlu0 %4100
      %4102 = vrot.lane.b32.xlu0 %v4010, 127
      %v4103 = vpop.permute.xlu0 %4102
      %4104 = vrot.lane.b32.xlu0 %v4011, 127
      %v4105 = vpop.permute.xlu0 %4104
      %4106 = vrot.lane.b32.xlu0 %v4012, 127
      %v4107 = vpop.permute.xlu0 %4106
      %4108 = vrot.lane.b32.xlu0 %v4013, 127
      %v4109 = vpop.permute.xlu0 %4108
      %4110 = vrot.lane.b32.xlu0 %v4014, 127
      %v4111 = vpop.permute.xlu0 %4110
      %4112 = vrot.lane.b32.xlu0 %v4015, 127
      %v4113 = vpop.permute.xlu0 %4112
      %4114 = vrot.lane.b32.xlu0 %v4016, 127
      %v4115 = vpop.permute.xlu0 %4114
      %4116 = vrot.lane.b32.xlu0 %v4017, 127
      %v4117 = vpop.permute.xlu0 %4116
      %4118 = vrot.lane.b32.xlu0 %v4018, 127
      %v4119 = vpop.permute.xlu0 %4118
      %4120 = vrot.lane.b32.xlu0 %v4019, 127
      %v4121 = vpop.permute.xlu0 %4120
      %4122 = vrot.lane.b32.xlu0 %v4020, 127
      %v4123 = vpop.permute.xlu0 %4122
      %4124 = vrot.lane.b32.xlu0 %v4021, 127
      %v4125 = vpop.permute.xlu0 %4124
      %4126 = vrot.lane.b32.xlu0 %v4022, 127
      %v4127 = vpop.permute.xlu0 %4126
      %4128 = vrot.lane.b32.xlu0 %v4023, 127
      %v4129 = vpop.permute.xlu0 %4128
      %4130 = vrot.lane.b32.xlu0 %v4024, 127
      %v4131 = vpop.permute.xlu0 %4130
      %4132 = vrot.lane.b32.xlu0 %v4025, 127
      %v4133 = vpop.permute.xlu0 %4132
      %4134 = vrot.lane.b32.xlu0 %v4026, 127
      %v4135 = vpop.permute.xlu0 %4134
      %4136 = vrot.lane.b32.xlu0 %v4027, 127
      %v4137 = vpop.permute.xlu0 %4136
      %4138 = vrot.lane.b32.xlu0 %v4028, 127
      %v4139 = vpop.permute.xlu0 %4138
      %4140 = vrot.lane.b32.xlu0 %v4029, 127
      %v4141 = vpop.permute.xlu0 %4140
      %4142 = vrot.lane.b32.xlu0 %v4030, 127
      %v4143 = vpop.permute.xlu0 %4142
      %4144 = vrot.lane.b32.xlu0 %v4031, 127
      %v4145 = vpop.permute.xlu0 %4144
      %4146 = vrot.lane.b32.xlu0 %v4032, 127
      %v4147 = vpop.permute.xlu0 %4146
      %4148 = vrot.lane.b32.xlu0 %v4033, 127
      %v4149 = vpop.permute.xlu0 %4148
      %4150 = vrot.lane.b32.xlu0 %v4034, 127
      %v4151 = vpop.permute.xlu0 %4150
      %4152 = vrot.lane.b32.xlu0 %v4035, 127
      %v4153 = vpop.permute.xlu0 %4152
      %4154 = vrot.lane.b32.xlu0 %v4036, 127
      %v4155 = vpop.permute.xlu0 %4154
      %4156 = vrot.lane.b32.xlu0 %v4037, 127
      %v4157 = vpop.permute.xlu0 %4156
      %v4158 = vsel %vm230, %v4079, %v4081
      %v4159 = vsel %vm230, %v4081, %v4083
      %v4160 = vsel %vm230, %v4083, %v4085
      %v4161 = vsel %vm230, %v4085, %v4087
      %v4162 = vsel %vm230, %v4089, %v4091
      %v4163 = vsel %vm230, %v4091, %v4093
      %v4164 = vsel %vm230, %v4093, %v4095
      %v4165 = vsel %vm230, %v4095, %v4097
      %v4166 = vsel %vm230, %v4099, %v4101
      %v4167 = vsel %vm230, %v4101, %v4103
      %v4168 = vsel %vm230, %v4103, %v4105
      %v4169 = vsel %vm230, %v4105, %v4107
      %v4170 = vsel %vm230, %v4109, %v4111
      %v4171 = vsel %vm230, %v4111, %v4113
      %v4172 = vsel %vm230, %v4113, %v4115
      %v4173 = vsel %vm230, %v4115, %v4117
      %v4174 = vsel %vm230, %v4119, %v4121
      %v4175 = vsel %vm230, %v4121, %v4123
      %v4176 = vsel %vm230, %v4123, %v4125
      %v4177 = vsel %vm230, %v4125, %v4127
      %v4178 = vsel %vm230, %v4129, %v4131
      %v4179 = vsel %vm230, %v4131, %v4133
      %v4180 = vsel %vm230, %v4133, %v4135
      %v4181 = vsel %vm230, %v4135, %v4137
      %v4182 = vsel %vm230, %v4139, %v4141
      %v4183 = vsel %vm230, %v4141, %v4143
      %v4184 = vsel %vm230, %v4143, %v4145
      %v4185 = vsel %vm230, %v4145, %v4147
      %v4186 = vsel %vm230, %v4149, %v4151
      %v4187 = vsel %vm230, %v4151, %v4153
      %v4188 = vsel %vm230, %v4153, %v4155
      %v4189 = vsel %vm230, %v4155, %v4157
      %v4230 = vmax.f32 %v3998, %v4158
      %v4231 = vmax.f32 %v3999, %v4159
      %v4232 = vmax.f32 %v4000, %v4160
      %v4233 = vmax.f32 %v4001, %v4161
      %v4234 = vmax.f32 %v4002, %v4087
      %v4235 = vmax.f32 %v4003, %v4162
      %v4236 = vmax.f32 %v4004, %v4163
      %v4237 = vmax.f32 %v4005, %v4164
      %v4238 = vmax.f32 %v4006, %v4165
      %v4239 = vmax.f32 %v4007, %v4097
      %v4240 = vmax.f32 %v4008, %v4166
      %v4241 = vmax.f32 %v4009, %v4167
      %v4242 = vmax.f32 %v4010, %v4168
      %v4243 = vmax.f32 %v4011, %v4169
      %v4244 = vmax.f32 %v4012, %v4107
      %v4245 = vmax.f32 %v4013, %v4170
      %v4246 = vmax.f32 %v4014, %v4171
      %v4247 = vmax.f32 %v4015, %v4172
      %v4248 = vmax.f32 %v4016, %v4173
      %v4249 = vmax.f32 %v4017, %v4117
      %v4250 = vmax.f32 %v4018, %v4174
      %v4251 = vmax.f32 %v4019, %v4175
      %v4252 = vmax.f32 %v4020, %v4176
      %v4253 = vmax.f32 %v4021, %v4177
      %v4254 = vmax.f32 %v4022, %v4127
      %v4255 = vmax.f32 %v4023, %v4178
      %v4256 = vmax.f32 %v4024, %v4179
      %v4257 = vmax.f32 %v4025, %v4180
      %v4258 = vmax.f32 %v4026, %v4181
      %v4259 = vmax.f32 %v4027, %v4137
      %v4260 = vmax.f32 %v4028, %v4182
      %v4261 = vmax.f32 %v4029, %v4183
      %v4262 = vmax.f32 %v4030, %v4184
      %v4263 = vmax.f32 %v4031, %v4185
      %v4264 = vmax.f32 %v4032, %v4147
      %v4265 = vmax.f32 %v4033, %v4186
      %v4266 = vmax.f32 %v4034, %v4187
      %v4267 = vmax.f32 %v4035, %v4188
      %v4268 = vmax.f32 %v4036, %v4189
      %v4269 = vmax.f32 %v4037, %v4157
      %v4270 = vld [vmem:[#allocation4 + $0x28] sm:$0xff]
      %v4271 = vld [vmem:[#allocation4 + $0x58] sm:$0xff]
      %v4272 = vld [vmem:[#allocation4 + $0x88] sm:$0xff]
      %v4273 = vld [vmem:[#allocation4 + $0xb8] sm:$0xff]
      %v4274 = vld [vmem:[#allocation4 + $0xe8] sm:$0xff]
      %v4275 = vld [vmem:[#allocation4 + $0x118] sm:$0xff]
      %v4276 = vld [vmem:[#allocation4 + $0x148] sm:$0xff]
      %v4277 = vld [vmem:[#allocation4 + $0x178] sm:$0xff]
      %4286 = vrot.lane.b32.xlu0 %v4270, 127
      %v4287 = vpop.permute.xlu0 %4286
      %4288 = vrot.lane.b32.xlu0 %v4271, 127
      %v4289 = vpop.permute.xlu0 %4288
      %4290 = vrot.lane.b32.xlu0 %v4272, 127
      %v4291 = vpop.permute.xlu0 %4290
      %4292 = vrot.lane.b32.xlu0 %v4273, 127
      %v4293 = vpop.permute.xlu0 %4292
      %4294 = vrot.lane.b32.xlu0 %v4274, 127
      %v4295 = vpop.permute.xlu0 %4294
      %4296 = vrot.lane.b32.xlu0 %v4275, 127
      %v4297 = vpop.permute.xlu0 %4296
      %4298 = vrot.lane.b32.xlu0 %v4276, 127
      %v4299 = vpop.permute.xlu0 %4298
      %4300 = vrot.lane.b32.xlu0 %v4277, 127
      %v4301 = vpop.permute.xlu0 %4300
      %v4302 = vsel %vm230, %v4087, %v4287
      %v4303 = vsel %vm230, %v4097, %v4289
      %v4304 = vsel %vm230, %v4107, %v4291
      %v4305 = vsel %vm230, %v4117, %v4293
      %v4306 = vsel %vm230, %v4127, %v4295
      %v4307 = vsel %vm230, %v4137, %v4297
      %v4308 = vsel %vm230, %v4147, %v4299
      %v4309 = vsel %vm230, %v4157, %v4301
      %v4326 = vmax.f32 %v4002, %v4302
      %v4327 = vmax.f32 %v4270, %v4287
      %v4328 = vmax.f32 %v4007, %v4303
      %v4329 = vmax.f32 %v4271, %v4289
      %v4330 = vmax.f32 %v4012, %v4304
      %v4331 = vmax.f32 %v4272, %v4291
      %v4332 = vmax.f32 %v4017, %v4305
      %v4333 = vmax.f32 %v4273, %v4293
      %v4334 = vmax.f32 %v4022, %v4306
      %v4335 = vmax.f32 %v4274, %v4295
      %v4336 = vmax.f32 %v4027, %v4307
      %v4337 = vmax.f32 %v4275, %v4297
      %v4338 = vmax.f32 %v4032, %v4308
      %v4339 = vmax.f32 %v4276, %v4299
      %v4340 = vmax.f32 %v4037, %v4309
      %v4341 = vmax.f32 %v4277, %v4301
      %4390 = vrot.lane.b32.xlu0 %v4230, 100
      %v4391 = vpop.permute.xlu0 %4390
      %4392 = vrot.lane.b32.xlu0 %v4231, 100
      %v4393 = vpop.permute.xlu0 %4392
      %4394 = vrot.lane.b32.xlu0 %v4232, 100
      %v4395 = vpop.permute.xlu0 %4394
      %4396 = vrot.lane.b32.xlu0 %v4233, 100
      %v4397 = vpop.permute.xlu0 %4396
      %4398 = vrot.lane.b32.xlu0 %v4326, 100
      %v4399 = vpop.permute.xlu0 %4398
      %4400 = vrot.lane.b32.xlu0 %v4327, 100
      %v4401 = vpop.permute.xlu0 %4400
      %4402 = vrot.lane.b32.xlu0 %v4235, 100
      %v4403 = vpop.permute.xlu0 %4402
      %4404 = vrot.lane.b32.xlu0 %v4236, 100
      %v4405 = vpop.permute.xlu0 %4404
      %4406 = vrot.lane.b32.xlu0 %v4237, 100
      %v4407 = vpop.permute.xlu0 %4406
      %4408 = vrot.lane.b32.xlu0 %v4238, 100
      %v4409 = vpop.permute.xlu0 %4408
      %4410 = vrot.lane.b32.xlu0 %v4328, 100
      %v4411 = vpop.permute.xlu0 %4410
      %4412 = vrot.lane.b32.xlu0 %v4329, 100
      %v4413 = vpop.permute.xlu0 %4412
      %4414 = vrot.lane.b32.xlu0 %v4240, 100
      %v4415 = vpop.permute.xlu0 %4414
      %4416 = vrot.lane.b32.xlu0 %v4241, 100
      %v4417 = vpop.permute.xlu0 %4416
      %4418 = vrot.lane.b32.xlu0 %v4242, 100
      %v4419 = vpop.permute.xlu0 %4418
      %4420 = vrot.lane.b32.xlu0 %v4243, 100
      %v4421 = vpop.permute.xlu0 %4420
      %4422 = vrot.lane.b32.xlu0 %v4330, 100
      %v4423 = vpop.permute.xlu0 %4422
      %4424 = vrot.lane.b32.xlu0 %v4331, 100
      %v4425 = vpop.permute.xlu0 %4424
      %4426 = vrot.lane.b32.xlu0 %v4245, 100
      %v4427 = vpop.permute.xlu0 %4426
      %4428 = vrot.lane.b32.xlu0 %v4246, 100
      %v4429 = vpop.permute.xlu0 %4428
      %4430 = vrot.lane.b32.xlu0 %v4247, 100
      %v4431 = vpop.permute.xlu0 %4430
      %4432 = vrot.lane.b32.xlu0 %v4248, 100
      %v4433 = vpop.permute.xlu0 %4432
      %4434 = vrot.lane.b32.xlu0 %v4332, 100
      %v4435 = vpop.permute.xlu0 %4434
      %4436 = vrot.lane.b32.xlu0 %v4333, 100
      %v4437 = vpop.permute.xlu0 %4436
      %4438 = vrot.lane.b32.xlu0 %v4250, 100
      %v4439 = vpop.permute.xlu0 %4438
      %4440 = vrot.lane.b32.xlu0 %v4251, 100
      %v4441 = vpop.permute.xlu0 %4440
      %4442 = vrot.lane.b32.xlu0 %v4252, 100
      %v4443 = vpop.permute.xlu0 %4442
      %4444 = vrot.lane.b32.xlu0 %v4253, 100
      %v4445 = vpop.permute.xlu0 %4444
      %4446 = vrot.lane.b32.xlu0 %v4334, 100
      %v4447 = vpop.permute.xlu0 %4446
      %4448 = vrot.lane.b32.xlu0 %v4335, 100
      %v4449 = vpop.permute.xlu0 %4448
      %4450 = vrot.lane.b32.xlu0 %v4255, 100
      %v4451 = vpop.permute.xlu0 %4450
      %4452 = vrot.lane.b32.xlu0 %v4256, 100
      %v4453 = vpop.permute.xlu0 %4452
      %4454 = vrot.lane.b32.xlu0 %v4257, 100
      %v4455 = vpop.permute.xlu0 %4454
      %4456 = vrot.lane.b32.xlu0 %v4258, 100
      %v4457 = vpop.permute.xlu0 %4456
      %4458 = vrot.lane.b32.xlu0 %v4336, 100
      %v4459 = vpop.permute.xlu0 %4458
      %4460 = vrot.lane.b32.xlu0 %v4337, 100
      %v4461 = vpop.permute.xlu0 %4460
      %4462 = vrot.lane.b32.xlu0 %v4260, 100
      %v4463 = vpop.permute.xlu0 %4462
      %4464 = vrot.lane.b32.xlu0 %v4261, 100
      %v4465 = vpop.permute.xlu0 %4464
      %4466 = vrot.lane.b32.xlu0 %v4262, 100
      %v4467 = vpop.permute.xlu0 %4466
      %4468 = vrot.lane.b32.xlu0 %v4263, 100
      %v4469 = vpop.permute.xlu0 %4468
      %4470 = vrot.lane.b32.xlu0 %v4338, 100
      %v4471 = vpop.permute.xlu0 %4470
      %4472 = vrot.lane.b32.xlu0 %v4339, 100
      %v4473 = vpop.permute.xlu0 %4472
      %4474 = vrot.lane.b32.xlu0 %v4265, 100
      %v4475 = vpop.permute.xlu0 %4474
      %4476 = vrot.lane.b32.xlu0 %v4266, 100
      %v4477 = vpop.permute.xlu0 %4476
      %4478 = vrot.lane.b32.xlu0 %v4267, 100
      %v4479 = vpop.permute.xlu0 %4478
      %4480 = vrot.lane.b32.xlu0 %v4268, 100
      %v4481 = vpop.permute.xlu0 %4480
      %4482 = vrot.lane.b32.xlu0 %v4340, 100
      %v4483 = vpop.permute.xlu0 %4482
      %4484 = vrot.lane.b32.xlu0 %v4341, 100
      %v4485 = vpop.permute.xlu0 %4484
      %v4486 = vsel %vm592, %v4391, %v4393
      %v4487 = vsel %vm592, %v4393, %v4395
      %v4488 = vsel %vm592, %v4395, %v4397
      %v4489 = vsel %vm592, %v4397, %v4399
      %v4490 = vsel %vm592, %v4399, %v4401
      %v4491 = vsel %vm592, %v4403, %v4405
      %v4492 = vsel %vm592, %v4405, %v4407
      %v4493 = vsel %vm592, %v4407, %v4409
      %v4494 = vsel %vm592, %v4409, %v4411
      %v4495 = vsel %vm592, %v4411, %v4413
      %v4496 = vsel %vm592, %v4415, %v4417
      %v4497 = vsel %vm592, %v4417, %v4419
      %v4498 = vsel %vm592, %v4419, %v4421
      %v4499 = vsel %vm592, %v4421, %v4423
      %v4500 = vsel %vm592, %v4423, %v4425
      %v4501 = vsel %vm592, %v4427, %v4429
      %v4502 = vsel %vm592, %v4429, %v4431
      %v4503 = vsel %vm592, %v4431, %v4433
      %v4504 = vsel %vm592, %v4433, %v4435
      %v4505 = vsel %vm592, %v4435, %v4437
      %v4506 = vsel %vm592, %v4439, %v4441
      %v4507 = vsel %vm592, %v4441, %v4443
      %v4508 = vsel %vm592, %v4443, %v4445
      %v4509 = vsel %vm592, %v4445, %v4447
      %v4510 = vsel %vm592, %v4447, %v4449
      %v4511 = vsel %vm592, %v4451, %v4453
      %v4512 = vsel %vm592, %v4453, %v4455
      %v4513 = vsel %vm592, %v4455, %v4457
      %v4514 = vsel %vm592, %v4457, %v4459
      %v4515 = vsel %vm592, %v4459, %v4461
      %v4516 = vsel %vm592, %v4463, %v4465
      %v4517 = vsel %vm592, %v4465, %v4467
      %v4518 = vsel %vm592, %v4467, %v4469
      %v4519 = vsel %vm592, %v4469, %v4471
      %v4520 = vsel %vm592, %v4471, %v4473
      %v4521 = vsel %vm592, %v4475, %v4477
      %v4522 = vsel %vm592, %v4477, %v4479
      %v4523 = vsel %vm592, %v4479, %v4481
      %v4524 = vsel %vm592, %v4481, %v4483
      %v4525 = vsel %vm592, %v4483, %v4485
      %v4566 = vmax.f32 %v4230, %v4486
      %v4567 = vmax.f32 %v4231, %v4487
      %v4568 = vmax.f32 %v4232, %v4488
      %v4569 = vmax.f32 %v4233, %v4489
      %v4570 = vmax.f32 %v4234, %v4490
      %v4571 = vmax.f32 %v4235, %v4491
      %v4572 = vmax.f32 %v4236, %v4492
      %v4573 = vmax.f32 %v4237, %v4493
      %v4574 = vmax.f32 %v4238, %v4494
      %v4575 = vmax.f32 %v4239, %v4495
      %v4576 = vmax.f32 %v4240, %v4496
      %v4577 = vmax.f32 %v4241, %v4497
      %v4578 = vmax.f32 %v4242, %v4498
      %v4579 = vmax.f32 %v4243, %v4499
      %v4580 = vmax.f32 %v4244, %v4500
      %v4581 = vmax.f32 %v4245, %v4501
      %v4582 = vmax.f32 %v4246, %v4502
      %v4583 = vmax.f32 %v4247, %v4503
      %v4584 = vmax.f32 %v4248, %v4504
      %v4585 = vmax.f32 %v4249, %v4505
      %v4586 = vmax.f32 %v4250, %v4506
      %v4587 = vmax.f32 %v4251, %v4507
      %v4588 = vmax.f32 %v4252, %v4508
      %v4589 = vmax.f32 %v4253, %v4509
      %v4590 = vmax.f32 %v4254, %v4510
      %v4591 = vmax.f32 %v4255, %v4511
      %v4592 = vmax.f32 %v4256, %v4512
      %v4593 = vmax.f32 %v4257, %v4513
      %v4594 = vmax.f32 %v4258, %v4514
      %v4595 = vmax.f32 %v4259, %v4515
      %v4596 = vmax.f32 %v4260, %v4516
      %v4597 = vmax.f32 %v4261, %v4517
      %v4598 = vmax.f32 %v4262, %v4518
      %v4599 = vmax.f32 %v4263, %v4519
      %v4600 = vmax.f32 %v4264, %v4520
      %v4601 = vmax.f32 %v4265, %v4521
      %v4602 = vmax.f32 %v4266, %v4522
      %v4603 = vmax.f32 %v4267, %v4523
      %v4604 = vmax.f32 %v4268, %v4524
      %v4605 = vmax.f32 %v4269, %v4525
      %v4606 = vpack.c.bf16 %v4571, %v4566
      %v4607 = vpack.c.bf16 %v4572, %v4567
      %v4608 = vpack.c.bf16 %v4573, %v4568
      %v4609 = vpack.c.bf16 %v4574, %v4569
      %v4610 = vpack.c.bf16 %v4575, %v4570
      %v4611 = vpack.c.bf16 %v4581, %v4576
      %v4612 = vpack.c.bf16 %v4582, %v4577
      %v4613 = vpack.c.bf16 %v4583, %v4578
      %v4614 = vpack.c.bf16 %v4584, %v4579
      %v4615 = vpack.c.bf16 %v4585, %v4580
      %v4616 = vpack.c.bf16 %v4591, %v4586
      %v4617 = vpack.c.bf16 %v4592, %v4587
      %v4618 = vpack.c.bf16 %v4593, %v4588
      %v4619 = vpack.c.bf16 %v4594, %v4589
      %v4620 = vpack.c.bf16 %v4595, %v4590
      %v4621 = vpack.c.bf16 %v4601, %v4596
      %v4622 = vpack.c.bf16 %v4602, %v4597
      %v4623 = vpack.c.bf16 %v4603, %v4598
      %v4624 = vpack.c.bf16 %v4604, %v4599
      %v4625 = vpack.c.bf16 %v4605, %v4600
      %v4626 = vld [vmem:[%s5] sm:$0xff]
      %v4627 = vld [vmem:[%s5 + $0x8] sm:$0xff]
      %v4628 = vld [vmem:[%s5 + $0x10] sm:$0xff]
      %v4629 = vld [vmem:[%s5 + $0x18] sm:$0xff]
      %v4630 = vld [vmem:[%s5 + $0x20] sm:$0xff]
      %v4631 = vld [vmem:[%s5 + $0x28] sm:$0xff]
      %v4632 = vld [vmem:[%s5 + $0x30] sm:$0xff]
      %v4633 = vld [vmem:[%s5 + $0x38] sm:$0xff]
      %v4634 = vld [vmem:[%s5 + $0x40] sm:$0xff]
      %v4635 = vld [vmem:[%s5 + $0x48] sm:$0xff]
      %v4636 = vld [vmem:[%s5 + $0x50] sm:$0xff]
      %v4637 = vld [vmem:[%s5 + $0x58] sm:$0xff]
      %v4638 = vld [vmem:[%s5 + $0x60] sm:$0xff]
      %v4639 = vld [vmem:[%s5 + $0x68] sm:$0xff]
      %v4640 = vld [vmem:[%s5 + $0x70] sm:$0xff]
      %v4641 = vld [vmem:[%s5 + $0x78] sm:$0xff]
      %v4642 = vld [vmem:[%s5 + $0x80] sm:$0xff]
      %v4643 = vld [vmem:[%s5 + $0x88] sm:$0xff]
      %v4644 = vld [vmem:[%s5 + $0x90] sm:$0xff]
      %v4645 = vld [vmem:[%s5 + $0x98] sm:$0xff]
      %v4646 = vld [vmem:[%s5 + $0xa0] sm:$0xff]
      %v4647 = vld [vmem:[%s5 + $0xa8] sm:$0xff]
      %v4648 = vld [vmem:[%s5 + $0xb0] sm:$0xff]
      %v4649 = vld [vmem:[%s5 + $0xb8] sm:$0xff]
      %v4650 = vld [vmem:[%s5 + $0xc0] sm:$0xff]
      %v4651 = vld [vmem:[%s5 + $0xc8] sm:$0xff]
      %v4652 = vld [vmem:[%s5 + $0xd0] sm:$0xff]
      %v4653 = vld [vmem:[%s5 + $0xd8] sm:$0xff]
      %v4654 = vld [vmem:[%s5 + $0xe0] sm:$0xff]
      %v4655 = vld [vmem:[%s5 + $0xe8] sm:$0xff]
      %v4656 = vld [vmem:[%s5 + $0xf0] sm:$0xff]
      %v4657 = vld [vmem:[%s5 + $0xf8] sm:$0xff]
      %v4658 = vld [vmem:[%s5 + $0x100] sm:$0xff]
      %v4659 = vld [vmem:[%s5 + $0x108] sm:$0xff]
      %v4660 = vld [vmem:[%s5 + $0x110] sm:$0xff]
      %v4661 = vld [vmem:[%s5 + $0x118] sm:$0xff]
      %v4662 = vld [vmem:[%s5 + $0x120] sm:$0xff]
      %v4663 = vld [vmem:[%s5 + $0x128] sm:$0xff]
      %v4664 = vld [vmem:[%s5 + $0x130] sm:$0xff]
      %v4665 = vld [vmem:[%s5 + $0x138] sm:$0xff]
      %v4666 = vld [vmem:[%s5 + $0x140] sm:$0xff]
      %v4667 = vld [vmem:[%s5 + $0x148] sm:$0xff]
      %v4668 = vld [vmem:[%s5 + $0x150] sm:$0xff]
      %v4669 = vld [vmem:[%s5 + $0x158] sm:$0xff]
      %v4670 = vld [vmem:[%s5 + $0x160] sm:$0xff]
      %v4671 = vld [vmem:[%s5 + $0x168] sm:$0xff]
      %v4672 = vld [vmem:[%s5 + $0x170] sm:$0xff]
      %v4673 = vld [vmem:[%s5 + $0x178] sm:$0xff]
      %v4674 = vld [vmem:[%s5 + $0x180] sm:$0xff]
      %v4675 = vld [vmem:[%s5 + $0x188] sm:$0xff]
      %v4676 = vld [vmem:[%s5 + $0x190] sm:$0xff]
      %v4677 = vld [vmem:[%s5 + $0x198] sm:$0xff]
      %v4678 = vld [vmem:[%s5 + $0x1a0] sm:$0xff]
      %v4679 = vld [vmem:[%s5 + $0x1a8] sm:$0xff]
      %v4680 = vld [vmem:[%s5 + $0x1b0] sm:$0xff]
      %v4681 = vld [vmem:[%s5 + $0x1b8] sm:$0xff]
      %v4682 = vld [vmem:[%s5 + $0x1c0] sm:$0xff]
      %v4683 = vld [vmem:[%s5 + $0x1c8] sm:$0xff]
      %v4684 = vld [vmem:[%s5 + $0x1d0] sm:$0xff]
      %v4685 = vld [vmem:[%s5 + $0x1d8] sm:$0xff]
      %v4686 = vld [vmem:[%s5 + $0x1e0] sm:$0xff]
      %v4687 = vld [vmem:[%s5 + $0x1e8] sm:$0xff]
      %v4688 = vld [vmem:[%s5 + $0x1f0] sm:$0xff]
      %v4689 = vld [vmem:[%s5 + $0x1f8] sm:$0xff]
      %v4690 = vld [vmem:[%s5 + $0x200] sm:$0xff]
      %v4691 = vld [vmem:[%s5 + $0x208] sm:$0xff]
      %v4692 = vld [vmem:[%s5 + $0x210] sm:$0xff]
      %v4693 = vld [vmem:[%s5 + $0x218] sm:$0xff]
      %v4694 = vld [vmem:[%s5 + $0x220] sm:$0xff]
      %v4695 = vld [vmem:[%s5 + $0x228] sm:$0xff]
      %v4696 = vld [vmem:[%s5 + $0x230] sm:$0xff]
      %v4697 = vld [vmem:[%s5 + $0x238] sm:$0xff]
      %v4698 = vld [vmem:[%s5 + $0x240] sm:$0xff]
      %v4699 = vld [vmem:[%s5 + $0x248] sm:$0xff]
      %v4700 = vld [vmem:[%s5 + $0x250] sm:$0xff]
      %v4701 = vld [vmem:[%s5 + $0x258] sm:$0xff]
      %v4702 = vld [vmem:[%s5 + $0x260] sm:$0xff]
      %v4703 = vld [vmem:[%s5 + $0x268] sm:$0xff]
      %v4704 = vld [vmem:[%s5 + $0x270] sm:$0xff]
      %v4705 = vld [vmem:[%s5 + $0x278] sm:$0xff]
      %v4786 = vunpack.c.l.b16 %v4626
      %v4787 = vunpack.c.h.b16 %v4626
      %v4788 = vunpack.c.l.b16 %v4627
      %v4789 = vunpack.c.h.b16 %v4627
      %v4790 = vunpack.c.l.b16 %v4628
      %v4791 = vunpack.c.h.b16 %v4628
      %v4792 = vunpack.c.l.b16 %v4629
      %v4793 = vunpack.c.h.b16 %v4629
      %v4794 = vunpack.c.l.b16 %v4630
      %v4795 = vunpack.c.h.b16 %v4630
      %v4796 = vunpack.c.l.b16 %v4631
      %v4797 = vunpack.c.h.b16 %v4631
      %v4798 = vunpack.c.l.b16 %v4632
      %v4799 = vunpack.c.h.b16 %v4632
      %v4800 = vunpack.c.l.b16 %v4633
      %v4801 = vunpack.c.h.b16 %v4633
      %v4802 = vunpack.c.l.b16 %v4634
      %v4803 = vunpack.c.h.b16 %v4634
      %v4804 = vunpack.c.l.b16 %v4635
      %v4805 = vunpack.c.h.b16 %v4635
      %v4806 = vunpack.c.l.b16 %v4636
      %v4807 = vunpack.c.h.b16 %v4636
      %v4808 = vunpack.c.l.b16 %v4637
      %v4809 = vunpack.c.h.b16 %v4637
      %v4810 = vunpack.c.l.b16 %v4638
      %v4811 = vunpack.c.h.b16 %v4638
      %v4812 = vunpack.c.l.b16 %v4639
      %v4813 = vunpack.c.h.b16 %v4639
      %v4814 = vunpack.c.l.b16 %v4640
      %v4815 = vunpack.c.h.b16 %v4640
      %v4816 = vunpack.c.l.b16 %v4641
      %v4817 = vunpack.c.h.b16 %v4641
      %v4818 = vunpack.c.l.b16 %v4642
      %v4819 = vunpack.c.h.b16 %v4642
      %v4820 = vunpack.c.l.b16 %v4643
      %v4821 = vunpack.c.h.b16 %v4643
      %v4822 = vunpack.c.l.b16 %v4644
      %v4823 = vunpack.c.h.b16 %v4644
      %v4824 = vunpack.c.l.b16 %v4645
      %v4825 = vunpack.c.h.b16 %v4645
      %v4826 = vunpack.c.l.b16 %v4646
      %v4827 = vunpack.c.h.b16 %v4646
      %v4828 = vunpack.c.l.b16 %v4647
      %v4829 = vunpack.c.h.b16 %v4647
      %v4830 = vunpack.c.l.b16 %v4648
      %v4831 = vunpack.c.h.b16 %v4648
      %v4832 = vunpack.c.l.b16 %v4649
      %v4833 = vunpack.c.h.b16 %v4649
      %v4834 = vunpack.c.l.b16 %v4650
      %v4835 = vunpack.c.h.b16 %v4650
      %v4836 = vunpack.c.l.b16 %v4651
      %v4837 = vunpack.c.h.b16 %v4651
      %v4838 = vunpack.c.l.b16 %v4652
      %v4839 = vunpack.c.h.b16 %v4652
      %v4840 = vunpack.c.l.b16 %v4653
      %v4841 = vunpack.c.h.b16 %v4653
      %v4842 = vunpack.c.l.b16 %v4654
      %v4843 = vunpack.c.h.b16 %v4654
      %v4844 = vunpack.c.l.b16 %v4655
      %v4845 = vunpack.c.h.b16 %v4655
      %v4846 = vunpack.c.l.b16 %v4656
      %v4847 = vunpack.c.h.b16 %v4656
      %v4848 = vunpack.c.l.b16 %v4657
      %v4849 = vunpack.c.h.b16 %v4657
      %v4850 = vunpack.c.l.b16 %v4658
      %v4851 = vunpack.c.h.b16 %v4658
      %v4852 = vunpack.c.l.b16 %v4659
      %v4853 = vunpack.c.h.b16 %v4659
      %v4854 = vunpack.c.l.b16 %v4660
      %v4855 = vunpack.c.h.b16 %v4660
      %v4856 = vunpack.c.l.b16 %v4661
      %v4857 = vunpack.c.h.b16 %v4661
      %v4858 = vunpack.c.l.b16 %v4662
      %v4859 = vunpack.c.h.b16 %v4662
      %v4860 = vunpack.c.l.b16 %v4663
      %v4861 = vunpack.c.h.b16 %v4663
      %v4862 = vunpack.c.l.b16 %v4664
      %v4863 = vunpack.c.h.b16 %v4664
      %v4864 = vunpack.c.l.b16 %v4665
      %v4865 = vunpack.c.h.b16 %v4665
      %v4866 = vunpack.c.l.b16 %v4666
      %v4867 = vunpack.c.h.b16 %v4666
      %v4868 = vunpack.c.l.b16 %v4667
      %v4869 = vunpack.c.h.b16 %v4667
      %v4870 = vunpack.c.l.b16 %v4668
      %v4871 = vunpack.c.h.b16 %v4668
      %v4872 = vunpack.c.l.b16 %v4669
      %v4873 = vunpack.c.h.b16 %v4669
      %v4874 = vunpack.c.l.b16 %v4670
      %v4875 = vunpack.c.h.b16 %v4670
      %v4876 = vunpack.c.l.b16 %v4671
      %v4877 = vunpack.c.h.b16 %v4671
      %v4878 = vunpack.c.l.b16 %v4672
      %v4879 = vunpack.c.h.b16 %v4672
      %v4880 = vunpack.c.l.b16 %v4673
      %v4881 = vunpack.c.h.b16 %v4673
      %v4882 = vunpack.c.l.b16 %v4674
      %v4883 = vunpack.c.h.b16 %v4674
      %v4884 = vunpack.c.l.b16 %v4675
      %v4885 = vunpack.c.h.b16 %v4675
      %v4886 = vunpack.c.l.b16 %v4676
      %v4887 = vunpack.c.h.b16 %v4676
      %v4888 = vunpack.c.l.b16 %v4677
      %v4889 = vunpack.c.h.b16 %v4677
      %v4890 = vunpack.c.l.b16 %v4678
      %v4891 = vunpack.c.h.b16 %v4678
      %v4892 = vunpack.c.l.b16 %v4679
      %v4893 = vunpack.c.h.b16 %v4679
      %v4894 = vunpack.c.l.b16 %v4680
      %v4895 = vunpack.c.h.b16 %v4680
      %v4896 = vunpack.c.l.b16 %v4681
      %v4897 = vunpack.c.h.b16 %v4681
      %v4898 = vunpack.c.l.b16 %v4682
      %v4899 = vunpack.c.h.b16 %v4682
      %v4900 = vunpack.c.l.b16 %v4683
      %v4901 = vunpack.c.h.b16 %v4683
      %v4902 = vunpack.c.l.b16 %v4684
      %v4903 = vunpack.c.h.b16 %v4684
      %v4904 = vunpack.c.l.b16 %v4685
      %v4905 = vunpack.c.h.b16 %v4685
      %v4906 = vunpack.c.l.b16 %v4686
      %v4907 = vunpack.c.h.b16 %v4686
      %v4908 = vunpack.c.l.b16 %v4687
      %v4909 = vunpack.c.h.b16 %v4687
      %v4910 = vunpack.c.l.b16 %v4688
      %v4911 = vunpack.c.h.b16 %v4688
      %v4912 = vunpack.c.l.b16 %v4689
      %v4913 = vunpack.c.h.b16 %v4689
      %v4914 = vunpack.c.l.b16 %v4690
      %v4915 = vunpack.c.h.b16 %v4690
      %v4916 = vunpack.c.l.b16 %v4691
      %v4917 = vunpack.c.h.b16 %v4691
      %v4918 = vunpack.c.l.b16 %v4692
      %v4919 = vunpack.c.h.b16 %v4692
      %v4920 = vunpack.c.l.b16 %v4693
      %v4921 = vunpack.c.h.b16 %v4693
      %v4922 = vunpack.c.l.b16 %v4694
      %v4923 = vunpack.c.h.b16 %v4694
      %v4924 = vunpack.c.l.b16 %v4695
      %v4925 = vunpack.c.h.b16 %v4695
      %v4926 = vunpack.c.l.b16 %v4696
      %v4927 = vunpack.c.h.b16 %v4696
      %v4928 = vunpack.c.l.b16 %v4697
      %v4929 = vunpack.c.h.b16 %v4697
      %v4930 = vunpack.c.l.b16 %v4698
      %v4931 = vunpack.c.h.b16 %v4698
      %v4932 = vunpack.c.l.b16 %v4699
      %v4933 = vunpack.c.h.b16 %v4699
      %v4934 = vunpack.c.l.b16 %v4700
      %v4935 = vunpack.c.h.b16 %v4700
      %v4936 = vunpack.c.l.b16 %v4701
      %v4937 = vunpack.c.h.b16 %v4701
      %v4938 = vunpack.c.l.b16 %v4702
      %v4939 = vunpack.c.h.b16 %v4702
      %v4940 = vunpack.c.l.b16 %v4703
      %v4941 = vunpack.c.h.b16 %v4703
      %v4942 = vunpack.c.l.b16 %v4704
      %v4943 = vunpack.c.h.b16 %v4704
      %v4944 = vunpack.c.l.b16 %v4705
      %v4945 = vunpack.c.h.b16 %v4705
      %v4946 = vpack.c.b16 %v4788, %v4786
      %v4947 = vpack.c.b16 %v4789, %v4787
      %v4948 = vpack.c.b16 %v4792, %v4790
      %v4949 = vpack.c.b16 %v4793, %v4791
      %v4950 = vpack.c.b16 %v4796, %v4794
      %v4951 = vpack.c.b16 %v4797, %v4795
      %v4952 = vpack.c.b16 %v4800, %v4798
      %v4953 = vpack.c.b16 %v4801, %v4799
      %v4954 = vpack.c.b16 %v4804, %v4802
      %v4955 = vpack.c.b16 %v4805, %v4803
      %v4956 = vpack.c.b16 %v4808, %v4806
      %v4957 = vpack.c.b16 %v4809, %v4807
      %v4958 = vpack.c.b16 %v4812, %v4810
      %v4959 = vpack.c.b16 %v4813, %v4811
      %v4960 = vpack.c.b16 %v4816, %v4814
      %v4961 = vpack.c.b16 %v4817, %v4815
      %v4962 = vpack.c.b16 %v4820, %v4818
      %v4963 = vpack.c.b16 %v4821, %v4819
      %v4964 = vpack.c.b16 %v4824, %v4822
      %v4965 = vpack.c.b16 %v4825, %v4823
      %v4966 = vpack.c.b16 %v4828, %v4826
      %v4967 = vpack.c.b16 %v4829, %v4827
      %v4968 = vpack.c.b16 %v4832, %v4830
      %v4969 = vpack.c.b16 %v4833, %v4831
      %v4970 = vpack.c.b16 %v4836, %v4834
      %v4971 = vpack.c.b16 %v4837, %v4835
      %v4972 = vpack.c.b16 %v4840, %v4838
      %v4973 = vpack.c.b16 %v4841, %v4839
      %v4974 = vpack.c.b16 %v4844, %v4842
      %v4975 = vpack.c.b16 %v4845, %v4843
      %v4976 = vpack.c.b16 %v4848, %v4846
      %v4977 = vpack.c.b16 %v4849, %v4847
      %v4978 = vpack.c.b16 %v4852, %v4850
      %v4979 = vpack.c.b16 %v4853, %v4851
      %v4980 = vpack.c.b16 %v4856, %v4854
      %v4981 = vpack.c.b16 %v4857, %v4855
      %v4982 = vpack.c.b16 %v4860, %v4858
      %v4983 = vpack.c.b16 %v4861, %v4859
      %v4984 = vpack.c.b16 %v4864, %v4862
      %v4985 = vpack.c.b16 %v4865, %v4863
      %v4986 = vpack.c.b16 %v4868, %v4866
      %v4987 = vpack.c.b16 %v4869, %v4867
      %v4988 = vpack.c.b16 %v4872, %v4870
      %v4989 = vpack.c.b16 %v4873, %v4871
      %v4990 = vpack.c.b16 %v4876, %v4874
      %v4991 = vpack.c.b16 %v4877, %v4875
      %v4992 = vpack.c.b16 %v4880, %v4878
      %v4993 = vpack.c.b16 %v4881, %v4879
      %v4994 = vpack.c.b16 %v4884, %v4882
      %v4995 = vpack.c.b16 %v4885, %v4883
      %v4996 = vpack.c.b16 %v4888, %v4886
      %v4997 = vpack.c.b16 %v4889, %v4887
      %v4998 = vpack.c.b16 %v4892, %v4890
      %v4999 = vpack.c.b16 %v4893, %v4891
      %v5000 = vpack.c.b16 %v4896, %v4894
      %v5001 = vpack.c.b16 %v4897, %v4895
      %v5002 = vpack.c.b16 %v4900, %v4898
      %v5003 = vpack.c.b16 %v4901, %v4899
      %v5004 = vpack.c.b16 %v4904, %v4902
      %v5005 = vpack.c.b16 %v4905, %v4903
      %v5006 = vpack.c.b16 %v4908, %v4906
      %v5007 = vpack.c.b16 %v4909, %v4907
      %v5008 = vpack.c.b16 %v4912, %v4910
      %v5009 = vpack.c.b16 %v4913, %v4911
      %v5010 = vpack.c.b16 %v4916, %v4914
      %v5011 = vpack.c.b16 %v4917, %v4915
      %v5012 = vpack.c.b16 %v4920, %v4918
      %v5013 = vpack.c.b16 %v4921, %v4919
      %v5014 = vpack.c.b16 %v4924, %v4922
      %v5015 = vpack.c.b16 %v4925, %v4923
      %v5016 = vpack.c.b16 %v4928, %v4926
      %v5017 = vpack.c.b16 %v4929, %v4927
      %v5018 = vpack.c.b16 %v4932, %v4930
      %v5019 = vpack.c.b16 %v4933, %v4931
      %v5020 = vpack.c.b16 %v4936, %v4934
      %v5021 = vpack.c.b16 %v4937, %v4935
      %v5022 = vpack.c.b16 %v4940, %v4938
      %v5023 = vpack.c.b16 %v4941, %v4939
      %v5024 = vpack.c.b16 %v4944, %v4942
      %v5025 = vpack.c.b16 %v4945, %v4943
      %v5105 = vsel %vm230, %v4610, 0
      %v5108 = vsel %vm230, %v4615, 0
      %v5111 = vsel %vm230, %v4620, 0
      %v5114 = vsel %vm230, %v4625, 0
      %vm5116 = vcmask 1046528
      %vm5117 = vcmask 1047552
      %v5118 = vsel %vm5116, 4294967295, 65535
      %v5119 = vsel %vm5117, %v5118, 0
      %v5121 = vand.u32 %v5024, %v5119
      %v5124 = vand.u32 %v5025, %v5119
      %5126 = vmatpush.bf16.msra.mxu0 %v4960
      %5127 = vmatpush.bf16.msra.mxu0 %v4958
      %5128 = vmatpush.bf16.msra.mxu0 %v4956
      %5129 = vmatpush.bf16.msra.mxu0 %v4954
      %5130 = vmatpush.bf16.msra.mxu0 %v4952
      %5131 = vmatpush.bf16.msra.mxu0 %v4950
      %5132 = vmatpush.bf16.msra.mxu0 %v4948
      %5133 = vmatpush.bf16.msra.mxu0 %v4946
      %5134 = vmatmul.bf16.gmra.mxu0 %v4606
      %v5135 = vpop.f32.mrf.mxu0
      %v5136 = vadd.f32 0.0, %v5135
      %v5137 = vpop.f32.mrf.mxu0
      %v5138 = vadd.f32 0.0, %v5137
      %5139 = vmatmul.bf16.gmra.mxu0 %v4611
      %v5140 = vpop.f32.mrf.mxu0
      %v5141 = vadd.f32 0.0, %v5140
      %v5142 = vpop.f32.mrf.mxu0
      %v5143 = vadd.f32 0.0, %v5142
      %5144 = vmatmul.bf16.gmra.mxu0 %v4616
      %v5145 = vpop.f32.mrf.mxu0
      %v5146 = vadd.f32 0.0, %v5145
      %v5147 = vpop.f32.mrf.mxu0
      %v5148 = vadd.f32 0.0, %v5147
      %5149 = vmatmul.bf16.gmra.mxu0 %v4621
      %v5150 = vpop.f32.mrf.mxu0
      %v5151 = vadd.f32 0.0, %v5150
      %v5152 = vpop.f32.mrf.mxu0
      %v5153 = vadd.f32 0.0, %v5152
      %5154 = vdwg.mxu0
      %5155 = vmatpush.bf16.msra.mxu0 %v4976
      %5156 = vmatpush.bf16.msra.mxu0 %v4974
      %5157 = vmatpush.bf16.msra.mxu0 %v4972
      %5158 = vmatpush.bf16.msra.mxu0 %v4970
      %5159 = vmatpush.bf16.msra.mxu0 %v4968
      %5160 = vmatpush.bf16.msra.mxu0 %v4966
      %5161 = vmatpush.bf16.msra.mxu0 %v4964
      %5162 = vmatpush.bf16.msra.mxu0 %v4962
      %5163 = vmatmul.bf16.gmra.mxu0 %v4607
      %v5164 = vpop.f32.mrf.mxu0
      %v5165 = vadd.f32 %v5136, %v5164
      %v5166 = vpop.f32.mrf.mxu0
      %v5167 = vadd.f32 %v5138, %v5166
      %5168 = vmatmul.bf16.gmra.mxu0 %v4612
      %v5169 = vpop.f32.mrf.mxu0
      %v5170 = vadd.f32 %v5141, %v5169
      %v5171 = vpop.f32.mrf.mxu0
      %v5172 = vadd.f32 %v5143, %v5171
      %5173 = vmatmul.bf16.gmra.mxu0 %v4617
      %v5174 = vpop.f32.mrf.mxu0
      %v5175 = vadd.f32 %v5146, %v5174
      %v5176 = vpop.f32.mrf.mxu0
      %v5177 = vadd.f32 %v5148, %v5176
      %5178 = vmatmul.bf16.gmra.mxu0 %v4622
      %v5179 = vpop.f32.mrf.mxu0
      %v5180 = vadd.f32 %v5151, %v5179
      %v5181 = vpop.f32.mrf.mxu0
      %v5182 = vadd.f32 %v5153, %v5181
      %5183 = vdwg.mxu0
      %5184 = vmatpush.bf16.msra.mxu0 %v4992
      %5185 = vmatpush.bf16.msra.mxu0 %v4990
      %5186 = vmatpush.bf16.msra.mxu0 %v4988
      %5187 = vmatpush.bf16.msra.mxu0 %v4986
      %5188 = vmatpush.bf16.msra.mxu0 %v4984
      %5189 = vmatpush.bf16.msra.mxu0 %v4982
      %5190 = vmatpush.bf16.msra.mxu0 %v4980
      %5191 = vmatpush.bf16.msra.mxu0 %v4978
      %5192 = vmatmul.bf16.gmra.mxu0 %v4608
      %v5193 = vpop.f32.mrf.mxu0
      %v5194 = vadd.f32 %v5165, %v5193
      %v5195 = vpop.f32.mrf.mxu0
      %v5196 = vadd.f32 %v5167, %v5195
      %5197 = vmatmul.bf16.gmra.mxu0 %v4613
      %v5198 = vpop.f32.mrf.mxu0
      %v5199 = vadd.f32 %v5170, %v5198
      %v5200 = vpop.f32.mrf.mxu0
      %v5201 = vadd.f32 %v5172, %v5200
      %5202 = vmatmul.bf16.gmra.mxu0 %v4618
      %v5203 = vpop.f32.mrf.mxu0
      %v5204 = vadd.f32 %v5175, %v5203
      %v5205 = vpop.f32.mrf.mxu0
      %v5206 = vadd.f32 %v5177, %v5205
      %5207 = vmatmul.bf16.gmra.mxu0 %v4623
      %v5208 = vpop.f32.mrf.mxu0
      %v5209 = vadd.f32 %v5180, %v5208
      %v5210 = vpop.f32.mrf.mxu0
      %v5211 = vadd.f32 %v5182, %v5210
      %5212 = vdwg.mxu0
      %5213 = vmatpush.bf16.msra.mxu0 %v5008
      %5214 = vmatpush.bf16.msra.mxu0 %v5006
      %5215 = vmatpush.bf16.msra.mxu0 %v5004
      %5216 = vmatpush.bf16.msra.mxu0 %v5002
      %5217 = vmatpush.bf16.msra.mxu0 %v5000
      %5218 = vmatpush.bf16.msra.mxu0 %v4998
      %5219 = vmatpush.bf16.msra.mxu0 %v4996
      %5220 = vmatpush.bf16.msra.mxu0 %v4994
      %5221 = vmatmul.bf16.gmra.mxu0 %v4609
      %v5222 = vpop.f32.mrf.mxu0
      %v5223 = vadd.f32 %v5194, %v5222
      %v5224 = vpop.f32.mrf.mxu0
      %v5225 = vadd.f32 %v5196, %v5224
      %5226 = vmatmul.bf16.gmra.mxu0 %v4614
      %v5227 = vpop.f32.mrf.mxu0
      %v5228 = vadd.f32 %v5199, %v5227
      %v5229 = vpop.f32.mrf.mxu0
      %v5230 = vadd.f32 %v5201, %v5229
      %5231 = vmatmul.bf16.gmra.mxu0 %v4619
      %v5232 = vpop.f32.mrf.mxu0
      %v5233 = vadd.f32 %v5204, %v5232
      %v5234 = vpop.f32.mrf.mxu0
      %v5235 = vadd.f32 %v5206, %v5234
      %5236 = vmatmul.bf16.gmra.mxu0 %v4624
      %v5237 = vpop.f32.mrf.mxu0
      %v5238 = vadd.f32 %v5209, %v5237
      %v5239 = vpop.f32.mrf.mxu0
      %v5240 = vadd.f32 %v5211, %v5239
      %5241 = vdwg.mxu0
      %5242 = vmatpush.bf16.msra.mxu0 %v5121
      %5243 = vmatpush.bf16.msra.mxu0 %v5022
      %5244 = vmatpush.bf16.msra.mxu0 %v5020
      %5245 = vmatpush.bf16.msra.mxu0 %v5018
      %5246 = vmatpush.bf16.msra.mxu0 %v5016
      %5247 = vmatpush.bf16.msra.mxu0 %v5014
      %5248 = vmatpush.bf16.msra.mxu0 %v5012
      %5249 = vmatpush.bf16.msra.mxu0 %v5010
      %5250 = vmatmul.bf16.gmra.mxu0 %v5105
      %v5251 = vpop.f32.mrf.mxu0
      %v5252 = vadd.f32 %v5223, %v5251
      %v5253 = vpop.f32.mrf.mxu0
      %v5254 = vadd.f32 %v5225, %v5253
      %5255 = vmatmul.bf16.gmra.mxu0 %v5108
      %v5256 = vpop.f32.mrf.mxu0
      %v5257 = vadd.f32 %v5228, %v5256
      %v5258 = vpop.f32.mrf.mxu0
      %v5259 = vadd.f32 %v5230, %v5258
      %5260 = vmatmul.bf16.gmra.mxu0 %v5111
      %v5261 = vpop.f32.mrf.mxu0
      %v5262 = vadd.f32 %v5233, %v5261
      %v5263 = vpop.f32.mrf.mxu0
      %v5264 = vadd.f32 %v5235, %v5263
      %5265 = vmatmul.bf16.gmra.mxu0 %v5114
      %v5266 = vpop.f32.mrf.mxu0
      %v5267 = vadd.f32 %v5238, %v5266
      %v5268 = vpop.f32.mrf.mxu0
      %v5269 = vadd.f32 %v5240, %v5268
      %5270 = vdwg.mxu0
      %5271 = vmatpush.bf16.msra.mxu0 %v4961
      %5272 = vmatpush.bf16.msra.mxu0 %v4959
      %5273 = vmatpush.bf16.msra.mxu0 %v4957
      %5274 = vmatpush.bf16.msra.mxu0 %v4955
      %5275 = vmatpush.bf16.msra.mxu0 %v4953
      %5276 = vmatpush.bf16.msra.mxu0 %v4951
      %5277 = vmatpush.bf16.msra.mxu0 %v4949
      %5278 = vmatpush.bf16.msra.mxu0 %v4947
      %5279 = vmatmul.bf16.gmra.mxu0 %v4606
      %v5280 = vpop.f32.mrf.mxu0
      %v5281 = vadd.f32 0.0, %v5280
      %v5282 = vpop.f32.mrf.mxu0
      %v5283 = vadd.f32 0.0, %v5282
      %5284 = vmatmul.bf16.gmra.mxu0 %v4611
      %v5285 = vpop.f32.mrf.mxu0
      %v5286 = vadd.f32 0.0, %v5285
      %v5287 = vpop.f32.mrf.mxu0
      %v5288 = vadd.f32 0.0, %v5287
      %5289 = vmatmul.bf16.gmra.mxu0 %v4616
      %v5290 = vpop.f32.mrf.mxu0
      %v5291 = vadd.f32 0.0, %v5290
      %v5292 = vpop.f32.mrf.mxu0
      %v5293 = vadd.f32 0.0, %v5292
      %5294 = vmatmul.bf16.gmra.mxu0 %v4621
      %v5295 = vpop.f32.mrf.mxu0
      %v5296 = vadd.f32 0.0, %v5295
      %v5297 = vpop.f32.mrf.mxu0
      %v5298 = vadd.f32 0.0, %v5297
      %5299 = vdwg.mxu0
      %5300 = vmatpush.bf16.msra.mxu0 %v4977
      %5301 = vmatpush.bf16.msra.mxu0 %v4975
      %5302 = vmatpush.bf16.msra.mxu0 %v4973
      %5303 = vmatpush.bf16.msra.mxu0 %v4971
      %5304 = vmatpush.bf16.msra.mxu0 %v4969
      %5305 = vmatpush.bf16.msra.mxu0 %v4967
      %5306 = vmatpush.bf16.msra.mxu0 %v4965
      %5307 = vmatpush.bf16.msra.mxu0 %v4963
      %5308 = vmatmul.bf16.gmra.mxu0 %v4607
      %v5309 = vpop.f32.mrf.mxu0
      %v5310 = vadd.f32 %v5281, %v5309
      %v5311 = vpop.f32.mrf.mxu0
      %v5312 = vadd.f32 %v5283, %v5311
      %5313 = vmatmul.bf16.gmra.mxu0 %v4612
      %v5314 = vpop.f32.mrf.mxu0
      %v5315 = vadd.f32 %v5286, %v5314
      %v5316 = vpop.f32.mrf.mxu0
      %v5317 = vadd.f32 %v5288, %v5316
      %5318 = vmatmul.bf16.gmra.mxu0 %v4617
      %v5319 = vpop.f32.mrf.mxu0
      %v5320 = vadd.f32 %v5291, %v5319
      %v5321 = vpop.f32.mrf.mxu0
      %v5322 = vadd.f32 %v5293, %v5321
      %5323 = vmatmul.bf16.gmra.mxu0 %v4622
      %v5324 = vpop.f32.mrf.mxu0
      %v5325 = vadd.f32 %v5296, %v5324
      %v5326 = vpop.f32.mrf.mxu0
      %v5327 = vadd.f32 %v5298, %v5326
      %5328 = vdwg.mxu0
      %5329 = vmatpush.bf16.msra.mxu0 %v4993
      %5330 = vmatpush.bf16.msra.mxu0 %v4991
      %5331 = vmatpush.bf16.msra.mxu0 %v4989
      %5332 = vmatpush.bf16.msra.mxu0 %v4987
      %5333 = vmatpush.bf16.msra.mxu0 %v4985
      %5334 = vmatpush.bf16.msra.mxu0 %v4983
      %5335 = vmatpush.bf16.msra.mxu0 %v4981
      %5336 = vmatpush.bf16.msra.mxu0 %v4979
      %5337 = vmatmul.bf16.gmra.mxu0 %v4608
      %v5338 = vpop.f32.mrf.mxu0
      %v5339 = vadd.f32 %v5310, %v5338
      %v5340 = vpop.f32.mrf.mxu0
      %v5341 = vadd.f32 %v5312, %v5340
      %5342 = vmatmul.bf16.gmra.mxu0 %v4613
      %v5343 = vpop.f32.mrf.mxu0
      %v5344 = vadd.f32 %v5315, %v5343
      %v5345 = vpop.f32.mrf.mxu0
      %v5346 = vadd.f32 %v5317, %v5345
      %5347 = vmatmul.bf16.gmra.mxu0 %v4618
      %v5348 = vpop.f32.mrf.mxu0
      %v5349 = vadd.f32 %v5320, %v5348
      %v5350 = vpop.f32.mrf.mxu0
      %v5351 = vadd.f32 %v5322, %v5350
      %5352 = vmatmul.bf16.gmra.mxu0 %v4623
      %v5353 = vpop.f32.mrf.mxu0
      %v5354 = vadd.f32 %v5325, %v5353
      %v5355 = vpop.f32.mrf.mxu0
      %v5356 = vadd.f32 %v5327, %v5355
      %5357 = vdwg.mxu0
      %5358 = vmatpush.bf16.msra.mxu0 %v5009
      %5359 = vmatpush.bf16.msra.mxu0 %v5007
      %5360 = vmatpush.bf16.msra.mxu0 %v5005
      %5361 = vmatpush.bf16.msra.mxu0 %v5003
      %5362 = vmatpush.bf16.msra.mxu0 %v5001
      %5363 = vmatpush.bf16.msra.mxu0 %v4999
      %5364 = vmatpush.bf16.msra.mxu0 %v4997
      %5365 = vmatpush.bf16.msra.mxu0 %v4995
      %5366 = vmatmul.bf16.gmra.mxu0 %v4609
      %v5367 = vpop.f32.mrf.mxu0
      %v5368 = vadd.f32 %v5339, %v5367
      %v5369 = vpop.f32.mrf.mxu0
      %v5370 = vadd.f32 %v5341, %v5369
      %5371 = vmatmul.bf16.gmra.mxu0 %v4614
      %v5372 = vpop.f32.mrf.mxu0
      %v5373 = vadd.f32 %v5344, %v5372
      %v5374 = vpop.f32.mrf.mxu0
      %v5375 = vadd.f32 %v5346, %v5374
      %5376 = vmatmul.bf16.gmra.mxu0 %v4619
      %v5377 = vpop.f32.mrf.mxu0
      %v5378 = vadd.f32 %v5349, %v5377
      %v5379 = vpop.f32.mrf.mxu0
      %v5380 = vadd.f32 %v5351, %v5379
      %5381 = vmatmul.bf16.gmra.mxu0 %v4624
      %v5382 = vpop.f32.mrf.mxu0
      %v5383 = vadd.f32 %v5354, %v5382
      %v5384 = vpop.f32.mrf.mxu0
      %v5385 = vadd.f32 %v5356, %v5384
      %5386 = vdwg.mxu0
      %5387 = vmatpush.bf16.msra.mxu0 %v5124
      %5388 = vmatpush.bf16.msra.mxu0 %v5023
      %5389 = vmatpush.bf16.msra.mxu0 %v5021
      %5390 = vmatpush.bf16.msra.mxu0 %v5019
      %5391 = vmatpush.bf16.msra.mxu0 %v5017
      %5392 = vmatpush.bf16.msra.mxu0 %v5015
      %5393 = vmatpush.bf16.msra.mxu0 %v5013
      %5394 = vmatpush.bf16.msra.mxu0 %v5011
      %5395 = vmatmul.bf16.gmra.mxu0 %v5105
      %v5396 = vpop.f32.mrf.mxu0
      %v5397 = vadd.f32 %v5368, %v5396
      %v5398 = vpop.f32.mrf.mxu0
      %v5399 = vadd.f32 %v5370, %v5398
      %5400 = vmatmul.bf16.gmra.mxu0 %v5108
      %v5401 = vpop.f32.mrf.mxu0
      %v5402 = vadd.f32 %v5373, %v5401
      %v5403 = vpop.f32.mrf.mxu0
      %v5404 = vadd.f32 %v5375, %v5403
      %5405 = vmatmul.bf16.gmra.mxu0 %v5111
      %v5406 = vpop.f32.mrf.mxu0
      %v5407 = vadd.f32 %v5378, %v5406
      %v5408 = vpop.f32.mrf.mxu0
      %v5409 = vadd.f32 %v5380, %v5408
      %5410 = vmatmul.bf16.gmra.mxu0 %v5114
      %v5411 = vpop.f32.mrf.mxu0
      %v5412 = vadd.f32 %v5383, %v5411
      %v5413 = vpop.f32.mrf.mxu0
      %v5414 = vadd.f32 %v5385, %v5413
      %5415 = vdwg.mxu0
      %v5416 = vpack.c.bf16 %v5397, %v5252
      %v5417 = vpack.c.bf16 %v5399, %v5254
      %v5418 = vpack.c.bf16 %v5402, %v5257
      %v5419 = vpack.c.bf16 %v5404, %v5259
      %v5420 = vpack.c.bf16 %v5407, %v5262
      %v5421 = vpack.c.bf16 %v5409, %v5264
      %v5422 = vpack.c.bf16 %v5412, %v5267
      %v5423 = vpack.c.bf16 %v5414, %v5269
      %s5424 = smul.u32 %s41, 16
      %s5425 = smul.addr %s5424, 4
      %s5426 = scalar_lea.vmem %s6, %s5425
      %vm5427 = vcmask 130052
      %vm5428 = vmor %vm5427, %vm1714
      %5429 = vst.msk [vmem:[%s5426] sm:$0xff] %vm5428, %v5416
      %5430 = vst.msk [vmem:[%s5426 + $0x8] sm:$0xff] %vm5428, %v5417
      %5431 = vst.msk [vmem:[%s5426 + $0x10] sm:$0xff] %vm5428, %v5418
      %5432 = vst.msk [vmem:[%s5426 + $0x18] sm:$0xff] %vm5428, %v5419
      %5433 = vst.msk [vmem:[%s5426 + $0x20] sm:$0xff] %vm5428, %v5420
      %5434 = vst.msk [vmem:[%s5426 + $0x28] sm:$0xff] %vm5428, %v5421
      %5435 = vst.msk [vmem:[%s5426 + $0x30] sm:$0xff] %vm5428, %v5422
      %5436 = vst.msk [vmem:[%s5426 + $0x38] sm:$0xff] %vm5428, %v5423
    $region34: #{net_forward.2} parent=1 // loop_footer
      %s45 = sadd.s32 1, %s41
    $region35: #{net_forward.2} parent=1 // loop_footer_branch
      %40 = sbr.rel target = $region31
    $region36: #{net_forward.2} parent=1 // loop_exit
      _
    // Predicated region
    $region37: #{net_forward.2} parent=1 // pred_check
      _
    $region38: #{net_forward.2} parent=1 // pred_check_branch
      %5438 = sbr.rel (0) target = $region40
    $region39: #{net_forward.2} parent=1 // pred_region
      _
    $region40: #{net_forward.2} parent=1 // pred_fallthru
      _
    // Predicated region
    $region41: #{net_forward.2} parent=1 // pred_check
      _
    $region42: #{net_forward.2} parent=1 // pred_check_branch
      %5440 = sbr.rel (0) target = $region44
    $region43: #{net_forward.2} parent=1 // pred_region
      _
    $region44: #{net_forward.2} parent=1 // pred_fallthru
      _
    %5441 = vsyncpa [#allocation6], 1

</llo_original>
